<compile_context>
chip_gen: v6e
topology: v6e:2x2x1
jax: 0.10.0
libtpu: 0.0.40
codegen_flags: <defaults>
</compile_context>

<pallas_src>
import functools
from typing import NamedTuple, Tuple

import jax
import jax.numpy as jnp
import numpy as np
from jax.experimental import pallas as pl
from jax.experimental.pallas import tpu as pltpu

LANE = 128


def _round_up(x, m):
    return (x + m - 1) // m * m


class _Dims(NamedTuple):
    H: int
    W: int
    KH1: int
    KW1: int
    OCP1: int
    OH1: int
    OW1: int
    P1: Tuple[int, int]
    PH1: int
    PW1: int
    KH2: int
    KW2: int
    OCP2: int
    OH2: int
    OW2: int
    P2: Tuple[int, int]
    PH2: int
    PW2: int
    NL: int
    NLP: int


# ----------------------------------------------------------------------------
# Fused Pallas kernel: one grid step == one batch element, everything in VMEM.
# ----------------------------------------------------------------------------
def _fused_kernel(x_ref, w1_ref, b1_ref, w2_ref, b2_ref, wfc_ref, bfc_ref,
                  out_ref, h1_ref, p1_ref, h2_ref, p2_ref, *, dims):
    d = dims

    # -------- conv1 + bias + ReLU (C_in == 1) --------------------------------
    # VPU broadcast-MAC over the KH1*KW1 taps; channels are the 128-wide lane dim.
    acc1 = jnp.zeros((d.OH1, d.OW1, d.OCP1), jnp.float32)
    for kh in range(d.KH1):
        for kw in range(d.KW1):
            t = kh * d.KW1 + kw
            xs = x_ref[0, kh:kh + d.OH1, kw:kw + d.OW1, :]       # (OH1, OW1, 1)
            acc1 = acc1 + xs * w1_ref[t:t + 1, :]                # -> (OH1, OW1, OCP1)
    h1_ref[...] = jnp.maximum(acc1 + b1_ref[...], 0.0)

    # -------- max pooling (kernel == stride == pool, floor mode) -------------
    def _pool(src, dst, oh, ow, p, q):
        for i in range(oh):
            row = src[p * i]                                     # (W_src, C)
            for di in range(1, p):
                row = jnp.maximum(row, src[p * i + di])
            for j in range(ow):
                win = row[q * j:q * j + q, :]                    # (q, C)
                dst[i, j:j + 1, :] = jnp.max(win, axis=0, keepdims=True)

    if d.P1 == (1, 1):
        c2_src = h1_ref
    else:
        _pool(h1_ref, p1_ref, d.PH1, d.PW1, d.P1[0], d.P1[1])
        c2_src = p1_ref

    # -------- conv2 + bias + ReLU ---------------------------------------------
    # One lane-dense MXU matmul per (output row, tap): (OW2, 128) @ (128, 128).
    b2 = b2_ref[...]                                             # (1, OCP2)
    for oh in range(d.OH2):
        acc = jnp.zeros((d.OW2, d.OCP2), jnp.float32)
        for kh in range(d.KH2):
            for kw in range(d.KW2):
                t = kh * d.KW2 + kw
                patch = c2_src[oh + kh, kw:kw + d.OW2, :]        # (OW2, ICP)
                acc = acc + jnp.dot(patch, w2_ref[t],
                                    preferred_element_type=jnp.float32)
        h2_ref[oh] = jnp.maximum(acc + b2, 0.0)                  # (OW2, OCP2)

    if d.P2 == (1, 1):
        f_src = h2_ref
    else:
        _pool(h2_ref, p2_ref, d.PH2, d.PW2, d.P2[0], d.P2[1])
        f_src = p2_ref

    # -------- fully connected --------------------------------------------------
    # Flatten order is (h, w, c_padded); fc weights were pre-permuted to match.
    acc = bfc_ref[...]                                           # (1, NLP)
    for hh in range(d.PH2):
        for ww in range(d.PW2):
            pos = hh * d.PW2 + ww
            v = f_src[hh, ww:ww + 1, :]                          # (1, OCP2)
            acc = acc + jnp.dot(v, wfc_ref[pos],
                                preferred_element_type=jnp.float32)
    out_ref[0] = acc


# ----------------------------------------------------------------------------
# One-time host-side parameter re-layout + lane padding (out of the hot path).
# ----------------------------------------------------------------------------
def _prepare(params, config):
    w1 = jnp.asarray(params["conv1_w"], jnp.float32)   # (OC1, 1, KH1, KW1)
    b1 = jnp.asarray(params["conv1_b"], jnp.float32)
    w2 = jnp.asarray(params["conv2_w"], jnp.float32)   # (OC2, IC2, KH2, KW2)
    b2 = jnp.asarray(params["conv2_b"], jnp.float32)
    wf = jnp.asarray(params["fc_w"], jnp.float32)      # (NL, fc_in)
    bf = jnp.asarray(params["fc_b"], jnp.float32)

    OC1, _, KH1, KW1 = w1.shape
    OC2, IC2, KH2, KW2 = w2.shape
    NL = wf.shape[0]
    H, W = config["height"], config["width"]
    s1 = tuple(config["conv1_stride"])
    s2 = tuple(config["conv2_stride"])
    P1 = tuple(config["conv1_pool"])
    P2 = tuple(config["conv2_pool"])
    # TODO(synk): general conv strides need strided in-kernel window reads.
    assert s1 == (1, 1) and s2 == (1, 1), "only stride (1,1) convs implemented"

    OCP1 = _round_up(OC1, LANE)
    OCP2 = _round_up(OC2, LANE)
    NLP = _round_up(NL, LANE)

    OH1, OW1 = H - KH1 + 1, W - KW1 + 1
    PH1, PW1 = OH1 // P1[0], OW1 // P1[1]
    OH2, OW2 = PH1 - KH2 + 1, PW1 - KW2 + 1
    PH2, PW2 = OH2 // P2[0], OW2 // P2[1]

    # conv1 weights: (OC1, 1, KH1, KW1) -> (KH1*KW1, OCP1), zero-padded lanes.
    w1p = jnp.transpose(w1[:, 0], (1, 2, 0))                       # (KH1, KW1, OC1)
    w1p = jnp.pad(w1p, ((0, 0), (0, 0), (0, OCP1 - OC1)))
    w1p = w1p.reshape(KH1 * KW1, OCP1)
    b1p = jnp.pad(b1, (0, OCP1 - OC1)).reshape(1, OCP1)

    # conv2 weights: (OC2, IC2, KH2, KW2) -> (KH2*KW2, ICP=OCP1, OCP2).
    w2p = jnp.transpose(w2, (2, 3, 1, 0))                          # (KH2, KW2, IC2, OC2)
    w2p = jnp.pad(w2p, ((0, 0), (0, 0), (0, OCP1 - IC2), (0, OCP2 - OC2)))
    w2p = w2p.reshape(KH2 * KW2, OCP1, OCP2)
    b2p = jnp.pad(b2, (0, OCP2 - OC2)).reshape(1, OCP2)

    # fc weights: PyTorch flattens NCHW -> (c, h, w); kernel flattens (h, w, c_padded).
    wfp = wf.reshape(NL, OC2, PH2, PW2)                            # (n, c, h, w)
    wfp = jnp.transpose(wfp, (2, 3, 1, 0))                         # (h, w, c, n)
    wfp = jnp.pad(wfp, ((0, 0), (0, 0), (0, OCP2 - OC2), (0, NLP - NL)))
    wfp = wfp.reshape(PH2 * PW2, OCP2, NLP)
    bfp = jnp.pad(bf, (0, NLP - NL)).reshape(1, NLP)

    dims = _Dims(H=H, W=W, KH1=KH1, KW1=KW1, OCP1=OCP1, OH1=OH1, OW1=OW1,
                 P1=P1, PH1=PH1, PW1=PW1, KH2=KH2, KW2=KW2, OCP2=OCP2,
                 OH2=OH2, OW2=OW2, P2=P2, PH2=PH2, PW2=PW2, NL=NL, NLP=NLP)
    return (w1p, b1p, w2p, b2p, wfp, bfp), dims


def make_speech_model_forward(params, config):
    weights, d = _prepare(params, config)
    kernel = functools.partial(_fused_kernel, dims=d)
    w1p, b1p, w2p, b2p, wfp, bfp = weights

    def fwd(x):
        B = x.shape[0]
        x4 = x.astype(jnp.float32)[..., None]                     # (B, H, W, 1) NHWC
        out_p = pl.pallas_call(
            kernel,
            out_shape=jax.ShapeDtypeStruct((B, 1, d.NLP), jnp.float32),
            grid=(B,),
            in_specs=[
                pl.BlockSpec((1, d.H, d.W, 1), lambda b: (b, 0, 0, 0)),
                pl.BlockSpec(w1p.shape, lambda b: (0, 0)),
                pl.BlockSpec(b1p.shape, lambda b: (0, 0)),
                pl.BlockSpec(w2p.shape, lambda b: (0, 0, 0)),
                pl.BlockSpec(b2p.shape, lambda b: (0, 0)),
                pl.BlockSpec(wfp.shape, lambda b: (0, 0, 0)),
                pl.BlockSpec(bfp.shape, lambda b: (0, 0)),
            ],
            out_specs=pl.BlockSpec((1, 1, d.NLP), lambda b: (b, 0, 0)),
            scratch_shapes=[
                pltpu.VMEM((d.OH1, d.OW1, d.OCP1), jnp.float32),   # conv1 out
                pltpu.VMEM((d.PH1, d.PW1, d.OCP1), jnp.float32),   # pool1 out
                pltpu.VMEM((d.OH2, d.OW2, d.OCP2), jnp.float32),   # conv2 out
                pltpu.VMEM((d.PH2, d.PW2, d.OCP2), jnp.float32),   # pool2 out
            ],
            compiler_params=pltpu.CompilerParams(
                dimension_semantics=("parallel",),
            ),
        )(x4, w1p, b1p, w2p, b2p, wfp, bfp)
        return out_p[:, 0, :d.NL]

    return jax.jit(fwd)


# ----------------------------------------------------------------------------
# Pure-JAX reference (for correctness check)
# ----------------------------------------------------------------------------
def reference_forward(x, params, config):
    xin = x[:, None, :, :]  # NCHW
    hi = jax.lax.Precision.HIGHEST

    def conv(y, w, b, stride):
        y = jax.lax.conv_general_dilated(
            y, w, window_strides=stride, padding="VALID",
            dimension_numbers=("NCHW", "OIHW", "NCHW"), precision=hi)
        return jax.nn.relu(y + b[None, :, None, None])

    def pool(y, p):
        return jax.lax.reduce_window(
            y, -jnp.inf, jax.lax.max, (1, 1) + tuple(p), (1, 1) + tuple(p), "VALID")

    y = conv(xin, params["conv1_w"], params["conv1_b"], tuple(config["conv1_stride"]))
    y = pool(y, config["conv1_pool"])
    y = conv(y, params["conv2_w"], params["conv2_b"], tuple(config["conv2_stride"]))
    y = pool(y, config["conv2_pool"])
    y = y.reshape(y.shape[0], -1)
    return jnp.dot(y, params["fc_w"].T, precision=hi) + params["fc_b"]


# ----------------------------------------------------------------------------
# Main
# ----------------------------------------------------------------------------
if __name__ == "__main__":
    config = {
        "n_labels": 4,
        "n_feature_maps1": 8,
        "n_feature_maps2": 8,
        "conv1_size": (4, 4),
        "conv2_size": (3, 3),
        "conv1_pool": (2, 2),
        "conv2_pool": (1, 1),
        "conv1_stride": (1, 1),
        "conv2_stride": (1, 1),
        "dropout_prob": 0.5,
        "height": 16,
        "width": 16,
    }
    # Derived sizes (same formula as the PyTorch module):
    m1, m2 = config["conv1_size"]; s, v = config["conv1_stride"]; p, q = config["conv1_pool"]
    h = (config["height"] - m1 + 1) // (s * p)
    w = (config["width"] - m2 + 1) // (v * q)
    m1, m2 = config["conv2_size"]; s, v = config["conv2_stride"]; p, q = config["conv2_pool"]
    conv_net_size = (h - m1 + 1) // (s * p) * ((w - m2 + 1) // (v * q))
    fc_in = config["n_feature_maps2"] * conv_net_size  # = 8 * 16 = 128

    key = jax.random.PRNGKey(0)
    kx, k1, k2, k3, k4, k5, k6 = jax.random.split(key, 7)

    params = {
        "conv1_w": 0.1 * jax.random.normal(
            k1, (config["n_feature_maps1"], 1) + config["conv1_size"], jnp.float32),
        "conv1_b": 0.1 * jax.random.normal(k2, (config["n_feature_maps1"],), jnp.float32),
        "conv2_w": 0.1 * jax.random.normal(
            k3, (config["n_feature_maps2"], config["n_feature_maps1"]) + config["conv2_size"],
            jnp.float32),
        "conv2_b": 0.1 * jax.random.normal(k4, (config["n_feature_maps2"],), jnp.float32),
        "fc_w": 0.1 * jax.random.normal(k5, (config["n_labels"], fc_in), jnp.float32),
        "fc_b": 0.1 * jax.random.normal(k6, (config["n_labels"],), jnp.float32),
    }

    batch = 2
    x = jax.random.normal(kx, (batch, config["height"], config["width"]), jnp.float32)

    fwd = make_speech_model_forward(params, config)
    out = jax.block_until_ready(fwd(x))
    assert out.shape == (batch, config["n_labels"]), out.shape

    ref = jax.block_until_ready(reference_forward(x, params, config))
    np.testing.assert_allclose(np.asarray(out), np.asarray(ref), rtol=1e-2, atol=1e-3)

    print("KERNEL_OK")
</pallas_src>

<mosaic_0001>
module attributes {stable_mosaic.version = 11 : i64} {
  func.func @_fused_kernel(%arg0: i32, %arg1: memref<1x16x16x1xf32, #tpu.memory_space<vmem>>, %arg2: memref<16x128xf32, #tpu.memory_space<vmem>>, %arg3: memref<1x128xf32, #tpu.memory_space<vmem>>, %arg4: memref<9x128x128xf32, #tpu.memory_space<vmem>>, %arg5: memref<1x128xf32, #tpu.memory_space<vmem>>, %arg6: memref<16x128x128xf32, #tpu.memory_space<vmem>>, %arg7: memref<1x128xf32, #tpu.memory_space<vmem>>, %arg8: memref<1x1x128xf32, #tpu.memory_space<vmem>>, %arg9: memref<13x13x128xf32, #tpu.memory_space<vmem>>, %arg10: memref<6x6x128xf32, #tpu.memory_space<vmem>>, %arg11: memref<4x4x128xf32, #tpu.memory_space<vmem>>, %arg12: memref<4x4x128xf32, #tpu.memory_space<vmem>>) attributes {dimension_semantics = [#tpu.dimension_semantics<parallel>], iteration_bounds = array<i64: 2>, scalar_prefetch = 0 : i64, scratch_operands = 4 : i64, tpu.core_type = #tpu.core_type<tc>, window_params = [{transform_indices = @transform_0, window_bounds = array<i64: 1, 16, 16, 1>}, {pipeline_mode = #tpu.pipeline_mode<synchronous>, transform_indices = @transform_1, window_bounds = array<i64: 16, 128>}, {pipeline_mode = #tpu.pipeline_mode<synchronous>, transform_indices = @transform_2, window_bounds = array<i64: 1, 128>}, {pipeline_mode = #tpu.pipeline_mode<synchronous>, transform_indices = @transform_3, window_bounds = array<i64: 9, 128, 128>}, {pipeline_mode = #tpu.pipeline_mode<synchronous>, transform_indices = @transform_4, window_bounds = array<i64: 1, 128>}, {pipeline_mode = #tpu.pipeline_mode<synchronous>, transform_indices = @transform_5, window_bounds = array<i64: 16, 128, 128>}, {pipeline_mode = #tpu.pipeline_mode<synchronous>, transform_indices = @transform_6, window_bounds = array<i64: 1, 128>}, {transform_indices = @transform_7, window_bounds = array<i64: 1, 1, 128>}]} {
    %cst = arith.constant 0.000000e+00 : f32
    %0 = vector.broadcast %cst : f32 to vector<13x13x128xf32>
    %c0 = arith.constant 0 : index
    %c0_0 = arith.constant 0 : index
    %c0_1 = arith.constant 0 : index
    %c0_2 = arith.constant 0 : index
    %1 = vector.load %arg1[%c0, %c0_0, %c0_1, %c0_2] : memref<1x16x16x1xf32, #tpu.memory_space<vmem>>, vector<1x13x13x1xf32>
    %2 = vector.shape_cast %1 : vector<1x13x13x1xf32> to vector<13x13x1xf32>
    %c0_3 = arith.constant 0 : index
    %c0_4 = arith.constant 0 : index
    %3 = vector.load %arg2[%c0_3, %c0_4] : memref<16x128xf32, #tpu.memory_space<vmem>>, vector<1x128xf32>
    %4 = vector.shape_cast %3 : vector<1x128xf32> to vector<1x1x128xf32>
    %5 = vector.broadcast %2 : vector<13x13x1xf32> to vector<13x13x128xf32>
    %6 = vector.broadcast %4 : vector<1x1x128xf32> to vector<13x13x128xf32>
    %7 = arith.mulf %5, %6 : vector<13x13x128xf32>
    %8 = arith.addf %0, %7 : vector<13x13x128xf32>
    %c0_5 = arith.constant 0 : index
    %c0_6 = arith.constant 0 : index
    %c1 = arith.constant 1 : index
    %c0_7 = arith.constant 0 : index
    %9 = vector.load %arg1[%c0_5, %c0_6, %c1, %c0_7] : memref<1x16x16x1xf32, #tpu.memory_space<vmem>>, vector<1x13x13x1xf32>
    %10 = vector.shape_cast %9 : vector<1x13x13x1xf32> to vector<13x13x1xf32>
    %c1_8 = arith.constant 1 : index
    %c0_9 = arith.constant 0 : index
    %11 = vector.load %arg2[%c1_8, %c0_9] : memref<16x128xf32, #tpu.memory_space<vmem>>, vector<1x128xf32>
    %12 = vector.shape_cast %11 : vector<1x128xf32> to vector<1x1x128xf32>
    %13 = vector.broadcast %10 : vector<13x13x1xf32> to vector<13x13x128xf32>
    %14 = vector.broadcast %12 : vector<1x1x128xf32> to vector<13x13x128xf32>
    %15 = arith.mulf %13, %14 : vector<13x13x128xf32>
    %16 = arith.addf %8, %15 : vector<13x13x128xf32>
    %c0_10 = arith.constant 0 : index
    %c0_11 = arith.constant 0 : index
    %c2 = arith.constant 2 : index
    %c0_12 = arith.constant 0 : index
    %17 = vector.load %arg1[%c0_10, %c0_11, %c2, %c0_12] : memref<1x16x16x1xf32, #tpu.memory_space<vmem>>, vector<1x13x13x1xf32>
    %18 = vector.shape_cast %17 : vector<1x13x13x1xf32> to vector<13x13x1xf32>
    %c2_13 = arith.constant 2 : index
    %c0_14 = arith.constant 0 : index
    %19 = vector.load %arg2[%c2_13, %c0_14] : memref<16x128xf32, #tpu.memory_space<vmem>>, vector<1x128xf32>
    %20 = vector.shape_cast %19 : vector<1x128xf32> to vector<1x1x128xf32>
    %21 = vector.broadcast %18 : vector<13x13x1xf32> to vector<13x13x128xf32>
    %22 = vector.broadcast %20 : vector<1x1x128xf32> to vector<13x13x128xf32>
    %23 = arith.mulf %21, %22 : vector<13x13x128xf32>
    %24 = arith.addf %16, %23 : vector<13x13x128xf32>
    %c0_15 = arith.constant 0 : index
    %c0_16 = arith.constant 0 : index
    %c3 = arith.constant 3 : index
    %c0_17 = arith.constant 0 : index
    %25 = vector.load %arg1[%c0_15, %c0_16, %c3, %c0_17] : memref<1x16x16x1xf32, #tpu.memory_space<vmem>>, vector<1x13x13x1xf32>
    %26 = vector.shape_cast %25 : vector<1x13x13x1xf32> to vector<13x13x1xf32>
    %c3_18 = arith.constant 3 : index
    %c0_19 = arith.constant 0 : index
    %27 = vector.load %arg2[%c3_18, %c0_19] : memref<16x128xf32, #tpu.memory_space<vmem>>, vector<1x128xf32>
    %28 = vector.shape_cast %27 : vector<1x128xf32> to vector<1x1x128xf32>
    %29 = vector.broadcast %26 : vector<13x13x1xf32> to vector<13x13x128xf32>
    %30 = vector.broadcast %28 : vector<1x1x128xf32> to vector<13x13x128xf32>
    %31 = arith.mulf %29, %30 : vector<13x13x128xf32>
    %32 = arith.addf %24, %31 : vector<13x13x128xf32>
    %c0_20 = arith.constant 0 : index
    %c1_21 = arith.constant 1 : index
    %c0_22 = arith.constant 0 : index
    %c0_23 = arith.constant 0 : index
    %33 = vector.load %arg1[%c0_20, %c1_21, %c0_22, %c0_23] : memref<1x16x16x1xf32, #tpu.memory_space<vmem>>, vector<1x13x13x1xf32>
    %34 = vector.shape_cast %33 : vector<1x13x13x1xf32> to vector<13x13x1xf32>
    %c4 = arith.constant 4 : index
    %c0_24 = arith.constant 0 : index
    %35 = vector.load %arg2[%c4, %c0_24] : memref<16x128xf32, #tpu.memory_space<vmem>>, vector<1x128xf32>
    %36 = vector.shape_cast %35 : vector<1x128xf32> to vector<1x1x128xf32>
    %37 = vector.broadcast %34 : vector<13x13x1xf32> to vector<13x13x128xf32>
    %38 = vector.broadcast %36 : vector<1x1x128xf32> to vector<13x13x128xf32>
    %39 = arith.mulf %37, %38 : vector<13x13x128xf32>
    %40 = arith.addf %32, %39 : vector<13x13x128xf32>
    %c0_25 = arith.constant 0 : index
    %c1_26 = arith.constant 1 : index
    %c1_27 = arith.constant 1 : index
    %c0_28 = arith.constant 0 : index
    %41 = vector.load %arg1[%c0_25, %c1_26, %c1_27, %c0_28] : memref<1x16x16x1xf32, #tpu.memory_space<vmem>>, vector<1x13x13x1xf32>
    %42 = vector.shape_cast %41 : vector<1x13x13x1xf32> to vector<13x13x1xf32>
    %c5 = arith.constant 5 : index
    %c0_29 = arith.constant 0 : index
    %43 = vector.load %arg2[%c5, %c0_29] : memref<16x128xf32, #tpu.memory_space<vmem>>, vector<1x128xf32>
    %44 = vector.shape_cast %43 : vector<1x128xf32> to vector<1x1x128xf32>
    %45 = vector.broadcast %42 : vector<13x13x1xf32> to vector<13x13x128xf32>
    %46 = vector.broadcast %44 : vector<1x1x128xf32> to vector<13x13x128xf32>
    %47 = arith.mulf %45, %46 : vector<13x13x128xf32>
    %48 = arith.addf %40, %47 : vector<13x13x128xf32>
    %c0_30 = arith.constant 0 : index
    %c1_31 = arith.constant 1 : index
    %c2_32 = arith.constant 2 : index
    %c0_33 = arith.constant 0 : index
    %49 = vector.load %arg1[%c0_30, %c1_31, %c2_32, %c0_33] : memref<1x16x16x1xf32, #tpu.memory_space<vmem>>, vector<1x13x13x1xf32>
    %50 = vector.shape_cast %49 : vector<1x13x13x1xf32> to vector<13x13x1xf32>
    %c6 = arith.constant 6 : index
    %c0_34 = arith.constant 0 : index
    %51 = vector.load %arg2[%c6, %c0_34] : memref<16x128xf32, #tpu.memory_space<vmem>>, vector<1x128xf32>
    %52 = vector.shape_cast %51 : vector<1x128xf32> to vector<1x1x128xf32>
    %53 = vector.broadcast %50 : vector<13x13x1xf32> to vector<13x13x128xf32>
    %54 = vector.broadcast %52 : vector<1x1x128xf32> to vector<13x13x128xf32>
    %55 = arith.mulf %53, %54 : vector<13x13x128xf32>
    %56 = arith.addf %48, %55 : vector<13x13x128xf32>
    %c0_35 = arith.constant 0 : index
    %c1_36 = arith.constant 1 : index
    %c3_37 = arith.constant 3 : index
    %c0_38 = arith.constant 0 : index
    %57 = vector.load %arg1[%c0_35, %c1_36, %c3_37, %c0_38] : memref<1x16x16x1xf32, #tpu.memory_space<vmem>>, vector<1x13x13x1xf32>
    %58 = vector.shape_cast %57 : vector<1x13x13x1xf32> to vector<13x13x1xf32>
    %c7 = arith.constant 7 : index
    %c0_39 = arith.constant 0 : index
    %59 = vector.load %arg2[%c7, %c0_39] : memref<16x128xf32, #tpu.memory_space<vmem>>, vector<1x128xf32>
    %60 = vector.shape_cast %59 : vector<1x128xf32> to vector<1x1x128xf32>
    %61 = vector.broadcast %58 : vector<13x13x1xf32> to vector<13x13x128xf32>
    %62 = vector.broadcast %60 : vector<1x1x128xf32> to vector<13x13x128xf32>
    %63 = arith.mulf %61, %62 : vector<13x13x128xf32>
    %64 = arith.addf %56, %63 : vector<13x13x128xf32>
    %c0_40 = arith.constant 0 : index
    %c2_41 = arith.constant 2 : index
    %c0_42 = arith.constant 0 : index
    %c0_43 = arith.constant 0 : index
    %65 = vector.load %arg1[%c0_40, %c2_41, %c0_42, %c0_43] : memref<1x16x16x1xf32, #tpu.memory_space<vmem>>, vector<1x13x13x1xf32>
    %66 = vector.shape_cast %65 : vector<1x13x13x1xf32> to vector<13x13x1xf32>
    %c8 = arith.constant 8 : index
    %c0_44 = arith.constant 0 : index
    %67 = vector.load %arg2[%c8, %c0_44] : memref<16x128xf32, #tpu.memory_space<vmem>>, vector<1x128xf32>
    %68 = vector.shape_cast %67 : vector<1x128xf32> to vector<1x1x128xf32>
    %69 = vector.broadcast %66 : vector<13x13x1xf32> to vector<13x13x128xf32>
    %70 = vector.broadcast %68 : vector<1x1x128xf32> to vector<13x13x128xf32>
    %71 = arith.mulf %69, %70 : vector<13x13x128xf32>
    %72 = arith.addf %64, %71 : vector<13x13x128xf32>
    %c0_45 = arith.constant 0 : index
    %c2_46 = arith.constant 2 : index
    %c1_47 = arith.constant 1 : index
    %c0_48 = arith.constant 0 : index
    %73 = vector.load %arg1[%c0_45, %c2_46, %c1_47, %c0_48] : memref<1x16x16x1xf32, #tpu.memory_space<vmem>>, vector<1x13x13x1xf32>
    %74 = vector.shape_cast %73 : vector<1x13x13x1xf32> to vector<13x13x1xf32>
    %c9 = arith.constant 9 : index
    %c0_49 = arith.constant 0 : index
    %75 = vector.load %arg2[%c9, %c0_49] : memref<16x128xf32, #tpu.memory_space<vmem>>, vector<1x128xf32>
    %76 = vector.shape_cast %75 : vector<1x128xf32> to vector<1x1x128xf32>
    %77 = vector.broadcast %74 : vector<13x13x1xf32> to vector<13x13x128xf32>
    %78 = vector.broadcast %76 : vector<1x1x128xf32> to vector<13x13x128xf32>
    %79 = arith.mulf %77, %78 : vector<13x13x128xf32>
    %80 = arith.addf %72, %79 : vector<13x13x128xf32>
    %c0_50 = arith.constant 0 : index
    %c2_51 = arith.constant 2 : index
    %c2_52 = arith.constant 2 : index
    %c0_53 = arith.constant 0 : index
    %81 = vector.load %arg1[%c0_50, %c2_51, %c2_52, %c0_53] : memref<1x16x16x1xf32, #tpu.memory_space<vmem>>, vector<1x13x13x1xf32>
    %82 = vector.shape_cast %81 : vector<1x13x13x1xf32> to vector<13x13x1xf32>
    %c10 = arith.constant 10 : index
    %c0_54 = arith.constant 0 : index
    %83 = vector.load %arg2[%c10, %c0_54] : memref<16x128xf32, #tpu.memory_space<vmem>>, vector<1x128xf32>
    %84 = vector.shape_cast %83 : vector<1x128xf32> to vector<1x1x128xf32>
    %85 = vector.broadcast %82 : vector<13x13x1xf32> to vector<13x13x128xf32>
    %86 = vector.broadcast %84 : vector<1x1x128xf32> to vector<13x13x128xf32>
    %87 = arith.mulf %85, %86 : vector<13x13x128xf32>
    %88 = arith.addf %80, %87 : vector<13x13x128xf32>
    %c0_55 = arith.constant 0 : index
    %c2_56 = arith.constant 2 : index
    %c3_57 = arith.constant 3 : index
    %c0_58 = arith.constant 0 : index
    %89 = vector.load %arg1[%c0_55, %c2_56, %c3_57, %c0_58] : memref<1x16x16x1xf32, #tpu.memory_space<vmem>>, vector<1x13x13x1xf32>
    %90 = vector.shape_cast %89 : vector<1x13x13x1xf32> to vector<13x13x1xf32>
    %c11 = arith.constant 11 : index
    %c0_59 = arith.constant 0 : index
    %91 = vector.load %arg2[%c11, %c0_59] : memref<16x128xf32, #tpu.memory_space<vmem>>, vector<1x128xf32>
    %92 = vector.shape_cast %91 : vector<1x128xf32> to vector<1x1x128xf32>
    %93 = vector.broadcast %90 : vector<13x13x1xf32> to vector<13x13x128xf32>
    %94 = vector.broadcast %92 : vector<1x1x128xf32> to vector<13x13x128xf32>
    %95 = arith.mulf %93, %94 : vector<13x13x128xf32>
    %96 = arith.addf %88, %95 : vector<13x13x128xf32>
    %c0_60 = arith.constant 0 : index
    %c3_61 = arith.constant 3 : index
    %c0_62 = arith.constant 0 : index
    %c0_63 = arith.constant 0 : index
    %97 = vector.load %arg1[%c0_60, %c3_61, %c0_62, %c0_63] : memref<1x16x16x1xf32, #tpu.memory_space<vmem>>, vector<1x13x13x1xf32>
    %98 = vector.shape_cast %97 : vector<1x13x13x1xf32> to vector<13x13x1xf32>
    %c12 = arith.constant 12 : index
    %c0_64 = arith.constant 0 : index
    %99 = vector.load %arg2[%c12, %c0_64] : memref<16x128xf32, #tpu.memory_space<vmem>>, vector<1x128xf32>
    %100 = vector.shape_cast %99 : vector<1x128xf32> to vector<1x1x128xf32>
    %101 = vector.broadcast %98 : vector<13x13x1xf32> to vector<13x13x128xf32>
    %102 = vector.broadcast %100 : vector<1x1x128xf32> to vector<13x13x128xf32>
    %103 = arith.mulf %101, %102 : vector<13x13x128xf32>
    %104 = arith.addf %96, %103 : vector<13x13x128xf32>
    %c0_65 = arith.constant 0 : index
    %c3_66 = arith.constant 3 : index
    %c1_67 = arith.constant 1 : index
    %c0_68 = arith.constant 0 : index
    %105 = vector.load %arg1[%c0_65, %c3_66, %c1_67, %c0_68] : memref<1x16x16x1xf32, #tpu.memory_space<vmem>>, vector<1x13x13x1xf32>
    %106 = vector.shape_cast %105 : vector<1x13x13x1xf32> to vector<13x13x1xf32>
    %c13 = arith.constant 13 : index
    %c0_69 = arith.constant 0 : index
    %107 = vector.load %arg2[%c13, %c0_69] : memref<16x128xf32, #tpu.memory_space<vmem>>, vector<1x128xf32>
    %108 = vector.shape_cast %107 : vector<1x128xf32> to vector<1x1x128xf32>
    %109 = vector.broadcast %106 : vector<13x13x1xf32> to vector<13x13x128xf32>
    %110 = vector.broadcast %108 : vector<1x1x128xf32> to vector<13x13x128xf32>
    %111 = arith.mulf %109, %110 : vector<13x13x128xf32>
    %112 = arith.addf %104, %111 : vector<13x13x128xf32>
    %c0_70 = arith.constant 0 : index
    %c3_71 = arith.constant 3 : index
    %c2_72 = arith.constant 2 : index
    %c0_73 = arith.constant 0 : index
    %113 = vector.load %arg1[%c0_70, %c3_71, %c2_72, %c0_73] : memref<1x16x16x1xf32, #tpu.memory_space<vmem>>, vector<1x13x13x1xf32>
    %114 = vector.shape_cast %113 : vector<1x13x13x1xf32> to vector<13x13x1xf32>
    %c14 = arith.constant 14 : index
    %c0_74 = arith.constant 0 : index
    %115 = vector.load %arg2[%c14, %c0_74] : memref<16x128xf32, #tpu.memory_space<vmem>>, vector<1x128xf32>
    %116 = vector.shape_cast %115 : vector<1x128xf32> to vector<1x1x128xf32>
    %117 = vector.broadcast %114 : vector<13x13x1xf32> to vector<13x13x128xf32>
    %118 = vector.broadcast %116 : vector<1x1x128xf32> to vector<13x13x128xf32>
    %119 = arith.mulf %117, %118 : vector<13x13x128xf32>
    %120 = arith.addf %112, %119 : vector<13x13x128xf32>
    %c0_75 = arith.constant 0 : index
    %c3_76 = arith.constant 3 : index
    %c3_77 = arith.constant 3 : index
    %c0_78 = arith.constant 0 : index
    %121 = vector.load %arg1[%c0_75, %c3_76, %c3_77, %c0_78] : memref<1x16x16x1xf32, #tpu.memory_space<vmem>>, vector<1x13x13x1xf32>
    %122 = vector.shape_cast %121 : vector<1x13x13x1xf32> to vector<13x13x1xf32>
    %c15 = arith.constant 15 : index
    %c0_79 = arith.constant 0 : index
    %123 = vector.load %arg2[%c15, %c0_79] : memref<16x128xf32, #tpu.memory_space<vmem>>, vector<1x128xf32>
    %124 = vector.shape_cast %123 : vector<1x128xf32> to vector<1x1x128xf32>
    %125 = vector.broadcast %122 : vector<13x13x1xf32> to vector<13x13x128xf32>
    %126 = vector.broadcast %124 : vector<1x1x128xf32> to vector<13x13x128xf32>
    %127 = arith.mulf %125, %126 : vector<13x13x128xf32>
    %128 = arith.addf %120, %127 : vector<13x13x128xf32>
    %c0_80 = arith.constant 0 : index
    %c0_81 = arith.constant 0 : index
    %129 = vector.load %arg3[%c0_80, %c0_81] : memref<1x128xf32, #tpu.memory_space<vmem>>, vector<1x128xf32>
    %130 = vector.shape_cast %129 : vector<1x128xf32> to vector<1x1x128xf32>
    %131 = vector.broadcast %130 : vector<1x1x128xf32> to vector<13x13x128xf32>
    %132 = arith.addf %128, %131 : vector<13x13x128xf32>
    %cst_82 = arith.constant 0.000000e+00 : f32
    %133 = vector.broadcast %cst_82 : f32 to vector<13x13x128xf32>
    %134 = arith.maximumf %132, %133 : vector<13x13x128xf32>
    %c0_83 = arith.constant 0 : index
    %c0_84 = arith.constant 0 : index
    %c0_85 = arith.constant 0 : index
    %135 = vector.load %arg9[%c0_83, %c0_84, %c0_85] : memref<13x13x128xf32, #tpu.memory_space<vmem>>, vector<13x13x128xf32>
    tpu.vector_store %arg9[%c0_83, %c0_84, %c0_85], %134 {strides = array<i32>} : memref<13x13x128xf32, #tpu.memory_space<vmem>>, vector<13x13x128xf32>,
    %c0_86 = arith.constant 0 : index
    %c0_87 = arith.constant 0 : index
    %c0_88 = arith.constant 0 : index
    %136 = vector.load %arg9[%c0_86, %c0_87, %c0_88] : memref<13x13x128xf32, #tpu.memory_space<vmem>>, vector<1x13x128xf32>
    %137 = vector.shape_cast %136 : vector<1x13x128xf32> to vector<13x128xf32>
    %c1_89 = arith.constant 1 : index
    %c0_90 = arith.constant 0 : index
    %c0_91 = arith.constant 0 : index
    %138 = vector.load %arg9[%c1_89, %c0_90, %c0_91] : memref<13x13x128xf32, #tpu.memory_space<vmem>>, vector<1x13x128xf32>
    %139 = vector.shape_cast %138 : vector<1x13x128xf32> to vector<13x128xf32>
    %140 = arith.maximumf %137, %139 : vector<13x128xf32>
    %141 = vector.extract_strided_slice %140 {offsets = [0, 0], sizes = [2, 128], strides = [1, 1]} : vector<13x128xf32> to vector<2x128xf32>
    %cst_92 = arith.constant dense<0xFF800000> : vector<128xf32>
    %142 = vector.multi_reduction <maximumf>, %141, %cst_92 [0] : vector<2x128xf32> to vector<128xf32>
    %143 = vector.shape_cast %142 : vector<128xf32> to vector<1x128xf32>
    %c0_93 = arith.constant 0 : index
    %c0_94 = arith.constant 0 : index
    %c0_95 = arith.constant 0 : index
    %144 = vector.load %arg10[%c0_93, %c0_94, %c0_95] : memref<6x6x128xf32, #tpu.memory_space<vmem>>, vector<1x1x128xf32>
    %145 = vector.shape_cast %144 : vector<1x1x128xf32> to vector<1x128xf32>
    %146 = vector.shape_cast %143 : vector<1x128xf32> to vector<1x1x128xf32>
    tpu.vector_store %arg10[%c0_93, %c0_94, %c0_95], %146 {strides = array<i32>} : memref<6x6x128xf32, #tpu.memory_space<vmem>>, vector<1x1x128xf32>,
    %147 = vector.extract_strided_slice %140 {offsets = [2, 0], sizes = [2, 128], strides = [1, 1]} : vector<13x128xf32> to vector<2x128xf32>
    %cst_96 = arith.constant dense<0xFF800000> : vector<128xf32>
    %148 = vector.multi_reduction <maximumf>, %147, %cst_96 [0] : vector<2x128xf32> to vector<128xf32>
    %149 = vector.shape_cast %148 : vector<128xf32> to vector<1x128xf32>
    %c0_97 = arith.constant 0 : index
    %c1_98 = arith.constant 1 : index
    %c0_99 = arith.constant 0 : index
    %150 = vector.load %arg10[%c0_97, %c1_98, %c0_99] : memref<6x6x128xf32, #tpu.memory_space<vmem>>, vector<1x1x128xf32>
    %151 = vector.shape_cast %150 : vector<1x1x128xf32> to vector<1x128xf32>
    %152 = vector.shape_cast %149 : vector<1x128xf32> to vector<1x1x128xf32>
    tpu.vector_store %arg10[%c0_97, %c1_98, %c0_99], %152 {strides = array<i32>} : memref<6x6x128xf32, #tpu.memory_space<vmem>>, vector<1x1x128xf32>,
    %153 = vector.extract_strided_slice %140 {offsets = [4, 0], sizes = [2, 128], strides = [1, 1]} : vector<13x128xf32> to vector<2x128xf32>
    %cst_100 = arith.constant dense<0xFF800000> : vector<128xf32>
    %154 = vector.multi_reduction <maximumf>, %153, %cst_100 [0] : vector<2x128xf32> to vector<128xf32>
    %155 = vector.shape_cast %154 : vector<128xf32> to vector<1x128xf32>
    %c0_101 = arith.constant 0 : index
    %c2_102 = arith.constant 2 : index
    %c0_103 = arith.constant 0 : index
    %156 = vector.load %arg10[%c0_101, %c2_102, %c0_103] : memref<6x6x128xf32, #tpu.memory_space<vmem>>, vector<1x1x128xf32>
    %157 = vector.shape_cast %156 : vector<1x1x128xf32> to vector<1x128xf32>
    %158 = vector.shape_cast %155 : vector<1x128xf32> to vector<1x1x128xf32>
    tpu.vector_store %arg10[%c0_101, %c2_102, %c0_103], %158 {strides = array<i32>} : memref<6x6x128xf32, #tpu.memory_space<vmem>>, vector<1x1x128xf32>,
    %159 = vector.extract_strided_slice %140 {offsets = [6, 0], sizes = [2, 128], strides = [1, 1]} : vector<13x128xf32> to vector<2x128xf32>
    %cst_104 = arith.constant dense<0xFF800000> : vector<128xf32>
    %160 = vector.multi_reduction <maximumf>, %159, %cst_104 [0] : vector<2x128xf32> to vector<128xf32>
    %161 = vector.shape_cast %160 : vector<128xf32> to vector<1x128xf32>
    %c0_105 = arith.constant 0 : index
    %c3_106 = arith.constant 3 : index
    %c0_107 = arith.constant 0 : index
    %162 = vector.load %arg10[%c0_105, %c3_106, %c0_107] : memref<6x6x128xf32, #tpu.memory_space<vmem>>, vector<1x1x128xf32>
    %163 = vector.shape_cast %162 : vector<1x1x128xf32> to vector<1x128xf32>
    %164 = vector.shape_cast %161 : vector<1x128xf32> to vector<1x1x128xf32>
    tpu.vector_store %arg10[%c0_105, %c3_106, %c0_107], %164 {strides = array<i32>} : memref<6x6x128xf32, #tpu.memory_space<vmem>>, vector<1x1x128xf32>,
    %165 = vector.extract_strided_slice %140 {offsets = [8, 0], sizes = [2, 128], strides = [1, 1]} : vector<13x128xf32> to vector<2x128xf32>
    %cst_108 = arith.constant dense<0xFF800000> : vector<128xf32>
    %166 = vector.multi_reduction <maximumf>, %165, %cst_108 [0] : vector<2x128xf32> to vector<128xf32>
    %167 = vector.shape_cast %166 : vector<128xf32> to vector<1x128xf32>
    %c0_109 = arith.constant 0 : index
    %c4_110 = arith.constant 4 : index
    %c0_111 = arith.constant 0 : index
    %168 = vector.load %arg10[%c0_109, %c4_110, %c0_111] : memref<6x6x128xf32, #tpu.memory_space<vmem>>, vector<1x1x128xf32>
    %169 = vector.shape_cast %168 : vector<1x1x128xf32> to vector<1x128xf32>
    %170 = vector.shape_cast %167 : vector<1x128xf32> to vector<1x1x128xf32>
    tpu.vector_store %arg10[%c0_109, %c4_110, %c0_111], %170 {strides = array<i32>} : memref<6x6x128xf32, #tpu.memory_space<vmem>>, vector<1x1x128xf32>,
    %171 = vector.extract_strided_slice %140 {offsets = [10, 0], sizes = [2, 128], strides = [1, 1]} : vector<13x128xf32> to vector<2x128xf32>
    %cst_112 = arith.constant dense<0xFF800000> : vector<128xf32>
    %172 = vector.multi_reduction <maximumf>, %171, %cst_112 [0] : vector<2x128xf32> to vector<128xf32>
    %173 = vector.shape_cast %172 : vector<128xf32> to vector<1x128xf32>
    %c0_113 = arith.constant 0 : index
    %c5_114 = arith.constant 5 : index
    %c0_115 = arith.constant 0 : index
    %174 = vector.load %arg10[%c0_113, %c5_114, %c0_115] : memref<6x6x128xf32, #tpu.memory_space<vmem>>, vector<1x1x128xf32>
    %175 = vector.shape_cast %174 : vector<1x1x128xf32> to vector<1x128xf32>
    %176 = vector.shape_cast %173 : vector<1x128xf32> to vector<1x1x128xf32>
    tpu.vector_store %arg10[%c0_113, %c5_114, %c0_115], %176 {strides = array<i32>} : memref<6x6x128xf32, #tpu.memory_space<vmem>>, vector<1x1x128xf32>,
    %c2_116 = arith.constant 2 : index
    %c0_117 = arith.constant 0 : index
    %c0_118 = arith.constant 0 : index
    %177 = vector.load %arg9[%c2_116, %c0_117, %c0_118] : memref<13x13x128xf32, #tpu.memory_space<vmem>>, vector<1x13x128xf32>
    %178 = vector.shape_cast %177 : vector<1x13x128xf32> to vector<13x128xf32>
    %c3_119 = arith.constant 3 : index
    %c0_120 = arith.constant 0 : index
    %c0_121 = arith.constant 0 : index
    %179 = vector.load %arg9[%c3_119, %c0_120, %c0_121] : memref<13x13x128xf32, #tpu.memory_space<vmem>>, vector<1x13x128xf32>
    %180 = vector.shape_cast %179 : vector<1x13x128xf32> to vector<13x128xf32>
    %181 = arith.maximumf %178, %180 : vector<13x128xf32>
    %182 = vector.extract_strided_slice %181 {offsets = [0, 0], sizes = [2, 128], strides = [1, 1]} : vector<13x128xf32> to vector<2x128xf32>
    %cst_122 = arith.constant dense<0xFF800000> : vector<128xf32>
    %183 = vector.multi_reduction <maximumf>, %182, %cst_122 [0] : vector<2x128xf32> to vector<128xf32>
    %184 = vector.shape_cast %183 : vector<128xf32> to vector<1x128xf32>
    %c1_123 = arith.constant 1 : index
    %c0_124 = arith.constant 0 : index
    %c0_125 = arith.constant 0 : index
    %185 = vector.load %arg10[%c1_123, %c0_124, %c0_125] : memref<6x6x128xf32, #tpu.memory_space<vmem>>, vector<1x1x128xf32>
    %186 = vector.shape_cast %185 : vector<1x1x128xf32> to vector<1x128xf32>
    %187 = vector.shape_cast %184 : vector<1x128xf32> to vector<1x1x128xf32>
    tpu.vector_store %arg10[%c1_123, %c0_124, %c0_125], %187 {strides = array<i32>} : memref<6x6x128xf32, #tpu.memory_space<vmem>>, vector<1x1x128xf32>,
    %188 = vector.extract_strided_slice %181 {offsets = [2, 0], sizes = [2, 128], strides = [1, 1]} : vector<13x128xf32> to vector<2x128xf32>
    %cst_126 = arith.constant dense<0xFF800000> : vector<128xf32>
    %189 = vector.multi_reduction <maximumf>, %188, %cst_126 [0] : vector<2x128xf32> to vector<128xf32>
    %190 = vector.shape_cast %189 : vector<128xf32> to vector<1x128xf32>
    %c1_127 = arith.constant 1 : index
    %c1_128 = arith.constant 1 : index
    %c0_129 = arith.constant 0 : index
    %191 = vector.load %arg10[%c1_127, %c1_128, %c0_129] : memref<6x6x128xf32, #tpu.memory_space<vmem>>, vector<1x1x128xf32>
    %192 = vector.shape_cast %191 : vector<1x1x128xf32> to vector<1x128xf32>
    %193 = vector.shape_cast %190 : vector<1x128xf32> to vector<1x1x128xf32>
    tpu.vector_store %arg10[%c1_127, %c1_128, %c0_129], %193 {strides = array<i32>} : memref<6x6x128xf32, #tpu.memory_space<vmem>>, vector<1x1x128xf32>,
    %194 = vector.extract_strided_slice %181 {offsets = [4, 0], sizes = [2, 128], strides = [1, 1]} : vector<13x128xf32> to vector<2x128xf32>
    %cst_130 = arith.constant dense<0xFF800000> : vector<128xf32>
    %195 = vector.multi_reduction <maximumf>, %194, %cst_130 [0] : vector<2x128xf32> to vector<128xf32>
    %196 = vector.shape_cast %195 : vector<128xf32> to vector<1x128xf32>
    %c1_131 = arith.constant 1 : index
    %c2_132 = arith.constant 2 : index
    %c0_133 = arith.constant 0 : index
    %197 = vector.load %arg10[%c1_131, %c2_132, %c0_133] : memref<6x6x128xf32, #tpu.memory_space<vmem>>, vector<1x1x128xf32>
    %198 = vector.shape_cast %197 : vector<1x1x128xf32> to vector<1x128xf32>
    %199 = vector.shape_cast %196 : vector<1x128xf32> to vector<1x1x128xf32>
    tpu.vector_store %arg10[%c1_131, %c2_132, %c0_133], %199 {strides = array<i32>} : memref<6x6x128xf32, #tpu.memory_space<vmem>>, vector<1x1x128xf32>,
    %200 = vector.extract_strided_slice %181 {offsets = [6, 0], sizes = [2, 128], strides = [1, 1]} : vector<13x128xf32> to vector<2x128xf32>
    %cst_134 = arith.constant dense<0xFF800000> : vector<128xf32>
    %201 = vector.multi_reduction <maximumf>, %200, %cst_134 [0] : vector<2x128xf32> to vector<128xf32>
    %202 = vector.shape_cast %201 : vector<128xf32> to vector<1x128xf32>
    %c1_135 = arith.constant 1 : index
    %c3_136 = arith.constant 3 : index
    %c0_137 = arith.constant 0 : index
    %203 = vector.load %arg10[%c1_135, %c3_136, %c0_137] : memref<6x6x128xf32, #tpu.memory_space<vmem>>, vector<1x1x128xf32>
    %204 = vector.shape_cast %203 : vector<1x1x128xf32> to vector<1x128xf32>
    %205 = vector.shape_cast %202 : vector<1x128xf32> to vector<1x1x128xf32>
    tpu.vector_store %arg10[%c1_135, %c3_136, %c0_137], %205 {strides = array<i32>} : memref<6x6x128xf32, #tpu.memory_space<vmem>>, vector<1x1x128xf32>,
    %206 = vector.extract_strided_slice %181 {offsets = [8, 0], sizes = [2, 128], strides = [1, 1]} : vector<13x128xf32> to vector<2x128xf32>
    %cst_138 = arith.constant dense<0xFF800000> : vector<128xf32>
    %207 = vector.multi_reduction <maximumf>, %206, %cst_138 [0] : vector<2x128xf32> to vector<128xf32>
    %208 = vector.shape_cast %207 : vector<128xf32> to vector<1x128xf32>
    %c1_139 = arith.constant 1 : index
    %c4_140 = arith.constant 4 : index
    %c0_141 = arith.constant 0 : index
    %209 = vector.load %arg10[%c1_139, %c4_140, %c0_141] : memref<6x6x128xf32, #tpu.memory_space<vmem>>, vector<1x1x128xf32>
    %210 = vector.shape_cast %209 : vector<1x1x128xf32> to vector<1x128xf32>
    %211 = vector.shape_cast %208 : vector<1x128xf32> to vector<1x1x128xf32>
    tpu.vector_store %arg10[%c1_139, %c4_140, %c0_141], %211 {strides = array<i32>} : memref<6x6x128xf32, #tpu.memory_space<vmem>>, vector<1x1x128xf32>,
    %212 = vector.extract_strided_slice %181 {offsets = [10, 0], sizes = [2, 128], strides = [1, 1]} : vector<13x128xf32> to vector<2x128xf32>
    %cst_142 = arith.constant dense<0xFF800000> : vector<128xf32>
    %213 = vector.multi_reduction <maximumf>, %212, %cst_142 [0] : vector<2x128xf32> to vector<128xf32>
    %214 = vector.shape_cast %213 : vector<128xf32> to vector<1x128xf32>
    %c1_143 = arith.constant 1 : index
    %c5_144 = arith.constant 5 : index
    %c0_145 = arith.constant 0 : index
    %215 = vector.load %arg10[%c1_143, %c5_144, %c0_145] : memref<6x6x128xf32, #tpu.memory_space<vmem>>, vector<1x1x128xf32>
    %216 = vector.shape_cast %215 : vector<1x1x128xf32> to vector<1x128xf32>
    %217 = vector.shape_cast %214 : vector<1x128xf32> to vector<1x1x128xf32>
    tpu.vector_store %arg10[%c1_143, %c5_144, %c0_145], %217 {strides = array<i32>} : memref<6x6x128xf32, #tpu.memory_space<vmem>>, vector<1x1x128xf32>,
    %c4_146 = arith.constant 4 : index
    %c0_147 = arith.constant 0 : index
    %c0_148 = arith.constant 0 : index
    %218 = vector.load %arg9[%c4_146, %c0_147, %c0_148] : memref<13x13x128xf32, #tpu.memory_space<vmem>>, vector<1x13x128xf32>
    %219 = vector.shape_cast %218 : vector<1x13x128xf32> to vector<13x128xf32>
    %c5_149 = arith.constant 5 : index
    %c0_150 = arith.constant 0 : index
    %c0_151 = arith.constant 0 : index
    %220 = vector.load %arg9[%c5_149, %c0_150, %c0_151] : memref<13x13x128xf32, #tpu.memory_space<vmem>>, vector<1x13x128xf32>
    %221 = vector.shape_cast %220 : vector<1x13x128xf32> to vector<13x128xf32>
    %222 = arith.maximumf %219, %221 : vector<13x128xf32>
    %223 = vector.extract_strided_slice %222 {offsets = [0, 0], sizes = [2, 128], strides = [1, 1]} : vector<13x128xf32> to vector<2x128xf32>
    %cst_152 = arith.constant dense<0xFF800000> : vector<128xf32>
    %224 = vector.multi_reduction <maximumf>, %223, %cst_152 [0] : vector<2x128xf32> to vector<128xf32>
    %225 = vector.shape_cast %224 : vector<128xf32> to vector<1x128xf32>
    %c2_153 = arith.constant 2 : index
    %c0_154 = arith.constant 0 : index
    %c0_155 = arith.constant 0 : index
    %226 = vector.load %arg10[%c2_153, %c0_154, %c0_155] : memref<6x6x128xf32, #tpu.memory_space<vmem>>, vector<1x1x128xf32>
    %227 = vector.shape_cast %226 : vector<1x1x128xf32> to vector<1x128xf32>
    %228 = vector.shape_cast %225 : vector<1x128xf32> to vector<1x1x128xf32>
    tpu.vector_store %arg10[%c2_153, %c0_154, %c0_155], %228 {strides = array<i32>} : memref<6x6x128xf32, #tpu.memory_space<vmem>>, vector<1x1x128xf32>,
    %229 = vector.extract_strided_slice %222 {offsets = [2, 0], sizes = [2, 128], strides = [1, 1]} : vector<13x128xf32> to vector<2x128xf32>
    %cst_156 = arith.constant dense<0xFF800000> : vector<128xf32>
    %230 = vector.multi_reduction <maximumf>, %229, %cst_156 [0] : vector<2x128xf32> to vector<128xf32>
    %231 = vector.shape_cast %230 : vector<128xf32> to vector<1x128xf32>
    %c2_157 = arith.constant 2 : index
    %c1_158 = arith.constant 1 : index
    %c0_159 = arith.constant 0 : index
    %232 = vector.load %arg10[%c2_157, %c1_158, %c0_159] : memref<6x6x128xf32, #tpu.memory_space<vmem>>, vector<1x1x128xf32>
    %233 = vector.shape_cast %232 : vector<1x1x128xf32> to vector<1x128xf32>
    %234 = vector.shape_cast %231 : vector<1x128xf32> to vector<1x1x128xf32>
    tpu.vector_store %arg10[%c2_157, %c1_158, %c0_159], %234 {strides = array<i32>} : memref<6x6x128xf32, #tpu.memory_space<vmem>>, vector<1x1x128xf32>,
    %235 = vector.extract_strided_slice %222 {offsets = [4, 0], sizes = [2, 128], strides = [1, 1]} : vector<13x128xf32> to vector<2x128xf32>
    %cst_160 = arith.constant dense<0xFF800000> : vector<128xf32>
    %236 = vector.multi_reduction <maximumf>, %235, %cst_160 [0] : vector<2x128xf32> to vector<128xf32>
    %237 = vector.shape_cast %236 : vector<128xf32> to vector<1x128xf32>
    %c2_161 = arith.constant 2 : index
    %c2_162 = arith.constant 2 : index
    %c0_163 = arith.constant 0 : index
    %238 = vector.load %arg10[%c2_161, %c2_162, %c0_163] : memref<6x6x128xf32, #tpu.memory_space<vmem>>, vector<1x1x128xf32>
    %239 = vector.shape_cast %238 : vector<1x1x128xf32> to vector<1x128xf32>
    %240 = vector.shape_cast %237 : vector<1x128xf32> to vector<1x1x128xf32>
    tpu.vector_store %arg10[%c2_161, %c2_162, %c0_163], %240 {strides = array<i32>} : memref<6x6x128xf32, #tpu.memory_space<vmem>>, vector<1x1x128xf32>,
    %241 = vector.extract_strided_slice %222 {offsets = [6, 0], sizes = [2, 128], strides = [1, 1]} : vector<13x128xf32> to vector<2x128xf32>
    %cst_164 = arith.constant dense<0xFF800000> : vector<128xf32>
    %242 = vector.multi_reduction <maximumf>, %241, %cst_164 [0] : vector<2x128xf32> to vector<128xf32>
    %243 = vector.shape_cast %242 : vector<128xf32> to vector<1x128xf32>
    %c2_165 = arith.constant 2 : index
    %c3_166 = arith.constant 3 : index
    %c0_167 = arith.constant 0 : index
    %244 = vector.load %arg10[%c2_165, %c3_166, %c0_167] : memref<6x6x128xf32, #tpu.memory_space<vmem>>, vector<1x1x128xf32>
    %245 = vector.shape_cast %244 : vector<1x1x128xf32> to vector<1x128xf32>
    %246 = vector.shape_cast %243 : vector<1x128xf32> to vector<1x1x128xf32>
    tpu.vector_store %arg10[%c2_165, %c3_166, %c0_167], %246 {strides = array<i32>} : memref<6x6x128xf32, #tpu.memory_space<vmem>>, vector<1x1x128xf32>,
    %247 = vector.extract_strided_slice %222 {offsets = [8, 0], sizes = [2, 128], strides = [1, 1]} : vector<13x128xf32> to vector<2x128xf32>
    %cst_168 = arith.constant dense<0xFF800000> : vector<128xf32>
    %248 = vector.multi_reduction <maximumf>, %247, %cst_168 [0] : vector<2x128xf32> to vector<128xf32>
    %249 = vector.shape_cast %248 : vector<128xf32> to vector<1x128xf32>
    %c2_169 = arith.constant 2 : index
    %c4_170 = arith.constant 4 : index
    %c0_171 = arith.constant 0 : index
    %250 = vector.load %arg10[%c2_169, %c4_170, %c0_171] : memref<6x6x128xf32, #tpu.memory_space<vmem>>, vector<1x1x128xf32>
    %251 = vector.shape_cast %250 : vector<1x1x128xf32> to vector<1x128xf32>
    %252 = vector.shape_cast %249 : vector<1x128xf32> to vector<1x1x128xf32>
    tpu.vector_store %arg10[%c2_169, %c4_170, %c0_171], %252 {strides = array<i32>} : memref<6x6x128xf32, #tpu.memory_space<vmem>>, vector<1x1x128xf32>,
    %253 = vector.extract_strided_slice %222 {offsets = [10, 0], sizes = [2, 128], strides = [1, 1]} : vector<13x128xf32> to vector<2x128xf32>
    %cst_172 = arith.constant dense<0xFF800000> : vector<128xf32>
    %254 = vector.multi_reduction <maximumf>, %253, %cst_172 [0] : vector<2x128xf32> to vector<128xf32>
    %255 = vector.shape_cast %254 : vector<128xf32> to vector<1x128xf32>
    %c2_173 = arith.constant 2 : index
    %c5_174 = arith.constant 5 : index
    %c0_175 = arith.constant 0 : index
    %256 = vector.load %arg10[%c2_173, %c5_174, %c0_175] : memref<6x6x128xf32, #tpu.memory_space<vmem>>, vector<1x1x128xf32>
    %257 = vector.shape_cast %256 : vector<1x1x128xf32> to vector<1x128xf32>
    %258 = vector.shape_cast %255 : vector<1x128xf32> to vector<1x1x128xf32>
    tpu.vector_store %arg10[%c2_173, %c5_174, %c0_175], %258 {strides = array<i32>} : memref<6x6x128xf32, #tpu.memory_space<vmem>>, vector<1x1x128xf32>,
    %c6_176 = arith.constant 6 : index
    %c0_177 = arith.constant 0 : index
    %c0_178 = arith.constant 0 : index
    %259 = vector.load %arg9[%c6_176, %c0_177, %c0_178] : memref<13x13x128xf32, #tpu.memory_space<vmem>>, vector<1x13x128xf32>
    %260 = vector.shape_cast %259 : vector<1x13x128xf32> to vector<13x128xf32>
    %c7_179 = arith.constant 7 : index
    %c0_180 = arith.constant 0 : index
    %c0_181 = arith.constant 0 : index
    %261 = vector.load %arg9[%c7_179, %c0_180, %c0_181] : memref<13x13x128xf32, #tpu.memory_space<vmem>>, vector<1x13x128xf32>
    %262 = vector.shape_cast %261 : vector<1x13x128xf32> to vector<13x128xf32>
    %263 = arith.maximumf %260, %262 : vector<13x128xf32>
    %264 = vector.extract_strided_slice %263 {offsets = [0, 0], sizes = [2, 128], strides = [1, 1]} : vector<13x128xf32> to vector<2x128xf32>
    %cst_182 = arith.constant dense<0xFF800000> : vector<128xf32>
    %265 = vector.multi_reduction <maximumf>, %264, %cst_182 [0] : vector<2x128xf32> to vector<128xf32>
    %266 = vector.shape_cast %265 : vector<128xf32> to vector<1x128xf32>
    %c3_183 = arith.constant 3 : index
    %c0_184 = arith.constant 0 : index
    %c0_185 = arith.constant 0 : index
    %267 = vector.load %arg10[%c3_183, %c0_184, %c0_185] : memref<6x6x128xf32, #tpu.memory_space<vmem>>, vector<1x1x128xf32>
    %268 = vector.shape_cast %267 : vector<1x1x128xf32> to vector<1x128xf32>
    %269 = vector.shape_cast %266 : vector<1x128xf32> to vector<1x1x128xf32>
    tpu.vector_store %arg10[%c3_183, %c0_184, %c0_185], %269 {strides = array<i32>} : memref<6x6x128xf32, #tpu.memory_space<vmem>>, vector<1x1x128xf32>,
    %270 = vector.extract_strided_slice %263 {offsets = [2, 0], sizes = [2, 128], strides = [1, 1]} : vector<13x128xf32> to vector<2x128xf32>
    %cst_186 = arith.constant dense<0xFF800000> : vector<128xf32>
    %271 = vector.multi_reduction <maximumf>, %270, %cst_186 [0] : vector<2x128xf32> to vector<128xf32>
    %272 = vector.shape_cast %271 : vector<128xf32> to vector<1x128xf32>
    %c3_187 = arith.constant 3 : index
    %c1_188 = arith.constant 1 : index
    %c0_189 = arith.constant 0 : index
    %273 = vector.load %arg10[%c3_187, %c1_188, %c0_189] : memref<6x6x128xf32, #tpu.memory_space<vmem>>, vector<1x1x128xf32>
    %274 = vector.shape_cast %273 : vector<1x1x128xf32> to vector<1x128xf32>
    %275 = vector.shape_cast %272 : vector<1x128xf32> to vector<1x1x128xf32>
    tpu.vector_store %arg10[%c3_187, %c1_188, %c0_189], %275 {strides = array<i32>} : memref<6x6x128xf32, #tpu.memory_space<vmem>>, vector<1x1x128xf32>,
    %276 = vector.extract_strided_slice %263 {offsets = [4, 0], sizes = [2, 128], strides = [1, 1]} : vector<13x128xf32> to vector<2x128xf32>
    %cst_190 = arith.constant dense<0xFF800000> : vector<128xf32>
    %277 = vector.multi_reduction <maximumf>, %276, %cst_190 [0] : vector<2x128xf32> to vector<128xf32>
    %278 = vector.shape_cast %277 : vector<128xf32> to vector<1x128xf32>
    %c3_191 = arith.constant 3 : index
    %c2_192 = arith.constant 2 : index
    %c0_193 = arith.constant 0 : index
    %279 = vector.load %arg10[%c3_191, %c2_192, %c0_193] : memref<6x6x128xf32, #tpu.memory_space<vmem>>, vector<1x1x128xf32>
    %280 = vector.shape_cast %279 : vector<1x1x128xf32> to vector<1x128xf32>
    %281 = vector.shape_cast %278 : vector<1x128xf32> to vector<1x1x128xf32>
    tpu.vector_store %arg10[%c3_191, %c2_192, %c0_193], %281 {strides = array<i32>} : memref<6x6x128xf32, #tpu.memory_space<vmem>>, vector<1x1x128xf32>,
    %282 = vector.extract_strided_slice %263 {offsets = [6, 0], sizes = [2, 128], strides = [1, 1]} : vector<13x128xf32> to vector<2x128xf32>
    %cst_194 = arith.constant dense<0xFF800000> : vector<128xf32>
    %283 = vector.multi_reduction <maximumf>, %282, %cst_194 [0] : vector<2x128xf32> to vector<128xf32>
    %284 = vector.shape_cast %283 : vector<128xf32> to vector<1x128xf32>
    %c3_195 = arith.constant 3 : index
    %c3_196 = arith.constant 3 : index
    %c0_197 = arith.constant 0 : index
    %285 = vector.load %arg10[%c3_195, %c3_196, %c0_197] : memref<6x6x128xf32, #tpu.memory_space<vmem>>, vector<1x1x128xf32>
    %286 = vector.shape_cast %285 : vector<1x1x128xf32> to vector<1x128xf32>
    %287 = vector.shape_cast %284 : vector<1x128xf32> to vector<1x1x128xf32>
    tpu.vector_store %arg10[%c3_195, %c3_196, %c0_197], %287 {strides = array<i32>} : memref<6x6x128xf32, #tpu.memory_space<vmem>>, vector<1x1x128xf32>,
    %288 = vector.extract_strided_slice %263 {offsets = [8, 0], sizes = [2, 128], strides = [1, 1]} : vector<13x128xf32> to vector<2x128xf32>
    %cst_198 = arith.constant dense<0xFF800000> : vector<128xf32>
    %289 = vector.multi_reduction <maximumf>, %288, %cst_198 [0] : vector<2x128xf32> to vector<128xf32>
    %290 = vector.shape_cast %289 : vector<128xf32> to vector<1x128xf32>
    %c3_199 = arith.constant 3 : index
    %c4_200 = arith.constant 4 : index
    %c0_201 = arith.constant 0 : index
    %291 = vector.load %arg10[%c3_199, %c4_200, %c0_201] : memref<6x6x128xf32, #tpu.memory_space<vmem>>, vector<1x1x128xf32>
    %292 = vector.shape_cast %291 : vector<1x1x128xf32> to vector<1x128xf32>
    %293 = vector.shape_cast %290 : vector<1x128xf32> to vector<1x1x128xf32>
    tpu.vector_store %arg10[%c3_199, %c4_200, %c0_201], %293 {strides = array<i32>} : memref<6x6x128xf32, #tpu.memory_space<vmem>>, vector<1x1x128xf32>,
    %294 = vector.extract_strided_slice %263 {offsets = [10, 0], sizes = [2, 128], strides = [1, 1]} : vector<13x128xf32> to vector<2x128xf32>
    %cst_202 = arith.constant dense<0xFF800000> : vector<128xf32>
    %295 = vector.multi_reduction <maximumf>, %294, %cst_202 [0] : vector<2x128xf32> to vector<128xf32>
    %296 = vector.shape_cast %295 : vector<128xf32> to vector<1x128xf32>
    %c3_203 = arith.constant 3 : index
    %c5_204 = arith.constant 5 : index
    %c0_205 = arith.constant 0 : index
    %297 = vector.load %arg10[%c3_203, %c5_204, %c0_205] : memref<6x6x128xf32, #tpu.memory_space<vmem>>, vector<1x1x128xf32>
    %298 = vector.shape_cast %297 : vector<1x1x128xf32> to vector<1x128xf32>
    %299 = vector.shape_cast %296 : vector<1x128xf32> to vector<1x1x128xf32>
    tpu.vector_store %arg10[%c3_203, %c5_204, %c0_205], %299 {strides = array<i32>} : memref<6x6x128xf32, #tpu.memory_space<vmem>>, vector<1x1x128xf32>,
    %c8_206 = arith.constant 8 : index
    %c0_207 = arith.constant 0 : index
    %c0_208 = arith.constant 0 : index
    %300 = vector.load %arg9[%c8_206, %c0_207, %c0_208] : memref<13x13x128xf32, #tpu.memory_space<vmem>>, vector<1x13x128xf32>
    %301 = vector.shape_cast %300 : vector<1x13x128xf32> to vector<13x128xf32>
    %c9_209 = arith.constant 9 : index
    %c0_210 = arith.constant 0 : index
    %c0_211 = arith.constant 0 : index
    %302 = vector.load %arg9[%c9_209, %c0_210, %c0_211] : memref<13x13x128xf32, #tpu.memory_space<vmem>>, vector<1x13x128xf32>
    %303 = vector.shape_cast %302 : vector<1x13x128xf32> to vector<13x128xf32>
    %304 = arith.maximumf %301, %303 : vector<13x128xf32>
    %305 = vector.extract_strided_slice %304 {offsets = [0, 0], sizes = [2, 128], strides = [1, 1]} : vector<13x128xf32> to vector<2x128xf32>
    %cst_212 = arith.constant dense<0xFF800000> : vector<128xf32>
    %306 = vector.multi_reduction <maximumf>, %305, %cst_212 [0] : vector<2x128xf32> to vector<128xf32>
    %307 = vector.shape_cast %306 : vector<128xf32> to vector<1x128xf32>
    %c4_213 = arith.constant 4 : index
    %c0_214 = arith.constant 0 : index
    %c0_215 = arith.constant 0 : index
    %308 = vector.load %arg10[%c4_213, %c0_214, %c0_215] : memref<6x6x128xf32, #tpu.memory_space<vmem>>, vector<1x1x128xf32>
    %309 = vector.shape_cast %308 : vector<1x1x128xf32> to vector<1x128xf32>
    %310 = vector.shape_cast %307 : vector<1x128xf32> to vector<1x1x128xf32>
    tpu.vector_store %arg10[%c4_213, %c0_214, %c0_215], %310 {strides = array<i32>} : memref<6x6x128xf32, #tpu.memory_space<vmem>>, vector<1x1x128xf32>,
    %311 = vector.extract_strided_slice %304 {offsets = [2, 0], sizes = [2, 128], strides = [1, 1]} : vector<13x128xf32> to vector<2x128xf32>
    %cst_216 = arith.constant dense<0xFF800000> : vector<128xf32>
    %312 = vector.multi_reduction <maximumf>, %311, %cst_216 [0] : vector<2x128xf32> to vector<128xf32>
    %313 = vector.shape_cast %312 : vector<128xf32> to vector<1x128xf32>
    %c4_217 = arith.constant 4 : index
    %c1_218 = arith.constant 1 : index
    %c0_219 = arith.constant 0 : index
    %314 = vector.load %arg10[%c4_217, %c1_218, %c0_219] : memref<6x6x128xf32, #tpu.memory_space<vmem>>, vector<1x1x128xf32>
    %315 = vector.shape_cast %314 : vector<1x1x128xf32> to vector<1x128xf32>
    %316 = vector.shape_cast %313 : vector<1x128xf32> to vector<1x1x128xf32>
    tpu.vector_store %arg10[%c4_217, %c1_218, %c0_219], %316 {strides = array<i32>} : memref<6x6x128xf32, #tpu.memory_space<vmem>>, vector<1x1x128xf32>,
    %317 = vector.extract_strided_slice %304 {offsets = [4, 0], sizes = [2, 128], strides = [1, 1]} : vector<13x128xf32> to vector<2x128xf32>
    %cst_220 = arith.constant dense<0xFF800000> : vector<128xf32>
    %318 = vector.multi_reduction <maximumf>, %317, %cst_220 [0] : vector<2x128xf32> to vector<128xf32>
    %319 = vector.shape_cast %318 : vector<128xf32> to vector<1x128xf32>
    %c4_221 = arith.constant 4 : index
    %c2_222 = arith.constant 2 : index
    %c0_223 = arith.constant 0 : index
    %320 = vector.load %arg10[%c4_221, %c2_222, %c0_223] : memref<6x6x128xf32, #tpu.memory_space<vmem>>, vector<1x1x128xf32>
    %321 = vector.shape_cast %320 : vector<1x1x128xf32> to vector<1x128xf32>
    %322 = vector.shape_cast %319 : vector<1x128xf32> to vector<1x1x128xf32>
    tpu.vector_store %arg10[%c4_221, %c2_222, %c0_223], %322 {strides = array<i32>} : memref<6x6x128xf32, #tpu.memory_space<vmem>>, vector<1x1x128xf32>,
    %323 = vector.extract_strided_slice %304 {offsets = [6, 0], sizes = [2, 128], strides = [1, 1]} : vector<13x128xf32> to vector<2x128xf32>
    %cst_224 = arith.constant dense<0xFF800000> : vector<128xf32>
    %324 = vector.multi_reduction <maximumf>, %323, %cst_224 [0] : vector<2x128xf32> to vector<128xf32>
    %325 = vector.shape_cast %324 : vector<128xf32> to vector<1x128xf32>
    %c4_225 = arith.constant 4 : index
    %c3_226 = arith.constant 3 : index
    %c0_227 = arith.constant 0 : index
    %326 = vector.load %arg10[%c4_225, %c3_226, %c0_227] : memref<6x6x128xf32, #tpu.memory_space<vmem>>, vector<1x1x128xf32>
    %327 = vector.shape_cast %326 : vector<1x1x128xf32> to vector<1x128xf32>
    %328 = vector.shape_cast %325 : vector<1x128xf32> to vector<1x1x128xf32>
    tpu.vector_store %arg10[%c4_225, %c3_226, %c0_227], %328 {strides = array<i32>} : memref<6x6x128xf32, #tpu.memory_space<vmem>>, vector<1x1x128xf32>,
    %329 = vector.extract_strided_slice %304 {offsets = [8, 0], sizes = [2, 128], strides = [1, 1]} : vector<13x128xf32> to vector<2x128xf32>
    %cst_228 = arith.constant dense<0xFF800000> : vector<128xf32>
    %330 = vector.multi_reduction <maximumf>, %329, %cst_228 [0] : vector<2x128xf32> to vector<128xf32>
    %331 = vector.shape_cast %330 : vector<128xf32> to vector<1x128xf32>
    %c4_229 = arith.constant 4 : index
    %c4_230 = arith.constant 4 : index
    %c0_231 = arith.constant 0 : index
    %332 = vector.load %arg10[%c4_229, %c4_230, %c0_231] : memref<6x6x128xf32, #tpu.memory_space<vmem>>, vector<1x1x128xf32>
    %333 = vector.shape_cast %332 : vector<1x1x128xf32> to vector<1x128xf32>
    %334 = vector.shape_cast %331 : vector<1x128xf32> to vector<1x1x128xf32>
    tpu.vector_store %arg10[%c4_229, %c4_230, %c0_231], %334 {strides = array<i32>} : memref<6x6x128xf32, #tpu.memory_space<vmem>>, vector<1x1x128xf32>,
    %335 = vector.extract_strided_slice %304 {offsets = [10, 0], sizes = [2, 128], strides = [1, 1]} : vector<13x128xf32> to vector<2x128xf32>
    %cst_232 = arith.constant dense<0xFF800000> : vector<128xf32>
    %336 = vector.multi_reduction <maximumf>, %335, %cst_232 [0] : vector<2x128xf32> to vector<128xf32>
    %337 = vector.shape_cast %336 : vector<128xf32> to vector<1x128xf32>
    %c4_233 = arith.constant 4 : index
    %c5_234 = arith.constant 5 : index
    %c0_235 = arith.constant 0 : index
    %338 = vector.load %arg10[%c4_233, %c5_234, %c0_235] : memref<6x6x128xf32, #tpu.memory_space<vmem>>, vector<1x1x128xf32>
    %339 = vector.shape_cast %338 : vector<1x1x128xf32> to vector<1x128xf32>
    %340 = vector.shape_cast %337 : vector<1x128xf32> to vector<1x1x128xf32>
    tpu.vector_store %arg10[%c4_233, %c5_234, %c0_235], %340 {strides = array<i32>} : memref<6x6x128xf32, #tpu.memory_space<vmem>>, vector<1x1x128xf32>,
    %c10_236 = arith.constant 10 : index
    %c0_237 = arith.constant 0 : index
    %c0_238 = arith.constant 0 : index
    %341 = vector.load %arg9[%c10_236, %c0_237, %c0_238] : memref<13x13x128xf32, #tpu.memory_space<vmem>>, vector<1x13x128xf32>
    %342 = vector.shape_cast %341 : vector<1x13x128xf32> to vector<13x128xf32>
    %c11_239 = arith.constant 11 : index
    %c0_240 = arith.constant 0 : index
    %c0_241 = arith.constant 0 : index
    %343 = vector.load %arg9[%c11_239, %c0_240, %c0_241] : memref<13x13x128xf32, #tpu.memory_space<vmem>>, vector<1x13x128xf32>
    %344 = vector.shape_cast %343 : vector<1x13x128xf32> to vector<13x128xf32>
    %345 = arith.maximumf %342, %344 : vector<13x128xf32>
    %346 = vector.extract_strided_slice %345 {offsets = [0, 0], sizes = [2, 128], strides = [1, 1]} : vector<13x128xf32> to vector<2x128xf32>
    %cst_242 = arith.constant dense<0xFF800000> : vector<128xf32>
    %347 = vector.multi_reduction <maximumf>, %346, %cst_242 [0] : vector<2x128xf32> to vector<128xf32>
    %348 = vector.shape_cast %347 : vector<128xf32> to vector<1x128xf32>
    %c5_243 = arith.constant 5 : index
    %c0_244 = arith.constant 0 : index
    %c0_245 = arith.constant 0 : index
    %349 = vector.load %arg10[%c5_243, %c0_244, %c0_245] : memref<6x6x128xf32, #tpu.memory_space<vmem>>, vector<1x1x128xf32>
    %350 = vector.shape_cast %349 : vector<1x1x128xf32> to vector<1x128xf32>
    %351 = vector.shape_cast %348 : vector<1x128xf32> to vector<1x1x128xf32>
    tpu.vector_store %arg10[%c5_243, %c0_244, %c0_245], %351 {strides = array<i32>} : memref<6x6x128xf32, #tpu.memory_space<vmem>>, vector<1x1x128xf32>,
    %352 = vector.extract_strided_slice %345 {offsets = [2, 0], sizes = [2, 128], strides = [1, 1]} : vector<13x128xf32> to vector<2x128xf32>
    %cst_246 = arith.constant dense<0xFF800000> : vector<128xf32>
    %353 = vector.multi_reduction <maximumf>, %352, %cst_246 [0] : vector<2x128xf32> to vector<128xf32>
    %354 = vector.shape_cast %353 : vector<128xf32> to vector<1x128xf32>
    %c5_247 = arith.constant 5 : index
    %c1_248 = arith.constant 1 : index
    %c0_249 = arith.constant 0 : index
    %355 = vector.load %arg10[%c5_247, %c1_248, %c0_249] : memref<6x6x128xf32, #tpu.memory_space<vmem>>, vector<1x1x128xf32>
    %356 = vector.shape_cast %355 : vector<1x1x128xf32> to vector<1x128xf32>
    %357 = vector.shape_cast %354 : vector<1x128xf32> to vector<1x1x128xf32>
    tpu.vector_store %arg10[%c5_247, %c1_248, %c0_249], %357 {strides = array<i32>} : memref<6x6x128xf32, #tpu.memory_space<vmem>>, vector<1x1x128xf32>,
    %358 = vector.extract_strided_slice %345 {offsets = [4, 0], sizes = [2, 128], strides = [1, 1]} : vector<13x128xf32> to vector<2x128xf32>
    %cst_250 = arith.constant dense<0xFF800000> : vector<128xf32>
    %359 = vector.multi_reduction <maximumf>, %358, %cst_250 [0] : vector<2x128xf32> to vector<128xf32>
    %360 = vector.shape_cast %359 : vector<128xf32> to vector<1x128xf32>
    %c5_251 = arith.constant 5 : index
    %c2_252 = arith.constant 2 : index
    %c0_253 = arith.constant 0 : index
    %361 = vector.load %arg10[%c5_251, %c2_252, %c0_253] : memref<6x6x128xf32, #tpu.memory_space<vmem>>, vector<1x1x128xf32>
    %362 = vector.shape_cast %361 : vector<1x1x128xf32> to vector<1x128xf32>
    %363 = vector.shape_cast %360 : vector<1x128xf32> to vector<1x1x128xf32>
    tpu.vector_store %arg10[%c5_251, %c2_252, %c0_253], %363 {strides = array<i32>} : memref<6x6x128xf32, #tpu.memory_space<vmem>>, vector<1x1x128xf32>,
    %364 = vector.extract_strided_slice %345 {offsets = [6, 0], sizes = [2, 128], strides = [1, 1]} : vector<13x128xf32> to vector<2x128xf32>
    %cst_254 = arith.constant dense<0xFF800000> : vector<128xf32>
    %365 = vector.multi_reduction <maximumf>, %364, %cst_254 [0] : vector<2x128xf32> to vector<128xf32>
    %366 = vector.shape_cast %365 : vector<128xf32> to vector<1x128xf32>
    %c5_255 = arith.constant 5 : index
    %c3_256 = arith.constant 3 : index
    %c0_257 = arith.constant 0 : index
    %367 = vector.load %arg10[%c5_255, %c3_256, %c0_257] : memref<6x6x128xf32, #tpu.memory_space<vmem>>, vector<1x1x128xf32>
    %368 = vector.shape_cast %367 : vector<1x1x128xf32> to vector<1x128xf32>
    %369 = vector.shape_cast %366 : vector<1x128xf32> to vector<1x1x128xf32>
    tpu.vector_store %arg10[%c5_255, %c3_256, %c0_257], %369 {strides = array<i32>} : memref<6x6x128xf32, #tpu.memory_space<vmem>>, vector<1x1x128xf32>,
    %370 = vector.extract_strided_slice %345 {offsets = [8, 0], sizes = [2, 128], strides = [1, 1]} : vector<13x128xf32> to vector<2x128xf32>
    %cst_258 = arith.constant dense<0xFF800000> : vector<128xf32>
    %371 = vector.multi_reduction <maximumf>, %370, %cst_258 [0] : vector<2x128xf32> to vector<128xf32>
    %372 = vector.shape_cast %371 : vector<128xf32> to vector<1x128xf32>
    %c5_259 = arith.constant 5 : index
    %c4_260 = arith.constant 4 : index
    %c0_261 = arith.constant 0 : index
    %373 = vector.load %arg10[%c5_259, %c4_260, %c0_261] : memref<6x6x128xf32, #tpu.memory_space<vmem>>, vector<1x1x128xf32>
    %374 = vector.shape_cast %373 : vector<1x1x128xf32> to vector<1x128xf32>
    %375 = vector.shape_cast %372 : vector<1x128xf32> to vector<1x1x128xf32>
    tpu.vector_store %arg10[%c5_259, %c4_260, %c0_261], %375 {strides = array<i32>} : memref<6x6x128xf32, #tpu.memory_space<vmem>>, vector<1x1x128xf32>,
    %376 = vector.extract_strided_slice %345 {offsets = [10, 0], sizes = [2, 128], strides = [1, 1]} : vector<13x128xf32> to vector<2x128xf32>
    %cst_262 = arith.constant dense<0xFF800000> : vector<128xf32>
    %377 = vector.multi_reduction <maximumf>, %376, %cst_262 [0] : vector<2x128xf32> to vector<128xf32>
    %378 = vector.shape_cast %377 : vector<128xf32> to vector<1x128xf32>
    %c5_263 = arith.constant 5 : index
    %c5_264 = arith.constant 5 : index
    %c0_265 = arith.constant 0 : index
    %379 = vector.load %arg10[%c5_263, %c5_264, %c0_265] : memref<6x6x128xf32, #tpu.memory_space<vmem>>, vector<1x1x128xf32>
    %380 = vector.shape_cast %379 : vector<1x1x128xf32> to vector<1x128xf32>
    %381 = vector.shape_cast %378 : vector<1x128xf32> to vector<1x1x128xf32>
    tpu.vector_store %arg10[%c5_263, %c5_264, %c0_265], %381 {strides = array<i32>} : memref<6x6x128xf32, #tpu.memory_space<vmem>>, vector<1x1x128xf32>,
    %c0_266 = arith.constant 0 : index
    %c0_267 = arith.constant 0 : index
    %382 = vector.load %arg5[%c0_266, %c0_267] : memref<1x128xf32, #tpu.memory_space<vmem>>, vector<1x128xf32>
    %cst_268 = arith.constant 0.000000e+00 : f32
    %383 = vector.broadcast %cst_268 : f32 to vector<4x128xf32>
    %c0_269 = arith.constant 0 : index
    %c0_270 = arith.constant 0 : index
    %c0_271 = arith.constant 0 : index
    %384 = vector.load %arg10[%c0_269, %c0_270, %c0_271] : memref<6x6x128xf32, #tpu.memory_space<vmem>>, vector<1x4x128xf32>
    %385 = vector.shape_cast %384 : vector<1x4x128xf32> to vector<4x128xf32>
    %c0_272 = arith.constant 0 : index
    %c0_273 = arith.constant 0 : index
    %c0_274 = arith.constant 0 : index
    %386 = vector.load %arg4[%c0_272, %c0_273, %c0_274] : memref<9x128x128xf32, #tpu.memory_space<vmem>>, vector<1x128x128xf32>
    %387 = vector.shape_cast %386 : vector<1x128x128xf32> to vector<128x128xf32>
    %cst_275 = arith.constant dense<0.000000e+00> : vector<4x128xf32>
    %388 = tpu.matmul %385, %387, %cst_275 {dimension_numbers = #tpu.dot_dimension_numbers<[1], [0], [0], [1], [0, 0, 1, 1], [], []>} : vector<4x128xf32>, vector<128x128xf32>, vector<4x128xf32> -> vector<4x128xf32>
    %389 = arith.addf %383, %388 : vector<4x128xf32>
    %c0_276 = arith.constant 0 : index
    %c1_277 = arith.constant 1 : index
    %c0_278 = arith.constant 0 : index
    %390 = vector.load %arg10[%c0_276, %c1_277, %c0_278] : memref<6x6x128xf32, #tpu.memory_space<vmem>>, vector<1x4x128xf32>
    %391 = vector.shape_cast %390 : vector<1x4x128xf32> to vector<4x128xf32>
    %c1_279 = arith.constant 1 : index
    %c0_280 = arith.constant 0 : index
    %c0_281 = arith.constant 0 : index
    %392 = vector.load %arg4[%c1_279, %c0_280, %c0_281] : memref<9x128x128xf32, #tpu.memory_space<vmem>>, vector<1x128x128xf32>
    %393 = vector.shape_cast %392 : vector<1x128x128xf32> to vector<128x128xf32>
    %cst_282 = arith.constant dense<0.000000e+00> : vector<4x128xf32>
    %394 = tpu.matmul %391, %393, %cst_282 {dimension_numbers = #tpu.dot_dimension_numbers<[1], [0], [0], [1], [0, 0, 1, 1], [], []>} : vector<4x128xf32>, vector<128x128xf32>, vector<4x128xf32> -> vector<4x128xf32>
    %395 = arith.addf %389, %394 : vector<4x128xf32>
    %c0_283 = arith.constant 0 : index
    %c2_284 = arith.constant 2 : index
    %c0_285 = arith.constant 0 : index
    %396 = vector.load %arg10[%c0_283, %c2_284, %c0_285] : memref<6x6x128xf32, #tpu.memory_space<vmem>>, vector<1x4x128xf32>
    %397 = vector.shape_cast %396 : vector<1x4x128xf32> to vector<4x128xf32>
    %c2_286 = arith.constant 2 : index
    %c0_287 = arith.constant 0 : index
    %c0_288 = arith.constant 0 : index
    %398 = vector.load %arg4[%c2_286, %c0_287, %c0_288] : memref<9x128x128xf32, #tpu.memory_space<vmem>>, vector<1x128x128xf32>
    %399 = vector.shape_cast %398 : vector<1x128x128xf32> to vector<128x128xf32>
    %cst_289 = arith.constant dense<0.000000e+00> : vector<4x128xf32>
    %400 = tpu.matmul %397, %399, %cst_289 {dimension_numbers = #tpu.dot_dimension_numbers<[1], [0], [0], [1], [0, 0, 1, 1], [], []>} : vector<4x128xf32>, vector<128x128xf32>, vector<4x128xf32> -> vector<4x128xf32>
    %401 = arith.addf %395, %400 : vector<4x128xf32>
    %c1_290 = arith.constant 1 : index
    %c0_291 = arith.constant 0 : index
    %c0_292 = arith.constant 0 : index
    %402 = vector.load %arg10[%c1_290, %c0_291, %c0_292] : memref<6x6x128xf32, #tpu.memory_space<vmem>>, vector<1x4x128xf32>
    %403 = vector.shape_cast %402 : vector<1x4x128xf32> to vector<4x128xf32>
    %c3_293 = arith.constant 3 : index
    %c0_294 = arith.constant 0 : index
    %c0_295 = arith.constant 0 : index
    %404 = vector.load %arg4[%c3_293, %c0_294, %c0_295] : memref<9x128x128xf32, #tpu.memory_space<vmem>>, vector<1x128x128xf32>
    %405 = vector.shape_cast %404 : vector<1x128x128xf32> to vector<128x128xf32>
    %cst_296 = arith.constant dense<0.000000e+00> : vector<4x128xf32>
    %406 = tpu.matmul %403, %405, %cst_296 {dimension_numbers = #tpu.dot_dimension_numbers<[1], [0], [0], [1], [0, 0, 1, 1], [], []>} : vector<4x128xf32>, vector<128x128xf32>, vector<4x128xf32> -> vector<4x128xf32>
    %407 = arith.addf %401, %406 : vector<4x128xf32>
    %c1_297 = arith.constant 1 : index
    %c1_298 = arith.constant 1 : index
    %c0_299 = arith.constant 0 : index
    %408 = vector.load %arg10[%c1_297, %c1_298, %c0_299] : memref<6x6x128xf32, #tpu.memory_space<vmem>>, vector<1x4x128xf32>
    %409 = vector.shape_cast %408 : vector<1x4x128xf32> to vector<4x128xf32>
    %c4_300 = arith.constant 4 : index
    %c0_301 = arith.constant 0 : index
    %c0_302 = arith.constant 0 : index
    %410 = vector.load %arg4[%c4_300, %c0_301, %c0_302] : memref<9x128x128xf32, #tpu.memory_space<vmem>>, vector<1x128x128xf32>
    %411 = vector.shape_cast %410 : vector<1x128x128xf32> to vector<128x128xf32>
    %cst_303 = arith.constant dense<0.000000e+00> : vector<4x128xf32>
    %412 = tpu.matmul %409, %411, %cst_303 {dimension_numbers = #tpu.dot_dimension_numbers<[1], [0], [0], [1], [0, 0, 1, 1], [], []>} : vector<4x128xf32>, vector<128x128xf32>, vector<4x128xf32> -> vector<4x128xf32>
    %413 = arith.addf %407, %412 : vector<4x128xf32>
    %c1_304 = arith.constant 1 : index
    %c2_305 = arith.constant 2 : index
    %c0_306 = arith.constant 0 : index
    %414 = vector.load %arg10[%c1_304, %c2_305, %c0_306] : memref<6x6x128xf32, #tpu.memory_space<vmem>>, vector<1x4x128xf32>
    %415 = vector.shape_cast %414 : vector<1x4x128xf32> to vector<4x128xf32>
    %c5_307 = arith.constant 5 : index
    %c0_308 = arith.constant 0 : index
    %c0_309 = arith.constant 0 : index
    %416 = vector.load %arg4[%c5_307, %c0_308, %c0_309] : memref<9x128x128xf32, #tpu.memory_space<vmem>>, vector<1x128x128xf32>
    %417 = vector.shape_cast %416 : vector<1x128x128xf32> to vector<128x128xf32>
    %cst_310 = arith.constant dense<0.000000e+00> : vector<4x128xf32>
    %418 = tpu.matmul %415, %417, %cst_310 {dimension_numbers = #tpu.dot_dimension_numbers<[1], [0], [0], [1], [0, 0, 1, 1], [], []>} : vector<4x128xf32>, vector<128x128xf32>, vector<4x128xf32> -> vector<4x128xf32>
    %419 = arith.addf %413, %418 : vector<4x128xf32>
    %c2_311 = arith.constant 2 : index
    %c0_312 = arith.constant 0 : index
    %c0_313 = arith.constant 0 : index
    %420 = vector.load %arg10[%c2_311, %c0_312, %c0_313] : memref<6x6x128xf32, #tpu.memory_space<vmem>>, vector<1x4x128xf32>
    %421 = vector.shape_cast %420 : vector<1x4x128xf32> to vector<4x128xf32>
    %c6_314 = arith.constant 6 : index
    %c0_315 = arith.constant 0 : index
    %c0_316 = arith.constant 0 : index
    %422 = vector.load %arg4[%c6_314, %c0_315, %c0_316] : memref<9x128x128xf32, #tpu.memory_space<vmem>>, vector<1x128x128xf32>
    %423 = vector.shape_cast %422 : vector<1x128x128xf32> to vector<128x128xf32>
    %cst_317 = arith.constant dense<0.000000e+00> : vector<4x128xf32>
    %424 = tpu.matmul %421, %423, %cst_317 {dimension_numbers = #tpu.dot_dimension_numbers<[1], [0], [0], [1], [0, 0, 1, 1], [], []>} : vector<4x128xf32>, vector<128x128xf32>, vector<4x128xf32> -> vector<4x128xf32>
    %425 = arith.addf %419, %424 : vector<4x128xf32>
    %c2_318 = arith.constant 2 : index
    %c1_319 = arith.constant 1 : index
    %c0_320 = arith.constant 0 : index
    %426 = vector.load %arg10[%c2_318, %c1_319, %c0_320] : memref<6x6x128xf32, #tpu.memory_space<vmem>>, vector<1x4x128xf32>
    %427 = vector.shape_cast %426 : vector<1x4x128xf32> to vector<4x128xf32>
    %c7_321 = arith.constant 7 : index
    %c0_322 = arith.constant 0 : index
    %c0_323 = arith.constant 0 : index
    %428 = vector.load %arg4[%c7_321, %c0_322, %c0_323] : memref<9x128x128xf32, #tpu.memory_space<vmem>>, vector<1x128x128xf32>
    %429 = vector.shape_cast %428 : vector<1x128x128xf32> to vector<128x128xf32>
    %cst_324 = arith.constant dense<0.000000e+00> : vector<4x128xf32>
    %430 = tpu.matmul %427, %429, %cst_324 {dimension_numbers = #tpu.dot_dimension_numbers<[1], [0], [0], [1], [0, 0, 1, 1], [], []>} : vector<4x128xf32>, vector<128x128xf32>, vector<4x128xf32> -> vector<4x128xf32>
    %431 = arith.addf %425, %430 : vector<4x128xf32>
    %c2_325 = arith.constant 2 : index
    %c2_326 = arith.constant 2 : index
    %c0_327 = arith.constant 0 : index
    %432 = vector.load %arg10[%c2_325, %c2_326, %c0_327] : memref<6x6x128xf32, #tpu.memory_space<vmem>>, vector<1x4x128xf32>
    %433 = vector.shape_cast %432 : vector<1x4x128xf32> to vector<4x128xf32>
    %c8_328 = arith.constant 8 : index
    %c0_329 = arith.constant 0 : index
    %c0_330 = arith.constant 0 : index
    %434 = vector.load %arg4[%c8_328, %c0_329, %c0_330] : memref<9x128x128xf32, #tpu.memory_space<vmem>>, vector<1x128x128xf32>
    %435 = vector.shape_cast %434 : vector<1x128x128xf32> to vector<128x128xf32>
    %cst_331 = arith.constant dense<0.000000e+00> : vector<4x128xf32>
    %436 = tpu.matmul %433, %435, %cst_331 {dimension_numbers = #tpu.dot_dimension_numbers<[1], [0], [0], [1], [0, 0, 1, 1], [], []>} : vector<4x128xf32>, vector<128x128xf32>, vector<4x128xf32> -> vector<4x128xf32>
    %437 = arith.addf %431, %436 : vector<4x128xf32>
    %438 = vector.broadcast %382 : vector<1x128xf32> to vector<4x128xf32>
    %439 = arith.addf %437, %438 : vector<4x128xf32>
    %cst_332 = arith.constant 0.000000e+00 : f32
    %440 = vector.broadcast %cst_332 : f32 to vector<4x128xf32>
    %441 = arith.maximumf %439, %440 : vector<4x128xf32>
    %c0_333 = arith.constant 0 : index
    %c0_334 = arith.constant 0 : index
    %c0_335 = arith.constant 0 : index
    %442 = vector.load %arg11[%c0_333, %c0_334, %c0_335] : memref<4x4x128xf32, #tpu.memory_space<vmem>>, vector<1x4x128xf32>
    %443 = vector.shape_cast %442 : vector<1x4x128xf32> to vector<4x128xf32>
    %444 = vector.shape_cast %441 : vector<4x128xf32> to vector<1x4x128xf32>
    tpu.vector_store %arg11[%c0_333, %c0_334, %c0_335], %444 {strides = array<i32>} : memref<4x4x128xf32, #tpu.memory_space<vmem>>, vector<1x4x128xf32>,
    %cst_336 = arith.constant 0.000000e+00 : f32
    %445 = vector.broadcast %cst_336 : f32 to vector<4x128xf32>
    %c1_337 = arith.constant 1 : index
    %c0_338 = arith.constant 0 : index
    %c0_339 = arith.constant 0 : index
    %446 = vector.load %arg10[%c1_337, %c0_338, %c0_339] : memref<6x6x128xf32, #tpu.memory_space<vmem>>, vector<1x4x128xf32>
    %447 = vector.shape_cast %446 : vector<1x4x128xf32> to vector<4x128xf32>
    %c0_340 = arith.constant 0 : index
    %c0_341 = arith.constant 0 : index
    %c0_342 = arith.constant 0 : index
    %448 = vector.load %arg4[%c0_340, %c0_341, %c0_342] : memref<9x128x128xf32, #tpu.memory_space<vmem>>, vector<1x128x128xf32>
    %449 = vector.shape_cast %448 : vector<1x128x128xf32> to vector<128x128xf32>
    %cst_343 = arith.constant dense<0.000000e+00> : vector<4x128xf32>
    %450 = tpu.matmul %447, %449, %cst_343 {dimension_numbers = #tpu.dot_dimension_numbers<[1], [0], [0], [1], [0, 0, 1, 1], [], []>} : vector<4x128xf32>, vector<128x128xf32>, vector<4x128xf32> -> vector<4x128xf32>
    %451 = arith.addf %445, %450 : vector<4x128xf32>
    %c1_344 = arith.constant 1 : index
    %c1_345 = arith.constant 1 : index
    %c0_346 = arith.constant 0 : index
    %452 = vector.load %arg10[%c1_344, %c1_345, %c0_346] : memref<6x6x128xf32, #tpu.memory_space<vmem>>, vector<1x4x128xf32>
    %453 = vector.shape_cast %452 : vector<1x4x128xf32> to vector<4x128xf32>
    %c1_347 = arith.constant 1 : index
    %c0_348 = arith.constant 0 : index
    %c0_349 = arith.constant 0 : index
    %454 = vector.load %arg4[%c1_347, %c0_348, %c0_349] : memref<9x128x128xf32, #tpu.memory_space<vmem>>, vector<1x128x128xf32>
    %455 = vector.shape_cast %454 : vector<1x128x128xf32> to vector<128x128xf32>
    %cst_350 = arith.constant dense<0.000000e+00> : vector<4x128xf32>
    %456 = tpu.matmul %453, %455, %cst_350 {dimension_numbers = #tpu.dot_dimension_numbers<[1], [0], [0], [1], [0, 0, 1, 1], [], []>} : vector<4x128xf32>, vector<128x128xf32>, vector<4x128xf32> -> vector<4x128xf32>
    %457 = arith.addf %451, %456 : vector<4x128xf32>
    %c1_351 = arith.constant 1 : index
    %c2_352 = arith.constant 2 : index
    %c0_353 = arith.constant 0 : index
    %458 = vector.load %arg10[%c1_351, %c2_352, %c0_353] : memref<6x6x128xf32, #tpu.memory_space<vmem>>, vector<1x4x128xf32>
    %459 = vector.shape_cast %458 : vector<1x4x128xf32> to vector<4x128xf32>
    %c2_354 = arith.constant 2 : index
    %c0_355 = arith.constant 0 : index
    %c0_356 = arith.constant 0 : index
    %460 = vector.load %arg4[%c2_354, %c0_355, %c0_356] : memref<9x128x128xf32, #tpu.memory_space<vmem>>, vector<1x128x128xf32>
    %461 = vector.shape_cast %460 : vector<1x128x128xf32> to vector<128x128xf32>
    %cst_357 = arith.constant dense<0.000000e+00> : vector<4x128xf32>
    %462 = tpu.matmul %459, %461, %cst_357 {dimension_numbers = #tpu.dot_dimension_numbers<[1], [0], [0], [1], [0, 0, 1, 1], [], []>} : vector<4x128xf32>, vector<128x128xf32>, vector<4x128xf32> -> vector<4x128xf32>
    %463 = arith.addf %457, %462 : vector<4x128xf32>
    %c2_358 = arith.constant 2 : index
    %c0_359 = arith.constant 0 : index
    %c0_360 = arith.constant 0 : index
    %464 = vector.load %arg10[%c2_358, %c0_359, %c0_360] : memref<6x6x128xf32, #tpu.memory_space<vmem>>, vector<1x4x128xf32>
    %465 = vector.shape_cast %464 : vector<1x4x128xf32> to vector<4x128xf32>
    %c3_361 = arith.constant 3 : index
    %c0_362 = arith.constant 0 : index
    %c0_363 = arith.constant 0 : index
    %466 = vector.load %arg4[%c3_361, %c0_362, %c0_363] : memref<9x128x128xf32, #tpu.memory_space<vmem>>, vector<1x128x128xf32>
    %467 = vector.shape_cast %466 : vector<1x128x128xf32> to vector<128x128xf32>
    %cst_364 = arith.constant dense<0.000000e+00> : vector<4x128xf32>
    %468 = tpu.matmul %465, %467, %cst_364 {dimension_numbers = #tpu.dot_dimension_numbers<[1], [0], [0], [1], [0, 0, 1, 1], [], []>} : vector<4x128xf32>, vector<128x128xf32>, vector<4x128xf32> -> vector<4x128xf32>
    %469 = arith.addf %463, %468 : vector<4x128xf32>
    %c2_365 = arith.constant 2 : index
    %c1_366 = arith.constant 1 : index
    %c0_367 = arith.constant 0 : index
    %470 = vector.load %arg10[%c2_365, %c1_366, %c0_367] : memref<6x6x128xf32, #tpu.memory_space<vmem>>, vector<1x4x128xf32>
    %471 = vector.shape_cast %470 : vector<1x4x128xf32> to vector<4x128xf32>
    %c4_368 = arith.constant 4 : index
    %c0_369 = arith.constant 0 : index
    %c0_370 = arith.constant 0 : index
    %472 = vector.load %arg4[%c4_368, %c0_369, %c0_370] : memref<9x128x128xf32, #tpu.memory_space<vmem>>, vector<1x128x128xf32>
    %473 = vector.shape_cast %472 : vector<1x128x128xf32> to vector<128x128xf32>
    %cst_371 = arith.constant dense<0.000000e+00> : vector<4x128xf32>
    %474 = tpu.matmul %471, %473, %cst_371 {dimension_numbers = #tpu.dot_dimension_numbers<[1], [0], [0], [1], [0, 0, 1, 1], [], []>} : vector<4x128xf32>, vector<128x128xf32>, vector<4x128xf32> -> vector<4x128xf32>
    %475 = arith.addf %469, %474 : vector<4x128xf32>
    %c2_372 = arith.constant 2 : index
    %c2_373 = arith.constant 2 : index
    %c0_374 = arith.constant 0 : index
    %476 = vector.load %arg10[%c2_372, %c2_373, %c0_374] : memref<6x6x128xf32, #tpu.memory_space<vmem>>, vector<1x4x128xf32>
    %477 = vector.shape_cast %476 : vector<1x4x128xf32> to vector<4x128xf32>
    %c5_375 = arith.constant 5 : index
    %c0_376 = arith.constant 0 : index
    %c0_377 = arith.constant 0 : index
    %478 = vector.load %arg4[%c5_375, %c0_376, %c0_377] : memref<9x128x128xf32, #tpu.memory_space<vmem>>, vector<1x128x128xf32>
    %479 = vector.shape_cast %478 : vector<1x128x128xf32> to vector<128x128xf32>
    %cst_378 = arith.constant dense<0.000000e+00> : vector<4x128xf32>
    %480 = tpu.matmul %477, %479, %cst_378 {dimension_numbers = #tpu.dot_dimension_numbers<[1], [0], [0], [1], [0, 0, 1, 1], [], []>} : vector<4x128xf32>, vector<128x128xf32>, vector<4x128xf32> -> vector<4x128xf32>
    %481 = arith.addf %475, %480 : vector<4x128xf32>
    %c3_379 = arith.constant 3 : index
    %c0_380 = arith.constant 0 : index
    %c0_381 = arith.constant 0 : index
    %482 = vector.load %arg10[%c3_379, %c0_380, %c0_381] : memref<6x6x128xf32, #tpu.memory_space<vmem>>, vector<1x4x128xf32>
    %483 = vector.shape_cast %482 : vector<1x4x128xf32> to vector<4x128xf32>
    %c6_382 = arith.constant 6 : index
    %c0_383 = arith.constant 0 : index
    %c0_384 = arith.constant 0 : index
    %484 = vector.load %arg4[%c6_382, %c0_383, %c0_384] : memref<9x128x128xf32, #tpu.memory_space<vmem>>, vector<1x128x128xf32>
    %485 = vector.shape_cast %484 : vector<1x128x128xf32> to vector<128x128xf32>
    %cst_385 = arith.constant dense<0.000000e+00> : vector<4x128xf32>
    %486 = tpu.matmul %483, %485, %cst_385 {dimension_numbers = #tpu.dot_dimension_numbers<[1], [0], [0], [1], [0, 0, 1, 1], [], []>} : vector<4x128xf32>, vector<128x128xf32>, vector<4x128xf32> -> vector<4x128xf32>
    %487 = arith.addf %481, %486 : vector<4x128xf32>
    %c3_386 = arith.constant 3 : index
    %c1_387 = arith.constant 1 : index
    %c0_388 = arith.constant 0 : index
    %488 = vector.load %arg10[%c3_386, %c1_387, %c0_388] : memref<6x6x128xf32, #tpu.memory_space<vmem>>, vector<1x4x128xf32>
    %489 = vector.shape_cast %488 : vector<1x4x128xf32> to vector<4x128xf32>
    %c7_389 = arith.constant 7 : index
    %c0_390 = arith.constant 0 : index
    %c0_391 = arith.constant 0 : index
    %490 = vector.load %arg4[%c7_389, %c0_390, %c0_391] : memref<9x128x128xf32, #tpu.memory_space<vmem>>, vector<1x128x128xf32>
    %491 = vector.shape_cast %490 : vector<1x128x128xf32> to vector<128x128xf32>
    %cst_392 = arith.constant dense<0.000000e+00> : vector<4x128xf32>
    %492 = tpu.matmul %489, %491, %cst_392 {dimension_numbers = #tpu.dot_dimension_numbers<[1], [0], [0], [1], [0, 0, 1, 1], [], []>} : vector<4x128xf32>, vector<128x128xf32>, vector<4x128xf32> -> vector<4x128xf32>
    %493 = arith.addf %487, %492 : vector<4x128xf32>
    %c3_393 = arith.constant 3 : index
    %c2_394 = arith.constant 2 : index
    %c0_395 = arith.constant 0 : index
    %494 = vector.load %arg10[%c3_393, %c2_394, %c0_395] : memref<6x6x128xf32, #tpu.memory_space<vmem>>, vector<1x4x128xf32>
    %495 = vector.shape_cast %494 : vector<1x4x128xf32> to vector<4x128xf32>
    %c8_396 = arith.constant 8 : index
    %c0_397 = arith.constant 0 : index
    %c0_398 = arith.constant 0 : index
    %496 = vector.load %arg4[%c8_396, %c0_397, %c0_398] : memref<9x128x128xf32, #tpu.memory_space<vmem>>, vector<1x128x128xf32>
    %497 = vector.shape_cast %496 : vector<1x128x128xf32> to vector<128x128xf32>
    %cst_399 = arith.constant dense<0.000000e+00> : vector<4x128xf32>
    %498 = tpu.matmul %495, %497, %cst_399 {dimension_numbers = #tpu.dot_dimension_numbers<[1], [0], [0], [1], [0, 0, 1, 1], [], []>} : vector<4x128xf32>, vector<128x128xf32>, vector<4x128xf32> -> vector<4x128xf32>
    %499 = arith.addf %493, %498 : vector<4x128xf32>
    %500 = vector.broadcast %382 : vector<1x128xf32> to vector<4x128xf32>
    %501 = arith.addf %499, %500 : vector<4x128xf32>
    %cst_400 = arith.constant 0.000000e+00 : f32
    %502 = vector.broadcast %cst_400 : f32 to vector<4x128xf32>
    %503 = arith.maximumf %501, %502 : vector<4x128xf32>
    %c1_401 = arith.constant 1 : index
    %c0_402 = arith.constant 0 : index
    %c0_403 = arith.constant 0 : index
    %504 = vector.load %arg11[%c1_401, %c0_402, %c0_403] : memref<4x4x128xf32, #tpu.memory_space<vmem>>, vector<1x4x128xf32>
    %505 = vector.shape_cast %504 : vector<1x4x128xf32> to vector<4x128xf32>
    %506 = vector.shape_cast %503 : vector<4x128xf32> to vector<1x4x128xf32>
    tpu.vector_store %arg11[%c1_401, %c0_402, %c0_403], %506 {strides = array<i32>} : memref<4x4x128xf32, #tpu.memory_space<vmem>>, vector<1x4x128xf32>,
    %cst_404 = arith.constant 0.000000e+00 : f32
    %507 = vector.broadcast %cst_404 : f32 to vector<4x128xf32>
    %c2_405 = arith.constant 2 : index
    %c0_406 = arith.constant 0 : index
    %c0_407 = arith.constant 0 : index
    %508 = vector.load %arg10[%c2_405, %c0_406, %c0_407] : memref<6x6x128xf32, #tpu.memory_space<vmem>>, vector<1x4x128xf32>
    %509 = vector.shape_cast %508 : vector<1x4x128xf32> to vector<4x128xf32>
    %c0_408 = arith.constant 0 : index
    %c0_409 = arith.constant 0 : index
    %c0_410 = arith.constant 0 : index
    %510 = vector.load %arg4[%c0_408, %c0_409, %c0_410] : memref<9x128x128xf32, #tpu.memory_space<vmem>>, vector<1x128x128xf32>
    %511 = vector.shape_cast %510 : vector<1x128x128xf32> to vector<128x128xf32>
    %cst_411 = arith.constant dense<0.000000e+00> : vector<4x128xf32>
    %512 = tpu.matmul %509, %511, %cst_411 {dimension_numbers = #tpu.dot_dimension_numbers<[1], [0], [0], [1], [0, 0, 1, 1], [], []>} : vector<4x128xf32>, vector<128x128xf32>, vector<4x128xf32> -> vector<4x128xf32>
    %513 = arith.addf %507, %512 : vector<4x128xf32>
    %c2_412 = arith.constant 2 : index
    %c1_413 = arith.constant 1 : index
    %c0_414 = arith.constant 0 : index
    %514 = vector.load %arg10[%c2_412, %c1_413, %c0_414] : memref<6x6x128xf32, #tpu.memory_space<vmem>>, vector<1x4x128xf32>
    %515 = vector.shape_cast %514 : vector<1x4x128xf32> to vector<4x128xf32>
    %c1_415 = arith.constant 1 : index
    %c0_416 = arith.constant 0 : index
    %c0_417 = arith.constant 0 : index
    %516 = vector.load %arg4[%c1_415, %c0_416, %c0_417] : memref<9x128x128xf32, #tpu.memory_space<vmem>>, vector<1x128x128xf32>
    %517 = vector.shape_cast %516 : vector<1x128x128xf32> to vector<128x128xf32>
    %cst_418 = arith.constant dense<0.000000e+00> : vector<4x128xf32>
    %518 = tpu.matmul %515, %517, %cst_418 {dimension_numbers = #tpu.dot_dimension_numbers<[1], [0], [0], [1], [0, 0, 1, 1], [], []>} : vector<4x128xf32>, vector<128x128xf32>, vector<4x128xf32> -> vector<4x128xf32>
    %519 = arith.addf %513, %518 : vector<4x128xf32>
    %c2_419 = arith.constant 2 : index
    %c2_420 = arith.constant 2 : index
    %c0_421 = arith.constant 0 : index
    %520 = vector.load %arg10[%c2_419, %c2_420, %c0_421] : memref<6x6x128xf32, #tpu.memory_space<vmem>>, vector<1x4x128xf32>
    %521 = vector.shape_cast %520 : vector<1x4x128xf32> to vector<4x128xf32>
    %c2_422 = arith.constant 2 : index
    %c0_423 = arith.constant 0 : index
    %c0_424 = arith.constant 0 : index
    %522 = vector.load %arg4[%c2_422, %c0_423, %c0_424] : memref<9x128x128xf32, #tpu.memory_space<vmem>>, vector<1x128x128xf32>
    %523 = vector.shape_cast %522 : vector<1x128x128xf32> to vector<128x128xf32>
    %cst_425 = arith.constant dense<0.000000e+00> : vector<4x128xf32>
    %524 = tpu.matmul %521, %523, %cst_425 {dimension_numbers = #tpu.dot_dimension_numbers<[1], [0], [0], [1], [0, 0, 1, 1], [], []>} : vector<4x128xf32>, vector<128x128xf32>, vector<4x128xf32> -> vector<4x128xf32>
    %525 = arith.addf %519, %524 : vector<4x128xf32>
    %c3_426 = arith.constant 3 : index
    %c0_427 = arith.constant 0 : index
    %c0_428 = arith.constant 0 : index
    %526 = vector.load %arg10[%c3_426, %c0_427, %c0_428] : memref<6x6x128xf32, #tpu.memory_space<vmem>>, vector<1x4x128xf32>
    %527 = vector.shape_cast %526 : vector<1x4x128xf32> to vector<4x128xf32>
    %c3_429 = arith.constant 3 : index
    %c0_430 = arith.constant 0 : index
    %c0_431 = arith.constant 0 : index
    %528 = vector.load %arg4[%c3_429, %c0_430, %c0_431] : memref<9x128x128xf32, #tpu.memory_space<vmem>>, vector<1x128x128xf32>
    %529 = vector.shape_cast %528 : vector<1x128x128xf32> to vector<128x128xf32>
    %cst_432 = arith.constant dense<0.000000e+00> : vector<4x128xf32>
    %530 = tpu.matmul %527, %529, %cst_432 {dimension_numbers = #tpu.dot_dimension_numbers<[1], [0], [0], [1], [0, 0, 1, 1], [], []>} : vector<4x128xf32>, vector<128x128xf32>, vector<4x128xf32> -> vector<4x128xf32>
    %531 = arith.addf %525, %530 : vector<4x128xf32>
    %c3_433 = arith.constant 3 : index
    %c1_434 = arith.constant 1 : index
    %c0_435 = arith.constant 0 : index
    %532 = vector.load %arg10[%c3_433, %c1_434, %c0_435] : memref<6x6x128xf32, #tpu.memory_space<vmem>>, vector<1x4x128xf32>
    %533 = vector.shape_cast %532 : vector<1x4x128xf32> to vector<4x128xf32>
    %c4_436 = arith.constant 4 : index
    %c0_437 = arith.constant 0 : index
    %c0_438 = arith.constant 0 : index
    %534 = vector.load %arg4[%c4_436, %c0_437, %c0_438] : memref<9x128x128xf32, #tpu.memory_space<vmem>>, vector<1x128x128xf32>
    %535 = vector.shape_cast %534 : vector<1x128x128xf32> to vector<128x128xf32>
    %cst_439 = arith.constant dense<0.000000e+00> : vector<4x128xf32>
    %536 = tpu.matmul %533, %535, %cst_439 {dimension_numbers = #tpu.dot_dimension_numbers<[1], [0], [0], [1], [0, 0, 1, 1], [], []>} : vector<4x128xf32>, vector<128x128xf32>, vector<4x128xf32> -> vector<4x128xf32>
    %537 = arith.addf %531, %536 : vector<4x128xf32>
    %c3_440 = arith.constant 3 : index
    %c2_441 = arith.constant 2 : index
    %c0_442 = arith.constant 0 : index
    %538 = vector.load %arg10[%c3_440, %c2_441, %c0_442] : memref<6x6x128xf32, #tpu.memory_space<vmem>>, vector<1x4x128xf32>
    %539 = vector.shape_cast %538 : vector<1x4x128xf32> to vector<4x128xf32>
    %c5_443 = arith.constant 5 : index
    %c0_444 = arith.constant 0 : index
    %c0_445 = arith.constant 0 : index
    %540 = vector.load %arg4[%c5_443, %c0_444, %c0_445] : memref<9x128x128xf32, #tpu.memory_space<vmem>>, vector<1x128x128xf32>
    %541 = vector.shape_cast %540 : vector<1x128x128xf32> to vector<128x128xf32>
    %cst_446 = arith.constant dense<0.000000e+00> : vector<4x128xf32>
    %542 = tpu.matmul %539, %541, %cst_446 {dimension_numbers = #tpu.dot_dimension_numbers<[1], [0], [0], [1], [0, 0, 1, 1], [], []>} : vector<4x128xf32>, vector<128x128xf32>, vector<4x128xf32> -> vector<4x128xf32>
    %543 = arith.addf %537, %542 : vector<4x128xf32>
    %c4_447 = arith.constant 4 : index
    %c0_448 = arith.constant 0 : index
    %c0_449 = arith.constant 0 : index
    %544 = vector.load %arg10[%c4_447, %c0_448, %c0_449] : memref<6x6x128xf32, #tpu.memory_space<vmem>>, vector<1x4x128xf32>
    %545 = vector.shape_cast %544 : vector<1x4x128xf32> to vector<4x128xf32>
    %c6_450 = arith.constant 6 : index
    %c0_451 = arith.constant 0 : index
    %c0_452 = arith.constant 0 : index
    %546 = vector.load %arg4[%c6_450, %c0_451, %c0_452] : memref<9x128x128xf32, #tpu.memory_space<vmem>>, vector<1x128x128xf32>
    %547 = vector.shape_cast %546 : vector<1x128x128xf32> to vector<128x128xf32>
    %cst_453 = arith.constant dense<0.000000e+00> : vector<4x128xf32>
    %548 = tpu.matmul %545, %547, %cst_453 {dimension_numbers = #tpu.dot_dimension_numbers<[1], [0], [0], [1], [0, 0, 1, 1], [], []>} : vector<4x128xf32>, vector<128x128xf32>, vector<4x128xf32> -> vector<4x128xf32>
    %549 = arith.addf %543, %548 : vector<4x128xf32>
    %c4_454 = arith.constant 4 : index
    %c1_455 = arith.constant 1 : index
    %c0_456 = arith.constant 0 : index
    %550 = vector.load %arg10[%c4_454, %c1_455, %c0_456] : memref<6x6x128xf32, #tpu.memory_space<vmem>>, vector<1x4x128xf32>
    %551 = vector.shape_cast %550 : vector<1x4x128xf32> to vector<4x128xf32>
    %c7_457 = arith.constant 7 : index
    %c0_458 = arith.constant 0 : index
    %c0_459 = arith.constant 0 : index
    %552 = vector.load %arg4[%c7_457, %c0_458, %c0_459] : memref<9x128x128xf32, #tpu.memory_space<vmem>>, vector<1x128x128xf32>
    %553 = vector.shape_cast %552 : vector<1x128x128xf32> to vector<128x128xf32>
    %cst_460 = arith.constant dense<0.000000e+00> : vector<4x128xf32>
    %554 = tpu.matmul %551, %553, %cst_460 {dimension_numbers = #tpu.dot_dimension_numbers<[1], [0], [0], [1], [0, 0, 1, 1], [], []>} : vector<4x128xf32>, vector<128x128xf32>, vector<4x128xf32> -> vector<4x128xf32>
    %555 = arith.addf %549, %554 : vector<4x128xf32>
    %c4_461 = arith.constant 4 : index
    %c2_462 = arith.constant 2 : index
    %c0_463 = arith.constant 0 : index
    %556 = vector.load %arg10[%c4_461, %c2_462, %c0_463] : memref<6x6x128xf32, #tpu.memory_space<vmem>>, vector<1x4x128xf32>
    %557 = vector.shape_cast %556 : vector<1x4x128xf32> to vector<4x128xf32>
    %c8_464 = arith.constant 8 : index
    %c0_465 = arith.constant 0 : index
    %c0_466 = arith.constant 0 : index
    %558 = vector.load %arg4[%c8_464, %c0_465, %c0_466] : memref<9x128x128xf32, #tpu.memory_space<vmem>>, vector<1x128x128xf32>
    %559 = vector.shape_cast %558 : vector<1x128x128xf32> to vector<128x128xf32>
    %cst_467 = arith.constant dense<0.000000e+00> : vector<4x128xf32>
    %560 = tpu.matmul %557, %559, %cst_467 {dimension_numbers = #tpu.dot_dimension_numbers<[1], [0], [0], [1], [0, 0, 1, 1], [], []>} : vector<4x128xf32>, vector<128x128xf32>, vector<4x128xf32> -> vector<4x128xf32>
    %561 = arith.addf %555, %560 : vector<4x128xf32>
    %562 = vector.broadcast %382 : vector<1x128xf32> to vector<4x128xf32>
    %563 = arith.addf %561, %562 : vector<4x128xf32>
    %cst_468 = arith.constant 0.000000e+00 : f32
    %564 = vector.broadcast %cst_468 : f32 to vector<4x128xf32>
    %565 = arith.maximumf %563, %564 : vector<4x128xf32>
    %c2_469 = arith.constant 2 : index
    %c0_470 = arith.constant 0 : index
    %c0_471 = arith.constant 0 : index
    %566 = vector.load %arg11[%c2_469, %c0_470, %c0_471] : memref<4x4x128xf32, #tpu.memory_space<vmem>>, vector<1x4x128xf32>
    %567 = vector.shape_cast %566 : vector<1x4x128xf32> to vector<4x128xf32>
    %568 = vector.shape_cast %565 : vector<4x128xf32> to vector<1x4x128xf32>
    tpu.vector_store %arg11[%c2_469, %c0_470, %c0_471], %568 {strides = array<i32>} : memref<4x4x128xf32, #tpu.memory_space<vmem>>, vector<1x4x128xf32>,
    %cst_472 = arith.constant 0.000000e+00 : f32
    %569 = vector.broadcast %cst_472 : f32 to vector<4x128xf32>
    %c3_473 = arith.constant 3 : index
    %c0_474 = arith.constant 0 : index
    %c0_475 = arith.constant 0 : index
    %570 = vector.load %arg10[%c3_473, %c0_474, %c0_475] : memref<6x6x128xf32, #tpu.memory_space<vmem>>, vector<1x4x128xf32>
    %571 = vector.shape_cast %570 : vector<1x4x128xf32> to vector<4x128xf32>
    %c0_476 = arith.constant 0 : index
    %c0_477 = arith.constant 0 : index
    %c0_478 = arith.constant 0 : index
    %572 = vector.load %arg4[%c0_476, %c0_477, %c0_478] : memref<9x128x128xf32, #tpu.memory_space<vmem>>, vector<1x128x128xf32>
    %573 = vector.shape_cast %572 : vector<1x128x128xf32> to vector<128x128xf32>
    %cst_479 = arith.constant dense<0.000000e+00> : vector<4x128xf32>
    %574 = tpu.matmul %571, %573, %cst_479 {dimension_numbers = #tpu.dot_dimension_numbers<[1], [0], [0], [1], [0, 0, 1, 1], [], []>} : vector<4x128xf32>, vector<128x128xf32>, vector<4x128xf32> -> vector<4x128xf32>
    %575 = arith.addf %569, %574 : vector<4x128xf32>
    %c3_480 = arith.constant 3 : index
    %c1_481 = arith.constant 1 : index
    %c0_482 = arith.constant 0 : index
    %576 = vector.load %arg10[%c3_480, %c1_481, %c0_482] : memref<6x6x128xf32, #tpu.memory_space<vmem>>, vector<1x4x128xf32>
    %577 = vector.shape_cast %576 : vector<1x4x128xf32> to vector<4x128xf32>
    %c1_483 = arith.constant 1 : index
    %c0_484 = arith.constant 0 : index
    %c0_485 = arith.constant 0 : index
    %578 = vector.load %arg4[%c1_483, %c0_484, %c0_485] : memref<9x128x128xf32, #tpu.memory_space<vmem>>, vector<1x128x128xf32>
    %579 = vector.shape_cast %578 : vector<1x128x128xf32> to vector<128x128xf32>
    %cst_486 = arith.constant dense<0.000000e+00> : vector<4x128xf32>
    %580 = tpu.matmul %577, %579, %cst_486 {dimension_numbers = #tpu.dot_dimension_numbers<[1], [0], [0], [1], [0, 0, 1, 1], [], []>} : vector<4x128xf32>, vector<128x128xf32>, vector<4x128xf32> -> vector<4x128xf32>
    %581 = arith.addf %575, %580 : vector<4x128xf32>
    %c3_487 = arith.constant 3 : index
    %c2_488 = arith.constant 2 : index
    %c0_489 = arith.constant 0 : index
    %582 = vector.load %arg10[%c3_487, %c2_488, %c0_489] : memref<6x6x128xf32, #tpu.memory_space<vmem>>, vector<1x4x128xf32>
    %583 = vector.shape_cast %582 : vector<1x4x128xf32> to vector<4x128xf32>
    %c2_490 = arith.constant 2 : index
    %c0_491 = arith.constant 0 : index
    %c0_492 = arith.constant 0 : index
    %584 = vector.load %arg4[%c2_490, %c0_491, %c0_492] : memref<9x128x128xf32, #tpu.memory_space<vmem>>, vector<1x128x128xf32>
    %585 = vector.shape_cast %584 : vector<1x128x128xf32> to vector<128x128xf32>
    %cst_493 = arith.constant dense<0.000000e+00> : vector<4x128xf32>
    %586 = tpu.matmul %583, %585, %cst_493 {dimension_numbers = #tpu.dot_dimension_numbers<[1], [0], [0], [1], [0, 0, 1, 1], [], []>} : vector<4x128xf32>, vector<128x128xf32>, vector<4x128xf32> -> vector<4x128xf32>
    %587 = arith.addf %581, %586 : vector<4x128xf32>
    %c4_494 = arith.constant 4 : index
    %c0_495 = arith.constant 0 : index
    %c0_496 = arith.constant 0 : index
    %588 = vector.load %arg10[%c4_494, %c0_495, %c0_496] : memref<6x6x128xf32, #tpu.memory_space<vmem>>, vector<1x4x128xf32>
    %589 = vector.shape_cast %588 : vector<1x4x128xf32> to vector<4x128xf32>
    %c3_497 = arith.constant 3 : index
    %c0_498 = arith.constant 0 : index
    %c0_499 = arith.constant 0 : index
    %590 = vector.load %arg4[%c3_497, %c0_498, %c0_499] : memref<9x128x128xf32, #tpu.memory_space<vmem>>, vector<1x128x128xf32>
    %591 = vector.shape_cast %590 : vector<1x128x128xf32> to vector<128x128xf32>
    %cst_500 = arith.constant dense<0.000000e+00> : vector<4x128xf32>
    %592 = tpu.matmul %589, %591, %cst_500 {dimension_numbers = #tpu.dot_dimension_numbers<[1], [0], [0], [1], [0, 0, 1, 1], [], []>} : vector<4x128xf32>, vector<128x128xf32>, vector<4x128xf32> -> vector<4x128xf32>
    %593 = arith.addf %587, %592 : vector<4x128xf32>
    %c4_501 = arith.constant 4 : index
    %c1_502 = arith.constant 1 : index
    %c0_503 = arith.constant 0 : index
    %594 = vector.load %arg10[%c4_501, %c1_502, %c0_503] : memref<6x6x128xf32, #tpu.memory_space<vmem>>, vector<1x4x128xf32>
    %595 = vector.shape_cast %594 : vector<1x4x128xf32> to vector<4x128xf32>
    %c4_504 = arith.constant 4 : index
    %c0_505 = arith.constant 0 : index
    %c0_506 = arith.constant 0 : index
    %596 = vector.load %arg4[%c4_504, %c0_505, %c0_506] : memref<9x128x128xf32, #tpu.memory_space<vmem>>, vector<1x128x128xf32>
    %597 = vector.shape_cast %596 : vector<1x128x128xf32> to vector<128x128xf32>
    %cst_507 = arith.constant dense<0.000000e+00> : vector<4x128xf32>
    %598 = tpu.matmul %595, %597, %cst_507 {dimension_numbers = #tpu.dot_dimension_numbers<[1], [0], [0], [1], [0, 0, 1, 1], [], []>} : vector<4x128xf32>, vector<128x128xf32>, vector<4x128xf32> -> vector<4x128xf32>
    %599 = arith.addf %593, %598 : vector<4x128xf32>
    %c4_508 = arith.constant 4 : index
    %c2_509 = arith.constant 2 : index
    %c0_510 = arith.constant 0 : index
    %600 = vector.load %arg10[%c4_508, %c2_509, %c0_510] : memref<6x6x128xf32, #tpu.memory_space<vmem>>, vector<1x4x128xf32>
    %601 = vector.shape_cast %600 : vector<1x4x128xf32> to vector<4x128xf32>
    %c5_511 = arith.constant 5 : index
    %c0_512 = arith.constant 0 : index
    %c0_513 = arith.constant 0 : index
    %602 = vector.load %arg4[%c5_511, %c0_512, %c0_513] : memref<9x128x128xf32, #tpu.memory_space<vmem>>, vector<1x128x128xf32>
    %603 = vector.shape_cast %602 : vector<1x128x128xf32> to vector<128x128xf32>
    %cst_514 = arith.constant dense<0.000000e+00> : vector<4x128xf32>
    %604 = tpu.matmul %601, %603, %cst_514 {dimension_numbers = #tpu.dot_dimension_numbers<[1], [0], [0], [1], [0, 0, 1, 1], [], []>} : vector<4x128xf32>, vector<128x128xf32>, vector<4x128xf32> -> vector<4x128xf32>
    %605 = arith.addf %599, %604 : vector<4x128xf32>
    %c5_515 = arith.constant 5 : index
    %c0_516 = arith.constant 0 : index
    %c0_517 = arith.constant 0 : index
    %606 = vector.load %arg10[%c5_515, %c0_516, %c0_517] : memref<6x6x128xf32, #tpu.memory_space<vmem>>, vector<1x4x128xf32>
    %607 = vector.shape_cast %606 : vector<1x4x128xf32> to vector<4x128xf32>
    %c6_518 = arith.constant 6 : index
    %c0_519 = arith.constant 0 : index
    %c0_520 = arith.constant 0 : index
    %608 = vector.load %arg4[%c6_518, %c0_519, %c0_520] : memref<9x128x128xf32, #tpu.memory_space<vmem>>, vector<1x128x128xf32>
    %609 = vector.shape_cast %608 : vector<1x128x128xf32> to vector<128x128xf32>
    %cst_521 = arith.constant dense<0.000000e+00> : vector<4x128xf32>
    %610 = tpu.matmul %607, %609, %cst_521 {dimension_numbers = #tpu.dot_dimension_numbers<[1], [0], [0], [1], [0, 0, 1, 1], [], []>} : vector<4x128xf32>, vector<128x128xf32>, vector<4x128xf32> -> vector<4x128xf32>
    %611 = arith.addf %605, %610 : vector<4x128xf32>
    %c5_522 = arith.constant 5 : index
    %c1_523 = arith.constant 1 : index
    %c0_524 = arith.constant 0 : index
    %612 = vector.load %arg10[%c5_522, %c1_523, %c0_524] : memref<6x6x128xf32, #tpu.memory_space<vmem>>, vector<1x4x128xf32>
    %613 = vector.shape_cast %612 : vector<1x4x128xf32> to vector<4x128xf32>
    %c7_525 = arith.constant 7 : index
    %c0_526 = arith.constant 0 : index
    %c0_527 = arith.constant 0 : index
    %614 = vector.load %arg4[%c7_525, %c0_526, %c0_527] : memref<9x128x128xf32, #tpu.memory_space<vmem>>, vector<1x128x128xf32>
    %615 = vector.shape_cast %614 : vector<1x128x128xf32> to vector<128x128xf32>
    %cst_528 = arith.constant dense<0.000000e+00> : vector<4x128xf32>
    %616 = tpu.matmul %613, %615, %cst_528 {dimension_numbers = #tpu.dot_dimension_numbers<[1], [0], [0], [1], [0, 0, 1, 1], [], []>} : vector<4x128xf32>, vector<128x128xf32>, vector<4x128xf32> -> vector<4x128xf32>
    %617 = arith.addf %611, %616 : vector<4x128xf32>
    %c5_529 = arith.constant 5 : index
    %c2_530 = arith.constant 2 : index
    %c0_531 = arith.constant 0 : index
    %618 = vector.load %arg10[%c5_529, %c2_530, %c0_531] : memref<6x6x128xf32, #tpu.memory_space<vmem>>, vector<1x4x128xf32>
    %619 = vector.shape_cast %618 : vector<1x4x128xf32> to vector<4x128xf32>
    %c8_532 = arith.constant 8 : index
    %c0_533 = arith.constant 0 : index
    %c0_534 = arith.constant 0 : index
    %620 = vector.load %arg4[%c8_532, %c0_533, %c0_534] : memref<9x128x128xf32, #tpu.memory_space<vmem>>, vector<1x128x128xf32>
    %621 = vector.shape_cast %620 : vector<1x128x128xf32> to vector<128x128xf32>
    %cst_535 = arith.constant dense<0.000000e+00> : vector<4x128xf32>
    %622 = tpu.matmul %619, %621, %cst_535 {dimension_numbers = #tpu.dot_dimension_numbers<[1], [0], [0], [1], [0, 0, 1, 1], [], []>} : vector<4x128xf32>, vector<128x128xf32>, vector<4x128xf32> -> vector<4x128xf32>
    %623 = arith.addf %617, %622 : vector<4x128xf32>
    %624 = vector.broadcast %382 : vector<1x128xf32> to vector<4x128xf32>
    %625 = arith.addf %623, %624 : vector<4x128xf32>
    %cst_536 = arith.constant 0.000000e+00 : f32
    %626 = vector.broadcast %cst_536 : f32 to vector<4x128xf32>
    %627 = arith.maximumf %625, %626 : vector<4x128xf32>
    %c3_537 = arith.constant 3 : index
    %c0_538 = arith.constant 0 : index
    %c0_539 = arith.constant 0 : index
    %628 = vector.load %arg11[%c3_537, %c0_538, %c0_539] : memref<4x4x128xf32, #tpu.memory_space<vmem>>, vector<1x4x128xf32>
    %629 = vector.shape_cast %628 : vector<1x4x128xf32> to vector<4x128xf32>
    %630 = vector.shape_cast %627 : vector<4x128xf32> to vector<1x4x128xf32>
    tpu.vector_store %arg11[%c3_537, %c0_538, %c0_539], %630 {strides = array<i32>} : memref<4x4x128xf32, #tpu.memory_space<vmem>>, vector<1x4x128xf32>,
    %c0_540 = arith.constant 0 : index
    %c0_541 = arith.constant 0 : index
    %631 = vector.load %arg7[%c0_540, %c0_541] : memref<1x128xf32, #tpu.memory_space<vmem>>, vector<1x128xf32>
    %c0_542 = arith.constant 0 : index
    %c0_543 = arith.constant 0 : index
    %c0_544 = arith.constant 0 : index
    %632 = vector.load %arg11[%c0_542, %c0_543, %c0_544] : memref<4x4x128xf32, #tpu.memory_space<vmem>>, vector<1x1x128xf32>
    %633 = vector.shape_cast %632 : vector<1x1x128xf32> to vector<1x128xf32>
    %c0_545 = arith.constant 0 : index
    %c0_546 = arith.constant 0 : index
    %c0_547 = arith.constant 0 : index
    %634 = vector.load %arg6[%c0_545, %c0_546, %c0_547] : memref<16x128x128xf32, #tpu.memory_space<vmem>>, vector<1x128x128xf32>
    %635 = vector.shape_cast %634 : vector<1x128x128xf32> to vector<128x128xf32>
    %cst_548 = arith.constant dense<0.000000e+00> : vector<1x128xf32>
    %636 = tpu.matmul %633, %635, %cst_548 {dimension_numbers = #tpu.dot_dimension_numbers<[1], [0], [0], [1], [0, 0, 1, 1], [], []>} : vector<1x128xf32>, vector<128x128xf32>, vector<1x128xf32> -> vector<1x128xf32>
    %637 = arith.addf %631, %636 : vector<1x128xf32>
    %c0_549 = arith.constant 0 : index
    %c1_550 = arith.constant 1 : index
    %c0_551 = arith.constant 0 : index
    %638 = vector.load %arg11[%c0_549, %c1_550, %c0_551] : memref<4x4x128xf32, #tpu.memory_space<vmem>>, vector<1x1x128xf32>
    %639 = vector.shape_cast %638 : vector<1x1x128xf32> to vector<1x128xf32>
    %c1_552 = arith.constant 1 : index
    %c0_553 = arith.constant 0 : index
    %c0_554 = arith.constant 0 : index
    %640 = vector.load %arg6[%c1_552, %c0_553, %c0_554] : memref<16x128x128xf32, #tpu.memory_space<vmem>>, vector<1x128x128xf32>
    %641 = vector.shape_cast %640 : vector<1x128x128xf32> to vector<128x128xf32>
    %cst_555 = arith.constant dense<0.000000e+00> : vector<1x128xf32>
    %642 = tpu.matmul %639, %641, %cst_555 {dimension_numbers = #tpu.dot_dimension_numbers<[1], [0], [0], [1], [0, 0, 1, 1], [], []>} : vector<1x128xf32>, vector<128x128xf32>, vector<1x128xf32> -> vector<1x128xf32>
    %643 = arith.addf %637, %642 : vector<1x128xf32>
    %c0_556 = arith.constant 0 : index
    %c2_557 = arith.constant 2 : index
    %c0_558 = arith.constant 0 : index
    %644 = vector.load %arg11[%c0_556, %c2_557, %c0_558] : memref<4x4x128xf32, #tpu.memory_space<vmem>>, vector<1x1x128xf32>
    %645 = vector.shape_cast %644 : vector<1x1x128xf32> to vector<1x128xf32>
    %c2_559 = arith.constant 2 : index
    %c0_560 = arith.constant 0 : index
    %c0_561 = arith.constant 0 : index
    %646 = vector.load %arg6[%c2_559, %c0_560, %c0_561] : memref<16x128x128xf32, #tpu.memory_space<vmem>>, vector<1x128x128xf32>
    %647 = vector.shape_cast %646 : vector<1x128x128xf32> to vector<128x128xf32>
    %cst_562 = arith.constant dense<0.000000e+00> : vector<1x128xf32>
    %648 = tpu.matmul %645, %647, %cst_562 {dimension_numbers = #tpu.dot_dimension_numbers<[1], [0], [0], [1], [0, 0, 1, 1], [], []>} : vector<1x128xf32>, vector<128x128xf32>, vector<1x128xf32> -> vector<1x128xf32>
    %649 = arith.addf %643, %648 : vector<1x128xf32>
    %c0_563 = arith.constant 0 : index
    %c3_564 = arith.constant 3 : index
    %c0_565 = arith.constant 0 : index
    %650 = vector.load %arg11[%c0_563, %c3_564, %c0_565] : memref<4x4x128xf32, #tpu.memory_space<vmem>>, vector<1x1x128xf32>
    %651 = vector.shape_cast %650 : vector<1x1x128xf32> to vector<1x128xf32>
    %c3_566 = arith.constant 3 : index
    %c0_567 = arith.constant 0 : index
    %c0_568 = arith.constant 0 : index
    %652 = vector.load %arg6[%c3_566, %c0_567, %c0_568] : memref<16x128x128xf32, #tpu.memory_space<vmem>>, vector<1x128x128xf32>
    %653 = vector.shape_cast %652 : vector<1x128x128xf32> to vector<128x128xf32>
    %cst_569 = arith.constant dense<0.000000e+00> : vector<1x128xf32>
    %654 = tpu.matmul %651, %653, %cst_569 {dimension_numbers = #tpu.dot_dimension_numbers<[1], [0], [0], [1], [0, 0, 1, 1], [], []>} : vector<1x128xf32>, vector<128x128xf32>, vector<1x128xf32> -> vector<1x128xf32>
    %655 = arith.addf %649, %654 : vector<1x128xf32>
    %c1_570 = arith.constant 1 : index
    %c0_571 = arith.constant 0 : index
    %c0_572 = arith.constant 0 : index
    %656 = vector.load %arg11[%c1_570, %c0_571, %c0_572] : memref<4x4x128xf32, #tpu.memory_space<vmem>>, vector<1x1x128xf32>
    %657 = vector.shape_cast %656 : vector<1x1x128xf32> to vector<1x128xf32>
    %c4_573 = arith.constant 4 : index
    %c0_574 = arith.constant 0 : index
    %c0_575 = arith.constant 0 : index
    %658 = vector.load %arg6[%c4_573, %c0_574, %c0_575] : memref<16x128x128xf32, #tpu.memory_space<vmem>>, vector<1x128x128xf32>
    %659 = vector.shape_cast %658 : vector<1x128x128xf32> to vector<128x128xf32>
    %cst_576 = arith.constant dense<0.000000e+00> : vector<1x128xf32>
    %660 = tpu.matmul %657, %659, %cst_576 {dimension_numbers = #tpu.dot_dimension_numbers<[1], [0], [0], [1], [0, 0, 1, 1], [], []>} : vector<1x128xf32>, vector<128x128xf32>, vector<1x128xf32> -> vector<1x128xf32>
    %661 = arith.addf %655, %660 : vector<1x128xf32>
    %c1_577 = arith.constant 1 : index
    %c1_578 = arith.constant 1 : index
    %c0_579 = arith.constant 0 : index
    %662 = vector.load %arg11[%c1_577, %c1_578, %c0_579] : memref<4x4x128xf32, #tpu.memory_space<vmem>>, vector<1x1x128xf32>
    %663 = vector.shape_cast %662 : vector<1x1x128xf32> to vector<1x128xf32>
    %c5_580 = arith.constant 5 : index
    %c0_581 = arith.constant 0 : index
    %c0_582 = arith.constant 0 : index
    %664 = vector.load %arg6[%c5_580, %c0_581, %c0_582] : memref<16x128x128xf32, #tpu.memory_space<vmem>>, vector<1x128x128xf32>
    %665 = vector.shape_cast %664 : vector<1x128x128xf32> to vector<128x128xf32>
    %cst_583 = arith.constant dense<0.000000e+00> : vector<1x128xf32>
    %666 = tpu.matmul %663, %665, %cst_583 {dimension_numbers = #tpu.dot_dimension_numbers<[1], [0], [0], [1], [0, 0, 1, 1], [], []>} : vector<1x128xf32>, vector<128x128xf32>, vector<1x128xf32> -> vector<1x128xf32>
    %667 = arith.addf %661, %666 : vector<1x128xf32>
    %c1_584 = arith.constant 1 : index
    %c2_585 = arith.constant 2 : index
    %c0_586 = arith.constant 0 : index
    %668 = vector.load %arg11[%c1_584, %c2_585, %c0_586] : memref<4x4x128xf32, #tpu.memory_space<vmem>>, vector<1x1x128xf32>
    %669 = vector.shape_cast %668 : vector<1x1x128xf32> to vector<1x128xf32>
    %c6_587 = arith.constant 6 : index
    %c0_588 = arith.constant 0 : index
    %c0_589 = arith.constant 0 : index
    %670 = vector.load %arg6[%c6_587, %c0_588, %c0_589] : memref<16x128x128xf32, #tpu.memory_space<vmem>>, vector<1x128x128xf32>
    %671 = vector.shape_cast %670 : vector<1x128x128xf32> to vector<128x128xf32>
    %cst_590 = arith.constant dense<0.000000e+00> : vector<1x128xf32>
    %672 = tpu.matmul %669, %671, %cst_590 {dimension_numbers = #tpu.dot_dimension_numbers<[1], [0], [0], [1], [0, 0, 1, 1], [], []>} : vector<1x128xf32>, vector<128x128xf32>, vector<1x128xf32> -> vector<1x128xf32>
    %673 = arith.addf %667, %672 : vector<1x128xf32>
    %c1_591 = arith.constant 1 : index
    %c3_592 = arith.constant 3 : index
    %c0_593 = arith.constant 0 : index
    %674 = vector.load %arg11[%c1_591, %c3_592, %c0_593] : memref<4x4x128xf32, #tpu.memory_space<vmem>>, vector<1x1x128xf32>
    %675 = vector.shape_cast %674 : vector<1x1x128xf32> to vector<1x128xf32>
    %c7_594 = arith.constant 7 : index
    %c0_595 = arith.constant 0 : index
    %c0_596 = arith.constant 0 : index
    %676 = vector.load %arg6[%c7_594, %c0_595, %c0_596] : memref<16x128x128xf32, #tpu.memory_space<vmem>>, vector<1x128x128xf32>
    %677 = vector.shape_cast %676 : vector<1x128x128xf32> to vector<128x128xf32>
    %cst_597 = arith.constant dense<0.000000e+00> : vector<1x128xf32>
    %678 = tpu.matmul %675, %677, %cst_597 {dimension_numbers = #tpu.dot_dimension_numbers<[1], [0], [0], [1], [0, 0, 1, 1], [], []>} : vector<1x128xf32>, vector<128x128xf32>, vector<1x128xf32> -> vector<1x128xf32>
    %679 = arith.addf %673, %678 : vector<1x128xf32>
    %c2_598 = arith.constant 2 : index
    %c0_599 = arith.constant 0 : index
    %c0_600 = arith.constant 0 : index
    %680 = vector.load %arg11[%c2_598, %c0_599, %c0_600] : memref<4x4x128xf32, #tpu.memory_space<vmem>>, vector<1x1x128xf32>
    %681 = vector.shape_cast %680 : vector<1x1x128xf32> to vector<1x128xf32>
    %c8_601 = arith.constant 8 : index
    %c0_602 = arith.constant 0 : index
    %c0_603 = arith.constant 0 : index
    %682 = vector.load %arg6[%c8_601, %c0_602, %c0_603] : memref<16x128x128xf32, #tpu.memory_space<vmem>>, vector<1x128x128xf32>
    %683 = vector.shape_cast %682 : vector<1x128x128xf32> to vector<128x128xf32>
    %cst_604 = arith.constant dense<0.000000e+00> : vector<1x128xf32>
    %684 = tpu.matmul %681, %683, %cst_604 {dimension_numbers = #tpu.dot_dimension_numbers<[1], [0], [0], [1], [0, 0, 1, 1], [], []>} : vector<1x128xf32>, vector<128x128xf32>, vector<1x128xf32> -> vector<1x128xf32>
    %685 = arith.addf %679, %684 : vector<1x128xf32>
    %c2_605 = arith.constant 2 : index
    %c1_606 = arith.constant 1 : index
    %c0_607 = arith.constant 0 : index
    %686 = vector.load %arg11[%c2_605, %c1_606, %c0_607] : memref<4x4x128xf32, #tpu.memory_space<vmem>>, vector<1x1x128xf32>
    %687 = vector.shape_cast %686 : vector<1x1x128xf32> to vector<1x128xf32>
    %c9_608 = arith.constant 9 : index
    %c0_609 = arith.constant 0 : index
    %c0_610 = arith.constant 0 : index
    %688 = vector.load %arg6[%c9_608, %c0_609, %c0_610] : memref<16x128x128xf32, #tpu.memory_space<vmem>>, vector<1x128x128xf32>
    %689 = vector.shape_cast %688 : vector<1x128x128xf32> to vector<128x128xf32>
    %cst_611 = arith.constant dense<0.000000e+00> : vector<1x128xf32>
    %690 = tpu.matmul %687, %689, %cst_611 {dimension_numbers = #tpu.dot_dimension_numbers<[1], [0], [0], [1], [0, 0, 1, 1], [], []>} : vector<1x128xf32>, vector<128x128xf32>, vector<1x128xf32> -> vector<1x128xf32>
    %691 = arith.addf %685, %690 : vector<1x128xf32>
    %c2_612 = arith.constant 2 : index
    %c2_613 = arith.constant 2 : index
    %c0_614 = arith.constant 0 : index
    %692 = vector.load %arg11[%c2_612, %c2_613, %c0_614] : memref<4x4x128xf32, #tpu.memory_space<vmem>>, vector<1x1x128xf32>
    %693 = vector.shape_cast %692 : vector<1x1x128xf32> to vector<1x128xf32>
    %c10_615 = arith.constant 10 : index
    %c0_616 = arith.constant 0 : index
    %c0_617 = arith.constant 0 : index
    %694 = vector.load %arg6[%c10_615, %c0_616, %c0_617] : memref<16x128x128xf32, #tpu.memory_space<vmem>>, vector<1x128x128xf32>
    %695 = vector.shape_cast %694 : vector<1x128x128xf32> to vector<128x128xf32>
    %cst_618 = arith.constant dense<0.000000e+00> : vector<1x128xf32>
    %696 = tpu.matmul %693, %695, %cst_618 {dimension_numbers = #tpu.dot_dimension_numbers<[1], [0], [0], [1], [0, 0, 1, 1], [], []>} : vector<1x128xf32>, vector<128x128xf32>, vector<1x128xf32> -> vector<1x128xf32>
    %697 = arith.addf %691, %696 : vector<1x128xf32>
    %c2_619 = arith.constant 2 : index
    %c3_620 = arith.constant 3 : index
    %c0_621 = arith.constant 0 : index
    %698 = vector.load %arg11[%c2_619, %c3_620, %c0_621] : memref<4x4x128xf32, #tpu.memory_space<vmem>>, vector<1x1x128xf32>
    %699 = vector.shape_cast %698 : vector<1x1x128xf32> to vector<1x128xf32>
    %c11_622 = arith.constant 11 : index
    %c0_623 = arith.constant 0 : index
    %c0_624 = arith.constant 0 : index
    %700 = vector.load %arg6[%c11_622, %c0_623, %c0_624] : memref<16x128x128xf32, #tpu.memory_space<vmem>>, vector<1x128x128xf32>
    %701 = vector.shape_cast %700 : vector<1x128x128xf32> to vector<128x128xf32>
    %cst_625 = arith.constant dense<0.000000e+00> : vector<1x128xf32>
    %702 = tpu.matmul %699, %701, %cst_625 {dimension_numbers = #tpu.dot_dimension_numbers<[1], [0], [0], [1], [0, 0, 1, 1], [], []>} : vector<1x128xf32>, vector<128x128xf32>, vector<1x128xf32> -> vector<1x128xf32>
    %703 = arith.addf %697, %702 : vector<1x128xf32>
    %c3_626 = arith.constant 3 : index
    %c0_627 = arith.constant 0 : index
    %c0_628 = arith.constant 0 : index
    %704 = vector.load %arg11[%c3_626, %c0_627, %c0_628] : memref<4x4x128xf32, #tpu.memory_space<vmem>>, vector<1x1x128xf32>
    %705 = vector.shape_cast %704 : vector<1x1x128xf32> to vector<1x128xf32>
    %c12_629 = arith.constant 12 : index
    %c0_630 = arith.constant 0 : index
    %c0_631 = arith.constant 0 : index
    %706 = vector.load %arg6[%c12_629, %c0_630, %c0_631] : memref<16x128x128xf32, #tpu.memory_space<vmem>>, vector<1x128x128xf32>
    %707 = vector.shape_cast %706 : vector<1x128x128xf32> to vector<128x128xf32>
    %cst_632 = arith.constant dense<0.000000e+00> : vector<1x128xf32>
    %708 = tpu.matmul %705, %707, %cst_632 {dimension_numbers = #tpu.dot_dimension_numbers<[1], [0], [0], [1], [0, 0, 1, 1], [], []>} : vector<1x128xf32>, vector<128x128xf32>, vector<1x128xf32> -> vector<1x128xf32>
    %709 = arith.addf %703, %708 : vector<1x128xf32>
    %c3_633 = arith.constant 3 : index
    %c1_634 = arith.constant 1 : index
    %c0_635 = arith.constant 0 : index
    %710 = vector.load %arg11[%c3_633, %c1_634, %c0_635] : memref<4x4x128xf32, #tpu.memory_space<vmem>>, vector<1x1x128xf32>
    %711 = vector.shape_cast %710 : vector<1x1x128xf32> to vector<1x128xf32>
    %c13_636 = arith.constant 13 : index
    %c0_637 = arith.constant 0 : index
    %c0_638 = arith.constant 0 : index
    %712 = vector.load %arg6[%c13_636, %c0_637, %c0_638] : memref<16x128x128xf32, #tpu.memory_space<vmem>>, vector<1x128x128xf32>
    %713 = vector.shape_cast %712 : vector<1x128x128xf32> to vector<128x128xf32>
    %cst_639 = arith.constant dense<0.000000e+00> : vector<1x128xf32>
    %714 = tpu.matmul %711, %713, %cst_639 {dimension_numbers = #tpu.dot_dimension_numbers<[1], [0], [0], [1], [0, 0, 1, 1], [], []>} : vector<1x128xf32>, vector<128x128xf32>, vector<1x128xf32> -> vector<1x128xf32>
    %715 = arith.addf %709, %714 : vector<1x128xf32>
    %c3_640 = arith.constant 3 : index
    %c2_641 = arith.constant 2 : index
    %c0_642 = arith.constant 0 : index
    %716 = vector.load %arg11[%c3_640, %c2_641, %c0_642] : memref<4x4x128xf32, #tpu.memory_space<vmem>>, vector<1x1x128xf32>
    %717 = vector.shape_cast %716 : vector<1x1x128xf32> to vector<1x128xf32>
    %c14_643 = arith.constant 14 : index
    %c0_644 = arith.constant 0 : index
    %c0_645 = arith.constant 0 : index
    %718 = vector.load %arg6[%c14_643, %c0_644, %c0_645] : memref<16x128x128xf32, #tpu.memory_space<vmem>>, vector<1x128x128xf32>
    %719 = vector.shape_cast %718 : vector<1x128x128xf32> to vector<128x128xf32>
    %cst_646 = arith.constant dense<0.000000e+00> : vector<1x128xf32>
    %720 = tpu.matmul %717, %719, %cst_646 {dimension_numbers = #tpu.dot_dimension_numbers<[1], [0], [0], [1], [0, 0, 1, 1], [], []>} : vector<1x128xf32>, vector<128x128xf32>, vector<1x128xf32> -> vector<1x128xf32>
    %721 = arith.addf %715, %720 : vector<1x128xf32>
    %c3_647 = arith.constant 3 : index
    %c3_648 = arith.constant 3 : index
    %c0_649 = arith.constant 0 : index
    %722 = vector.load %arg11[%c3_647, %c3_648, %c0_649] : memref<4x4x128xf32, #tpu.memory_space<vmem>>, vector<1x1x128xf32>
    %723 = vector.shape_cast %722 : vector<1x1x128xf32> to vector<1x128xf32>
    %c15_650 = arith.constant 15 : index
    %c0_651 = arith.constant 0 : index
    %c0_652 = arith.constant 0 : index
    %724 = vector.load %arg6[%c15_650, %c0_651, %c0_652] : memref<16x128x128xf32, #tpu.memory_space<vmem>>, vector<1x128x128xf32>
    %725 = vector.shape_cast %724 : vector<1x128x128xf32> to vector<128x128xf32>
    %cst_653 = arith.constant dense<0.000000e+00> : vector<1x128xf32>
    %726 = tpu.matmul %723, %725, %cst_653 {dimension_numbers = #tpu.dot_dimension_numbers<[1], [0], [0], [1], [0, 0, 1, 1], [], []>} : vector<1x128xf32>, vector<128x128xf32>, vector<1x128xf32> -> vector<1x128xf32>
    %727 = arith.addf %721, %726 : vector<1x128xf32>
    %c0_654 = arith.constant 0 : index
    %c0_655 = arith.constant 0 : index
    %c0_656 = arith.constant 0 : index
    %728 = vector.load %arg8[%c0_654, %c0_655, %c0_656] : memref<1x1x128xf32, #tpu.memory_space<vmem>>, vector<1x1x128xf32>
    %729 = vector.shape_cast %728 : vector<1x1x128xf32> to vector<1x128xf32>
    %730 = vector.shape_cast %727 : vector<1x128xf32> to vector<1x1x128xf32>
    tpu.vector_store %arg8[%c0_654, %c0_655, %c0_656], %730 {strides = array<i32>} : memref<1x1x128xf32, #tpu.memory_space<vmem>>, vector<1x1x128xf32>,
    return
  }
  func.func @transform_0(%arg0: i32) -> (i32, i32, i32, i32) {
    %c0_i32 = arith.constant 0 : i32
    %c0_i32_0 = arith.constant 0 : i32
    %c0_i32_1 = arith.constant 0 : i32
    %c0_i32_2 = arith.constant 0 : i32
    return %arg0, %c0_i32, %c0_i32_0, %c0_i32_1 : i32, i32, i32, i32
  }
  func.func @transform_1(%arg0: i32) -> (i32, i32) {
    %c0_i32 = arith.constant 0 : i32
    %c0_i32_0 = arith.constant 0 : i32
    %c0_i32_1 = arith.constant 0 : i32
    return %c0_i32, %c0_i32_0 : i32, i32
  }
  func.func @transform_2(%arg0: i32) -> (i32, i32) {
    %c0_i32 = arith.constant 0 : i32
    %c0_i32_0 = arith.constant 0 : i32
    %c0_i32_1 = arith.constant 0 : i32
    return %c0_i32, %c0_i32_0 : i32, i32
  }
  func.func @transform_3(%arg0: i32) -> (i32, i32, i32) {
    %c0_i32 = arith.constant 0 : i32
    %c0_i32_0 = arith.constant 0 : i32
    %c0_i32_1 = arith.constant 0 : i32
    %c0_i32_2 = arith.constant 0 : i32
    return %c0_i32, %c0_i32_0, %c0_i32_1 : i32, i32, i32
  }
  func.func @transform_4(%arg0: i32) -> (i32, i32) {
    %c0_i32 = arith.constant 0 : i32
    %c0_i32_0 = arith.constant 0 : i32
    %c0_i32_1 = arith.constant 0 : i32
    return %c0_i32, %c0_i32_0 : i32, i32
  }
  func.func @transform_5(%arg0: i32) -> (i32, i32, i32) {
    %c0_i32 = arith.constant 0 : i32
    %c0_i32_0 = arith.constant 0 : i32
    %c0_i32_1 = arith.constant 0 : i32
    %c0_i32_2 = arith.constant 0 : i32
    return %c0_i32, %c0_i32_0, %c0_i32_1 : i32, i32, i32
  }
  func.func @transform_6(%arg0: i32) -> (i32, i32) {
    %c0_i32 = arith.constant 0 : i32
    %c0_i32_0 = arith.constant 0 : i32
    %c0_i32_1 = arith.constant 0 : i32
    return %c0_i32, %c0_i32_0 : i32, i32
  }
  func.func @transform_7(%arg0: i32) -> (i32, i32, i32) {
    %c0_i32 = arith.constant 0 : i32
    %c0_i32_0 = arith.constant 0 : i32
    %c0_i32_1 = arith.constant 0 : i32
    return %arg0, %c0_i32, %c0_i32_0 : i32, i32, i32
  }
}

</mosaic_0001>

<llo_original>
// kernel: fwd.1
$region0: #{fwd.1}
  #allocation0 [shape = 'u32[]', space=smem, size = 0x4, offset = 0x4, fixed_abs, tag = 'smem constant byte address 0x4 - core index']
  #allocation1 [shape = 'u32[144,128]{1,0:T(1,128)}', space=vmem, size = 0x12000, scoped, tag = 'internal scratch']
  #allocation2 [shape = 'f32[13,13,128]{2,1,0:T(8,128)}', space=vmem, size = 0x1a000, scoped, tag = 'scratch operand']
  #allocation3 [shape = 'f32[6,6,128]{2,1,0:T(8,128)}', space=vmem, size = 0x6000, scoped, tag = 'scratch operand']
  #allocation4 [shape = 'f32[4,4,128]{2,1,0:T(4,128)}', space=vmem, size = 0x2000, scoped, tag = 'scratch operand']
  #allocation5 [shape = 'f32[4,4,128]{2,1,0:T(4,128)}', space=vmem, size = 0x2000, scoped, tag = 'scratch operand']
  %s0 = inlined_call_operand.vmem [shape: f32[2,16,16,1], index: 0, kind: input, shape index: {}]
  %s1 = inlined_call_operand.vmem [shape: f32[16,128], index: 1, kind: input, shape index: {}]
  %s2 = inlined_call_operand.vmem [shape: f32[1,128], index: 2, kind: input, shape index: {}]
  %s3 = inlined_call_operand.hbm [shape: f32[9,128,128], index: 3, kind: input, shape index: {}]
  %s4 = inlined_call_operand.vmem [shape: f32[1,128], index: 4, kind: input, shape index: {}]
  %s5 = inlined_call_operand.hbm [shape: f32[16,128,128], index: 5, kind: input, shape index: {}]
  %s6 = inlined_call_operand.vmem [shape: f32[1,128], index: 6, kind: input, shape index: {}]
  %s7 = inlined_call_operand.hbm [shape: f32[2,1,128], index: 7, kind: output, shape index: {}]
  %s8 = sld [smem:[#allocation0]]
  $region69: #{fwd.1} parent=0
    _
  %s10 = ssub.s32 1, %s8
  %s11 = scalar_select 0, %s10, %s8
  $region1: #{fwd.1} parent=0
    #allocation6 [shape = 'u8[589824]{0}', space=vmem, size = 0x90000, scoped, tag = 'input window, operand 3, single buffered']
    #allocation7 [shape = 's32[2]{0}', space=sflag, size = 0x8, scoped, tag = 'scoped memory for fwd.1']
    #allocation8 [shape = 's32[2]{0}', space=sflag, size = 0x8, scoped, tag = 'scoped memory for fwd.1']
    #allocation9 [shape = 'u8[1048576]{0}', space=vmem, size = 0x100000, scoped, tag = 'input window, operand 5, single buffered']
    #allocation10 [shape = 's32[1]{0}', space=sflag, size = 0x4, scoped, tag = 'scoped memory for fwd.1']
    #allocation11 [shape = 'u8[1024]{0}', space=vmem, size = 0x400, scoped, tag = 'output window, operand 0']
    %12 = vsyncpa [#allocation7], 0
    %13 = vsyncpa [#allocation10], 0
    %14 = vsyncpa [#allocation8], 0
    %s15 = scalar_lea.sflag [#allocation8], 1
    %16 = vsyncpa %s15, 0
    loop: start=0, step=1, limit=4
    $region2: #{fwd.1} parent=1 // loop_pre_header
      _
    $region3: #{fwd.1} parent=1 // loop_header
      %s18 = sphi 0, %s22
      %p19 = scmp.ge.s32.totalorder %s18, 4
      %s28 = sphi 0, %s30
      %s31 = sphi 0, %s28
      %s32 = sphi 0, %s31
      %s48 = sphi 0, %s32
      %s52 = sphi 0, %s52
      %s54 = sphi 0, %s52
      %s55 = sphi 0, %s54
      %s69 = sphi 0, %s55
      %s73 = sphi 0, %s73
      %s75 = sphi 0, %s73
      %s76 = sphi 0, %s75
      %s90 = sphi 0, %s76
      %s94 = sphi 0, %s94
      %s96 = sphi 0, %s94
      %s97 = sphi 0, %s96
      %s111 = sphi 0, %s97
      %s115 = sphi 0, %s115
      %s117 = sphi 0, %s115
      %s118 = sphi 0, %s117
      %s132 = sphi 0, %s118
      %s136 = sphi 0, %s136
      %s138 = sphi 0, %s136
      %s139 = sphi 0, %s138
      %s153 = sphi 0, %s139
      %s157 = sphi 0, %s157
      %s159 = sphi 0, %s157
      %s160 = sphi 0, %s159
      %s174 = sphi 0, %s160
      %s180 = sphi 0, %s182
      %s183 = sphi 0, %s180
      %s184 = sphi 0, %s183
      %s200 = sphi 0, %s184
    $region4: #{fwd.1} parent=1 // loop_header_branch
      %21 = sbr.rel (%p19) target = $region8
    $region5: #{fwd.1} parent=1 // loop_body
      %s23 = ssub.s32 %s18, 1
      %s24 = ssub.s32 %s18, 2
      %s25 = sadd.s32 %s18, 1
      %s26 = ssub.s32 %s18, %s25
      %p27 = scmp.eq.s32.totalorder %s26, 0
      %s29 = sadd.s32 %s28, 1
      %s30 = scalar_select %p27, %s28, %s29
      %p33 = pneg %p27
      %p34 = scmp.eq.s32.totalorder %s18, 1
      %p35 = por %p33, %p34
      %p36 = scmp.ne.s32.totalorder %s28, %s31
      %p37 = scmp.eq.s32.totalorder %s18, 0
      %p38 = por %p36, %p37
      %p39 = scmp.ne.s32.totalorder %s28, %s31
      %p40 = scmp.eq.s32.totalorder %s23, 1
      %p41 = por %p39, %p40
      %p42 = scmp.ne.s32.totalorder %s31, %s32
      %p43 = scmp.eq.s32.totalorder %s23, 0
      %p44 = por %p42, %p43
      %p45 = scmp.ne.s32.totalorder %s31, %s32
      %p46 = scmp.eq.s32.totalorder %s24, 1
      %p47 = por %p45, %p46
      %p49 = scmp.ne.s32.totalorder %s32, %s48
      %p50 = scmp.eq.s32.totalorder %s24, 0
      %p51 = por %p49, %p50
      %s53 = sadd.s32 %s52, 1
      %p56 = scmp.eq.s32.totalorder %s18, 1
      %p57 = scmp.ne.s32.totalorder %s52, %s54
      %p58 = scmp.eq.s32.totalorder %s18, 0
      %p59 = por %p57, %p58
      %p60 = scmp.ne.s32.totalorder %s52, %s54
      %p61 = scmp.eq.s32.totalorder %s23, 1
      %p62 = por %p60, %p61
      %p63 = scmp.ne.s32.totalorder %s54, %s55
      %p64 = scmp.eq.s32.totalorder %s23, 0
      %p65 = por %p63, %p64
      %p66 = scmp.ne.s32.totalorder %s54, %s55
      %p67 = scmp.eq.s32.totalorder %s24, 1
      %p68 = por %p66, %p67
      %p70 = scmp.ne.s32.totalorder %s55, %s69
      %p71 = scmp.eq.s32.totalorder %s24, 0
      %p72 = por %p70, %p71
      %s74 = sadd.s32 %s73, 1
      %p77 = scmp.eq.s32.totalorder %s18, 1
      %p78 = scmp.ne.s32.totalorder %s73, %s75
      %p79 = scmp.eq.s32.totalorder %s18, 0
      %p80 = por %p78, %p79
      %p81 = scmp.ne.s32.totalorder %s73, %s75
      %p82 = scmp.eq.s32.totalorder %s23, 1
      %p83 = por %p81, %p82
      %p84 = scmp.ne.s32.totalorder %s75, %s76
      %p85 = scmp.eq.s32.totalorder %s23, 0
      %p86 = por %p84, %p85
      %p87 = scmp.ne.s32.totalorder %s75, %s76
      %p88 = scmp.eq.s32.totalorder %s24, 1
      %p89 = por %p87, %p88
      %p91 = scmp.ne.s32.totalorder %s76, %s90
      %p92 = scmp.eq.s32.totalorder %s24, 0
      %p93 = por %p91, %p92
      %s95 = sadd.s32 %s94, 1
      %p98 = scmp.eq.s32.totalorder %s18, 1
      %p99 = scmp.ne.s32.totalorder %s94, %s96
      %p100 = scmp.eq.s32.totalorder %s18, 0
      %p101 = por %p99, %p100
      %p102 = scmp.ne.s32.totalorder %s94, %s96
      %p103 = scmp.eq.s32.totalorder %s23, 1
      %p104 = por %p102, %p103
      %p105 = scmp.ne.s32.totalorder %s96, %s97
      %p106 = scmp.eq.s32.totalorder %s23, 0
      %p107 = por %p105, %p106
      %p108 = scmp.ne.s32.totalorder %s96, %s97
      %p109 = scmp.eq.s32.totalorder %s24, 1
      %p110 = por %p108, %p109
      %p112 = scmp.ne.s32.totalorder %s97, %s111
      %p113 = scmp.eq.s32.totalorder %s24, 0
      %p114 = por %p112, %p113
      %s116 = sadd.s32 %s115, 1
      %p119 = scmp.eq.s32.totalorder %s18, 1
      %p120 = scmp.ne.s32.totalorder %s115, %s117
      %p121 = scmp.eq.s32.totalorder %s18, 0
      %p122 = por %p120, %p121
      %p123 = scmp.ne.s32.totalorder %s115, %s117
      %p124 = scmp.eq.s32.totalorder %s23, 1
      %p125 = por %p123, %p124
      %p126 = scmp.ne.s32.totalorder %s117, %s118
      %p127 = scmp.eq.s32.totalorder %s23, 0
      %p128 = por %p126, %p127
      %p129 = scmp.ne.s32.totalorder %s117, %s118
      %p130 = scmp.eq.s32.totalorder %s24, 1
      %p131 = por %p129, %p130
      %p133 = scmp.ne.s32.totalorder %s118, %s132
      %p134 = scmp.eq.s32.totalorder %s24, 0
      %p135 = por %p133, %p134
      %s137 = sadd.s32 %s136, 1
      %p140 = scmp.eq.s32.totalorder %s18, 1
      %p141 = scmp.ne.s32.totalorder %s136, %s138
      %p142 = scmp.eq.s32.totalorder %s18, 0
      %p143 = por %p141, %p142
      %p144 = scmp.ne.s32.totalorder %s136, %s138
      %p145 = scmp.eq.s32.totalorder %s23, 1
      %p146 = por %p144, %p145
      %p147 = scmp.ne.s32.totalorder %s138, %s139
      %p148 = scmp.eq.s32.totalorder %s23, 0
      %p149 = por %p147, %p148
      %p150 = scmp.ne.s32.totalorder %s138, %s139
      %p151 = scmp.eq.s32.totalorder %s24, 1
      %p152 = por %p150, %p151
      %p154 = scmp.ne.s32.totalorder %s139, %s153
      %p155 = scmp.eq.s32.totalorder %s24, 0
      %p156 = por %p154, %p155
      %s158 = sadd.s32 %s157, 1
      %p161 = scmp.eq.s32.totalorder %s18, 1
      %p162 = scmp.ne.s32.totalorder %s157, %s159
      %p163 = scmp.eq.s32.totalorder %s18, 0
      %p164 = por %p162, %p163
      %p165 = scmp.ne.s32.totalorder %s157, %s159
      %p166 = scmp.eq.s32.totalorder %s23, 1
      %p167 = por %p165, %p166
      %p168 = scmp.ne.s32.totalorder %s159, %s160
      %p169 = scmp.eq.s32.totalorder %s23, 0
      %p170 = por %p168, %p169
      %p171 = scmp.ne.s32.totalorder %s159, %s160
      %p172 = scmp.eq.s32.totalorder %s24, 1
      %p173 = por %p171, %p172
      %p175 = scmp.ne.s32.totalorder %s160, %s174
      %p176 = scmp.eq.s32.totalorder %s24, 0
      %p177 = por %p175, %p176
      %s178 = ssub.s32 %s18, %s25
      %p179 = scmp.eq.s32.totalorder %s178, 0
      %s181 = sadd.s32 %s180, 1
      %s182 = scalar_select %p179, %s180, %s181
      %p185 = pneg %p179
      %p186 = scmp.eq.s32.totalorder %s18, 1
      %p187 = por %p185, %p186
      %p188 = scmp.ne.s32.totalorder %s180, %s183
      %p189 = scmp.eq.s32.totalorder %s18, 0
      %p190 = por %p188, %p189
      %p191 = scmp.ne.s32.totalorder %s180, %s183
      %p192 = scmp.eq.s32.totalorder %s23, 1
      %p193 = por %p191, %p192
      %p194 = scmp.ne.s32.totalorder %s183, %s184
      %p195 = scmp.eq.s32.totalorder %s23, 0
      %p196 = por %p194, %p195
      %p197 = scmp.ne.s32.totalorder %s183, %s184
      %p198 = scmp.eq.s32.totalorder %s24, 1
      %p199 = por %p197, %p198
      %p201 = scmp.ne.s32.totalorder %s184, %s200
      %p202 = scmp.eq.s32.totalorder %s24, 0
      %p203 = por %p201, %p202
      %p204 = scmp.le.s32.totalorder 1, %s18
      %p205 = scmp.lt.s32.totalorder %s18, 3
      %p206 = pnand %p204, %p205
      %p207 = pneg %p206
      // Predicated region
      $region9: #{fwd.1} parent=5 // pred_check
        _
      $region10: #{fwd.1} parent=5 // pred_check_branch
        %209 = sbr.rel (%p206) target = $region12
      $region11: #{fwd.1} parent=5 // pred_region
        %s210 = ssub.s32 %s18, 1
        // Predicated region
        $region13: #{fwd.1} parent=11 // pred_check
          %p211 = pneg %p65
        $region14: #{fwd.1} parent=11 // pred_check_branch
          %213 = sbr.rel (%p211) target = $region16
        $region15: #{fwd.1} parent=11 // pred_region
          _
        $region16: #{fwd.1} parent=11 // pred_fallthru
          _
        // Predicated region
        $region17: #{fwd.1} parent=11 // pred_check
          %p214 = pneg %p86
        $region18: #{fwd.1} parent=11 // pred_check_branch
          %216 = sbr.rel (%p214) target = $region20
        $region19: #{fwd.1} parent=11 // pred_region
          _
        $region20: #{fwd.1} parent=11 // pred_fallthru
          _
        // Predicated region
        $region21: #{fwd.1} parent=11 // pred_check
          %p217 = pneg %p107
        $region22: #{fwd.1} parent=11 // pred_check_branch
          %219 = sbr.rel (%p217) target = $region24
        $region23: #{fwd.1} parent=11 // pred_region
          %s221 = ssub.s32 18432, 18432
          %222 = vsyncadd [#allocation7], %s221
          %s223 = sshll.u32 [#allocation6], 4
          %s224 = int_to_ptr.vmem [resolvable:$true] %s223
          %229 = dma.hbm_to_vmem [thread:$0]  %s3, 18432, %s224, [#allocation7], 128, 128, 8
        $region24: #{fwd.1} parent=11 // pred_fallthru
          _
        // Predicated region
        $region25: #{fwd.1} parent=11 // pred_check
          %p230 = pneg %p128
        $region26: #{fwd.1} parent=11 // pred_check_branch
          %232 = sbr.rel (%p230) target = $region28
        $region27: #{fwd.1} parent=11 // pred_region
          _
        $region28: #{fwd.1} parent=11 // pred_fallthru
          _
        // Predicated region
        $region29: #{fwd.1} parent=11 // pred_check
          %p233 = pneg %p149
        $region30: #{fwd.1} parent=11 // pred_check_branch
          %235 = sbr.rel (%p233) target = $region32
        $region31: #{fwd.1} parent=11 // pred_region
          %s237 = ssub.s32 32768, 32768
          %238 = vsyncadd [#allocation10], %s237
          %s239 = sshll.u32 [#allocation9], 4
          %s240 = int_to_ptr.vmem [resolvable:$true] %s239
          %245 = dma.hbm_to_vmem [thread:$0]  %s5, 32768, %s240, [#allocation10], 128, 128, 8
        $region32: #{fwd.1} parent=11 // pred_fallthru
          _
        // Predicated region
        $region33: #{fwd.1} parent=11 // pred_check
          %p246 = pneg %p170
        $region34: #{fwd.1} parent=11 // pred_check_branch
          %248 = sbr.rel (%p246) target = $region36
        $region35: #{fwd.1} parent=11 // pred_region
          _
        $region36: #{fwd.1} parent=11 // pred_fallthru
          _
      $region12: #{fwd.1} parent=5 // pred_fallthru
        _
      %p249 = scmp.lt.s32.totalorder %s18, 2
      // Predicated region
      $region37: #{fwd.1} parent=5 // pred_check
        %p250 = pneg %p249
      $region38: #{fwd.1} parent=5 // pred_check_branch
        %252 = sbr.rel (%p250) target = $region40
      $region39: #{fwd.1} parent=5 // pred_region
        // Predicated region
        $region41: #{fwd.1} parent=39 // pred_check
          %p253 = pneg %p38
        $region42: #{fwd.1} parent=39 // pred_check_branch
          %255 = sbr.rel (%p253) target = $region44
        $region43: #{fwd.1} parent=39 // pred_region
          %p256 = scmp.lt.s32.totalorder %s18, 1
          %s257 = scalar_select %p256, %s18, 1
          %s258 = smul.addr %s257, 32
          %s259 = smul.addr %s258, 8
          %s260 = scalar_lea.vmem %s0, %s259
        $region44: #{fwd.1} parent=39 // pred_fallthru
          _
      $region40: #{fwd.1} parent=5 // pred_fallthru
        _
      %p261 = scmp.le.s32.totalorder 1, %s18
      %p262 = scmp.lt.s32.totalorder %s18, 3
      %p263 = pnand %p261, %p262
      %p264 = pneg %p263
      // Predicated region
      $region45: #{fwd.1} parent=5 // pred_check
        _
      $region46: #{fwd.1} parent=5 // pred_check_branch
        %266 = sbr.rel (%p263) target = $region48
      $region47: #{fwd.1} parent=5 // pred_region
        %s267 = ssub.s32 %s18, 1
        // Predicated region
        $region49: #{fwd.1} parent=47 // pred_check
          %p268 = pneg %p107
        $region50: #{fwd.1} parent=47 // pred_check_branch
          %270 = sbr.rel (%p268) target = $region52
        $region51: #{fwd.1} parent=47 // pred_region
          %271 = dma.done [#allocation7], 18432
        $region52: #{fwd.1} parent=47 // pred_fallthru
          _
        // Predicated region
        $region53: #{fwd.1} parent=47 // pred_check
          %p272 = pneg %p149
        $region54: #{fwd.1} parent=47 // pred_check_branch
          %274 = sbr.rel (%p272) target = $region56
        $region55: #{fwd.1} parent=47 // pred_region
          %275 = dma.done [#allocation10], 32768
        $region56: #{fwd.1} parent=47 // pred_fallthru
          _
        %p276 = scmp.lt.s32.totalorder %s23, 1
        %s277 = scalar_select %p276, %s23, 1
        %s278 = smul.addr %s277, 32
        %s279 = smul.addr %s278, 8
        %s280 = scalar_lea.vmem %s0, %s279
        %p281 = pneg %p44
        %p282 = pneg %p41
        %p283 = pneg %p65
        %p284 = pneg %p62
        %p285 = pneg %p86
        %p286 = pneg %p83
        %p287 = pneg %p107
        %p288 = pneg %p104
        %p289 = pneg %p128
        %p290 = pneg %p125
        %p291 = pneg %p149
        %p292 = pneg %p146
        %p293 = pneg %p170
        %p294 = pneg %p167
        %p295 = pneg %p196
        %p296 = pneg %p193
        %s297 = sand.u32 %s183, 1
        %s298 = scalar_lea.sflag [#allocation8], %s297
        %s299 = sand.u32 %s183, 1
        %s300 = scalar_lea.vmem [#allocation11], %s299
        %p301 = scmp.lt.s32.totalorder %s23, 1
        %s302 = scalar_select %p301, %s23, 1
        %s303 = smul.addr %s302, 32
        %s304 = smul.addr %s303, 8
        %s305 = scalar_lea.vmem %s0, %s304
        %v306 = vld [vmem:[%s305] sm:$0xff]
        %v307 = vld [vmem:[%s305 + $0x8] sm:$0x1f]
        %v308 = vld [vmem:[%s305 + $0x10] sm:$0xff]
        %v309 = vld [vmem:[%s305 + $0x18] sm:$0x1f]
        %v310 = vld [vmem:[%s305 + $0x20] sm:$0xff]
        %v311 = vld [vmem:[%s305 + $0x28] sm:$0x1f]
        %v312 = vld [vmem:[%s305 + $0x30] sm:$0xff]
        %v313 = vld [vmem:[%s305 + $0x38] sm:$0x1f]
        %v314 = vld [vmem:[%s305 + $0x40] sm:$0xff]
        %v315 = vld [vmem:[%s305 + $0x48] sm:$0x1f]
        %v316 = vld [vmem:[%s305 + $0x50] sm:$0xff]
        %v317 = vld [vmem:[%s305 + $0x58] sm:$0x1f]
        %v318 = vld [vmem:[%s305 + $0x60] sm:$0xff]
        %v319 = vld [vmem:[%s305 + $0x68] sm:$0x1f]
        %v320 = vld [vmem:[%s305 + $0x70] sm:$0xff]
        %v321 = vld [vmem:[%s305 + $0x78] sm:$0x1f]
        %v322 = vld [vmem:[%s305 + $0x80] sm:$0xff]
        %v323 = vld [vmem:[%s305 + $0x88] sm:$0x1f]
        %v324 = vld [vmem:[%s305 + $0x90] sm:$0xff]
        %v325 = vld [vmem:[%s305 + $0x98] sm:$0x1f]
        %v326 = vld [vmem:[%s305 + $0xa0] sm:$0xff]
        %v327 = vld [vmem:[%s305 + $0xa8] sm:$0x1f]
        %v328 = vld [vmem:[%s305 + $0xb0] sm:$0xff]
        %v329 = vld [vmem:[%s305 + $0xb8] sm:$0x1f]
        %v330 = vld [vmem:[%s305 + $0xc0] sm:$0xff]
        %v331 = vld [vmem:[%s305 + $0xc8] sm:$0x1f]
        %v332 = vld [vmem:[%s1] sm:$0x1]
        %334 = vset.pattern.permute.xlu0 0
        %335 = vperm.xlu0 %334, %v306
        %v336 = vpop.permute.xlu0 %335
        %339 = vset.pattern.permute.xlu0 0
        %340 = vperm.xlu0 %339, %v307
        %v341 = vpop.permute.xlu0 %340
        %344 = vset.pattern.permute.xlu0 0
        %345 = vperm.xlu0 %344, %v308
        %v346 = vpop.permute.xlu0 %345
        %349 = vset.pattern.permute.xlu0 0
        %350 = vperm.xlu0 %349, %v309
        %v351 = vpop.permute.xlu0 %350
        %354 = vset.pattern.permute.xlu0 0
        %355 = vperm.xlu0 %354, %v310
        %v356 = vpop.permute.xlu0 %355
        %359 = vset.pattern.permute.xlu0 0
        %360 = vperm.xlu0 %359, %v311
        %v361 = vpop.permute.xlu0 %360
        %364 = vset.pattern.permute.xlu0 0
        %365 = vperm.xlu0 %364, %v312
        %v366 = vpop.permute.xlu0 %365
        %369 = vset.pattern.permute.xlu0 0
        %370 = vperm.xlu0 %369, %v313
        %v371 = vpop.permute.xlu0 %370
        %374 = vset.pattern.permute.xlu0 0
        %375 = vperm.xlu0 %374, %v314
        %v376 = vpop.permute.xlu0 %375
        %379 = vset.pattern.permute.xlu0 0
        %380 = vperm.xlu0 %379, %v315
        %v381 = vpop.permute.xlu0 %380
        %384 = vset.pattern.permute.xlu0 0
        %385 = vperm.xlu0 %384, %v316
        %v386 = vpop.permute.xlu0 %385
        %389 = vset.pattern.permute.xlu0 0
        %390 = vperm.xlu0 %389, %v317
        %v391 = vpop.permute.xlu0 %390
        %394 = vset.pattern.permute.xlu0 0
        %395 = vperm.xlu0 %394, %v318
        %v396 = vpop.permute.xlu0 %395
        %399 = vset.pattern.permute.xlu0 0
        %400 = vperm.xlu0 %399, %v319
        %v401 = vpop.permute.xlu0 %400
        %404 = vset.pattern.permute.xlu0 0
        %405 = vperm.xlu0 %404, %v320
        %v406 = vpop.permute.xlu0 %405
        %409 = vset.pattern.permute.xlu0 0
        %410 = vperm.xlu0 %409, %v321
        %v411 = vpop.permute.xlu0 %410
        %414 = vset.pattern.permute.xlu0 0
        %415 = vperm.xlu0 %414, %v322
        %v416 = vpop.permute.xlu0 %415
        %419 = vset.pattern.permute.xlu0 0
        %420 = vperm.xlu0 %419, %v323
        %v421 = vpop.permute.xlu0 %420
        %424 = vset.pattern.permute.xlu0 0
        %425 = vperm.xlu0 %424, %v324
        %v426 = vpop.permute.xlu0 %425
        %429 = vset.pattern.permute.xlu0 0
        %430 = vperm.xlu0 %429, %v325
        %v431 = vpop.permute.xlu0 %430
        %434 = vset.pattern.permute.xlu0 0
        %435 = vperm.xlu0 %434, %v326
        %v436 = vpop.permute.xlu0 %435
        %439 = vset.pattern.permute.xlu0 0
        %440 = vperm.xlu0 %439, %v327
        %v441 = vpop.permute.xlu0 %440
        %444 = vset.pattern.permute.xlu0 0
        %445 = vperm.xlu0 %444, %v328
        %v446 = vpop.permute.xlu0 %445
        %449 = vset.pattern.permute.xlu0 0
        %450 = vperm.xlu0 %449, %v329
        %v451 = vpop.permute.xlu0 %450
        %454 = vset.pattern.permute.xlu0 0
        %455 = vperm.xlu0 %454, %v330
        %v456 = vpop.permute.xlu0 %455
        %459 = vset.pattern.permute.xlu0 0
        %460 = vperm.xlu0 %459, %v331
        %v461 = vpop.permute.xlu0 %460
        %v463 = vlaneseq
        %v464 = vshrl.u32 %v463, 7
        %v465 = vsub.s32 0, %v464
        %v466 = vrot.slane %v332, %v465
        %v467 = vmul.f32 %v336, %v466
        %v468 = vmul.f32 %v341, %v466
        %v469 = vmul.f32 %v346, %v466
        %v470 = vmul.f32 %v351, %v466
        %v471 = vmul.f32 %v356, %v466
        %v472 = vmul.f32 %v361, %v466
        %v473 = vmul.f32 %v366, %v466
        %v474 = vmul.f32 %v371, %v466
        %v475 = vmul.f32 %v376, %v466
        %v476 = vmul.f32 %v381, %v466
        %v477 = vmul.f32 %v386, %v466
        %v478 = vmul.f32 %v391, %v466
        %v479 = vmul.f32 %v396, %v466
        %v480 = vmul.f32 %v401, %v466
        %v481 = vmul.f32 %v406, %v466
        %v482 = vmul.f32 %v411, %v466
        %v483 = vmul.f32 %v416, %v466
        %v484 = vmul.f32 %v421, %v466
        %v485 = vmul.f32 %v426, %v466
        %v486 = vmul.f32 %v431, %v466
        %v487 = vmul.f32 %v436, %v466
        %v488 = vmul.f32 %v441, %v466
        %v489 = vmul.f32 %v446, %v466
        %v490 = vmul.f32 %v451, %v466
        %v491 = vmul.f32 %v456, %v466
        %v492 = vmul.f32 %v461, %v466
        %v493 = vadd.f32 %v467, 0.0
        %v494 = vadd.f32 %v468, 0.0
        %v495 = vadd.f32 %v469, 0.0
        %v496 = vadd.f32 %v470, 0.0
        %v497 = vadd.f32 %v471, 0.0
        %v498 = vadd.f32 %v472, 0.0
        %v499 = vadd.f32 %v473, 0.0
        %v500 = vadd.f32 %v474, 0.0
        %v501 = vadd.f32 %v475, 0.0
        %v502 = vadd.f32 %v476, 0.0
        %v503 = vadd.f32 %v477, 0.0
        %v504 = vadd.f32 %v478, 0.0
        %v505 = vadd.f32 %v479, 0.0
        %v506 = vadd.f32 %v480, 0.0
        %v507 = vadd.f32 %v481, 0.0
        %v508 = vadd.f32 %v482, 0.0
        %v509 = vadd.f32 %v483, 0.0
        %v510 = vadd.f32 %v484, 0.0
        %v511 = vadd.f32 %v485, 0.0
        %v512 = vadd.f32 %v486, 0.0
        %v513 = vadd.f32 %v487, 0.0
        %v514 = vadd.f32 %v488, 0.0
        %v515 = vadd.f32 %v489, 0.0
        %v516 = vadd.f32 %v490, 0.0
        %v517 = vadd.f32 %v491, 0.0
        %v518 = vadd.f32 %v492, 0.0
        %v519 = vld [vmem:[%s305 + $0x1] sm:$0xff]
        %v520 = vld [vmem:[%s305 + $0x9] sm:$0x1f]
        %v521 = vld [vmem:[%s305 + $0x11] sm:$0xff]
        %v522 = vld [vmem:[%s305 + $0x19] sm:$0x1f]
        %v523 = vld [vmem:[%s305 + $0x21] sm:$0xff]
        %v524 = vld [vmem:[%s305 + $0x29] sm:$0x1f]
        %v525 = vld [vmem:[%s305 + $0x31] sm:$0xff]
        %v526 = vld [vmem:[%s305 + $0x39] sm:$0x1f]
        %v527 = vld [vmem:[%s305 + $0x41] sm:$0xff]
        %v528 = vld [vmem:[%s305 + $0x49] sm:$0x1f]
        %v529 = vld [vmem:[%s305 + $0x51] sm:$0xff]
        %v530 = vld [vmem:[%s305 + $0x59] sm:$0x1f]
        %v531 = vld [vmem:[%s305 + $0x61] sm:$0xff]
        %v532 = vld [vmem:[%s305 + $0x69] sm:$0x1f]
        %v533 = vld [vmem:[%s305 + $0x71] sm:$0xff]
        %v534 = vld [vmem:[%s305 + $0x79] sm:$0x1f]
        %v535 = vld [vmem:[%s305 + $0x81] sm:$0xff]
        %v536 = vld [vmem:[%s305 + $0x89] sm:$0x1f]
        %v537 = vld [vmem:[%s305 + $0x91] sm:$0xff]
        %v538 = vld [vmem:[%s305 + $0x99] sm:$0x1f]
        %v539 = vld [vmem:[%s305 + $0xa1] sm:$0xff]
        %v540 = vld [vmem:[%s305 + $0xa9] sm:$0x1f]
        %v541 = vld [vmem:[%s305 + $0xb1] sm:$0xff]
        %v542 = vld [vmem:[%s305 + $0xb9] sm:$0x1f]
        %v543 = vld [vmem:[%s305 + $0xc1] sm:$0xff]
        %v544 = vld [vmem:[%s305 + $0xc9] sm:$0x1f]
        %v545 = vld [vmem:[%s1 + $0x1] sm:$0x1]
        %547 = vset.pattern.permute.xlu0 0
        %548 = vperm.xlu0 %547, %v519
        %v549 = vpop.permute.xlu0 %548
        %552 = vset.pattern.permute.xlu0 0
        %553 = vperm.xlu0 %552, %v520
        %v554 = vpop.permute.xlu0 %553
        %557 = vset.pattern.permute.xlu0 0
        %558 = vperm.xlu0 %557, %v521
        %v559 = vpop.permute.xlu0 %558
        %562 = vset.pattern.permute.xlu0 0
        %563 = vperm.xlu0 %562, %v522
        %v564 = vpop.permute.xlu0 %563
        %567 = vset.pattern.permute.xlu0 0
        %568 = vperm.xlu0 %567, %v523
        %v569 = vpop.permute.xlu0 %568
        %572 = vset.pattern.permute.xlu0 0
        %573 = vperm.xlu0 %572, %v524
        %v574 = vpop.permute.xlu0 %573
        %577 = vset.pattern.permute.xlu0 0
        %578 = vperm.xlu0 %577, %v525
        %v579 = vpop.permute.xlu0 %578
        %582 = vset.pattern.permute.xlu0 0
        %583 = vperm.xlu0 %582, %v526
        %v584 = vpop.permute.xlu0 %583
        %587 = vset.pattern.permute.xlu0 0
        %588 = vperm.xlu0 %587, %v527
        %v589 = vpop.permute.xlu0 %588
        %592 = vset.pattern.permute.xlu0 0
        %593 = vperm.xlu0 %592, %v528
        %v594 = vpop.permute.xlu0 %593
        %597 = vset.pattern.permute.xlu0 0
        %598 = vperm.xlu0 %597, %v529
        %v599 = vpop.permute.xlu0 %598
        %602 = vset.pattern.permute.xlu0 0
        %603 = vperm.xlu0 %602, %v530
        %v604 = vpop.permute.xlu0 %603
        %607 = vset.pattern.permute.xlu0 0
        %608 = vperm.xlu0 %607, %v531
        %v609 = vpop.permute.xlu0 %608
        %612 = vset.pattern.permute.xlu0 0
        %613 = vperm.xlu0 %612, %v532
        %v614 = vpop.permute.xlu0 %613
        %617 = vset.pattern.permute.xlu0 0
        %618 = vperm.xlu0 %617, %v533
        %v619 = vpop.permute.xlu0 %618
        %622 = vset.pattern.permute.xlu0 0
        %623 = vperm.xlu0 %622, %v534
        %v624 = vpop.permute.xlu0 %623
        %627 = vset.pattern.permute.xlu0 0
        %628 = vperm.xlu0 %627, %v535
        %v629 = vpop.permute.xlu0 %628
        %632 = vset.pattern.permute.xlu0 0
        %633 = vperm.xlu0 %632, %v536
        %v634 = vpop.permute.xlu0 %633
        %637 = vset.pattern.permute.xlu0 0
        %638 = vperm.xlu0 %637, %v537
        %v639 = vpop.permute.xlu0 %638
        %642 = vset.pattern.permute.xlu0 0
        %643 = vperm.xlu0 %642, %v538
        %v644 = vpop.permute.xlu0 %643
        %647 = vset.pattern.permute.xlu0 0
        %648 = vperm.xlu0 %647, %v539
        %v649 = vpop.permute.xlu0 %648
        %652 = vset.pattern.permute.xlu0 0
        %653 = vperm.xlu0 %652, %v540
        %v654 = vpop.permute.xlu0 %653
        %657 = vset.pattern.permute.xlu0 0
        %658 = vperm.xlu0 %657, %v541
        %v659 = vpop.permute.xlu0 %658
        %662 = vset.pattern.permute.xlu0 0
        %663 = vperm.xlu0 %662, %v542
        %v664 = vpop.permute.xlu0 %663
        %667 = vset.pattern.permute.xlu0 0
        %668 = vperm.xlu0 %667, %v543
        %v669 = vpop.permute.xlu0 %668
        %672 = vset.pattern.permute.xlu0 0
        %673 = vperm.xlu0 %672, %v544
        %v674 = vpop.permute.xlu0 %673
        %v676 = vlaneseq
        %v677 = vshrl.u32 %v676, 7
        %v678 = vsub.s32 0, %v677
        %v679 = vrot.slane %v545, %v678
        %v680 = vmul.f32 %v549, %v679
        %v681 = vmul.f32 %v554, %v679
        %v682 = vmul.f32 %v559, %v679
        %v683 = vmul.f32 %v564, %v679
        %v684 = vmul.f32 %v569, %v679
        %v685 = vmul.f32 %v574, %v679
        %v686 = vmul.f32 %v579, %v679
        %v687 = vmul.f32 %v584, %v679
        %v688 = vmul.f32 %v589, %v679
        %v689 = vmul.f32 %v594, %v679
        %v690 = vmul.f32 %v599, %v679
        %v691 = vmul.f32 %v604, %v679
        %v692 = vmul.f32 %v609, %v679
        %v693 = vmul.f32 %v614, %v679
        %v694 = vmul.f32 %v619, %v679
        %v695 = vmul.f32 %v624, %v679
        %v696 = vmul.f32 %v629, %v679
        %v697 = vmul.f32 %v634, %v679
        %v698 = vmul.f32 %v639, %v679
        %v699 = vmul.f32 %v644, %v679
        %v700 = vmul.f32 %v649, %v679
        %v701 = vmul.f32 %v654, %v679
        %v702 = vmul.f32 %v659, %v679
        %v703 = vmul.f32 %v664, %v679
        %v704 = vmul.f32 %v669, %v679
        %v705 = vmul.f32 %v674, %v679
        %v706 = vadd.f32 %v493, %v680
        %v707 = vadd.f32 %v494, %v681
        %v708 = vadd.f32 %v495, %v682
        %v709 = vadd.f32 %v496, %v683
        %v710 = vadd.f32 %v497, %v684
        %v711 = vadd.f32 %v498, %v685
        %v712 = vadd.f32 %v499, %v686
        %v713 = vadd.f32 %v500, %v687
        %v714 = vadd.f32 %v501, %v688
        %v715 = vadd.f32 %v502, %v689
        %v716 = vadd.f32 %v503, %v690
        %v717 = vadd.f32 %v504, %v691
        %v718 = vadd.f32 %v505, %v692
        %v719 = vadd.f32 %v506, %v693
        %v720 = vadd.f32 %v507, %v694
        %v721 = vadd.f32 %v508, %v695
        %v722 = vadd.f32 %v509, %v696
        %v723 = vadd.f32 %v510, %v697
        %v724 = vadd.f32 %v511, %v698
        %v725 = vadd.f32 %v512, %v699
        %v726 = vadd.f32 %v513, %v700
        %v727 = vadd.f32 %v514, %v701
        %v728 = vadd.f32 %v515, %v702
        %v729 = vadd.f32 %v516, %v703
        %v730 = vadd.f32 %v517, %v704
        %v731 = vadd.f32 %v518, %v705
        %v732 = vld [vmem:[%s305 + $0x2] sm:$0xff]
        %v733 = vld [vmem:[%s305 + $0xa] sm:$0x1f]
        %v734 = vld [vmem:[%s305 + $0x12] sm:$0xff]
        %v735 = vld [vmem:[%s305 + $0x1a] sm:$0x1f]
        %v736 = vld [vmem:[%s305 + $0x22] sm:$0xff]
        %v737 = vld [vmem:[%s305 + $0x2a] sm:$0x1f]
        %v738 = vld [vmem:[%s305 + $0x32] sm:$0xff]
        %v739 = vld [vmem:[%s305 + $0x3a] sm:$0x1f]
        %v740 = vld [vmem:[%s305 + $0x42] sm:$0xff]
        %v741 = vld [vmem:[%s305 + $0x4a] sm:$0x1f]
        %v742 = vld [vmem:[%s305 + $0x52] sm:$0xff]
        %v743 = vld [vmem:[%s305 + $0x5a] sm:$0x1f]
        %v744 = vld [vmem:[%s305 + $0x62] sm:$0xff]
        %v745 = vld [vmem:[%s305 + $0x6a] sm:$0x1f]
        %v746 = vld [vmem:[%s305 + $0x72] sm:$0xff]
        %v747 = vld [vmem:[%s305 + $0x7a] sm:$0x1f]
        %v748 = vld [vmem:[%s305 + $0x82] sm:$0xff]
        %v749 = vld [vmem:[%s305 + $0x8a] sm:$0x1f]
        %v750 = vld [vmem:[%s305 + $0x92] sm:$0xff]
        %v751 = vld [vmem:[%s305 + $0x9a] sm:$0x1f]
        %v752 = vld [vmem:[%s305 + $0xa2] sm:$0xff]
        %v753 = vld [vmem:[%s305 + $0xaa] sm:$0x1f]
        %v754 = vld [vmem:[%s305 + $0xb2] sm:$0xff]
        %v755 = vld [vmem:[%s305 + $0xba] sm:$0x1f]
        %v756 = vld [vmem:[%s305 + $0xc2] sm:$0xff]
        %v757 = vld [vmem:[%s305 + $0xca] sm:$0x1f]
        %v758 = vld [vmem:[%s1 + $0x2] sm:$0x1]
        %760 = vset.pattern.permute.xlu0 0
        %761 = vperm.xlu0 %760, %v732
        %v762 = vpop.permute.xlu0 %761
        %765 = vset.pattern.permute.xlu0 0
        %766 = vperm.xlu0 %765, %v733
        %v767 = vpop.permute.xlu0 %766
        %770 = vset.pattern.permute.xlu0 0
        %771 = vperm.xlu0 %770, %v734
        %v772 = vpop.permute.xlu0 %771
        %775 = vset.pattern.permute.xlu0 0
        %776 = vperm.xlu0 %775, %v735
        %v777 = vpop.permute.xlu0 %776
        %780 = vset.pattern.permute.xlu0 0
        %781 = vperm.xlu0 %780, %v736
        %v782 = vpop.permute.xlu0 %781
        %785 = vset.pattern.permute.xlu0 0
        %786 = vperm.xlu0 %785, %v737
        %v787 = vpop.permute.xlu0 %786
        %790 = vset.pattern.permute.xlu0 0
        %791 = vperm.xlu0 %790, %v738
        %v792 = vpop.permute.xlu0 %791
        %795 = vset.pattern.permute.xlu0 0
        %796 = vperm.xlu0 %795, %v739
        %v797 = vpop.permute.xlu0 %796
        %800 = vset.pattern.permute.xlu0 0
        %801 = vperm.xlu0 %800, %v740
        %v802 = vpop.permute.xlu0 %801
        %805 = vset.pattern.permute.xlu0 0
        %806 = vperm.xlu0 %805, %v741
        %v807 = vpop.permute.xlu0 %806
        %810 = vset.pattern.permute.xlu0 0
        %811 = vperm.xlu0 %810, %v742
        %v812 = vpop.permute.xlu0 %811
        %815 = vset.pattern.permute.xlu0 0
        %816 = vperm.xlu0 %815, %v743
        %v817 = vpop.permute.xlu0 %816
        %820 = vset.pattern.permute.xlu0 0
        %821 = vperm.xlu0 %820, %v744
        %v822 = vpop.permute.xlu0 %821
        %825 = vset.pattern.permute.xlu0 0
        %826 = vperm.xlu0 %825, %v745
        %v827 = vpop.permute.xlu0 %826
        %830 = vset.pattern.permute.xlu0 0
        %831 = vperm.xlu0 %830, %v746
        %v832 = vpop.permute.xlu0 %831
        %835 = vset.pattern.permute.xlu0 0
        %836 = vperm.xlu0 %835, %v747
        %v837 = vpop.permute.xlu0 %836
        %840 = vset.pattern.permute.xlu0 0
        %841 = vperm.xlu0 %840, %v748
        %v842 = vpop.permute.xlu0 %841
        %845 = vset.pattern.permute.xlu0 0
        %846 = vperm.xlu0 %845, %v749
        %v847 = vpop.permute.xlu0 %846
        %850 = vset.pattern.permute.xlu0 0
        %851 = vperm.xlu0 %850, %v750
        %v852 = vpop.permute.xlu0 %851
        %855 = vset.pattern.permute.xlu0 0
        %856 = vperm.xlu0 %855, %v751
        %v857 = vpop.permute.xlu0 %856
        %860 = vset.pattern.permute.xlu0 0
        %861 = vperm.xlu0 %860, %v752
        %v862 = vpop.permute.xlu0 %861
        %865 = vset.pattern.permute.xlu0 0
        %866 = vperm.xlu0 %865, %v753
        %v867 = vpop.permute.xlu0 %866
        %870 = vset.pattern.permute.xlu0 0
        %871 = vperm.xlu0 %870, %v754
        %v872 = vpop.permute.xlu0 %871
        %875 = vset.pattern.permute.xlu0 0
        %876 = vperm.xlu0 %875, %v755
        %v877 = vpop.permute.xlu0 %876
        %880 = vset.pattern.permute.xlu0 0
        %881 = vperm.xlu0 %880, %v756
        %v882 = vpop.permute.xlu0 %881
        %885 = vset.pattern.permute.xlu0 0
        %886 = vperm.xlu0 %885, %v757
        %v887 = vpop.permute.xlu0 %886
        %v889 = vlaneseq
        %v890 = vshrl.u32 %v889, 7
        %v891 = vsub.s32 0, %v890
        %v892 = vrot.slane %v758, %v891
        %v893 = vmul.f32 %v762, %v892
        %v894 = vmul.f32 %v767, %v892
        %v895 = vmul.f32 %v772, %v892
        %v896 = vmul.f32 %v777, %v892
        %v897 = vmul.f32 %v782, %v892
        %v898 = vmul.f32 %v787, %v892
        %v899 = vmul.f32 %v792, %v892
        %v900 = vmul.f32 %v797, %v892
        %v901 = vmul.f32 %v802, %v892
        %v902 = vmul.f32 %v807, %v892
        %v903 = vmul.f32 %v812, %v892
        %v904 = vmul.f32 %v817, %v892
        %v905 = vmul.f32 %v822, %v892
        %v906 = vmul.f32 %v827, %v892
        %v907 = vmul.f32 %v832, %v892
        %v908 = vmul.f32 %v837, %v892
        %v909 = vmul.f32 %v842, %v892
        %v910 = vmul.f32 %v847, %v892
        %v911 = vmul.f32 %v852, %v892
        %v912 = vmul.f32 %v857, %v892
        %v913 = vmul.f32 %v862, %v892
        %v914 = vmul.f32 %v867, %v892
        %v915 = vmul.f32 %v872, %v892
        %v916 = vmul.f32 %v877, %v892
        %v917 = vmul.f32 %v882, %v892
        %v918 = vmul.f32 %v887, %v892
        %v919 = vadd.f32 %v706, %v893
        %v920 = vadd.f32 %v707, %v894
        %v921 = vadd.f32 %v708, %v895
        %v922 = vadd.f32 %v709, %v896
        %v923 = vadd.f32 %v710, %v897
        %v924 = vadd.f32 %v711, %v898
        %v925 = vadd.f32 %v712, %v899
        %v926 = vadd.f32 %v713, %v900
        %v927 = vadd.f32 %v714, %v901
        %v928 = vadd.f32 %v715, %v902
        %v929 = vadd.f32 %v716, %v903
        %v930 = vadd.f32 %v717, %v904
        %v931 = vadd.f32 %v718, %v905
        %v932 = vadd.f32 %v719, %v906
        %v933 = vadd.f32 %v720, %v907
        %v934 = vadd.f32 %v721, %v908
        %v935 = vadd.f32 %v722, %v909
        %v936 = vadd.f32 %v723, %v910
        %v937 = vadd.f32 %v724, %v911
        %v938 = vadd.f32 %v725, %v912
        %v939 = vadd.f32 %v726, %v913
        %v940 = vadd.f32 %v727, %v914
        %v941 = vadd.f32 %v728, %v915
        %v942 = vadd.f32 %v729, %v916
        %v943 = vadd.f32 %v730, %v917
        %v944 = vadd.f32 %v731, %v918
        %v945 = vld [vmem:[%s305 + $0x3] sm:$0xff]
        %v946 = vld [vmem:[%s305 + $0xb] sm:$0x1f]
        %v947 = vld [vmem:[%s305 + $0x13] sm:$0xff]
        %v948 = vld [vmem:[%s305 + $0x1b] sm:$0x1f]
        %v949 = vld [vmem:[%s305 + $0x23] sm:$0xff]
        %v950 = vld [vmem:[%s305 + $0x2b] sm:$0x1f]
        %v951 = vld [vmem:[%s305 + $0x33] sm:$0xff]
        %v952 = vld [vmem:[%s305 + $0x3b] sm:$0x1f]
        %v953 = vld [vmem:[%s305 + $0x43] sm:$0xff]
        %v954 = vld [vmem:[%s305 + $0x4b] sm:$0x1f]
        %v955 = vld [vmem:[%s305 + $0x53] sm:$0xff]
        %v956 = vld [vmem:[%s305 + $0x5b] sm:$0x1f]
        %v957 = vld [vmem:[%s305 + $0x63] sm:$0xff]
        %v958 = vld [vmem:[%s305 + $0x6b] sm:$0x1f]
        %v959 = vld [vmem:[%s305 + $0x73] sm:$0xff]
        %v960 = vld [vmem:[%s305 + $0x7b] sm:$0x1f]
        %v961 = vld [vmem:[%s305 + $0x83] sm:$0xff]
        %v962 = vld [vmem:[%s305 + $0x8b] sm:$0x1f]
        %v963 = vld [vmem:[%s305 + $0x93] sm:$0xff]
        %v964 = vld [vmem:[%s305 + $0x9b] sm:$0x1f]
        %v965 = vld [vmem:[%s305 + $0xa3] sm:$0xff]
        %v966 = vld [vmem:[%s305 + $0xab] sm:$0x1f]
        %v967 = vld [vmem:[%s305 + $0xb3] sm:$0xff]
        %v968 = vld [vmem:[%s305 + $0xbb] sm:$0x1f]
        %v969 = vld [vmem:[%s305 + $0xc3] sm:$0xff]
        %v970 = vld [vmem:[%s305 + $0xcb] sm:$0x1f]
        %v971 = vld [vmem:[%s1 + $0x3] sm:$0x1]
        %973 = vset.pattern.permute.xlu0 0
        %974 = vperm.xlu0 %973, %v945
        %v975 = vpop.permute.xlu0 %974
        %978 = vset.pattern.permute.xlu0 0
        %979 = vperm.xlu0 %978, %v946
        %v980 = vpop.permute.xlu0 %979
        %983 = vset.pattern.permute.xlu0 0
        %984 = vperm.xlu0 %983, %v947
        %v985 = vpop.permute.xlu0 %984
        %988 = vset.pattern.permute.xlu0 0
        %989 = vperm.xlu0 %988, %v948
        %v990 = vpop.permute.xlu0 %989
        %993 = vset.pattern.permute.xlu0 0
        %994 = vperm.xlu0 %993, %v949
        %v995 = vpop.permute.xlu0 %994
        %998 = vset.pattern.permute.xlu0 0
        %999 = vperm.xlu0 %998, %v950
        %v1000 = vpop.permute.xlu0 %999
        %1003 = vset.pattern.permute.xlu0 0
        %1004 = vperm.xlu0 %1003, %v951
        %v1005 = vpop.permute.xlu0 %1004
        %1008 = vset.pattern.permute.xlu0 0
        %1009 = vperm.xlu0 %1008, %v952
        %v1010 = vpop.permute.xlu0 %1009
        %1013 = vset.pattern.permute.xlu0 0
        %1014 = vperm.xlu0 %1013, %v953
        %v1015 = vpop.permute.xlu0 %1014
        %1018 = vset.pattern.permute.xlu0 0
        %1019 = vperm.xlu0 %1018, %v954
        %v1020 = vpop.permute.xlu0 %1019
        %1023 = vset.pattern.permute.xlu0 0
        %1024 = vperm.xlu0 %1023, %v955
        %v1025 = vpop.permute.xlu0 %1024
        %1028 = vset.pattern.permute.xlu0 0
        %1029 = vperm.xlu0 %1028, %v956
        %v1030 = vpop.permute.xlu0 %1029
        %1033 = vset.pattern.permute.xlu0 0
        %1034 = vperm.xlu0 %1033, %v957
        %v1035 = vpop.permute.xlu0 %1034
        %1038 = vset.pattern.permute.xlu0 0
        %1039 = vperm.xlu0 %1038, %v958
        %v1040 = vpop.permute.xlu0 %1039
        %1043 = vset.pattern.permute.xlu0 0
        %1044 = vperm.xlu0 %1043, %v959
        %v1045 = vpop.permute.xlu0 %1044
        %1048 = vset.pattern.permute.xlu0 0
        %1049 = vperm.xlu0 %1048, %v960
        %v1050 = vpop.permute.xlu0 %1049
        %1053 = vset.pattern.permute.xlu0 0
        %1054 = vperm.xlu0 %1053, %v961
        %v1055 = vpop.permute.xlu0 %1054
        %1058 = vset.pattern.permute.xlu0 0
        %1059 = vperm.xlu0 %1058, %v962
        %v1060 = vpop.permute.xlu0 %1059
        %1063 = vset.pattern.permute.xlu0 0
        %1064 = vperm.xlu0 %1063, %v963
        %v1065 = vpop.permute.xlu0 %1064
        %1068 = vset.pattern.permute.xlu0 0
        %1069 = vperm.xlu0 %1068, %v964
        %v1070 = vpop.permute.xlu0 %1069
        %1073 = vset.pattern.permute.xlu0 0
        %1074 = vperm.xlu0 %1073, %v965
        %v1075 = vpop.permute.xlu0 %1074
        %1078 = vset.pattern.permute.xlu0 0
        %1079 = vperm.xlu0 %1078, %v966
        %v1080 = vpop.permute.xlu0 %1079
        %1083 = vset.pattern.permute.xlu0 0
        %1084 = vperm.xlu0 %1083, %v967
        %v1085 = vpop.permute.xlu0 %1084
        %1088 = vset.pattern.permute.xlu0 0
        %1089 = vperm.xlu0 %1088, %v968
        %v1090 = vpop.permute.xlu0 %1089
        %1093 = vset.pattern.permute.xlu0 0
        %1094 = vperm.xlu0 %1093, %v969
        %v1095 = vpop.permute.xlu0 %1094
        %1098 = vset.pattern.permute.xlu0 0
        %1099 = vperm.xlu0 %1098, %v970
        %v1100 = vpop.permute.xlu0 %1099
        %v1102 = vlaneseq
        %v1103 = vshrl.u32 %v1102, 7
        %v1104 = vsub.s32 0, %v1103
        %v1105 = vrot.slane %v971, %v1104
        %v1106 = vmul.f32 %v975, %v1105
        %v1107 = vmul.f32 %v980, %v1105
        %v1108 = vmul.f32 %v985, %v1105
        %v1109 = vmul.f32 %v990, %v1105
        %v1110 = vmul.f32 %v995, %v1105
        %v1111 = vmul.f32 %v1000, %v1105
        %v1112 = vmul.f32 %v1005, %v1105
        %v1113 = vmul.f32 %v1010, %v1105
        %v1114 = vmul.f32 %v1015, %v1105
        %v1115 = vmul.f32 %v1020, %v1105
        %v1116 = vmul.f32 %v1025, %v1105
        %v1117 = vmul.f32 %v1030, %v1105
        %v1118 = vmul.f32 %v1035, %v1105
        %v1119 = vmul.f32 %v1040, %v1105
        %v1120 = vmul.f32 %v1045, %v1105
        %v1121 = vmul.f32 %v1050, %v1105
        %v1122 = vmul.f32 %v1055, %v1105
        %v1123 = vmul.f32 %v1060, %v1105
        %v1124 = vmul.f32 %v1065, %v1105
        %v1125 = vmul.f32 %v1070, %v1105
        %v1126 = vmul.f32 %v1075, %v1105
        %v1127 = vmul.f32 %v1080, %v1105
        %v1128 = vmul.f32 %v1085, %v1105
        %v1129 = vmul.f32 %v1090, %v1105
        %v1130 = vmul.f32 %v1095, %v1105
        %v1131 = vmul.f32 %v1100, %v1105
        %v1132 = vadd.f32 %v919, %v1106
        %v1133 = vadd.f32 %v920, %v1107
        %v1134 = vadd.f32 %v921, %v1108
        %v1135 = vadd.f32 %v922, %v1109
        %v1136 = vadd.f32 %v923, %v1110
        %v1137 = vadd.f32 %v924, %v1111
        %v1138 = vadd.f32 %v925, %v1112
        %v1139 = vadd.f32 %v926, %v1113
        %v1140 = vadd.f32 %v927, %v1114
        %v1141 = vadd.f32 %v928, %v1115
        %v1142 = vadd.f32 %v929, %v1116
        %v1143 = vadd.f32 %v930, %v1117
        %v1144 = vadd.f32 %v931, %v1118
        %v1145 = vadd.f32 %v932, %v1119
        %v1146 = vadd.f32 %v933, %v1120
        %v1147 = vadd.f32 %v934, %v1121
        %v1148 = vadd.f32 %v935, %v1122
        %v1149 = vadd.f32 %v936, %v1123
        %v1150 = vadd.f32 %v937, %v1124
        %v1151 = vadd.f32 %v938, %v1125
        %v1152 = vadd.f32 %v939, %v1126
        %v1153 = vadd.f32 %v940, %v1127
        %v1154 = vadd.f32 %v941, %v1128
        %v1155 = vadd.f32 %v942, %v1129
        %v1156 = vadd.f32 %v943, %v1130
        %v1157 = vadd.f32 %v944, %v1131
        %s1158 = scalar_lea.vmem %s305, 16
        %v1159 = vld [vmem:[%s1158] sm:$0xff]
        %v1160 = vld [vmem:[%s1158 + $0x8] sm:$0x1f]
        %v1161 = vld [vmem:[%s1158 + $0x10] sm:$0xff]
        %v1162 = vld [vmem:[%s1158 + $0x18] sm:$0x1f]
        %v1163 = vld [vmem:[%s1158 + $0x20] sm:$0xff]
        %v1164 = vld [vmem:[%s1158 + $0x28] sm:$0x1f]
        %v1165 = vld [vmem:[%s1158 + $0x30] sm:$0xff]
        %v1166 = vld [vmem:[%s1158 + $0x38] sm:$0x1f]
        %v1167 = vld [vmem:[%s1158 + $0x40] sm:$0xff]
        %v1168 = vld [vmem:[%s1158 + $0x48] sm:$0x1f]
        %v1169 = vld [vmem:[%s1158 + $0x50] sm:$0xff]
        %v1170 = vld [vmem:[%s1158 + $0x58] sm:$0x1f]
        %v1171 = vld [vmem:[%s1158 + $0x60] sm:$0xff]
        %v1172 = vld [vmem:[%s1158 + $0x68] sm:$0x1f]
        %v1173 = vld [vmem:[%s1158 + $0x70] sm:$0xff]
        %v1174 = vld [vmem:[%s1158 + $0x78] sm:$0x1f]
        %v1175 = vld [vmem:[%s1158 + $0x80] sm:$0xff]
        %v1176 = vld [vmem:[%s1158 + $0x88] sm:$0x1f]
        %v1177 = vld [vmem:[%s1158 + $0x90] sm:$0xff]
        %v1178 = vld [vmem:[%s1158 + $0x98] sm:$0x1f]
        %v1179 = vld [vmem:[%s1158 + $0xa0] sm:$0xff]
        %v1180 = vld [vmem:[%s1158 + $0xa8] sm:$0x1f]
        %v1181 = vld [vmem:[%s1158 + $0xb0] sm:$0xff]
        %v1182 = vld [vmem:[%s1158 + $0xb8] sm:$0x1f]
        %v1183 = vld [vmem:[%s1158 + $0xc0] sm:$0xff]
        %v1184 = vld [vmem:[%s1158 + $0xc8] sm:$0x1f]
        %v1185 = vld [vmem:[%s1 + $0x4] sm:$0x1]
        %1187 = vset.pattern.permute.xlu0 0
        %1188 = vperm.xlu0 %1187, %v1159
        %v1189 = vpop.permute.xlu0 %1188
        %1192 = vset.pattern.permute.xlu0 0
        %1193 = vperm.xlu0 %1192, %v1160
        %v1194 = vpop.permute.xlu0 %1193
        %1197 = vset.pattern.permute.xlu0 0
        %1198 = vperm.xlu0 %1197, %v1161
        %v1199 = vpop.permute.xlu0 %1198
        %1202 = vset.pattern.permute.xlu0 0
        %1203 = vperm.xlu0 %1202, %v1162
        %v1204 = vpop.permute.xlu0 %1203
        %1207 = vset.pattern.permute.xlu0 0
        %1208 = vperm.xlu0 %1207, %v1163
        %v1209 = vpop.permute.xlu0 %1208
        %1212 = vset.pattern.permute.xlu0 0
        %1213 = vperm.xlu0 %1212, %v1164
        %v1214 = vpop.permute.xlu0 %1213
        %1217 = vset.pattern.permute.xlu0 0
        %1218 = vperm.xlu0 %1217, %v1165
        %v1219 = vpop.permute.xlu0 %1218
        %1222 = vset.pattern.permute.xlu0 0
        %1223 = vperm.xlu0 %1222, %v1166
        %v1224 = vpop.permute.xlu0 %1223
        %1227 = vset.pattern.permute.xlu0 0
        %1228 = vperm.xlu0 %1227, %v1167
        %v1229 = vpop.permute.xlu0 %1228
        %1232 = vset.pattern.permute.xlu0 0
        %1233 = vperm.xlu0 %1232, %v1168
        %v1234 = vpop.permute.xlu0 %1233
        %1237 = vset.pattern.permute.xlu0 0
        %1238 = vperm.xlu0 %1237, %v1169
        %v1239 = vpop.permute.xlu0 %1238
        %1242 = vset.pattern.permute.xlu0 0
        %1243 = vperm.xlu0 %1242, %v1170
        %v1244 = vpop.permute.xlu0 %1243
        %1247 = vset.pattern.permute.xlu0 0
        %1248 = vperm.xlu0 %1247, %v1171
        %v1249 = vpop.permute.xlu0 %1248
        %1252 = vset.pattern.permute.xlu0 0
        %1253 = vperm.xlu0 %1252, %v1172
        %v1254 = vpop.permute.xlu0 %1253
        %1257 = vset.pattern.permute.xlu0 0
        %1258 = vperm.xlu0 %1257, %v1173
        %v1259 = vpop.permute.xlu0 %1258
        %1262 = vset.pattern.permute.xlu0 0
        %1263 = vperm.xlu0 %1262, %v1174
        %v1264 = vpop.permute.xlu0 %1263
        %1267 = vset.pattern.permute.xlu0 0
        %1268 = vperm.xlu0 %1267, %v1175
        %v1269 = vpop.permute.xlu0 %1268
        %1272 = vset.pattern.permute.xlu0 0
        %1273 = vperm.xlu0 %1272, %v1176
        %v1274 = vpop.permute.xlu0 %1273
        %1277 = vset.pattern.permute.xlu0 0
        %1278 = vperm.xlu0 %1277, %v1177
        %v1279 = vpop.permute.xlu0 %1278
        %1282 = vset.pattern.permute.xlu0 0
        %1283 = vperm.xlu0 %1282, %v1178
        %v1284 = vpop.permute.xlu0 %1283
        %1287 = vset.pattern.permute.xlu0 0
        %1288 = vperm.xlu0 %1287, %v1179
        %v1289 = vpop.permute.xlu0 %1288
        %1292 = vset.pattern.permute.xlu0 0
        %1293 = vperm.xlu0 %1292, %v1180
        %v1294 = vpop.permute.xlu0 %1293
        %1297 = vset.pattern.permute.xlu0 0
        %1298 = vperm.xlu0 %1297, %v1181
        %v1299 = vpop.permute.xlu0 %1298
        %1302 = vset.pattern.permute.xlu0 0
        %1303 = vperm.xlu0 %1302, %v1182
        %v1304 = vpop.permute.xlu0 %1303
        %1307 = vset.pattern.permute.xlu0 0
        %1308 = vperm.xlu0 %1307, %v1183
        %v1309 = vpop.permute.xlu0 %1308
        %1312 = vset.pattern.permute.xlu0 0
        %1313 = vperm.xlu0 %1312, %v1184
        %v1314 = vpop.permute.xlu0 %1313
        %v1316 = vlaneseq
        %v1317 = vshrl.u32 %v1316, 7
        %v1318 = vsub.s32 0, %v1317
        %v1319 = vrot.slane %v1185, %v1318
        %v1320 = vmul.f32 %v1189, %v1319
        %v1321 = vmul.f32 %v1194, %v1319
        %v1322 = vmul.f32 %v1199, %v1319
        %v1323 = vmul.f32 %v1204, %v1319
        %v1324 = vmul.f32 %v1209, %v1319
        %v1325 = vmul.f32 %v1214, %v1319
        %v1326 = vmul.f32 %v1219, %v1319
        %v1327 = vmul.f32 %v1224, %v1319
        %v1328 = vmul.f32 %v1229, %v1319
        %v1329 = vmul.f32 %v1234, %v1319
        %v1330 = vmul.f32 %v1239, %v1319
        %v1331 = vmul.f32 %v1244, %v1319
        %v1332 = vmul.f32 %v1249, %v1319
        %v1333 = vmul.f32 %v1254, %v1319
        %v1334 = vmul.f32 %v1259, %v1319
        %v1335 = vmul.f32 %v1264, %v1319
        %v1336 = vmul.f32 %v1269, %v1319
        %v1337 = vmul.f32 %v1274, %v1319
        %v1338 = vmul.f32 %v1279, %v1319
        %v1339 = vmul.f32 %v1284, %v1319
        %v1340 = vmul.f32 %v1289, %v1319
        %v1341 = vmul.f32 %v1294, %v1319
        %v1342 = vmul.f32 %v1299, %v1319
        %v1343 = vmul.f32 %v1304, %v1319
        %v1344 = vmul.f32 %v1309, %v1319
        %v1345 = vmul.f32 %v1314, %v1319
        %v1346 = vadd.f32 %v1132, %v1320
        %v1347 = vadd.f32 %v1133, %v1321
        %v1348 = vadd.f32 %v1134, %v1322
        %v1349 = vadd.f32 %v1135, %v1323
        %v1350 = vadd.f32 %v1136, %v1324
        %v1351 = vadd.f32 %v1137, %v1325
        %v1352 = vadd.f32 %v1138, %v1326
        %v1353 = vadd.f32 %v1139, %v1327
        %v1354 = vadd.f32 %v1140, %v1328
        %v1355 = vadd.f32 %v1141, %v1329
        %v1356 = vadd.f32 %v1142, %v1330
        %v1357 = vadd.f32 %v1143, %v1331
        %v1358 = vadd.f32 %v1144, %v1332
        %v1359 = vadd.f32 %v1145, %v1333
        %v1360 = vadd.f32 %v1146, %v1334
        %v1361 = vadd.f32 %v1147, %v1335
        %v1362 = vadd.f32 %v1148, %v1336
        %v1363 = vadd.f32 %v1149, %v1337
        %v1364 = vadd.f32 %v1150, %v1338
        %v1365 = vadd.f32 %v1151, %v1339
        %v1366 = vadd.f32 %v1152, %v1340
        %v1367 = vadd.f32 %v1153, %v1341
        %v1368 = vadd.f32 %v1154, %v1342
        %v1369 = vadd.f32 %v1155, %v1343
        %v1370 = vadd.f32 %v1156, %v1344
        %v1371 = vadd.f32 %v1157, %v1345
        %v1372 = vld [vmem:[%s1158 + $0x1] sm:$0xff]
        %v1373 = vld [vmem:[%s1158 + $0x9] sm:$0x1f]
        %v1374 = vld [vmem:[%s1158 + $0x11] sm:$0xff]
        %v1375 = vld [vmem:[%s1158 + $0x19] sm:$0x1f]
        %v1376 = vld [vmem:[%s1158 + $0x21] sm:$0xff]
        %v1377 = vld [vmem:[%s1158 + $0x29] sm:$0x1f]
        %v1378 = vld [vmem:[%s1158 + $0x31] sm:$0xff]
        %v1379 = vld [vmem:[%s1158 + $0x39] sm:$0x1f]
        %v1380 = vld [vmem:[%s1158 + $0x41] sm:$0xff]
        %v1381 = vld [vmem:[%s1158 + $0x49] sm:$0x1f]
        %v1382 = vld [vmem:[%s1158 + $0x51] sm:$0xff]
        %v1383 = vld [vmem:[%s1158 + $0x59] sm:$0x1f]
        %v1384 = vld [vmem:[%s1158 + $0x61] sm:$0xff]
        %v1385 = vld [vmem:[%s1158 + $0x69] sm:$0x1f]
        %v1386 = vld [vmem:[%s1158 + $0x71] sm:$0xff]
        %v1387 = vld [vmem:[%s1158 + $0x79] sm:$0x1f]
        %v1388 = vld [vmem:[%s1158 + $0x81] sm:$0xff]
        %v1389 = vld [vmem:[%s1158 + $0x89] sm:$0x1f]
        %v1390 = vld [vmem:[%s1158 + $0x91] sm:$0xff]
        %v1391 = vld [vmem:[%s1158 + $0x99] sm:$0x1f]
        %v1392 = vld [vmem:[%s1158 + $0xa1] sm:$0xff]
        %v1393 = vld [vmem:[%s1158 + $0xa9] sm:$0x1f]
        %v1394 = vld [vmem:[%s1158 + $0xb1] sm:$0xff]
        %v1395 = vld [vmem:[%s1158 + $0xb9] sm:$0x1f]
        %v1396 = vld [vmem:[%s1158 + $0xc1] sm:$0xff]
        %v1397 = vld [vmem:[%s1158 + $0xc9] sm:$0x1f]
        %v1398 = vld [vmem:[%s1 + $0x5] sm:$0x1]
        %1400 = vset.pattern.permute.xlu0 0
        %1401 = vperm.xlu0 %1400, %v1372
        %v1402 = vpop.permute.xlu0 %1401
        %1405 = vset.pattern.permute.xlu0 0
        %1406 = vperm.xlu0 %1405, %v1373
        %v1407 = vpop.permute.xlu0 %1406
        %1410 = vset.pattern.permute.xlu0 0
        %1411 = vperm.xlu0 %1410, %v1374
        %v1412 = vpop.permute.xlu0 %1411
        %1415 = vset.pattern.permute.xlu0 0
        %1416 = vperm.xlu0 %1415, %v1375
        %v1417 = vpop.permute.xlu0 %1416
        %1420 = vset.pattern.permute.xlu0 0
        %1421 = vperm.xlu0 %1420, %v1376
        %v1422 = vpop.permute.xlu0 %1421
        %1425 = vset.pattern.permute.xlu0 0
        %1426 = vperm.xlu0 %1425, %v1377
        %v1427 = vpop.permute.xlu0 %1426
        %1430 = vset.pattern.permute.xlu0 0
        %1431 = vperm.xlu0 %1430, %v1378
        %v1432 = vpop.permute.xlu0 %1431
        %1435 = vset.pattern.permute.xlu0 0
        %1436 = vperm.xlu0 %1435, %v1379
        %v1437 = vpop.permute.xlu0 %1436
        %1440 = vset.pattern.permute.xlu0 0
        %1441 = vperm.xlu0 %1440, %v1380
        %v1442 = vpop.permute.xlu0 %1441
        %1445 = vset.pattern.permute.xlu0 0
        %1446 = vperm.xlu0 %1445, %v1381
        %v1447 = vpop.permute.xlu0 %1446
        %1450 = vset.pattern.permute.xlu0 0
        %1451 = vperm.xlu0 %1450, %v1382
        %v1452 = vpop.permute.xlu0 %1451
        %1455 = vset.pattern.permute.xlu0 0
        %1456 = vperm.xlu0 %1455, %v1383
        %v1457 = vpop.permute.xlu0 %1456
        %1460 = vset.pattern.permute.xlu0 0
        %1461 = vperm.xlu0 %1460, %v1384
        %v1462 = vpop.permute.xlu0 %1461
        %1465 = vset.pattern.permute.xlu0 0
        %1466 = vperm.xlu0 %1465, %v1385
        %v1467 = vpop.permute.xlu0 %1466
        %1470 = vset.pattern.permute.xlu0 0
        %1471 = vperm.xlu0 %1470, %v1386
        %v1472 = vpop.permute.xlu0 %1471
        %1475 = vset.pattern.permute.xlu0 0
        %1476 = vperm.xlu0 %1475, %v1387
        %v1477 = vpop.permute.xlu0 %1476
        %1480 = vset.pattern.permute.xlu0 0
        %1481 = vperm.xlu0 %1480, %v1388
        %v1482 = vpop.permute.xlu0 %1481
        %1485 = vset.pattern.permute.xlu0 0
        %1486 = vperm.xlu0 %1485, %v1389
        %v1487 = vpop.permute.xlu0 %1486
        %1490 = vset.pattern.permute.xlu0 0
        %1491 = vperm.xlu0 %1490, %v1390
        %v1492 = vpop.permute.xlu0 %1491
        %1495 = vset.pattern.permute.xlu0 0
        %1496 = vperm.xlu0 %1495, %v1391
        %v1497 = vpop.permute.xlu0 %1496
        %1500 = vset.pattern.permute.xlu0 0
        %1501 = vperm.xlu0 %1500, %v1392
        %v1502 = vpop.permute.xlu0 %1501
        %1505 = vset.pattern.permute.xlu0 0
        %1506 = vperm.xlu0 %1505, %v1393
        %v1507 = vpop.permute.xlu0 %1506
        %1510 = vset.pattern.permute.xlu0 0
        %1511 = vperm.xlu0 %1510, %v1394
        %v1512 = vpop.permute.xlu0 %1511
        %1515 = vset.pattern.permute.xlu0 0
        %1516 = vperm.xlu0 %1515, %v1395
        %v1517 = vpop.permute.xlu0 %1516
        %1520 = vset.pattern.permute.xlu0 0
        %1521 = vperm.xlu0 %1520, %v1396
        %v1522 = vpop.permute.xlu0 %1521
        %1525 = vset.pattern.permute.xlu0 0
        %1526 = vperm.xlu0 %1525, %v1397
        %v1527 = vpop.permute.xlu0 %1526
        %v1529 = vlaneseq
        %v1530 = vshrl.u32 %v1529, 7
        %v1531 = vsub.s32 0, %v1530
        %v1532 = vrot.slane %v1398, %v1531
        %v1533 = vmul.f32 %v1402, %v1532
        %v1534 = vmul.f32 %v1407, %v1532
        %v1535 = vmul.f32 %v1412, %v1532
        %v1536 = vmul.f32 %v1417, %v1532
        %v1537 = vmul.f32 %v1422, %v1532
        %v1538 = vmul.f32 %v1427, %v1532
        %v1539 = vmul.f32 %v1432, %v1532
        %v1540 = vmul.f32 %v1437, %v1532
        %v1541 = vmul.f32 %v1442, %v1532
        %v1542 = vmul.f32 %v1447, %v1532
        %v1543 = vmul.f32 %v1452, %v1532
        %v1544 = vmul.f32 %v1457, %v1532
        %v1545 = vmul.f32 %v1462, %v1532
        %v1546 = vmul.f32 %v1467, %v1532
        %v1547 = vmul.f32 %v1472, %v1532
        %v1548 = vmul.f32 %v1477, %v1532
        %v1549 = vmul.f32 %v1482, %v1532
        %v1550 = vmul.f32 %v1487, %v1532
        %v1551 = vmul.f32 %v1492, %v1532
        %v1552 = vmul.f32 %v1497, %v1532
        %v1553 = vmul.f32 %v1502, %v1532
        %v1554 = vmul.f32 %v1507, %v1532
        %v1555 = vmul.f32 %v1512, %v1532
        %v1556 = vmul.f32 %v1517, %v1532
        %v1557 = vmul.f32 %v1522, %v1532
        %v1558 = vmul.f32 %v1527, %v1532
        %v1559 = vadd.f32 %v1346, %v1533
        %v1560 = vadd.f32 %v1347, %v1534
        %v1561 = vadd.f32 %v1348, %v1535
        %v1562 = vadd.f32 %v1349, %v1536
        %v1563 = vadd.f32 %v1350, %v1537
        %v1564 = vadd.f32 %v1351, %v1538
        %v1565 = vadd.f32 %v1352, %v1539
        %v1566 = vadd.f32 %v1353, %v1540
        %v1567 = vadd.f32 %v1354, %v1541
        %v1568 = vadd.f32 %v1355, %v1542
        %v1569 = vadd.f32 %v1356, %v1543
        %v1570 = vadd.f32 %v1357, %v1544
        %v1571 = vadd.f32 %v1358, %v1545
        %v1572 = vadd.f32 %v1359, %v1546
        %v1573 = vadd.f32 %v1360, %v1547
        %v1574 = vadd.f32 %v1361, %v1548
        %v1575 = vadd.f32 %v1362, %v1549
        %v1576 = vadd.f32 %v1363, %v1550
        %v1577 = vadd.f32 %v1364, %v1551
        %v1578 = vadd.f32 %v1365, %v1552
        %v1579 = vadd.f32 %v1366, %v1553
        %v1580 = vadd.f32 %v1367, %v1554
        %v1581 = vadd.f32 %v1368, %v1555
        %v1582 = vadd.f32 %v1369, %v1556
        %v1583 = vadd.f32 %v1370, %v1557
        %v1584 = vadd.f32 %v1371, %v1558
        %v1585 = vld [vmem:[%s1158 + $0x2] sm:$0xff]
        %v1586 = vld [vmem:[%s1158 + $0xa] sm:$0x1f]
        %v1587 = vld [vmem:[%s1158 + $0x12] sm:$0xff]
        %v1588 = vld [vmem:[%s1158 + $0x1a] sm:$0x1f]
        %v1589 = vld [vmem:[%s1158 + $0x22] sm:$0xff]
        %v1590 = vld [vmem:[%s1158 + $0x2a] sm:$0x1f]
        %v1591 = vld [vmem:[%s1158 + $0x32] sm:$0xff]
        %v1592 = vld [vmem:[%s1158 + $0x3a] sm:$0x1f]
        %v1593 = vld [vmem:[%s1158 + $0x42] sm:$0xff]
        %v1594 = vld [vmem:[%s1158 + $0x4a] sm:$0x1f]
        %v1595 = vld [vmem:[%s1158 + $0x52] sm:$0xff]
        %v1596 = vld [vmem:[%s1158 + $0x5a] sm:$0x1f]
        %v1597 = vld [vmem:[%s1158 + $0x62] sm:$0xff]
        %v1598 = vld [vmem:[%s1158 + $0x6a] sm:$0x1f]
        %v1599 = vld [vmem:[%s1158 + $0x72] sm:$0xff]
        %v1600 = vld [vmem:[%s1158 + $0x7a] sm:$0x1f]
        %v1601 = vld [vmem:[%s1158 + $0x82] sm:$0xff]
        %v1602 = vld [vmem:[%s1158 + $0x8a] sm:$0x1f]
        %v1603 = vld [vmem:[%s1158 + $0x92] sm:$0xff]
        %v1604 = vld [vmem:[%s1158 + $0x9a] sm:$0x1f]
        %v1605 = vld [vmem:[%s1158 + $0xa2] sm:$0xff]
        %v1606 = vld [vmem:[%s1158 + $0xaa] sm:$0x1f]
        %v1607 = vld [vmem:[%s1158 + $0xb2] sm:$0xff]
        %v1608 = vld [vmem:[%s1158 + $0xba] sm:$0x1f]
        %v1609 = vld [vmem:[%s1158 + $0xc2] sm:$0xff]
        %v1610 = vld [vmem:[%s1158 + $0xca] sm:$0x1f]
        %v1611 = vld [vmem:[%s1 + $0x6] sm:$0x1]
        %1613 = vset.pattern.permute.xlu0 0
        %1614 = vperm.xlu0 %1613, %v1585
        %v1615 = vpop.permute.xlu0 %1614
        %1618 = vset.pattern.permute.xlu0 0
        %1619 = vperm.xlu0 %1618, %v1586
        %v1620 = vpop.permute.xlu0 %1619
        %1623 = vset.pattern.permute.xlu0 0
        %1624 = vperm.xlu0 %1623, %v1587
        %v1625 = vpop.permute.xlu0 %1624
        %1628 = vset.pattern.permute.xlu0 0
        %1629 = vperm.xlu0 %1628, %v1588
        %v1630 = vpop.permute.xlu0 %1629
        %1633 = vset.pattern.permute.xlu0 0
        %1634 = vperm.xlu0 %1633, %v1589
        %v1635 = vpop.permute.xlu0 %1634
        %1638 = vset.pattern.permute.xlu0 0
        %1639 = vperm.xlu0 %1638, %v1590
        %v1640 = vpop.permute.xlu0 %1639
        %1643 = vset.pattern.permute.xlu0 0
        %1644 = vperm.xlu0 %1643, %v1591
        %v1645 = vpop.permute.xlu0 %1644
        %1648 = vset.pattern.permute.xlu0 0
        %1649 = vperm.xlu0 %1648, %v1592
        %v1650 = vpop.permute.xlu0 %1649
        %1653 = vset.pattern.permute.xlu0 0
        %1654 = vperm.xlu0 %1653, %v1593
        %v1655 = vpop.permute.xlu0 %1654
        %1658 = vset.pattern.permute.xlu0 0
        %1659 = vperm.xlu0 %1658, %v1594
        %v1660 = vpop.permute.xlu0 %1659
        %1663 = vset.pattern.permute.xlu0 0
        %1664 = vperm.xlu0 %1663, %v1595
        %v1665 = vpop.permute.xlu0 %1664
        %1668 = vset.pattern.permute.xlu0 0
        %1669 = vperm.xlu0 %1668, %v1596
        %v1670 = vpop.permute.xlu0 %1669
        %1673 = vset.pattern.permute.xlu0 0
        %1674 = vperm.xlu0 %1673, %v1597
        %v1675 = vpop.permute.xlu0 %1674
        %1678 = vset.pattern.permute.xlu0 0
        %1679 = vperm.xlu0 %1678, %v1598
        %v1680 = vpop.permute.xlu0 %1679
        %1683 = vset.pattern.permute.xlu0 0
        %1684 = vperm.xlu0 %1683, %v1599
        %v1685 = vpop.permute.xlu0 %1684
        %1688 = vset.pattern.permute.xlu0 0
        %1689 = vperm.xlu0 %1688, %v1600
        %v1690 = vpop.permute.xlu0 %1689
        %1693 = vset.pattern.permute.xlu0 0
        %1694 = vperm.xlu0 %1693, %v1601
        %v1695 = vpop.permute.xlu0 %1694
        %1698 = vset.pattern.permute.xlu0 0
        %1699 = vperm.xlu0 %1698, %v1602
        %v1700 = vpop.permute.xlu0 %1699
        %1703 = vset.pattern.permute.xlu0 0
        %1704 = vperm.xlu0 %1703, %v1603
        %v1705 = vpop.permute.xlu0 %1704
        %1708 = vset.pattern.permute.xlu0 0
        %1709 = vperm.xlu0 %1708, %v1604
        %v1710 = vpop.permute.xlu0 %1709
        %1713 = vset.pattern.permute.xlu0 0
        %1714 = vperm.xlu0 %1713, %v1605
        %v1715 = vpop.permute.xlu0 %1714
        %1718 = vset.pattern.permute.xlu0 0
        %1719 = vperm.xlu0 %1718, %v1606
        %v1720 = vpop.permute.xlu0 %1719
        %1723 = vset.pattern.permute.xlu0 0
        %1724 = vperm.xlu0 %1723, %v1607
        %v1725 = vpop.permute.xlu0 %1724
        %1728 = vset.pattern.permute.xlu0 0
        %1729 = vperm.xlu0 %1728, %v1608
        %v1730 = vpop.permute.xlu0 %1729
        %1733 = vset.pattern.permute.xlu0 0
        %1734 = vperm.xlu0 %1733, %v1609
        %v1735 = vpop.permute.xlu0 %1734
        %1738 = vset.pattern.permute.xlu0 0
        %1739 = vperm.xlu0 %1738, %v1610
        %v1740 = vpop.permute.xlu0 %1739
        %v1742 = vlaneseq
        %v1743 = vshrl.u32 %v1742, 7
        %v1744 = vsub.s32 0, %v1743
        %v1745 = vrot.slane %v1611, %v1744
        %v1746 = vmul.f32 %v1615, %v1745
        %v1747 = vmul.f32 %v1620, %v1745
        %v1748 = vmul.f32 %v1625, %v1745
        %v1749 = vmul.f32 %v1630, %v1745
        %v1750 = vmul.f32 %v1635, %v1745
        %v1751 = vmul.f32 %v1640, %v1745
        %v1752 = vmul.f32 %v1645, %v1745
        %v1753 = vmul.f32 %v1650, %v1745
        %v1754 = vmul.f32 %v1655, %v1745
        %v1755 = vmul.f32 %v1660, %v1745
        %v1756 = vmul.f32 %v1665, %v1745
        %v1757 = vmul.f32 %v1670, %v1745
        %v1758 = vmul.f32 %v1675, %v1745
        %v1759 = vmul.f32 %v1680, %v1745
        %v1760 = vmul.f32 %v1685, %v1745
        %v1761 = vmul.f32 %v1690, %v1745
        %v1762 = vmul.f32 %v1695, %v1745
        %v1763 = vmul.f32 %v1700, %v1745
        %v1764 = vmul.f32 %v1705, %v1745
        %v1765 = vmul.f32 %v1710, %v1745
        %v1766 = vmul.f32 %v1715, %v1745
        %v1767 = vmul.f32 %v1720, %v1745
        %v1768 = vmul.f32 %v1725, %v1745
        %v1769 = vmul.f32 %v1730, %v1745
        %v1770 = vmul.f32 %v1735, %v1745
        %v1771 = vmul.f32 %v1740, %v1745
        %v1772 = vadd.f32 %v1559, %v1746
        %v1773 = vadd.f32 %v1560, %v1747
        %v1774 = vadd.f32 %v1561, %v1748
        %v1775 = vadd.f32 %v1562, %v1749
        %v1776 = vadd.f32 %v1563, %v1750
        %v1777 = vadd.f32 %v1564, %v1751
        %v1778 = vadd.f32 %v1565, %v1752
        %v1779 = vadd.f32 %v1566, %v1753
        %v1780 = vadd.f32 %v1567, %v1754
        %v1781 = vadd.f32 %v1568, %v1755
        %v1782 = vadd.f32 %v1569, %v1756
        %v1783 = vadd.f32 %v1570, %v1757
        %v1784 = vadd.f32 %v1571, %v1758
        %v1785 = vadd.f32 %v1572, %v1759
        %v1786 = vadd.f32 %v1573, %v1760
        %v1787 = vadd.f32 %v1574, %v1761
        %v1788 = vadd.f32 %v1575, %v1762
        %v1789 = vadd.f32 %v1576, %v1763
        %v1790 = vadd.f32 %v1577, %v1764
        %v1791 = vadd.f32 %v1578, %v1765
        %v1792 = vadd.f32 %v1579, %v1766
        %v1793 = vadd.f32 %v1580, %v1767
        %v1794 = vadd.f32 %v1581, %v1768
        %v1795 = vadd.f32 %v1582, %v1769
        %v1796 = vadd.f32 %v1583, %v1770
        %v1797 = vadd.f32 %v1584, %v1771
        %v1798 = vld [vmem:[%s1158 + $0x3] sm:$0xff]
        %v1799 = vld [vmem:[%s1158 + $0xb] sm:$0x1f]
        %v1800 = vld [vmem:[%s1158 + $0x13] sm:$0xff]
        %v1801 = vld [vmem:[%s1158 + $0x1b] sm:$0x1f]
        %v1802 = vld [vmem:[%s1158 + $0x23] sm:$0xff]
        %v1803 = vld [vmem:[%s1158 + $0x2b] sm:$0x1f]
        %v1804 = vld [vmem:[%s1158 + $0x33] sm:$0xff]
        %v1805 = vld [vmem:[%s1158 + $0x3b] sm:$0x1f]
        %v1806 = vld [vmem:[%s1158 + $0x43] sm:$0xff]
        %v1807 = vld [vmem:[%s1158 + $0x4b] sm:$0x1f]
        %v1808 = vld [vmem:[%s1158 + $0x53] sm:$0xff]
        %v1809 = vld [vmem:[%s1158 + $0x5b] sm:$0x1f]
        %v1810 = vld [vmem:[%s1158 + $0x63] sm:$0xff]
        %v1811 = vld [vmem:[%s1158 + $0x6b] sm:$0x1f]
        %v1812 = vld [vmem:[%s1158 + $0x73] sm:$0xff]
        %v1813 = vld [vmem:[%s1158 + $0x7b] sm:$0x1f]
        %v1814 = vld [vmem:[%s1158 + $0x83] sm:$0xff]
        %v1815 = vld [vmem:[%s1158 + $0x8b] sm:$0x1f]
        %v1816 = vld [vmem:[%s1158 + $0x93] sm:$0xff]
        %v1817 = vld [vmem:[%s1158 + $0x9b] sm:$0x1f]
        %v1818 = vld [vmem:[%s1158 + $0xa3] sm:$0xff]
        %v1819 = vld [vmem:[%s1158 + $0xab] sm:$0x1f]
        %v1820 = vld [vmem:[%s1158 + $0xb3] sm:$0xff]
        %v1821 = vld [vmem:[%s1158 + $0xbb] sm:$0x1f]
        %v1822 = vld [vmem:[%s1158 + $0xc3] sm:$0xff]
        %v1823 = vld [vmem:[%s1158 + $0xcb] sm:$0x1f]
        %v1824 = vld [vmem:[%s1 + $0x7] sm:$0x1]
        %1826 = vset.pattern.permute.xlu0 0
        %1827 = vperm.xlu0 %1826, %v1798
        %v1828 = vpop.permute.xlu0 %1827
        %1831 = vset.pattern.permute.xlu0 0
        %1832 = vperm.xlu0 %1831, %v1799
        %v1833 = vpop.permute.xlu0 %1832
        %1836 = vset.pattern.permute.xlu0 0
        %1837 = vperm.xlu0 %1836, %v1800
        %v1838 = vpop.permute.xlu0 %1837
        %1841 = vset.pattern.permute.xlu0 0
        %1842 = vperm.xlu0 %1841, %v1801
        %v1843 = vpop.permute.xlu0 %1842
        %1846 = vset.pattern.permute.xlu0 0
        %1847 = vperm.xlu0 %1846, %v1802
        %v1848 = vpop.permute.xlu0 %1847
        %1851 = vset.pattern.permute.xlu0 0
        %1852 = vperm.xlu0 %1851, %v1803
        %v1853 = vpop.permute.xlu0 %1852
        %1856 = vset.pattern.permute.xlu0 0
        %1857 = vperm.xlu0 %1856, %v1804
        %v1858 = vpop.permute.xlu0 %1857
        %1861 = vset.pattern.permute.xlu0 0
        %1862 = vperm.xlu0 %1861, %v1805
        %v1863 = vpop.permute.xlu0 %1862
        %1866 = vset.pattern.permute.xlu0 0
        %1867 = vperm.xlu0 %1866, %v1806
        %v1868 = vpop.permute.xlu0 %1867
        %1871 = vset.pattern.permute.xlu0 0
        %1872 = vperm.xlu0 %1871, %v1807
        %v1873 = vpop.permute.xlu0 %1872
        %1876 = vset.pattern.permute.xlu0 0
        %1877 = vperm.xlu0 %1876, %v1808
        %v1878 = vpop.permute.xlu0 %1877
        %1881 = vset.pattern.permute.xlu0 0
        %1882 = vperm.xlu0 %1881, %v1809
        %v1883 = vpop.permute.xlu0 %1882
        %1886 = vset.pattern.permute.xlu0 0
        %1887 = vperm.xlu0 %1886, %v1810
        %v1888 = vpop.permute.xlu0 %1887
        %1891 = vset.pattern.permute.xlu0 0
        %1892 = vperm.xlu0 %1891, %v1811
        %v1893 = vpop.permute.xlu0 %1892
        %1896 = vset.pattern.permute.xlu0 0
        %1897 = vperm.xlu0 %1896, %v1812
        %v1898 = vpop.permute.xlu0 %1897
        %1901 = vset.pattern.permute.xlu0 0
        %1902 = vperm.xlu0 %1901, %v1813
        %v1903 = vpop.permute.xlu0 %1902
        %1906 = vset.pattern.permute.xlu0 0
        %1907 = vperm.xlu0 %1906, %v1814
        %v1908 = vpop.permute.xlu0 %1907
        %1911 = vset.pattern.permute.xlu0 0
        %1912 = vperm.xlu0 %1911, %v1815
        %v1913 = vpop.permute.xlu0 %1912
        %1916 = vset.pattern.permute.xlu0 0
        %1917 = vperm.xlu0 %1916, %v1816
        %v1918 = vpop.permute.xlu0 %1917
        %1921 = vset.pattern.permute.xlu0 0
        %1922 = vperm.xlu0 %1921, %v1817
        %v1923 = vpop.permute.xlu0 %1922
        %1926 = vset.pattern.permute.xlu0 0
        %1927 = vperm.xlu0 %1926, %v1818
        %v1928 = vpop.permute.xlu0 %1927
        %1931 = vset.pattern.permute.xlu0 0
        %1932 = vperm.xlu0 %1931, %v1819
        %v1933 = vpop.permute.xlu0 %1932
        %1936 = vset.pattern.permute.xlu0 0
        %1937 = vperm.xlu0 %1936, %v1820
        %v1938 = vpop.permute.xlu0 %1937
        %1941 = vset.pattern.permute.xlu0 0
        %1942 = vperm.xlu0 %1941, %v1821
        %v1943 = vpop.permute.xlu0 %1942
        %1946 = vset.pattern.permute.xlu0 0
        %1947 = vperm.xlu0 %1946, %v1822
        %v1948 = vpop.permute.xlu0 %1947
        %1951 = vset.pattern.permute.xlu0 0
        %1952 = vperm.xlu0 %1951, %v1823
        %v1953 = vpop.permute.xlu0 %1952
        %v1955 = vlaneseq
        %v1956 = vshrl.u32 %v1955, 7
        %v1957 = vsub.s32 0, %v1956
        %v1958 = vrot.slane %v1824, %v1957
        %v1959 = vmul.f32 %v1828, %v1958
        %v1960 = vmul.f32 %v1833, %v1958
        %v1961 = vmul.f32 %v1838, %v1958
        %v1962 = vmul.f32 %v1843, %v1958
        %v1963 = vmul.f32 %v1848, %v1958
        %v1964 = vmul.f32 %v1853, %v1958
        %v1965 = vmul.f32 %v1858, %v1958
        %v1966 = vmul.f32 %v1863, %v1958
        %v1967 = vmul.f32 %v1868, %v1958
        %v1968 = vmul.f32 %v1873, %v1958
        %v1969 = vmul.f32 %v1878, %v1958
        %v1970 = vmul.f32 %v1883, %v1958
        %v1971 = vmul.f32 %v1888, %v1958
        %v1972 = vmul.f32 %v1893, %v1958
        %v1973 = vmul.f32 %v1898, %v1958
        %v1974 = vmul.f32 %v1903, %v1958
        %v1975 = vmul.f32 %v1908, %v1958
        %v1976 = vmul.f32 %v1913, %v1958
        %v1977 = vmul.f32 %v1918, %v1958
        %v1978 = vmul.f32 %v1923, %v1958
        %v1979 = vmul.f32 %v1928, %v1958
        %v1980 = vmul.f32 %v1933, %v1958
        %v1981 = vmul.f32 %v1938, %v1958
        %v1982 = vmul.f32 %v1943, %v1958
        %v1983 = vmul.f32 %v1948, %v1958
        %v1984 = vmul.f32 %v1953, %v1958
        %v1985 = vadd.f32 %v1772, %v1959
        %v1986 = vadd.f32 %v1773, %v1960
        %v1987 = vadd.f32 %v1774, %v1961
        %v1988 = vadd.f32 %v1775, %v1962
        %v1989 = vadd.f32 %v1776, %v1963
        %v1990 = vadd.f32 %v1777, %v1964
        %v1991 = vadd.f32 %v1778, %v1965
        %v1992 = vadd.f32 %v1779, %v1966
        %v1993 = vadd.f32 %v1780, %v1967
        %v1994 = vadd.f32 %v1781, %v1968
        %v1995 = vadd.f32 %v1782, %v1969
        %v1996 = vadd.f32 %v1783, %v1970
        %v1997 = vadd.f32 %v1784, %v1971
        %v1998 = vadd.f32 %v1785, %v1972
        %v1999 = vadd.f32 %v1786, %v1973
        %v2000 = vadd.f32 %v1787, %v1974
        %v2001 = vadd.f32 %v1788, %v1975
        %v2002 = vadd.f32 %v1789, %v1976
        %v2003 = vadd.f32 %v1790, %v1977
        %v2004 = vadd.f32 %v1791, %v1978
        %v2005 = vadd.f32 %v1792, %v1979
        %v2006 = vadd.f32 %v1793, %v1980
        %v2007 = vadd.f32 %v1794, %v1981
        %v2008 = vadd.f32 %v1795, %v1982
        %v2009 = vadd.f32 %v1796, %v1983
        %v2010 = vadd.f32 %v1797, %v1984
        %s2011 = scalar_lea.vmem %s305, 32
        %v2012 = vld [vmem:[%s2011] sm:$0xff]
        %v2013 = vld [vmem:[%s2011 + $0x8] sm:$0x1f]
        %v2014 = vld [vmem:[%s2011 + $0x10] sm:$0xff]
        %v2015 = vld [vmem:[%s2011 + $0x18] sm:$0x1f]
        %v2016 = vld [vmem:[%s2011 + $0x20] sm:$0xff]
        %v2017 = vld [vmem:[%s2011 + $0x28] sm:$0x1f]
        %v2018 = vld [vmem:[%s2011 + $0x30] sm:$0xff]
        %v2019 = vld [vmem:[%s2011 + $0x38] sm:$0x1f]
        %v2020 = vld [vmem:[%s2011 + $0x40] sm:$0xff]
        %v2021 = vld [vmem:[%s2011 + $0x48] sm:$0x1f]
        %v2022 = vld [vmem:[%s2011 + $0x50] sm:$0xff]
        %v2023 = vld [vmem:[%s2011 + $0x58] sm:$0x1f]
        %v2024 = vld [vmem:[%s2011 + $0x60] sm:$0xff]
        %v2025 = vld [vmem:[%s2011 + $0x68] sm:$0x1f]
        %v2026 = vld [vmem:[%s2011 + $0x70] sm:$0xff]
        %v2027 = vld [vmem:[%s2011 + $0x78] sm:$0x1f]
        %v2028 = vld [vmem:[%s2011 + $0x80] sm:$0xff]
        %v2029 = vld [vmem:[%s2011 + $0x88] sm:$0x1f]
        %v2030 = vld [vmem:[%s2011 + $0x90] sm:$0xff]
        %v2031 = vld [vmem:[%s2011 + $0x98] sm:$0x1f]
        %v2032 = vld [vmem:[%s2011 + $0xa0] sm:$0xff]
        %v2033 = vld [vmem:[%s2011 + $0xa8] sm:$0x1f]
        %v2034 = vld [vmem:[%s2011 + $0xb0] sm:$0xff]
        %v2035 = vld [vmem:[%s2011 + $0xb8] sm:$0x1f]
        %v2036 = vld [vmem:[%s2011 + $0xc0] sm:$0xff]
        %v2037 = vld [vmem:[%s2011 + $0xc8] sm:$0x1f]
        %v2038 = vld [vmem:[%s1 + $0x8] sm:$0x1]
        %2040 = vset.pattern.permute.xlu0 0
        %2041 = vperm.xlu0 %2040, %v2012
        %v2042 = vpop.permute.xlu0 %2041
        %2045 = vset.pattern.permute.xlu0 0
        %2046 = vperm.xlu0 %2045, %v2013
        %v2047 = vpop.permute.xlu0 %2046
        %2050 = vset.pattern.permute.xlu0 0
        %2051 = vperm.xlu0 %2050, %v2014
        %v2052 = vpop.permute.xlu0 %2051
        %2055 = vset.pattern.permute.xlu0 0
        %2056 = vperm.xlu0 %2055, %v2015
        %v2057 = vpop.permute.xlu0 %2056
        %2060 = vset.pattern.permute.xlu0 0
        %2061 = vperm.xlu0 %2060, %v2016
        %v2062 = vpop.permute.xlu0 %2061
        %2065 = vset.pattern.permute.xlu0 0
        %2066 = vperm.xlu0 %2065, %v2017
        %v2067 = vpop.permute.xlu0 %2066
        %2070 = vset.pattern.permute.xlu0 0
        %2071 = vperm.xlu0 %2070, %v2018
        %v2072 = vpop.permute.xlu0 %2071
        %2075 = vset.pattern.permute.xlu0 0
        %2076 = vperm.xlu0 %2075, %v2019
        %v2077 = vpop.permute.xlu0 %2076
        %2080 = vset.pattern.permute.xlu0 0
        %2081 = vperm.xlu0 %2080, %v2020
        %v2082 = vpop.permute.xlu0 %2081
        %2085 = vset.pattern.permute.xlu0 0
        %2086 = vperm.xlu0 %2085, %v2021
        %v2087 = vpop.permute.xlu0 %2086
        %2090 = vset.pattern.permute.xlu0 0
        %2091 = vperm.xlu0 %2090, %v2022
        %v2092 = vpop.permute.xlu0 %2091
        %2095 = vset.pattern.permute.xlu0 0
        %2096 = vperm.xlu0 %2095, %v2023
        %v2097 = vpop.permute.xlu0 %2096
        %2100 = vset.pattern.permute.xlu0 0
        %2101 = vperm.xlu0 %2100, %v2024
        %v2102 = vpop.permute.xlu0 %2101
        %2105 = vset.pattern.permute.xlu0 0
        %2106 = vperm.xlu0 %2105, %v2025
        %v2107 = vpop.permute.xlu0 %2106
        %2110 = vset.pattern.permute.xlu0 0
        %2111 = vperm.xlu0 %2110, %v2026
        %v2112 = vpop.permute.xlu0 %2111
        %2115 = vset.pattern.permute.xlu0 0
        %2116 = vperm.xlu0 %2115, %v2027
        %v2117 = vpop.permute.xlu0 %2116
        %2120 = vset.pattern.permute.xlu0 0
        %2121 = vperm.xlu0 %2120, %v2028
        %v2122 = vpop.permute.xlu0 %2121
        %2125 = vset.pattern.permute.xlu0 0
        %2126 = vperm.xlu0 %2125, %v2029
        %v2127 = vpop.permute.xlu0 %2126
        %2130 = vset.pattern.permute.xlu0 0
        %2131 = vperm.xlu0 %2130, %v2030
        %v2132 = vpop.permute.xlu0 %2131
        %2135 = vset.pattern.permute.xlu0 0
        %2136 = vperm.xlu0 %2135, %v2031
        %v2137 = vpop.permute.xlu0 %2136
        %2140 = vset.pattern.permute.xlu0 0
        %2141 = vperm.xlu0 %2140, %v2032
        %v2142 = vpop.permute.xlu0 %2141
        %2145 = vset.pattern.permute.xlu0 0
        %2146 = vperm.xlu0 %2145, %v2033
        %v2147 = vpop.permute.xlu0 %2146
        %2150 = vset.pattern.permute.xlu0 0
        %2151 = vperm.xlu0 %2150, %v2034
        %v2152 = vpop.permute.xlu0 %2151
        %2155 = vset.pattern.permute.xlu0 0
        %2156 = vperm.xlu0 %2155, %v2035
        %v2157 = vpop.permute.xlu0 %2156
        %2160 = vset.pattern.permute.xlu0 0
        %2161 = vperm.xlu0 %2160, %v2036
        %v2162 = vpop.permute.xlu0 %2161
        %2165 = vset.pattern.permute.xlu0 0
        %2166 = vperm.xlu0 %2165, %v2037
        %v2167 = vpop.permute.xlu0 %2166
        %v2169 = vlaneseq
        %v2170 = vshrl.u32 %v2169, 7
        %v2171 = vsub.s32 0, %v2170
        %v2172 = vrot.slane %v2038, %v2171
        %v2173 = vmul.f32 %v2042, %v2172
        %v2174 = vmul.f32 %v2047, %v2172
        %v2175 = vmul.f32 %v2052, %v2172
        %v2176 = vmul.f32 %v2057, %v2172
        %v2177 = vmul.f32 %v2062, %v2172
        %v2178 = vmul.f32 %v2067, %v2172
        %v2179 = vmul.f32 %v2072, %v2172
        %v2180 = vmul.f32 %v2077, %v2172
        %v2181 = vmul.f32 %v2082, %v2172
        %v2182 = vmul.f32 %v2087, %v2172
        %v2183 = vmul.f32 %v2092, %v2172
        %v2184 = vmul.f32 %v2097, %v2172
        %v2185 = vmul.f32 %v2102, %v2172
        %v2186 = vmul.f32 %v2107, %v2172
        %v2187 = vmul.f32 %v2112, %v2172
        %v2188 = vmul.f32 %v2117, %v2172
        %v2189 = vmul.f32 %v2122, %v2172
        %v2190 = vmul.f32 %v2127, %v2172
        %v2191 = vmul.f32 %v2132, %v2172
        %v2192 = vmul.f32 %v2137, %v2172
        %v2193 = vmul.f32 %v2142, %v2172
        %v2194 = vmul.f32 %v2147, %v2172
        %v2195 = vmul.f32 %v2152, %v2172
        %v2196 = vmul.f32 %v2157, %v2172
        %v2197 = vmul.f32 %v2162, %v2172
        %v2198 = vmul.f32 %v2167, %v2172
        %v2199 = vadd.f32 %v1985, %v2173
        %v2200 = vadd.f32 %v1986, %v2174
        %v2201 = vadd.f32 %v1987, %v2175
        %v2202 = vadd.f32 %v1988, %v2176
        %v2203 = vadd.f32 %v1989, %v2177
        %v2204 = vadd.f32 %v1990, %v2178
        %v2205 = vadd.f32 %v1991, %v2179
        %v2206 = vadd.f32 %v1992, %v2180
        %v2207 = vadd.f32 %v1993, %v2181
        %v2208 = vadd.f32 %v1994, %v2182
        %v2209 = vadd.f32 %v1995, %v2183
        %v2210 = vadd.f32 %v1996, %v2184
        %v2211 = vadd.f32 %v1997, %v2185
        %v2212 = vadd.f32 %v1998, %v2186
        %v2213 = vadd.f32 %v1999, %v2187
        %v2214 = vadd.f32 %v2000, %v2188
        %v2215 = vadd.f32 %v2001, %v2189
        %v2216 = vadd.f32 %v2002, %v2190
        %v2217 = vadd.f32 %v2003, %v2191
        %v2218 = vadd.f32 %v2004, %v2192
        %v2219 = vadd.f32 %v2005, %v2193
        %v2220 = vadd.f32 %v2006, %v2194
        %v2221 = vadd.f32 %v2007, %v2195
        %v2222 = vadd.f32 %v2008, %v2196
        %v2223 = vadd.f32 %v2009, %v2197
        %v2224 = vadd.f32 %v2010, %v2198
        %v2225 = vld [vmem:[%s2011 + $0x1] sm:$0xff]
        %v2226 = vld [vmem:[%s2011 + $0x9] sm:$0x1f]
        %v2227 = vld [vmem:[%s2011 + $0x11] sm:$0xff]
        %v2228 = vld [vmem:[%s2011 + $0x19] sm:$0x1f]
        %v2229 = vld [vmem:[%s2011 + $0x21] sm:$0xff]
        %v2230 = vld [vmem:[%s2011 + $0x29] sm:$0x1f]
        %v2231 = vld [vmem:[%s2011 + $0x31] sm:$0xff]
        %v2232 = vld [vmem:[%s2011 + $0x39] sm:$0x1f]
        %v2233 = vld [vmem:[%s2011 + $0x41] sm:$0xff]
        %v2234 = vld [vmem:[%s2011 + $0x49] sm:$0x1f]
        %v2235 = vld [vmem:[%s2011 + $0x51] sm:$0xff]
        %v2236 = vld [vmem:[%s2011 + $0x59] sm:$0x1f]
        %v2237 = vld [vmem:[%s2011 + $0x61] sm:$0xff]
        %v2238 = vld [vmem:[%s2011 + $0x69] sm:$0x1f]
        %v2239 = vld [vmem:[%s2011 + $0x71] sm:$0xff]
        %v2240 = vld [vmem:[%s2011 + $0x79] sm:$0x1f]
        %v2241 = vld [vmem:[%s2011 + $0x81] sm:$0xff]
        %v2242 = vld [vmem:[%s2011 + $0x89] sm:$0x1f]
        %v2243 = vld [vmem:[%s2011 + $0x91] sm:$0xff]
        %v2244 = vld [vmem:[%s2011 + $0x99] sm:$0x1f]
        %v2245 = vld [vmem:[%s2011 + $0xa1] sm:$0xff]
        %v2246 = vld [vmem:[%s2011 + $0xa9] sm:$0x1f]
        %v2247 = vld [vmem:[%s2011 + $0xb1] sm:$0xff]
        %v2248 = vld [vmem:[%s2011 + $0xb9] sm:$0x1f]
        %v2249 = vld [vmem:[%s2011 + $0xc1] sm:$0xff]
        %v2250 = vld [vmem:[%s2011 + $0xc9] sm:$0x1f]
        %v2251 = vld [vmem:[%s1 + $0x9] sm:$0x1]
        %2253 = vset.pattern.permute.xlu0 0
        %2254 = vperm.xlu0 %2253, %v2225
        %v2255 = vpop.permute.xlu0 %2254
        %2258 = vset.pattern.permute.xlu0 0
        %2259 = vperm.xlu0 %2258, %v2226
        %v2260 = vpop.permute.xlu0 %2259
        %2263 = vset.pattern.permute.xlu0 0
        %2264 = vperm.xlu0 %2263, %v2227
        %v2265 = vpop.permute.xlu0 %2264
        %2268 = vset.pattern.permute.xlu0 0
        %2269 = vperm.xlu0 %2268, %v2228
        %v2270 = vpop.permute.xlu0 %2269
        %2273 = vset.pattern.permute.xlu0 0
        %2274 = vperm.xlu0 %2273, %v2229
        %v2275 = vpop.permute.xlu0 %2274
        %2278 = vset.pattern.permute.xlu0 0
        %2279 = vperm.xlu0 %2278, %v2230
        %v2280 = vpop.permute.xlu0 %2279
        %2283 = vset.pattern.permute.xlu0 0
        %2284 = vperm.xlu0 %2283, %v2231
        %v2285 = vpop.permute.xlu0 %2284
        %2288 = vset.pattern.permute.xlu0 0
        %2289 = vperm.xlu0 %2288, %v2232
        %v2290 = vpop.permute.xlu0 %2289
        %2293 = vset.pattern.permute.xlu0 0
        %2294 = vperm.xlu0 %2293, %v2233
        %v2295 = vpop.permute.xlu0 %2294
        %2298 = vset.pattern.permute.xlu0 0
        %2299 = vperm.xlu0 %2298, %v2234
        %v2300 = vpop.permute.xlu0 %2299
        %2303 = vset.pattern.permute.xlu0 0
        %2304 = vperm.xlu0 %2303, %v2235
        %v2305 = vpop.permute.xlu0 %2304
        %2308 = vset.pattern.permute.xlu0 0
        %2309 = vperm.xlu0 %2308, %v2236
        %v2310 = vpop.permute.xlu0 %2309
        %2313 = vset.pattern.permute.xlu0 0
        %2314 = vperm.xlu0 %2313, %v2237
        %v2315 = vpop.permute.xlu0 %2314
        %2318 = vset.pattern.permute.xlu0 0
        %2319 = vperm.xlu0 %2318, %v2238
        %v2320 = vpop.permute.xlu0 %2319
        %2323 = vset.pattern.permute.xlu0 0
        %2324 = vperm.xlu0 %2323, %v2239
        %v2325 = vpop.permute.xlu0 %2324
        %2328 = vset.pattern.permute.xlu0 0
        %2329 = vperm.xlu0 %2328, %v2240
        %v2330 = vpop.permute.xlu0 %2329
        %2333 = vset.pattern.permute.xlu0 0
        %2334 = vperm.xlu0 %2333, %v2241
        %v2335 = vpop.permute.xlu0 %2334
        %2338 = vset.pattern.permute.xlu0 0
        %2339 = vperm.xlu0 %2338, %v2242
        %v2340 = vpop.permute.xlu0 %2339
        %2343 = vset.pattern.permute.xlu0 0
        %2344 = vperm.xlu0 %2343, %v2243
        %v2345 = vpop.permute.xlu0 %2344
        %2348 = vset.pattern.permute.xlu0 0
        %2349 = vperm.xlu0 %2348, %v2244
        %v2350 = vpop.permute.xlu0 %2349
        %2353 = vset.pattern.permute.xlu0 0
        %2354 = vperm.xlu0 %2353, %v2245
        %v2355 = vpop.permute.xlu0 %2354
        %2358 = vset.pattern.permute.xlu0 0
        %2359 = vperm.xlu0 %2358, %v2246
        %v2360 = vpop.permute.xlu0 %2359
        %2363 = vset.pattern.permute.xlu0 0
        %2364 = vperm.xlu0 %2363, %v2247
        %v2365 = vpop.permute.xlu0 %2364
        %2368 = vset.pattern.permute.xlu0 0
        %2369 = vperm.xlu0 %2368, %v2248
        %v2370 = vpop.permute.xlu0 %2369
        %2373 = vset.pattern.permute.xlu0 0
        %2374 = vperm.xlu0 %2373, %v2249
        %v2375 = vpop.permute.xlu0 %2374
        %2378 = vset.pattern.permute.xlu0 0
        %2379 = vperm.xlu0 %2378, %v2250
        %v2380 = vpop.permute.xlu0 %2379
        %v2382 = vlaneseq
        %v2383 = vshrl.u32 %v2382, 7
        %v2384 = vsub.s32 0, %v2383
        %v2385 = vrot.slane %v2251, %v2384
        %v2386 = vmul.f32 %v2255, %v2385
        %v2387 = vmul.f32 %v2260, %v2385
        %v2388 = vmul.f32 %v2265, %v2385
        %v2389 = vmul.f32 %v2270, %v2385
        %v2390 = vmul.f32 %v2275, %v2385
        %v2391 = vmul.f32 %v2280, %v2385
        %v2392 = vmul.f32 %v2285, %v2385
        %v2393 = vmul.f32 %v2290, %v2385
        %v2394 = vmul.f32 %v2295, %v2385
        %v2395 = vmul.f32 %v2300, %v2385
        %v2396 = vmul.f32 %v2305, %v2385
        %v2397 = vmul.f32 %v2310, %v2385
        %v2398 = vmul.f32 %v2315, %v2385
        %v2399 = vmul.f32 %v2320, %v2385
        %v2400 = vmul.f32 %v2325, %v2385
        %v2401 = vmul.f32 %v2330, %v2385
        %v2402 = vmul.f32 %v2335, %v2385
        %v2403 = vmul.f32 %v2340, %v2385
        %v2404 = vmul.f32 %v2345, %v2385
        %v2405 = vmul.f32 %v2350, %v2385
        %v2406 = vmul.f32 %v2355, %v2385
        %v2407 = vmul.f32 %v2360, %v2385
        %v2408 = vmul.f32 %v2365, %v2385
        %v2409 = vmul.f32 %v2370, %v2385
        %v2410 = vmul.f32 %v2375, %v2385
        %v2411 = vmul.f32 %v2380, %v2385
        %v2412 = vadd.f32 %v2199, %v2386
        %v2413 = vadd.f32 %v2200, %v2387
        %v2414 = vadd.f32 %v2201, %v2388
        %v2415 = vadd.f32 %v2202, %v2389
        %v2416 = vadd.f32 %v2203, %v2390
        %v2417 = vadd.f32 %v2204, %v2391
        %v2418 = vadd.f32 %v2205, %v2392
        %v2419 = vadd.f32 %v2206, %v2393
        %v2420 = vadd.f32 %v2207, %v2394
        %v2421 = vadd.f32 %v2208, %v2395
        %v2422 = vadd.f32 %v2209, %v2396
        %v2423 = vadd.f32 %v2210, %v2397
        %v2424 = vadd.f32 %v2211, %v2398
        %v2425 = vadd.f32 %v2212, %v2399
        %v2426 = vadd.f32 %v2213, %v2400
        %v2427 = vadd.f32 %v2214, %v2401
        %v2428 = vadd.f32 %v2215, %v2402
        %v2429 = vadd.f32 %v2216, %v2403
        %v2430 = vadd.f32 %v2217, %v2404
        %v2431 = vadd.f32 %v2218, %v2405
        %v2432 = vadd.f32 %v2219, %v2406
        %v2433 = vadd.f32 %v2220, %v2407
        %v2434 = vadd.f32 %v2221, %v2408
        %v2435 = vadd.f32 %v2222, %v2409
        %v2436 = vadd.f32 %v2223, %v2410
        %v2437 = vadd.f32 %v2224, %v2411
        %v2438 = vld [vmem:[%s2011 + $0x2] sm:$0xff]
        %v2439 = vld [vmem:[%s2011 + $0xa] sm:$0x1f]
        %v2440 = vld [vmem:[%s2011 + $0x12] sm:$0xff]
        %v2441 = vld [vmem:[%s2011 + $0x1a] sm:$0x1f]
        %v2442 = vld [vmem:[%s2011 + $0x22] sm:$0xff]
        %v2443 = vld [vmem:[%s2011 + $0x2a] sm:$0x1f]
        %v2444 = vld [vmem:[%s2011 + $0x32] sm:$0xff]
        %v2445 = vld [vmem:[%s2011 + $0x3a] sm:$0x1f]
        %v2446 = vld [vmem:[%s2011 + $0x42] sm:$0xff]
        %v2447 = vld [vmem:[%s2011 + $0x4a] sm:$0x1f]
        %v2448 = vld [vmem:[%s2011 + $0x52] sm:$0xff]
        %v2449 = vld [vmem:[%s2011 + $0x5a] sm:$0x1f]
        %v2450 = vld [vmem:[%s2011 + $0x62] sm:$0xff]
        %v2451 = vld [vmem:[%s2011 + $0x6a] sm:$0x1f]
        %v2452 = vld [vmem:[%s2011 + $0x72] sm:$0xff]
        %v2453 = vld [vmem:[%s2011 + $0x7a] sm:$0x1f]
        %v2454 = vld [vmem:[%s2011 + $0x82] sm:$0xff]
        %v2455 = vld [vmem:[%s2011 + $0x8a] sm:$0x1f]
        %v2456 = vld [vmem:[%s2011 + $0x92] sm:$0xff]
        %v2457 = vld [vmem:[%s2011 + $0x9a] sm:$0x1f]
        %v2458 = vld [vmem:[%s2011 + $0xa2] sm:$0xff]
        %v2459 = vld [vmem:[%s2011 + $0xaa] sm:$0x1f]
        %v2460 = vld [vmem:[%s2011 + $0xb2] sm:$0xff]
        %v2461 = vld [vmem:[%s2011 + $0xba] sm:$0x1f]
        %v2462 = vld [vmem:[%s2011 + $0xc2] sm:$0xff]
        %v2463 = vld [vmem:[%s2011 + $0xca] sm:$0x1f]
        %v2464 = vld [vmem:[%s1 + $0xa] sm:$0x1]
        %2466 = vset.pattern.permute.xlu0 0
        %2467 = vperm.xlu0 %2466, %v2438
        %v2468 = vpop.permute.xlu0 %2467
        %2471 = vset.pattern.permute.xlu0 0
        %2472 = vperm.xlu0 %2471, %v2439
        %v2473 = vpop.permute.xlu0 %2472
        %2476 = vset.pattern.permute.xlu0 0
        %2477 = vperm.xlu0 %2476, %v2440
        %v2478 = vpop.permute.xlu0 %2477
        %2481 = vset.pattern.permute.xlu0 0
        %2482 = vperm.xlu0 %2481, %v2441
        %v2483 = vpop.permute.xlu0 %2482
        %2486 = vset.pattern.permute.xlu0 0
        %2487 = vperm.xlu0 %2486, %v2442
        %v2488 = vpop.permute.xlu0 %2487
        %2491 = vset.pattern.permute.xlu0 0
        %2492 = vperm.xlu0 %2491, %v2443
        %v2493 = vpop.permute.xlu0 %2492
        %2496 = vset.pattern.permute.xlu0 0
        %2497 = vperm.xlu0 %2496, %v2444
        %v2498 = vpop.permute.xlu0 %2497
        %2501 = vset.pattern.permute.xlu0 0
        %2502 = vperm.xlu0 %2501, %v2445
        %v2503 = vpop.permute.xlu0 %2502
        %2506 = vset.pattern.permute.xlu0 0
        %2507 = vperm.xlu0 %2506, %v2446
        %v2508 = vpop.permute.xlu0 %2507
        %2511 = vset.pattern.permute.xlu0 0
        %2512 = vperm.xlu0 %2511, %v2447
        %v2513 = vpop.permute.xlu0 %2512
        %2516 = vset.pattern.permute.xlu0 0
        %2517 = vperm.xlu0 %2516, %v2448
        %v2518 = vpop.permute.xlu0 %2517
        %2521 = vset.pattern.permute.xlu0 0
        %2522 = vperm.xlu0 %2521, %v2449
        %v2523 = vpop.permute.xlu0 %2522
        %2526 = vset.pattern.permute.xlu0 0
        %2527 = vperm.xlu0 %2526, %v2450
        %v2528 = vpop.permute.xlu0 %2527
        %2531 = vset.pattern.permute.xlu0 0
        %2532 = vperm.xlu0 %2531, %v2451
        %v2533 = vpop.permute.xlu0 %2532
        %2536 = vset.pattern.permute.xlu0 0
        %2537 = vperm.xlu0 %2536, %v2452
        %v2538 = vpop.permute.xlu0 %2537
        %2541 = vset.pattern.permute.xlu0 0
        %2542 = vperm.xlu0 %2541, %v2453
        %v2543 = vpop.permute.xlu0 %2542
        %2546 = vset.pattern.permute.xlu0 0
        %2547 = vperm.xlu0 %2546, %v2454
        %v2548 = vpop.permute.xlu0 %2547
        %2551 = vset.pattern.permute.xlu0 0
        %2552 = vperm.xlu0 %2551, %v2455
        %v2553 = vpop.permute.xlu0 %2552
        %2556 = vset.pattern.permute.xlu0 0
        %2557 = vperm.xlu0 %2556, %v2456
        %v2558 = vpop.permute.xlu0 %2557
        %2561 = vset.pattern.permute.xlu0 0
        %2562 = vperm.xlu0 %2561, %v2457
        %v2563 = vpop.permute.xlu0 %2562
        %2566 = vset.pattern.permute.xlu0 0
        %2567 = vperm.xlu0 %2566, %v2458
        %v2568 = vpop.permute.xlu0 %2567
        %2571 = vset.pattern.permute.xlu0 0
        %2572 = vperm.xlu0 %2571, %v2459
        %v2573 = vpop.permute.xlu0 %2572
        %2576 = vset.pattern.permute.xlu0 0
        %2577 = vperm.xlu0 %2576, %v2460
        %v2578 = vpop.permute.xlu0 %2577
        %2581 = vset.pattern.permute.xlu0 0
        %2582 = vperm.xlu0 %2581, %v2461
        %v2583 = vpop.permute.xlu0 %2582
        %2586 = vset.pattern.permute.xlu0 0
        %2587 = vperm.xlu0 %2586, %v2462
        %v2588 = vpop.permute.xlu0 %2587
        %2591 = vset.pattern.permute.xlu0 0
        %2592 = vperm.xlu0 %2591, %v2463
        %v2593 = vpop.permute.xlu0 %2592
        %v2595 = vlaneseq
        %v2596 = vshrl.u32 %v2595, 7
        %v2597 = vsub.s32 0, %v2596
        %v2598 = vrot.slane %v2464, %v2597
        %v2599 = vmul.f32 %v2468, %v2598
        %v2600 = vmul.f32 %v2473, %v2598
        %v2601 = vmul.f32 %v2478, %v2598
        %v2602 = vmul.f32 %v2483, %v2598
        %v2603 = vmul.f32 %v2488, %v2598
        %v2604 = vmul.f32 %v2493, %v2598
        %v2605 = vmul.f32 %v2498, %v2598
        %v2606 = vmul.f32 %v2503, %v2598
        %v2607 = vmul.f32 %v2508, %v2598
        %v2608 = vmul.f32 %v2513, %v2598
        %v2609 = vmul.f32 %v2518, %v2598
        %v2610 = vmul.f32 %v2523, %v2598
        %v2611 = vmul.f32 %v2528, %v2598
        %v2612 = vmul.f32 %v2533, %v2598
        %v2613 = vmul.f32 %v2538, %v2598
        %v2614 = vmul.f32 %v2543, %v2598
        %v2615 = vmul.f32 %v2548, %v2598
        %v2616 = vmul.f32 %v2553, %v2598
        %v2617 = vmul.f32 %v2558, %v2598
        %v2618 = vmul.f32 %v2563, %v2598
        %v2619 = vmul.f32 %v2568, %v2598
        %v2620 = vmul.f32 %v2573, %v2598
        %v2621 = vmul.f32 %v2578, %v2598
        %v2622 = vmul.f32 %v2583, %v2598
        %v2623 = vmul.f32 %v2588, %v2598
        %v2624 = vmul.f32 %v2593, %v2598
        %v2625 = vadd.f32 %v2412, %v2599
        %v2626 = vadd.f32 %v2413, %v2600
        %v2627 = vadd.f32 %v2414, %v2601
        %v2628 = vadd.f32 %v2415, %v2602
        %v2629 = vadd.f32 %v2416, %v2603
        %v2630 = vadd.f32 %v2417, %v2604
        %v2631 = vadd.f32 %v2418, %v2605
        %v2632 = vadd.f32 %v2419, %v2606
        %v2633 = vadd.f32 %v2420, %v2607
        %v2634 = vadd.f32 %v2421, %v2608
        %v2635 = vadd.f32 %v2422, %v2609
        %v2636 = vadd.f32 %v2423, %v2610
        %v2637 = vadd.f32 %v2424, %v2611
        %v2638 = vadd.f32 %v2425, %v2612
        %v2639 = vadd.f32 %v2426, %v2613
        %v2640 = vadd.f32 %v2427, %v2614
        %v2641 = vadd.f32 %v2428, %v2615
        %v2642 = vadd.f32 %v2429, %v2616
        %v2643 = vadd.f32 %v2430, %v2617
        %v2644 = vadd.f32 %v2431, %v2618
        %v2645 = vadd.f32 %v2432, %v2619
        %v2646 = vadd.f32 %v2433, %v2620
        %v2647 = vadd.f32 %v2434, %v2621
        %v2648 = vadd.f32 %v2435, %v2622
        %v2649 = vadd.f32 %v2436, %v2623
        %v2650 = vadd.f32 %v2437, %v2624
        %v2651 = vld [vmem:[%s2011 + $0x3] sm:$0xff]
        %v2652 = vld [vmem:[%s2011 + $0xb] sm:$0x1f]
        %v2653 = vld [vmem:[%s2011 + $0x13] sm:$0xff]
        %v2654 = vld [vmem:[%s2011 + $0x1b] sm:$0x1f]
        %v2655 = vld [vmem:[%s2011 + $0x23] sm:$0xff]
        %v2656 = vld [vmem:[%s2011 + $0x2b] sm:$0x1f]
        %v2657 = vld [vmem:[%s2011 + $0x33] sm:$0xff]
        %v2658 = vld [vmem:[%s2011 + $0x3b] sm:$0x1f]
        %v2659 = vld [vmem:[%s2011 + $0x43] sm:$0xff]
        %v2660 = vld [vmem:[%s2011 + $0x4b] sm:$0x1f]
        %v2661 = vld [vmem:[%s2011 + $0x53] sm:$0xff]
        %v2662 = vld [vmem:[%s2011 + $0x5b] sm:$0x1f]
        %v2663 = vld [vmem:[%s2011 + $0x63] sm:$0xff]
        %v2664 = vld [vmem:[%s2011 + $0x6b] sm:$0x1f]
        %v2665 = vld [vmem:[%s2011 + $0x73] sm:$0xff]
        %v2666 = vld [vmem:[%s2011 + $0x7b] sm:$0x1f]
        %v2667 = vld [vmem:[%s2011 + $0x83] sm:$0xff]
        %v2668 = vld [vmem:[%s2011 + $0x8b] sm:$0x1f]
        %v2669 = vld [vmem:[%s2011 + $0x93] sm:$0xff]
        %v2670 = vld [vmem:[%s2011 + $0x9b] sm:$0x1f]
        %v2671 = vld [vmem:[%s2011 + $0xa3] sm:$0xff]
        %v2672 = vld [vmem:[%s2011 + $0xab] sm:$0x1f]
        %v2673 = vld [vmem:[%s2011 + $0xb3] sm:$0xff]
        %v2674 = vld [vmem:[%s2011 + $0xbb] sm:$0x1f]
        %v2675 = vld [vmem:[%s2011 + $0xc3] sm:$0xff]
        %v2676 = vld [vmem:[%s2011 + $0xcb] sm:$0x1f]
        %v2677 = vld [vmem:[%s1 + $0xb] sm:$0x1]
        %2679 = vset.pattern.permute.xlu0 0
        %2680 = vperm.xlu0 %2679, %v2651
        %v2681 = vpop.permute.xlu0 %2680
        %2684 = vset.pattern.permute.xlu0 0
        %2685 = vperm.xlu0 %2684, %v2652
        %v2686 = vpop.permute.xlu0 %2685
        %2689 = vset.pattern.permute.xlu0 0
        %2690 = vperm.xlu0 %2689, %v2653
        %v2691 = vpop.permute.xlu0 %2690
        %2694 = vset.pattern.permute.xlu0 0
        %2695 = vperm.xlu0 %2694, %v2654
        %v2696 = vpop.permute.xlu0 %2695
        %2699 = vset.pattern.permute.xlu0 0
        %2700 = vperm.xlu0 %2699, %v2655
        %v2701 = vpop.permute.xlu0 %2700
        %2704 = vset.pattern.permute.xlu0 0
        %2705 = vperm.xlu0 %2704, %v2656
        %v2706 = vpop.permute.xlu0 %2705
        %2709 = vset.pattern.permute.xlu0 0
        %2710 = vperm.xlu0 %2709, %v2657
        %v2711 = vpop.permute.xlu0 %2710
        %2714 = vset.pattern.permute.xlu0 0
        %2715 = vperm.xlu0 %2714, %v2658
        %v2716 = vpop.permute.xlu0 %2715
        %2719 = vset.pattern.permute.xlu0 0
        %2720 = vperm.xlu0 %2719, %v2659
        %v2721 = vpop.permute.xlu0 %2720
        %2724 = vset.pattern.permute.xlu0 0
        %2725 = vperm.xlu0 %2724, %v2660
        %v2726 = vpop.permute.xlu0 %2725
        %2729 = vset.pattern.permute.xlu0 0
        %2730 = vperm.xlu0 %2729, %v2661
        %v2731 = vpop.permute.xlu0 %2730
        %2734 = vset.pattern.permute.xlu0 0
        %2735 = vperm.xlu0 %2734, %v2662
        %v2736 = vpop.permute.xlu0 %2735
        %2739 = vset.pattern.permute.xlu0 0
        %2740 = vperm.xlu0 %2739, %v2663
        %v2741 = vpop.permute.xlu0 %2740
        %2744 = vset.pattern.permute.xlu0 0
        %2745 = vperm.xlu0 %2744, %v2664
        %v2746 = vpop.permute.xlu0 %2745
        %2749 = vset.pattern.permute.xlu0 0
        %2750 = vperm.xlu0 %2749, %v2665
        %v2751 = vpop.permute.xlu0 %2750
        %2754 = vset.pattern.permute.xlu0 0
        %2755 = vperm.xlu0 %2754, %v2666
        %v2756 = vpop.permute.xlu0 %2755
        %2759 = vset.pattern.permute.xlu0 0
        %2760 = vperm.xlu0 %2759, %v2667
        %v2761 = vpop.permute.xlu0 %2760
        %2764 = vset.pattern.permute.xlu0 0
        %2765 = vperm.xlu0 %2764, %v2668
        %v2766 = vpop.permute.xlu0 %2765
        %2769 = vset.pattern.permute.xlu0 0
        %2770 = vperm.xlu0 %2769, %v2669
        %v2771 = vpop.permute.xlu0 %2770
        %2774 = vset.pattern.permute.xlu0 0
        %2775 = vperm.xlu0 %2774, %v2670
        %v2776 = vpop.permute.xlu0 %2775
        %2779 = vset.pattern.permute.xlu0 0
        %2780 = vperm.xlu0 %2779, %v2671
        %v2781 = vpop.permute.xlu0 %2780
        %2784 = vset.pattern.permute.xlu0 0
        %2785 = vperm.xlu0 %2784, %v2672
        %v2786 = vpop.permute.xlu0 %2785
        %2789 = vset.pattern.permute.xlu0 0
        %2790 = vperm.xlu0 %2789, %v2673
        %v2791 = vpop.permute.xlu0 %2790
        %2794 = vset.pattern.permute.xlu0 0
        %2795 = vperm.xlu0 %2794, %v2674
        %v2796 = vpop.permute.xlu0 %2795
        %2799 = vset.pattern.permute.xlu0 0
        %2800 = vperm.xlu0 %2799, %v2675
        %v2801 = vpop.permute.xlu0 %2800
        %2804 = vset.pattern.permute.xlu0 0
        %2805 = vperm.xlu0 %2804, %v2676
        %v2806 = vpop.permute.xlu0 %2805
        %v2808 = vlaneseq
        %v2809 = vshrl.u32 %v2808, 7
        %v2810 = vsub.s32 0, %v2809
        %v2811 = vrot.slane %v2677, %v2810
        %v2812 = vmul.f32 %v2681, %v2811
        %v2813 = vmul.f32 %v2686, %v2811
        %v2814 = vmul.f32 %v2691, %v2811
        %v2815 = vmul.f32 %v2696, %v2811
        %v2816 = vmul.f32 %v2701, %v2811
        %v2817 = vmul.f32 %v2706, %v2811
        %v2818 = vmul.f32 %v2711, %v2811
        %v2819 = vmul.f32 %v2716, %v2811
        %v2820 = vmul.f32 %v2721, %v2811
        %v2821 = vmul.f32 %v2726, %v2811
        %v2822 = vmul.f32 %v2731, %v2811
        %v2823 = vmul.f32 %v2736, %v2811
        %v2824 = vmul.f32 %v2741, %v2811
        %v2825 = vmul.f32 %v2746, %v2811
        %v2826 = vmul.f32 %v2751, %v2811
        %v2827 = vmul.f32 %v2756, %v2811
        %v2828 = vmul.f32 %v2761, %v2811
        %v2829 = vmul.f32 %v2766, %v2811
        %v2830 = vmul.f32 %v2771, %v2811
        %v2831 = vmul.f32 %v2776, %v2811
        %v2832 = vmul.f32 %v2781, %v2811
        %v2833 = vmul.f32 %v2786, %v2811
        %v2834 = vmul.f32 %v2791, %v2811
        %v2835 = vmul.f32 %v2796, %v2811
        %v2836 = vmul.f32 %v2801, %v2811
        %v2837 = vmul.f32 %v2806, %v2811
        %v2838 = vadd.f32 %v2625, %v2812
        %v2839 = vadd.f32 %v2626, %v2813
        %v2840 = vadd.f32 %v2627, %v2814
        %v2841 = vadd.f32 %v2628, %v2815
        %v2842 = vadd.f32 %v2629, %v2816
        %v2843 = vadd.f32 %v2630, %v2817
        %v2844 = vadd.f32 %v2631, %v2818
        %v2845 = vadd.f32 %v2632, %v2819
        %v2846 = vadd.f32 %v2633, %v2820
        %v2847 = vadd.f32 %v2634, %v2821
        %v2848 = vadd.f32 %v2635, %v2822
        %v2849 = vadd.f32 %v2636, %v2823
        %v2850 = vadd.f32 %v2637, %v2824
        %v2851 = vadd.f32 %v2638, %v2825
        %v2852 = vadd.f32 %v2639, %v2826
        %v2853 = vadd.f32 %v2640, %v2827
        %v2854 = vadd.f32 %v2641, %v2828
        %v2855 = vadd.f32 %v2642, %v2829
        %v2856 = vadd.f32 %v2643, %v2830
        %v2857 = vadd.f32 %v2644, %v2831
        %v2858 = vadd.f32 %v2645, %v2832
        %v2859 = vadd.f32 %v2646, %v2833
        %v2860 = vadd.f32 %v2647, %v2834
        %v2861 = vadd.f32 %v2648, %v2835
        %v2862 = vadd.f32 %v2649, %v2836
        %v2863 = vadd.f32 %v2650, %v2837
        %s2864 = scalar_lea.vmem %s305, 48
        %v2865 = vld [vmem:[%s2864] sm:$0xff]
        %v2866 = vld [vmem:[%s2864 + $0x8] sm:$0x1f]
        %v2867 = vld [vmem:[%s2864 + $0x10] sm:$0xff]
        %v2868 = vld [vmem:[%s2864 + $0x18] sm:$0x1f]
        %v2869 = vld [vmem:[%s2864 + $0x20] sm:$0xff]
        %v2870 = vld [vmem:[%s2864 + $0x28] sm:$0x1f]
        %v2871 = vld [vmem:[%s2864 + $0x30] sm:$0xff]
        %v2872 = vld [vmem:[%s2864 + $0x38] sm:$0x1f]
        %v2873 = vld [vmem:[%s2864 + $0x40] sm:$0xff]
        %v2874 = vld [vmem:[%s2864 + $0x48] sm:$0x1f]
        %v2875 = vld [vmem:[%s2864 + $0x50] sm:$0xff]
        %v2876 = vld [vmem:[%s2864 + $0x58] sm:$0x1f]
        %v2877 = vld [vmem:[%s2864 + $0x60] sm:$0xff]
        %v2878 = vld [vmem:[%s2864 + $0x68] sm:$0x1f]
        %v2879 = vld [vmem:[%s2864 + $0x70] sm:$0xff]
        %v2880 = vld [vmem:[%s2864 + $0x78] sm:$0x1f]
        %v2881 = vld [vmem:[%s2864 + $0x80] sm:$0xff]
        %v2882 = vld [vmem:[%s2864 + $0x88] sm:$0x1f]
        %v2883 = vld [vmem:[%s2864 + $0x90] sm:$0xff]
        %v2884 = vld [vmem:[%s2864 + $0x98] sm:$0x1f]
        %v2885 = vld [vmem:[%s2864 + $0xa0] sm:$0xff]
        %v2886 = vld [vmem:[%s2864 + $0xa8] sm:$0x1f]
        %v2887 = vld [vmem:[%s2864 + $0xb0] sm:$0xff]
        %v2888 = vld [vmem:[%s2864 + $0xb8] sm:$0x1f]
        %v2889 = vld [vmem:[%s2864 + $0xc0] sm:$0xff]
        %v2890 = vld [vmem:[%s2864 + $0xc8] sm:$0x1f]
        %v2891 = vld [vmem:[%s1 + $0xc] sm:$0x1]
        %2893 = vset.pattern.permute.xlu0 0
        %2894 = vperm.xlu0 %2893, %v2865
        %v2895 = vpop.permute.xlu0 %2894
        %2898 = vset.pattern.permute.xlu0 0
        %2899 = vperm.xlu0 %2898, %v2866
        %v2900 = vpop.permute.xlu0 %2899
        %2903 = vset.pattern.permute.xlu0 0
        %2904 = vperm.xlu0 %2903, %v2867
        %v2905 = vpop.permute.xlu0 %2904
        %2908 = vset.pattern.permute.xlu0 0
        %2909 = vperm.xlu0 %2908, %v2868
        %v2910 = vpop.permute.xlu0 %2909
        %2913 = vset.pattern.permute.xlu0 0
        %2914 = vperm.xlu0 %2913, %v2869
        %v2915 = vpop.permute.xlu0 %2914
        %2918 = vset.pattern.permute.xlu0 0
        %2919 = vperm.xlu0 %2918, %v2870
        %v2920 = vpop.permute.xlu0 %2919
        %2923 = vset.pattern.permute.xlu0 0
        %2924 = vperm.xlu0 %2923, %v2871
        %v2925 = vpop.permute.xlu0 %2924
        %2928 = vset.pattern.permute.xlu0 0
        %2929 = vperm.xlu0 %2928, %v2872
        %v2930 = vpop.permute.xlu0 %2929
        %2933 = vset.pattern.permute.xlu0 0
        %2934 = vperm.xlu0 %2933, %v2873
        %v2935 = vpop.permute.xlu0 %2934
        %2938 = vset.pattern.permute.xlu0 0
        %2939 = vperm.xlu0 %2938, %v2874
        %v2940 = vpop.permute.xlu0 %2939
        %2943 = vset.pattern.permute.xlu0 0
        %2944 = vperm.xlu0 %2943, %v2875
        %v2945 = vpop.permute.xlu0 %2944
        %2948 = vset.pattern.permute.xlu0 0
        %2949 = vperm.xlu0 %2948, %v2876
        %v2950 = vpop.permute.xlu0 %2949
        %2953 = vset.pattern.permute.xlu0 0
        %2954 = vperm.xlu0 %2953, %v2877
        %v2955 = vpop.permute.xlu0 %2954
        %2958 = vset.pattern.permute.xlu0 0
        %2959 = vperm.xlu0 %2958, %v2878
        %v2960 = vpop.permute.xlu0 %2959
        %2963 = vset.pattern.permute.xlu0 0
        %2964 = vperm.xlu0 %2963, %v2879
        %v2965 = vpop.permute.xlu0 %2964
        %2968 = vset.pattern.permute.xlu0 0
        %2969 = vperm.xlu0 %2968, %v2880
        %v2970 = vpop.permute.xlu0 %2969
        %2973 = vset.pattern.permute.xlu0 0
        %2974 = vperm.xlu0 %2973, %v2881
        %v2975 = vpop.permute.xlu0 %2974
        %2978 = vset.pattern.permute.xlu0 0
        %2979 = vperm.xlu0 %2978, %v2882
        %v2980 = vpop.permute.xlu0 %2979
        %2983 = vset.pattern.permute.xlu0 0
        %2984 = vperm.xlu0 %2983, %v2883
        %v2985 = vpop.permute.xlu0 %2984
        %2988 = vset.pattern.permute.xlu0 0
        %2989 = vperm.xlu0 %2988, %v2884
        %v2990 = vpop.permute.xlu0 %2989
        %2993 = vset.pattern.permute.xlu0 0
        %2994 = vperm.xlu0 %2993, %v2885
        %v2995 = vpop.permute.xlu0 %2994
        %2998 = vset.pattern.permute.xlu0 0
        %2999 = vperm.xlu0 %2998, %v2886
        %v3000 = vpop.permute.xlu0 %2999
        %3003 = vset.pattern.permute.xlu0 0
        %3004 = vperm.xlu0 %3003, %v2887
        %v3005 = vpop.permute.xlu0 %3004
        %3008 = vset.pattern.permute.xlu0 0
        %3009 = vperm.xlu0 %3008, %v2888
        %v3010 = vpop.permute.xlu0 %3009
        %3013 = vset.pattern.permute.xlu0 0
        %3014 = vperm.xlu0 %3013, %v2889
        %v3015 = vpop.permute.xlu0 %3014
        %3018 = vset.pattern.permute.xlu0 0
        %3019 = vperm.xlu0 %3018, %v2890
        %v3020 = vpop.permute.xlu0 %3019
        %v3022 = vlaneseq
        %v3023 = vshrl.u32 %v3022, 7
        %v3024 = vsub.s32 0, %v3023
        %v3025 = vrot.slane %v2891, %v3024
        %v3026 = vmul.f32 %v2895, %v3025
        %v3027 = vmul.f32 %v2900, %v3025
        %v3028 = vmul.f32 %v2905, %v3025
        %v3029 = vmul.f32 %v2910, %v3025
        %v3030 = vmul.f32 %v2915, %v3025
        %v3031 = vmul.f32 %v2920, %v3025
        %v3032 = vmul.f32 %v2925, %v3025
        %v3033 = vmul.f32 %v2930, %v3025
        %v3034 = vmul.f32 %v2935, %v3025
        %v3035 = vmul.f32 %v2940, %v3025
        %v3036 = vmul.f32 %v2945, %v3025
        %v3037 = vmul.f32 %v2950, %v3025
        %v3038 = vmul.f32 %v2955, %v3025
        %v3039 = vmul.f32 %v2960, %v3025
        %v3040 = vmul.f32 %v2965, %v3025
        %v3041 = vmul.f32 %v2970, %v3025
        %v3042 = vmul.f32 %v2975, %v3025
        %v3043 = vmul.f32 %v2980, %v3025
        %v3044 = vmul.f32 %v2985, %v3025
        %v3045 = vmul.f32 %v2990, %v3025
        %v3046 = vmul.f32 %v2995, %v3025
        %v3047 = vmul.f32 %v3000, %v3025
        %v3048 = vmul.f32 %v3005, %v3025
        %v3049 = vmul.f32 %v3010, %v3025
        %v3050 = vmul.f32 %v3015, %v3025
        %v3051 = vmul.f32 %v3020, %v3025
        %v3052 = vadd.f32 %v2838, %v3026
        %v3053 = vadd.f32 %v2839, %v3027
        %v3054 = vadd.f32 %v2840, %v3028
        %v3055 = vadd.f32 %v2841, %v3029
        %v3056 = vadd.f32 %v2842, %v3030
        %v3057 = vadd.f32 %v2843, %v3031
        %v3058 = vadd.f32 %v2844, %v3032
        %v3059 = vadd.f32 %v2845, %v3033
        %v3060 = vadd.f32 %v2846, %v3034
        %v3061 = vadd.f32 %v2847, %v3035
        %v3062 = vadd.f32 %v2848, %v3036
        %v3063 = vadd.f32 %v2849, %v3037
        %v3064 = vadd.f32 %v2850, %v3038
        %v3065 = vadd.f32 %v2851, %v3039
        %v3066 = vadd.f32 %v2852, %v3040
        %v3067 = vadd.f32 %v2853, %v3041
        %v3068 = vadd.f32 %v2854, %v3042
        %v3069 = vadd.f32 %v2855, %v3043
        %v3070 = vadd.f32 %v2856, %v3044
        %v3071 = vadd.f32 %v2857, %v3045
        %v3072 = vadd.f32 %v2858, %v3046
        %v3073 = vadd.f32 %v2859, %v3047
        %v3074 = vadd.f32 %v2860, %v3048
        %v3075 = vadd.f32 %v2861, %v3049
        %v3076 = vadd.f32 %v2862, %v3050
        %v3077 = vadd.f32 %v2863, %v3051
        %v3078 = vld [vmem:[%s2864 + $0x1] sm:$0xff]
        %v3079 = vld [vmem:[%s2864 + $0x9] sm:$0x1f]
        %v3080 = vld [vmem:[%s2864 + $0x11] sm:$0xff]
        %v3081 = vld [vmem:[%s2864 + $0x19] sm:$0x1f]
        %v3082 = vld [vmem:[%s2864 + $0x21] sm:$0xff]
        %v3083 = vld [vmem:[%s2864 + $0x29] sm:$0x1f]
        %v3084 = vld [vmem:[%s2864 + $0x31] sm:$0xff]
        %v3085 = vld [vmem:[%s2864 + $0x39] sm:$0x1f]
        %v3086 = vld [vmem:[%s2864 + $0x41] sm:$0xff]
        %v3087 = vld [vmem:[%s2864 + $0x49] sm:$0x1f]
        %v3088 = vld [vmem:[%s2864 + $0x51] sm:$0xff]
        %v3089 = vld [vmem:[%s2864 + $0x59] sm:$0x1f]
        %v3090 = vld [vmem:[%s2864 + $0x61] sm:$0xff]
        %v3091 = vld [vmem:[%s2864 + $0x69] sm:$0x1f]
        %v3092 = vld [vmem:[%s2864 + $0x71] sm:$0xff]
        %v3093 = vld [vmem:[%s2864 + $0x79] sm:$0x1f]
        %v3094 = vld [vmem:[%s2864 + $0x81] sm:$0xff]
        %v3095 = vld [vmem:[%s2864 + $0x89] sm:$0x1f]
        %v3096 = vld [vmem:[%s2864 + $0x91] sm:$0xff]
        %v3097 = vld [vmem:[%s2864 + $0x99] sm:$0x1f]
        %v3098 = vld [vmem:[%s2864 + $0xa1] sm:$0xff]
        %v3099 = vld [vmem:[%s2864 + $0xa9] sm:$0x1f]
        %v3100 = vld [vmem:[%s2864 + $0xb1] sm:$0xff]
        %v3101 = vld [vmem:[%s2864 + $0xb9] sm:$0x1f]
        %v3102 = vld [vmem:[%s2864 + $0xc1] sm:$0xff]
        %v3103 = vld [vmem:[%s2864 + $0xc9] sm:$0x1f]
        %v3104 = vld [vmem:[%s1 + $0xd] sm:$0x1]
        %3106 = vset.pattern.permute.xlu0 0
        %3107 = vperm.xlu0 %3106, %v3078
        %v3108 = vpop.permute.xlu0 %3107
        %3111 = vset.pattern.permute.xlu0 0
        %3112 = vperm.xlu0 %3111, %v3079
        %v3113 = vpop.permute.xlu0 %3112
        %3116 = vset.pattern.permute.xlu0 0
        %3117 = vperm.xlu0 %3116, %v3080
        %v3118 = vpop.permute.xlu0 %3117
        %3121 = vset.pattern.permute.xlu0 0
        %3122 = vperm.xlu0 %3121, %v3081
        %v3123 = vpop.permute.xlu0 %3122
        %3126 = vset.pattern.permute.xlu0 0
        %3127 = vperm.xlu0 %3126, %v3082
        %v3128 = vpop.permute.xlu0 %3127
        %3131 = vset.pattern.permute.xlu0 0
        %3132 = vperm.xlu0 %3131, %v3083
        %v3133 = vpop.permute.xlu0 %3132
        %3136 = vset.pattern.permute.xlu0 0
        %3137 = vperm.xlu0 %3136, %v3084
        %v3138 = vpop.permute.xlu0 %3137
        %3141 = vset.pattern.permute.xlu0 0
        %3142 = vperm.xlu0 %3141, %v3085
        %v3143 = vpop.permute.xlu0 %3142
        %3146 = vset.pattern.permute.xlu0 0
        %3147 = vperm.xlu0 %3146, %v3086
        %v3148 = vpop.permute.xlu0 %3147
        %3151 = vset.pattern.permute.xlu0 0
        %3152 = vperm.xlu0 %3151, %v3087
        %v3153 = vpop.permute.xlu0 %3152
        %3156 = vset.pattern.permute.xlu0 0
        %3157 = vperm.xlu0 %3156, %v3088
        %v3158 = vpop.permute.xlu0 %3157
        %3161 = vset.pattern.permute.xlu0 0
        %3162 = vperm.xlu0 %3161, %v3089
        %v3163 = vpop.permute.xlu0 %3162
        %3166 = vset.pattern.permute.xlu0 0
        %3167 = vperm.xlu0 %3166, %v3090
        %v3168 = vpop.permute.xlu0 %3167
        %3171 = vset.pattern.permute.xlu0 0
        %3172 = vperm.xlu0 %3171, %v3091
        %v3173 = vpop.permute.xlu0 %3172
        %3176 = vset.pattern.permute.xlu0 0
        %3177 = vperm.xlu0 %3176, %v3092
        %v3178 = vpop.permute.xlu0 %3177
        %3181 = vset.pattern.permute.xlu0 0
        %3182 = vperm.xlu0 %3181, %v3093
        %v3183 = vpop.permute.xlu0 %3182
        %3186 = vset.pattern.permute.xlu0 0
        %3187 = vperm.xlu0 %3186, %v3094
        %v3188 = vpop.permute.xlu0 %3187
        %3191 = vset.pattern.permute.xlu0 0
        %3192 = vperm.xlu0 %3191, %v3095
        %v3193 = vpop.permute.xlu0 %3192
        %3196 = vset.pattern.permute.xlu0 0
        %3197 = vperm.xlu0 %3196, %v3096
        %v3198 = vpop.permute.xlu0 %3197
        %3201 = vset.pattern.permute.xlu0 0
        %3202 = vperm.xlu0 %3201, %v3097
        %v3203 = vpop.permute.xlu0 %3202
        %3206 = vset.pattern.permute.xlu0 0
        %3207 = vperm.xlu0 %3206, %v3098
        %v3208 = vpop.permute.xlu0 %3207
        %3211 = vset.pattern.permute.xlu0 0
        %3212 = vperm.xlu0 %3211, %v3099
        %v3213 = vpop.permute.xlu0 %3212
        %3216 = vset.pattern.permute.xlu0 0
        %3217 = vperm.xlu0 %3216, %v3100
        %v3218 = vpop.permute.xlu0 %3217
        %3221 = vset.pattern.permute.xlu0 0
        %3222 = vperm.xlu0 %3221, %v3101
        %v3223 = vpop.permute.xlu0 %3222
        %3226 = vset.pattern.permute.xlu0 0
        %3227 = vperm.xlu0 %3226, %v3102
        %v3228 = vpop.permute.xlu0 %3227
        %3231 = vset.pattern.permute.xlu0 0
        %3232 = vperm.xlu0 %3231, %v3103
        %v3233 = vpop.permute.xlu0 %3232
        %v3235 = vlaneseq
        %v3236 = vshrl.u32 %v3235, 7
        %v3237 = vsub.s32 0, %v3236
        %v3238 = vrot.slane %v3104, %v3237
        %v3239 = vmul.f32 %v3108, %v3238
        %v3240 = vmul.f32 %v3113, %v3238
        %v3241 = vmul.f32 %v3118, %v3238
        %v3242 = vmul.f32 %v3123, %v3238
        %v3243 = vmul.f32 %v3128, %v3238
        %v3244 = vmul.f32 %v3133, %v3238
        %v3245 = vmul.f32 %v3138, %v3238
        %v3246 = vmul.f32 %v3143, %v3238
        %v3247 = vmul.f32 %v3148, %v3238
        %v3248 = vmul.f32 %v3153, %v3238
        %v3249 = vmul.f32 %v3158, %v3238
        %v3250 = vmul.f32 %v3163, %v3238
        %v3251 = vmul.f32 %v3168, %v3238
        %v3252 = vmul.f32 %v3173, %v3238
        %v3253 = vmul.f32 %v3178, %v3238
        %v3254 = vmul.f32 %v3183, %v3238
        %v3255 = vmul.f32 %v3188, %v3238
        %v3256 = vmul.f32 %v3193, %v3238
        %v3257 = vmul.f32 %v3198, %v3238
        %v3258 = vmul.f32 %v3203, %v3238
        %v3259 = vmul.f32 %v3208, %v3238
        %v3260 = vmul.f32 %v3213, %v3238
        %v3261 = vmul.f32 %v3218, %v3238
        %v3262 = vmul.f32 %v3223, %v3238
        %v3263 = vmul.f32 %v3228, %v3238
        %v3264 = vmul.f32 %v3233, %v3238
        %v3265 = vadd.f32 %v3052, %v3239
        %v3266 = vadd.f32 %v3053, %v3240
        %v3267 = vadd.f32 %v3054, %v3241
        %v3268 = vadd.f32 %v3055, %v3242
        %v3269 = vadd.f32 %v3056, %v3243
        %v3270 = vadd.f32 %v3057, %v3244
        %v3271 = vadd.f32 %v3058, %v3245
        %v3272 = vadd.f32 %v3059, %v3246
        %v3273 = vadd.f32 %v3060, %v3247
        %v3274 = vadd.f32 %v3061, %v3248
        %v3275 = vadd.f32 %v3062, %v3249
        %v3276 = vadd.f32 %v3063, %v3250
        %v3277 = vadd.f32 %v3064, %v3251
        %v3278 = vadd.f32 %v3065, %v3252
        %v3279 = vadd.f32 %v3066, %v3253
        %v3280 = vadd.f32 %v3067, %v3254
        %v3281 = vadd.f32 %v3068, %v3255
        %v3282 = vadd.f32 %v3069, %v3256
        %v3283 = vadd.f32 %v3070, %v3257
        %v3284 = vadd.f32 %v3071, %v3258
        %v3285 = vadd.f32 %v3072, %v3259
        %v3286 = vadd.f32 %v3073, %v3260
        %v3287 = vadd.f32 %v3074, %v3261
        %v3288 = vadd.f32 %v3075, %v3262
        %v3289 = vadd.f32 %v3076, %v3263
        %v3290 = vadd.f32 %v3077, %v3264
        %v3291 = vld [vmem:[%s2864 + $0x2] sm:$0xff]
        %v3292 = vld [vmem:[%s2864 + $0xa] sm:$0x1f]
        %v3293 = vld [vmem:[%s2864 + $0x12] sm:$0xff]
        %v3294 = vld [vmem:[%s2864 + $0x1a] sm:$0x1f]
        %v3295 = vld [vmem:[%s2864 + $0x22] sm:$0xff]
        %v3296 = vld [vmem:[%s2864 + $0x2a] sm:$0x1f]
        %v3297 = vld [vmem:[%s2864 + $0x32] sm:$0xff]
        %v3298 = vld [vmem:[%s2864 + $0x3a] sm:$0x1f]
        %v3299 = vld [vmem:[%s2864 + $0x42] sm:$0xff]
        %v3300 = vld [vmem:[%s2864 + $0x4a] sm:$0x1f]
        %v3301 = vld [vmem:[%s2864 + $0x52] sm:$0xff]
        %v3302 = vld [vmem:[%s2864 + $0x5a] sm:$0x1f]
        %v3303 = vld [vmem:[%s2864 + $0x62] sm:$0xff]
        %v3304 = vld [vmem:[%s2864 + $0x6a] sm:$0x1f]
        %v3305 = vld [vmem:[%s2864 + $0x72] sm:$0xff]
        %v3306 = vld [vmem:[%s2864 + $0x7a] sm:$0x1f]
        %v3307 = vld [vmem:[%s2864 + $0x82] sm:$0xff]
        %v3308 = vld [vmem:[%s2864 + $0x8a] sm:$0x1f]
        %v3309 = vld [vmem:[%s2864 + $0x92] sm:$0xff]
        %v3310 = vld [vmem:[%s2864 + $0x9a] sm:$0x1f]
        %v3311 = vld [vmem:[%s2864 + $0xa2] sm:$0xff]
        %v3312 = vld [vmem:[%s2864 + $0xaa] sm:$0x1f]
        %v3313 = vld [vmem:[%s2864 + $0xb2] sm:$0xff]
        %v3314 = vld [vmem:[%s2864 + $0xba] sm:$0x1f]
        %v3315 = vld [vmem:[%s2864 + $0xc2] sm:$0xff]
        %v3316 = vld [vmem:[%s2864 + $0xca] sm:$0x1f]
        %v3317 = vld [vmem:[%s1 + $0xe] sm:$0x1]
        %3319 = vset.pattern.permute.xlu0 0
        %3320 = vperm.xlu0 %3319, %v3291
        %v3321 = vpop.permute.xlu0 %3320
        %3324 = vset.pattern.permute.xlu0 0
        %3325 = vperm.xlu0 %3324, %v3292
        %v3326 = vpop.permute.xlu0 %3325
        %3329 = vset.pattern.permute.xlu0 0
        %3330 = vperm.xlu0 %3329, %v3293
        %v3331 = vpop.permute.xlu0 %3330
        %3334 = vset.pattern.permute.xlu0 0
        %3335 = vperm.xlu0 %3334, %v3294
        %v3336 = vpop.permute.xlu0 %3335
        %3339 = vset.pattern.permute.xlu0 0
        %3340 = vperm.xlu0 %3339, %v3295
        %v3341 = vpop.permute.xlu0 %3340
        %3344 = vset.pattern.permute.xlu0 0
        %3345 = vperm.xlu0 %3344, %v3296
        %v3346 = vpop.permute.xlu0 %3345
        %3349 = vset.pattern.permute.xlu0 0
        %3350 = vperm.xlu0 %3349, %v3297
        %v3351 = vpop.permute.xlu0 %3350
        %3354 = vset.pattern.permute.xlu0 0
        %3355 = vperm.xlu0 %3354, %v3298
        %v3356 = vpop.permute.xlu0 %3355
        %3359 = vset.pattern.permute.xlu0 0
        %3360 = vperm.xlu0 %3359, %v3299
        %v3361 = vpop.permute.xlu0 %3360
        %3364 = vset.pattern.permute.xlu0 0
        %3365 = vperm.xlu0 %3364, %v3300
        %v3366 = vpop.permute.xlu0 %3365
        %3369 = vset.pattern.permute.xlu0 0
        %3370 = vperm.xlu0 %3369, %v3301
        %v3371 = vpop.permute.xlu0 %3370
        %3374 = vset.pattern.permute.xlu0 0
        %3375 = vperm.xlu0 %3374, %v3302
        %v3376 = vpop.permute.xlu0 %3375
        %3379 = vset.pattern.permute.xlu0 0
        %3380 = vperm.xlu0 %3379, %v3303
        %v3381 = vpop.permute.xlu0 %3380
        %3384 = vset.pattern.permute.xlu0 0
        %3385 = vperm.xlu0 %3384, %v3304
        %v3386 = vpop.permute.xlu0 %3385
        %3389 = vset.pattern.permute.xlu0 0
        %3390 = vperm.xlu0 %3389, %v3305
        %v3391 = vpop.permute.xlu0 %3390
        %3394 = vset.pattern.permute.xlu0 0
        %3395 = vperm.xlu0 %3394, %v3306
        %v3396 = vpop.permute.xlu0 %3395
        %3399 = vset.pattern.permute.xlu0 0
        %3400 = vperm.xlu0 %3399, %v3307
        %v3401 = vpop.permute.xlu0 %3400
        %3404 = vset.pattern.permute.xlu0 0
        %3405 = vperm.xlu0 %3404, %v3308
        %v3406 = vpop.permute.xlu0 %3405
        %3409 = vset.pattern.permute.xlu0 0
        %3410 = vperm.xlu0 %3409, %v3309
        %v3411 = vpop.permute.xlu0 %3410
        %3414 = vset.pattern.permute.xlu0 0
        %3415 = vperm.xlu0 %3414, %v3310
        %v3416 = vpop.permute.xlu0 %3415
        %3419 = vset.pattern.permute.xlu0 0
        %3420 = vperm.xlu0 %3419, %v3311
        %v3421 = vpop.permute.xlu0 %3420
        %3424 = vset.pattern.permute.xlu0 0
        %3425 = vperm.xlu0 %3424, %v3312
        %v3426 = vpop.permute.xlu0 %3425
        %3429 = vset.pattern.permute.xlu0 0
        %3430 = vperm.xlu0 %3429, %v3313
        %v3431 = vpop.permute.xlu0 %3430
        %3434 = vset.pattern.permute.xlu0 0
        %3435 = vperm.xlu0 %3434, %v3314
        %v3436 = vpop.permute.xlu0 %3435
        %3439 = vset.pattern.permute.xlu0 0
        %3440 = vperm.xlu0 %3439, %v3315
        %v3441 = vpop.permute.xlu0 %3440
        %3444 = vset.pattern.permute.xlu0 0
        %3445 = vperm.xlu0 %3444, %v3316
        %v3446 = vpop.permute.xlu0 %3445
        %v3448 = vlaneseq
        %v3449 = vshrl.u32 %v3448, 7
        %v3450 = vsub.s32 0, %v3449
        %v3451 = vrot.slane %v3317, %v3450
        %v3452 = vmul.f32 %v3321, %v3451
        %v3453 = vmul.f32 %v3326, %v3451
        %v3454 = vmul.f32 %v3331, %v3451
        %v3455 = vmul.f32 %v3336, %v3451
        %v3456 = vmul.f32 %v3341, %v3451
        %v3457 = vmul.f32 %v3346, %v3451
        %v3458 = vmul.f32 %v3351, %v3451
        %v3459 = vmul.f32 %v3356, %v3451
        %v3460 = vmul.f32 %v3361, %v3451
        %v3461 = vmul.f32 %v3366, %v3451
        %v3462 = vmul.f32 %v3371, %v3451
        %v3463 = vmul.f32 %v3376, %v3451
        %v3464 = vmul.f32 %v3381, %v3451
        %v3465 = vmul.f32 %v3386, %v3451
        %v3466 = vmul.f32 %v3391, %v3451
        %v3467 = vmul.f32 %v3396, %v3451
        %v3468 = vmul.f32 %v3401, %v3451
        %v3469 = vmul.f32 %v3406, %v3451
        %v3470 = vmul.f32 %v3411, %v3451
        %v3471 = vmul.f32 %v3416, %v3451
        %v3472 = vmul.f32 %v3421, %v3451
        %v3473 = vmul.f32 %v3426, %v3451
        %v3474 = vmul.f32 %v3431, %v3451
        %v3475 = vmul.f32 %v3436, %v3451
        %v3476 = vmul.f32 %v3441, %v3451
        %v3477 = vmul.f32 %v3446, %v3451
        %v3478 = vadd.f32 %v3265, %v3452
        %v3479 = vadd.f32 %v3266, %v3453
        %v3480 = vadd.f32 %v3267, %v3454
        %v3481 = vadd.f32 %v3268, %v3455
        %v3482 = vadd.f32 %v3269, %v3456
        %v3483 = vadd.f32 %v3270, %v3457
        %v3484 = vadd.f32 %v3271, %v3458
        %v3485 = vadd.f32 %v3272, %v3459
        %v3486 = vadd.f32 %v3273, %v3460
        %v3487 = vadd.f32 %v3274, %v3461
        %v3488 = vadd.f32 %v3275, %v3462
        %v3489 = vadd.f32 %v3276, %v3463
        %v3490 = vadd.f32 %v3277, %v3464
        %v3491 = vadd.f32 %v3278, %v3465
        %v3492 = vadd.f32 %v3279, %v3466
        %v3493 = vadd.f32 %v3280, %v3467
        %v3494 = vadd.f32 %v3281, %v3468
        %v3495 = vadd.f32 %v3282, %v3469
        %v3496 = vadd.f32 %v3283, %v3470
        %v3497 = vadd.f32 %v3284, %v3471
        %v3498 = vadd.f32 %v3285, %v3472
        %v3499 = vadd.f32 %v3286, %v3473
        %v3500 = vadd.f32 %v3287, %v3474
        %v3501 = vadd.f32 %v3288, %v3475
        %v3502 = vadd.f32 %v3289, %v3476
        %v3503 = vadd.f32 %v3290, %v3477
        %v3504 = vld [vmem:[%s2864 + $0x3] sm:$0xff]
        %v3505 = vld [vmem:[%s2864 + $0xb] sm:$0x1f]
        %v3506 = vld [vmem:[%s2864 + $0x13] sm:$0xff]
        %v3507 = vld [vmem:[%s2864 + $0x1b] sm:$0x1f]
        %v3508 = vld [vmem:[%s2864 + $0x23] sm:$0xff]
        %v3509 = vld [vmem:[%s2864 + $0x2b] sm:$0x1f]
        %v3510 = vld [vmem:[%s2864 + $0x33] sm:$0xff]
        %v3511 = vld [vmem:[%s2864 + $0x3b] sm:$0x1f]
        %v3512 = vld [vmem:[%s2864 + $0x43] sm:$0xff]
        %v3513 = vld [vmem:[%s2864 + $0x4b] sm:$0x1f]
        %v3514 = vld [vmem:[%s2864 + $0x53] sm:$0xff]
        %v3515 = vld [vmem:[%s2864 + $0x5b] sm:$0x1f]
        %v3516 = vld [vmem:[%s2864 + $0x63] sm:$0xff]
        %v3517 = vld [vmem:[%s2864 + $0x6b] sm:$0x1f]
        %v3518 = vld [vmem:[%s2864 + $0x73] sm:$0xff]
        %v3519 = vld [vmem:[%s2864 + $0x7b] sm:$0x1f]
        %v3520 = vld [vmem:[%s2864 + $0x83] sm:$0xff]
        %v3521 = vld [vmem:[%s2864 + $0x8b] sm:$0x1f]
        %v3522 = vld [vmem:[%s2864 + $0x93] sm:$0xff]
        %v3523 = vld [vmem:[%s2864 + $0x9b] sm:$0x1f]
        %v3524 = vld [vmem:[%s2864 + $0xa3] sm:$0xff]
        %v3525 = vld [vmem:[%s2864 + $0xab] sm:$0x1f]
        %v3526 = vld [vmem:[%s2864 + $0xb3] sm:$0xff]
        %v3527 = vld [vmem:[%s2864 + $0xbb] sm:$0x1f]
        %v3528 = vld [vmem:[%s2864 + $0xc3] sm:$0xff]
        %v3529 = vld [vmem:[%s2864 + $0xcb] sm:$0x1f]
        %v3530 = vld [vmem:[%s1 + $0xf] sm:$0x1]
        %3532 = vset.pattern.permute.xlu0 0
        %3533 = vperm.xlu0 %3532, %v3504
        %v3534 = vpop.permute.xlu0 %3533
        %3537 = vset.pattern.permute.xlu0 0
        %3538 = vperm.xlu0 %3537, %v3505
        %v3539 = vpop.permute.xlu0 %3538
        %3542 = vset.pattern.permute.xlu0 0
        %3543 = vperm.xlu0 %3542, %v3506
        %v3544 = vpop.permute.xlu0 %3543
        %3547 = vset.pattern.permute.xlu0 0
        %3548 = vperm.xlu0 %3547, %v3507
        %v3549 = vpop.permute.xlu0 %3548
        %3552 = vset.pattern.permute.xlu0 0
        %3553 = vperm.xlu0 %3552, %v3508
        %v3554 = vpop.permute.xlu0 %3553
        %3557 = vset.pattern.permute.xlu0 0
        %3558 = vperm.xlu0 %3557, %v3509
        %v3559 = vpop.permute.xlu0 %3558
        %3562 = vset.pattern.permute.xlu0 0
        %3563 = vperm.xlu0 %3562, %v3510
        %v3564 = vpop.permute.xlu0 %3563
        %3567 = vset.pattern.permute.xlu0 0
        %3568 = vperm.xlu0 %3567, %v3511
        %v3569 = vpop.permute.xlu0 %3568
        %3572 = vset.pattern.permute.xlu0 0
        %3573 = vperm.xlu0 %3572, %v3512
        %v3574 = vpop.permute.xlu0 %3573
        %3577 = vset.pattern.permute.xlu0 0
        %3578 = vperm.xlu0 %3577, %v3513
        %v3579 = vpop.permute.xlu0 %3578
        %3582 = vset.pattern.permute.xlu0 0
        %3583 = vperm.xlu0 %3582, %v3514
        %v3584 = vpop.permute.xlu0 %3583
        %3587 = vset.pattern.permute.xlu0 0
        %3588 = vperm.xlu0 %3587, %v3515
        %v3589 = vpop.permute.xlu0 %3588
        %3592 = vset.pattern.permute.xlu0 0
        %3593 = vperm.xlu0 %3592, %v3516
        %v3594 = vpop.permute.xlu0 %3593
        %3597 = vset.pattern.permute.xlu0 0
        %3598 = vperm.xlu0 %3597, %v3517
        %v3599 = vpop.permute.xlu0 %3598
        %3602 = vset.pattern.permute.xlu0 0
        %3603 = vperm.xlu0 %3602, %v3518
        %v3604 = vpop.permute.xlu0 %3603
        %3607 = vset.pattern.permute.xlu0 0
        %3608 = vperm.xlu0 %3607, %v3519
        %v3609 = vpop.permute.xlu0 %3608
        %3612 = vset.pattern.permute.xlu0 0
        %3613 = vperm.xlu0 %3612, %v3520
        %v3614 = vpop.permute.xlu0 %3613
        %3617 = vset.pattern.permute.xlu0 0
        %3618 = vperm.xlu0 %3617, %v3521
        %v3619 = vpop.permute.xlu0 %3618
        %3622 = vset.pattern.permute.xlu0 0
        %3623 = vperm.xlu0 %3622, %v3522
        %v3624 = vpop.permute.xlu0 %3623
        %3627 = vset.pattern.permute.xlu0 0
        %3628 = vperm.xlu0 %3627, %v3523
        %v3629 = vpop.permute.xlu0 %3628
        %3632 = vset.pattern.permute.xlu0 0
        %3633 = vperm.xlu0 %3632, %v3524
        %v3634 = vpop.permute.xlu0 %3633
        %3637 = vset.pattern.permute.xlu0 0
        %3638 = vperm.xlu0 %3637, %v3525
        %v3639 = vpop.permute.xlu0 %3638
        %3642 = vset.pattern.permute.xlu0 0
        %3643 = vperm.xlu0 %3642, %v3526
        %v3644 = vpop.permute.xlu0 %3643
        %3647 = vset.pattern.permute.xlu0 0
        %3648 = vperm.xlu0 %3647, %v3527
        %v3649 = vpop.permute.xlu0 %3648
        %3652 = vset.pattern.permute.xlu0 0
        %3653 = vperm.xlu0 %3652, %v3528
        %v3654 = vpop.permute.xlu0 %3653
        %3657 = vset.pattern.permute.xlu0 0
        %3658 = vperm.xlu0 %3657, %v3529
        %v3659 = vpop.permute.xlu0 %3658
        %v3661 = vlaneseq
        %v3662 = vshrl.u32 %v3661, 7
        %v3663 = vsub.s32 0, %v3662
        %v3664 = vrot.slane %v3530, %v3663
        %v3665 = vmul.f32 %v3534, %v3664
        %v3666 = vmul.f32 %v3539, %v3664
        %v3667 = vmul.f32 %v3544, %v3664
        %v3668 = vmul.f32 %v3549, %v3664
        %v3669 = vmul.f32 %v3554, %v3664
        %v3670 = vmul.f32 %v3559, %v3664
        %v3671 = vmul.f32 %v3564, %v3664
        %v3672 = vmul.f32 %v3569, %v3664
        %v3673 = vmul.f32 %v3574, %v3664
        %v3674 = vmul.f32 %v3579, %v3664
        %v3675 = vmul.f32 %v3584, %v3664
        %v3676 = vmul.f32 %v3589, %v3664
        %v3677 = vmul.f32 %v3594, %v3664
        %v3678 = vmul.f32 %v3599, %v3664
        %v3679 = vmul.f32 %v3604, %v3664
        %v3680 = vmul.f32 %v3609, %v3664
        %v3681 = vmul.f32 %v3614, %v3664
        %v3682 = vmul.f32 %v3619, %v3664
        %v3683 = vmul.f32 %v3624, %v3664
        %v3684 = vmul.f32 %v3629, %v3664
        %v3685 = vmul.f32 %v3634, %v3664
        %v3686 = vmul.f32 %v3639, %v3664
        %v3687 = vmul.f32 %v3644, %v3664
        %v3688 = vmul.f32 %v3649, %v3664
        %v3689 = vmul.f32 %v3654, %v3664
        %v3690 = vmul.f32 %v3659, %v3664
        %v3691 = vadd.f32 %v3478, %v3665
        %v3692 = vadd.f32 %v3479, %v3666
        %v3693 = vadd.f32 %v3480, %v3667
        %v3694 = vadd.f32 %v3481, %v3668
        %v3695 = vadd.f32 %v3482, %v3669
        %v3696 = vadd.f32 %v3483, %v3670
        %v3697 = vadd.f32 %v3484, %v3671
        %v3698 = vadd.f32 %v3485, %v3672
        %v3699 = vadd.f32 %v3486, %v3673
        %v3700 = vadd.f32 %v3487, %v3674
        %v3701 = vadd.f32 %v3488, %v3675
        %v3702 = vadd.f32 %v3489, %v3676
        %v3703 = vadd.f32 %v3490, %v3677
        %v3704 = vadd.f32 %v3491, %v3678
        %v3705 = vadd.f32 %v3492, %v3679
        %v3706 = vadd.f32 %v3493, %v3680
        %v3707 = vadd.f32 %v3494, %v3681
        %v3708 = vadd.f32 %v3495, %v3682
        %v3709 = vadd.f32 %v3496, %v3683
        %v3710 = vadd.f32 %v3497, %v3684
        %v3711 = vadd.f32 %v3498, %v3685
        %v3712 = vadd.f32 %v3499, %v3686
        %v3713 = vadd.f32 %v3500, %v3687
        %v3714 = vadd.f32 %v3501, %v3688
        %v3715 = vadd.f32 %v3502, %v3689
        %v3716 = vadd.f32 %v3503, %v3690
        %v3717 = vld [vmem:[%s2] sm:$0x1]
        %v3719 = vlaneseq
        %v3720 = vshrl.u32 %v3719, 7
        %v3721 = vsub.s32 0, %v3720
        %v3722 = vrot.slane %v3717, %v3721
        %v3724 = vadd.f32 %v3691, %v3722
        %v3725 = vadd.f32 %v3692, %v3722
        %v3726 = vadd.f32 %v3693, %v3722
        %v3727 = vadd.f32 %v3694, %v3722
        %v3728 = vadd.f32 %v3695, %v3722
        %v3729 = vadd.f32 %v3696, %v3722
        %v3730 = vadd.f32 %v3697, %v3722
        %v3731 = vadd.f32 %v3698, %v3722
        %v3732 = vadd.f32 %v3699, %v3722
        %v3733 = vadd.f32 %v3700, %v3722
        %v3734 = vadd.f32 %v3701, %v3722
        %v3735 = vadd.f32 %v3702, %v3722
        %v3736 = vadd.f32 %v3703, %v3722
        %v3737 = vadd.f32 %v3704, %v3722
        %v3738 = vadd.f32 %v3705, %v3722
        %v3739 = vadd.f32 %v3706, %v3722
        %v3740 = vadd.f32 %v3707, %v3722
        %v3741 = vadd.f32 %v3708, %v3722
        %v3742 = vadd.f32 %v3709, %v3722
        %v3743 = vadd.f32 %v3710, %v3722
        %v3744 = vadd.f32 %v3711, %v3722
        %v3745 = vadd.f32 %v3712, %v3722
        %v3746 = vadd.f32 %v3713, %v3722
        %v3747 = vadd.f32 %v3714, %v3722
        %v3748 = vadd.f32 %v3715, %v3722
        %v3749 = vadd.f32 %v3716, %v3722
        %v3750 = vmax.f32 %v3724, 0.0
        %v3751 = vmax.f32 %v3725, 0.0
        %v3752 = vmax.f32 %v3726, 0.0
        %v3753 = vmax.f32 %v3727, 0.0
        %v3754 = vmax.f32 %v3728, 0.0
        %v3755 = vmax.f32 %v3729, 0.0
        %v3756 = vmax.f32 %v3730, 0.0
        %v3757 = vmax.f32 %v3731, 0.0
        %v3758 = vmax.f32 %v3732, 0.0
        %v3759 = vmax.f32 %v3733, 0.0
        %v3760 = vmax.f32 %v3734, 0.0
        %v3761 = vmax.f32 %v3735, 0.0
        %v3762 = vmax.f32 %v3736, 0.0
        %v3763 = vmax.f32 %v3737, 0.0
        %v3764 = vmax.f32 %v3738, 0.0
        %v3765 = vmax.f32 %v3739, 0.0
        %v3766 = vmax.f32 %v3740, 0.0
        %v3767 = vmax.f32 %v3741, 0.0
        %v3768 = vmax.f32 %v3742, 0.0
        %v3769 = vmax.f32 %v3743, 0.0
        %v3770 = vmax.f32 %v3744, 0.0
        %v3771 = vmax.f32 %v3745, 0.0
        %v3772 = vmax.f32 %v3746, 0.0
        %v3773 = vmax.f32 %v3747, 0.0
        %v3774 = vmax.f32 %v3748, 0.0
        %v3775 = vmax.f32 %v3749, 0.0
        %3776 = vst [vmem:[#allocation2] sm:$0xff] %v3750
        %3777 = vst [vmem:[#allocation2 + $0x8] sm:$0x1f] %v3751
        %3778 = vst [vmem:[#allocation2 + $0x10] sm:$0xff] %v3752
        %3779 = vst [vmem:[#allocation2 + $0x18] sm:$0x1f] %v3753
        %3780 = vst [vmem:[#allocation2 + $0x20] sm:$0xff] %v3754
        %3781 = vst [vmem:[#allocation2 + $0x28] sm:$0x1f] %v3755
        %3782 = vst [vmem:[#allocation2 + $0x30] sm:$0xff] %v3756
        %3783 = vst [vmem:[#allocation2 + $0x38] sm:$0x1f] %v3757
        %3784 = vst [vmem:[#allocation2 + $0x40] sm:$0xff] %v3758
        %3785 = vst [vmem:[#allocation2 + $0x48] sm:$0x1f] %v3759
        %3786 = vst [vmem:[#allocation2 + $0x50] sm:$0xff] %v3760
        %3787 = vst [vmem:[#allocation2 + $0x58] sm:$0x1f] %v3761
        %3788 = vst [vmem:[#allocation2 + $0x60] sm:$0xff] %v3762
        %3789 = vst [vmem:[#allocation2 + $0x68] sm:$0x1f] %v3763
        %3790 = vst [vmem:[#allocation2 + $0x70] sm:$0xff] %v3764
        %3791 = vst [vmem:[#allocation2 + $0x78] sm:$0x1f] %v3765
        %3792 = vst [vmem:[#allocation2 + $0x80] sm:$0xff] %v3766
        %3793 = vst [vmem:[#allocation2 + $0x88] sm:$0x1f] %v3767
        %3794 = vst [vmem:[#allocation2 + $0x90] sm:$0xff] %v3768
        %3795 = vst [vmem:[#allocation2 + $0x98] sm:$0x1f] %v3769
        %3796 = vst [vmem:[#allocation2 + $0xa0] sm:$0xff] %v3770
        %3797 = vst [vmem:[#allocation2 + $0xa8] sm:$0x1f] %v3771
        %3798 = vst [vmem:[#allocation2 + $0xb0] sm:$0xff] %v3772
        %3799 = vst [vmem:[#allocation2 + $0xb8] sm:$0x1f] %v3773
        %3800 = vst [vmem:[#allocation2 + $0xc0] sm:$0xff] %v3774
        %3801 = vst [vmem:[#allocation2 + $0xc8] sm:$0x1f] %v3775
        %v3802 = vld [vmem:[#allocation2] sm:$0xff]
        %v3803 = vld [vmem:[#allocation2 + $0x8] sm:$0x1f]
        %s3804 = scalar_lea.vmem [#allocation2], 16
        %v3805 = vld [vmem:[%s3804] sm:$0xff]
        %v3806 = vld [vmem:[%s3804 + $0x8] sm:$0x1f]
        %v3807 = vmax.f32 %v3802, %v3805
        %v3808 = vmax.f32 %v3803, %v3806
        %vm3809 = vcmask 1041408
        %v3810 = vsel %vm3809, %v3807, -inf
        %v3811 = vrot.slane %v3810, 4
        %v3812 = vmax.f32 %v3810, %v3811
        %v3813 = vrot.slane %v3812, 2
        %v3814 = vmax.f32 %v3812, %v3813
        %v3815 = vrot.slane %v3814, 1
        %v3816 = vmax.f32 %v3814, %v3815
        %3817 = vst [vmem:[#allocation3] sm:$0x1] %v3816
        %vm3818 = vcmask 1043458
        %v3819 = vsel %vm3818, %v3807, -inf
        %v3820 = vrot.slane %v3819, 4
        %v3821 = vmax.f32 %v3819, %v3820
        %v3822 = vrot.slane %v3821, 2
        %v3823 = vmax.f32 %v3821, %v3822
        %v3824 = vrot.slane %v3823, 1
        %v3825 = vmax.f32 %v3823, %v3824
        %3826 = vst [vmem:[#allocation3 + $0x1] sm:$0x1] %v3825
        %vm3827 = vcmask 1045508
        %v3828 = vsel %vm3827, %v3807, -inf
        %v3829 = vrot.slane %v3828, 4
        %v3830 = vmax.f32 %v3828, %v3829
        %v3831 = vrot.slane %v3830, 2
        %v3832 = vmax.f32 %v3830, %v3831
        %v3833 = vrot.slane %v3832, 1
        %v3834 = vmax.f32 %v3832, %v3833
        %3835 = vst [vmem:[#allocation3 + $0x2] sm:$0x1] %v3834
        %vm3836 = vcmask 1047558
        %v3837 = vsel %vm3836, %v3807, -inf
        %v3838 = vrot.slane %v3837, 4
        %v3839 = vmax.f32 %v3837, %v3838
        %v3840 = vrot.slane %v3839, 2
        %v3841 = vmax.f32 %v3839, %v3840
        %v3842 = vrot.slane %v3841, 1
        %v3843 = vmax.f32 %v3841, %v3842
        %3844 = vst [vmem:[#allocation3 + $0x3] sm:$0x1] %v3843
        %v3845 = vsel %vm3809, %v3808, -inf
        %v3846 = vrot.slane %v3845, 4
        %v3847 = vmax.f32 %v3845, %v3846
        %v3848 = vrot.slane %v3847, 2
        %v3849 = vmax.f32 %v3847, %v3848
        %v3850 = vrot.slane %v3849, 1
        %v3851 = vmax.f32 %v3849, %v3850
        %3852 = vst [vmem:[#allocation3 + $0x4] sm:$0x1] %v3851
        %v3853 = vsel %vm3818, %v3808, -inf
        %v3854 = vrot.slane %v3853, 4
        %v3855 = vmax.f32 %v3853, %v3854
        %v3856 = vrot.slane %v3855, 2
        %v3857 = vmax.f32 %v3855, %v3856
        %v3858 = vrot.slane %v3857, 1
        %v3859 = vmax.f32 %v3857, %v3858
        %3860 = vst [vmem:[#allocation3 + $0x5] sm:$0x1] %v3859
        %s3861 = scalar_lea.vmem [#allocation2], 32
        %v3862 = vld [vmem:[%s3861] sm:$0xff]
        %v3863 = vld [vmem:[%s3861 + $0x8] sm:$0x1f]
        %s3864 = scalar_lea.vmem [#allocation2], 48
        %v3865 = vld [vmem:[%s3864] sm:$0xff]
        %v3866 = vld [vmem:[%s3864 + $0x8] sm:$0x1f]
        %v3867 = vmax.f32 %v3862, %v3865
        %v3868 = vmax.f32 %v3863, %v3866
        %v3869 = vsel %vm3809, %v3867, -inf
        %v3870 = vrot.slane %v3869, 4
        %v3871 = vmax.f32 %v3869, %v3870
        %v3872 = vrot.slane %v3871, 2
        %v3873 = vmax.f32 %v3871, %v3872
        %v3874 = vrot.slane %v3873, 1
        %v3875 = vmax.f32 %v3873, %v3874
        %s3876 = scalar_lea.vmem [#allocation3], 8
        %3877 = vst [vmem:[%s3876] sm:$0x1] %v3875
        %v3878 = vsel %vm3818, %v3867, -inf
        %v3879 = vrot.slane %v3878, 4
        %v3880 = vmax.f32 %v3878, %v3879
        %v3881 = vrot.slane %v3880, 2
        %v3882 = vmax.f32 %v3880, %v3881
        %v3883 = vrot.slane %v3882, 1
        %v3884 = vmax.f32 %v3882, %v3883
        %3885 = vst [vmem:[%s3876 + $0x1] sm:$0x1] %v3884
        %v3886 = vsel %vm3827, %v3867, -inf
        %v3887 = vrot.slane %v3886, 4
        %v3888 = vmax.f32 %v3886, %v3887
        %v3889 = vrot.slane %v3888, 2
        %v3890 = vmax.f32 %v3888, %v3889
        %v3891 = vrot.slane %v3890, 1
        %v3892 = vmax.f32 %v3890, %v3891
        %3893 = vst [vmem:[%s3876 + $0x2] sm:$0x1] %v3892
        %v3894 = vsel %vm3836, %v3867, -inf
        %v3895 = vrot.slane %v3894, 4
        %v3896 = vmax.f32 %v3894, %v3895
        %v3897 = vrot.slane %v3896, 2
        %v3898 = vmax.f32 %v3896, %v3897
        %v3899 = vrot.slane %v3898, 1
        %v3900 = vmax.f32 %v3898, %v3899
        %3901 = vst [vmem:[%s3876 + $0x3] sm:$0x1] %v3900
        %v3902 = vsel %vm3809, %v3868, -inf
        %v3903 = vrot.slane %v3902, 4
        %v3904 = vmax.f32 %v3902, %v3903
        %v3905 = vrot.slane %v3904, 2
        %v3906 = vmax.f32 %v3904, %v3905
        %v3907 = vrot.slane %v3906, 1
        %v3908 = vmax.f32 %v3906, %v3907
        %3909 = vst [vmem:[%s3876 + $0x4] sm:$0x1] %v3908
        %v3910 = vsel %vm3818, %v3868, -inf
        %v3911 = vrot.slane %v3910, 4
        %v3912 = vmax.f32 %v3910, %v3911
        %v3913 = vrot.slane %v3912, 2
        %v3914 = vmax.f32 %v3912, %v3913
        %v3915 = vrot.slane %v3914, 1
        %v3916 = vmax.f32 %v3914, %v3915
        %3917 = vst [vmem:[%s3876 + $0x5] sm:$0x1] %v3916
        %s3918 = scalar_lea.vmem [#allocation2], 64
        %v3919 = vld [vmem:[%s3918] sm:$0xff]
        %v3920 = vld [vmem:[%s3918 + $0x8] sm:$0x1f]
        %s3921 = scalar_lea.vmem [#allocation2], 80
        %v3922 = vld [vmem:[%s3921] sm:$0xff]
        %v3923 = vld [vmem:[%s3921 + $0x8] sm:$0x1f]
        %v3924 = vmax.f32 %v3919, %v3922
        %v3925 = vmax.f32 %v3920, %v3923
        %v3926 = vsel %vm3809, %v3924, -inf
        %v3927 = vrot.slane %v3926, 4
        %v3928 = vmax.f32 %v3926, %v3927
        %v3929 = vrot.slane %v3928, 2
        %v3930 = vmax.f32 %v3928, %v3929
        %v3931 = vrot.slane %v3930, 1
        %v3932 = vmax.f32 %v3930, %v3931
        %s3933 = scalar_lea.vmem [#allocation3], 16
        %3934 = vst [vmem:[%s3933] sm:$0x1] %v3932
        %v3935 = vsel %vm3818, %v3924, -inf
        %v3936 = vrot.slane %v3935, 4
        %v3937 = vmax.f32 %v3935, %v3936
        %v3938 = vrot.slane %v3937, 2
        %v3939 = vmax.f32 %v3937, %v3938
        %v3940 = vrot.slane %v3939, 1
        %v3941 = vmax.f32 %v3939, %v3940
        %3942 = vst [vmem:[%s3933 + $0x1] sm:$0x1] %v3941
        %v3943 = vsel %vm3827, %v3924, -inf
        %v3944 = vrot.slane %v3943, 4
        %v3945 = vmax.f32 %v3943, %v3944
        %v3946 = vrot.slane %v3945, 2
        %v3947 = vmax.f32 %v3945, %v3946
        %v3948 = vrot.slane %v3947, 1
        %v3949 = vmax.f32 %v3947, %v3948
        %3950 = vst [vmem:[%s3933 + $0x2] sm:$0x1] %v3949
        %v3951 = vsel %vm3836, %v3924, -inf
        %v3952 = vrot.slane %v3951, 4
        %v3953 = vmax.f32 %v3951, %v3952
        %v3954 = vrot.slane %v3953, 2
        %v3955 = vmax.f32 %v3953, %v3954
        %v3956 = vrot.slane %v3955, 1
        %v3957 = vmax.f32 %v3955, %v3956
        %3958 = vst [vmem:[%s3933 + $0x3] sm:$0x1] %v3957
        %v3959 = vsel %vm3809, %v3925, -inf
        %v3960 = vrot.slane %v3959, 4
        %v3961 = vmax.f32 %v3959, %v3960
        %v3962 = vrot.slane %v3961, 2
        %v3963 = vmax.f32 %v3961, %v3962
        %v3964 = vrot.slane %v3963, 1
        %v3965 = vmax.f32 %v3963, %v3964
        %3966 = vst [vmem:[%s3933 + $0x4] sm:$0x1] %v3965
        %v3967 = vsel %vm3818, %v3925, -inf
        %v3968 = vrot.slane %v3967, 4
        %v3969 = vmax.f32 %v3967, %v3968
        %v3970 = vrot.slane %v3969, 2
        %v3971 = vmax.f32 %v3969, %v3970
        %v3972 = vrot.slane %v3971, 1
        %v3973 = vmax.f32 %v3971, %v3972
        %3974 = vst [vmem:[%s3933 + $0x5] sm:$0x1] %v3973
        %s3975 = scalar_lea.vmem [#allocation2], 96
        %v3976 = vld [vmem:[%s3975] sm:$0xff]
        %v3977 = vld [vmem:[%s3975 + $0x8] sm:$0x1f]
        %s3978 = scalar_lea.vmem [#allocation2], 112
        %v3979 = vld [vmem:[%s3978] sm:$0xff]
        %v3980 = vld [vmem:[%s3978 + $0x8] sm:$0x1f]
        %v3981 = vmax.f32 %v3976, %v3979
        %v3982 = vmax.f32 %v3977, %v3980
        %v3983 = vsel %vm3809, %v3981, -inf
        %v3984 = vrot.slane %v3983, 4
        %v3985 = vmax.f32 %v3983, %v3984
        %v3986 = vrot.slane %v3985, 2
        %v3987 = vmax.f32 %v3985, %v3986
        %v3988 = vrot.slane %v3987, 1
        %v3989 = vmax.f32 %v3987, %v3988
        %s3990 = scalar_lea.vmem [#allocation3], 24
        %3991 = vst [vmem:[%s3990] sm:$0x1] %v3989
        %v3992 = vsel %vm3818, %v3981, -inf
        %v3993 = vrot.slane %v3992, 4
        %v3994 = vmax.f32 %v3992, %v3993
        %v3995 = vrot.slane %v3994, 2
        %v3996 = vmax.f32 %v3994, %v3995
        %v3997 = vrot.slane %v3996, 1
        %v3998 = vmax.f32 %v3996, %v3997
        %3999 = vst [vmem:[%s3990 + $0x1] sm:$0x1] %v3998
        %v4000 = vsel %vm3827, %v3981, -inf
        %v4001 = vrot.slane %v4000, 4
        %v4002 = vmax.f32 %v4000, %v4001
        %v4003 = vrot.slane %v4002, 2
        %v4004 = vmax.f32 %v4002, %v4003
        %v4005 = vrot.slane %v4004, 1
        %v4006 = vmax.f32 %v4004, %v4005
        %4007 = vst [vmem:[%s3990 + $0x2] sm:$0x1] %v4006
        %v4008 = vsel %vm3836, %v3981, -inf
        %v4009 = vrot.slane %v4008, 4
        %v4010 = vmax.f32 %v4008, %v4009
        %v4011 = vrot.slane %v4010, 2
        %v4012 = vmax.f32 %v4010, %v4011
        %v4013 = vrot.slane %v4012, 1
        %v4014 = vmax.f32 %v4012, %v4013
        %4015 = vst [vmem:[%s3990 + $0x3] sm:$0x1] %v4014
        %v4016 = vsel %vm3809, %v3982, -inf
        %v4017 = vrot.slane %v4016, 4
        %v4018 = vmax.f32 %v4016, %v4017
        %v4019 = vrot.slane %v4018, 2
        %v4020 = vmax.f32 %v4018, %v4019
        %v4021 = vrot.slane %v4020, 1
        %v4022 = vmax.f32 %v4020, %v4021
        %4023 = vst [vmem:[%s3990 + $0x4] sm:$0x1] %v4022
        %v4024 = vsel %vm3818, %v3982, -inf
        %v4025 = vrot.slane %v4024, 4
        %v4026 = vmax.f32 %v4024, %v4025
        %v4027 = vrot.slane %v4026, 2
        %v4028 = vmax.f32 %v4026, %v4027
        %v4029 = vrot.slane %v4028, 1
        %v4030 = vmax.f32 %v4028, %v4029
        %4031 = vst [vmem:[%s3990 + $0x5] sm:$0x1] %v4030
        %s4032 = scalar_lea.vmem [#allocation2], 128
        %v4033 = vld [vmem:[%s4032] sm:$0xff]
        %v4034 = vld [vmem:[%s4032 + $0x8] sm:$0x1f]
        %s4035 = scalar_lea.vmem [#allocation2], 144
        %v4036 = vld [vmem:[%s4035] sm:$0xff]
        %v4037 = vld [vmem:[%s4035 + $0x8] sm:$0x1f]
        %v4038 = vmax.f32 %v4033, %v4036
        %v4039 = vmax.f32 %v4034, %v4037
        %v4040 = vsel %vm3809, %v4038, -inf
        %v4041 = vrot.slane %v4040, 4
        %v4042 = vmax.f32 %v4040, %v4041
        %v4043 = vrot.slane %v4042, 2
        %v4044 = vmax.f32 %v4042, %v4043
        %v4045 = vrot.slane %v4044, 1
        %v4046 = vmax.f32 %v4044, %v4045
        %s4047 = scalar_lea.vmem [#allocation3], 32
        %4048 = vst [vmem:[%s4047] sm:$0x1] %v4046
        %v4049 = vsel %vm3818, %v4038, -inf
        %v4050 = vrot.slane %v4049, 4
        %v4051 = vmax.f32 %v4049, %v4050
        %v4052 = vrot.slane %v4051, 2
        %v4053 = vmax.f32 %v4051, %v4052
        %v4054 = vrot.slane %v4053, 1
        %v4055 = vmax.f32 %v4053, %v4054
        %4056 = vst [vmem:[%s4047 + $0x1] sm:$0x1] %v4055
        %v4057 = vsel %vm3827, %v4038, -inf
        %v4058 = vrot.slane %v4057, 4
        %v4059 = vmax.f32 %v4057, %v4058
        %v4060 = vrot.slane %v4059, 2
        %v4061 = vmax.f32 %v4059, %v4060
        %v4062 = vrot.slane %v4061, 1
        %v4063 = vmax.f32 %v4061, %v4062
        %4064 = vst [vmem:[%s4047 + $0x2] sm:$0x1] %v4063
        %v4065 = vsel %vm3836, %v4038, -inf
        %v4066 = vrot.slane %v4065, 4
        %v4067 = vmax.f32 %v4065, %v4066
        %v4068 = vrot.slane %v4067, 2
        %v4069 = vmax.f32 %v4067, %v4068
        %v4070 = vrot.slane %v4069, 1
        %v4071 = vmax.f32 %v4069, %v4070
        %4072 = vst [vmem:[%s4047 + $0x3] sm:$0x1] %v4071
        %v4073 = vsel %vm3809, %v4039, -inf
        %v4074 = vrot.slane %v4073, 4
        %v4075 = vmax.f32 %v4073, %v4074
        %v4076 = vrot.slane %v4075, 2
        %v4077 = vmax.f32 %v4075, %v4076
        %v4078 = vrot.slane %v4077, 1
        %v4079 = vmax.f32 %v4077, %v4078
        %4080 = vst [vmem:[%s4047 + $0x4] sm:$0x1] %v4079
        %v4081 = vsel %vm3818, %v4039, -inf
        %v4082 = vrot.slane %v4081, 4
        %v4083 = vmax.f32 %v4081, %v4082
        %v4084 = vrot.slane %v4083, 2
        %v4085 = vmax.f32 %v4083, %v4084
        %v4086 = vrot.slane %v4085, 1
        %v4087 = vmax.f32 %v4085, %v4086
        %4088 = vst [vmem:[%s4047 + $0x5] sm:$0x1] %v4087
        %s4089 = scalar_lea.vmem [#allocation2], 160
        %v4090 = vld [vmem:[%s4089] sm:$0xff]
        %v4091 = vld [vmem:[%s4089 + $0x8] sm:$0x1f]
        %s4092 = scalar_lea.vmem [#allocation2], 176
        %v4093 = vld [vmem:[%s4092] sm:$0xff]
        %v4094 = vld [vmem:[%s4092 + $0x8] sm:$0x1f]
        %v4095 = vmax.f32 %v4090, %v4093
        %v4096 = vmax.f32 %v4091, %v4094
        %v4097 = vsel %vm3809, %v4095, -inf
        %v4098 = vrot.slane %v4097, 4
        %v4099 = vmax.f32 %v4097, %v4098
        %v4100 = vrot.slane %v4099, 2
        %v4101 = vmax.f32 %v4099, %v4100
        %v4102 = vrot.slane %v4101, 1
        %v4103 = vmax.f32 %v4101, %v4102
        %s4104 = scalar_lea.vmem [#allocation3], 40
        %4105 = vst [vmem:[%s4104] sm:$0x1] %v4103
        %v4106 = vsel %vm3818, %v4095, -inf
        %v4107 = vrot.slane %v4106, 4
        %v4108 = vmax.f32 %v4106, %v4107
        %v4109 = vrot.slane %v4108, 2
        %v4110 = vmax.f32 %v4108, %v4109
        %v4111 = vrot.slane %v4110, 1
        %v4112 = vmax.f32 %v4110, %v4111
        %4113 = vst [vmem:[%s4104 + $0x1] sm:$0x1] %v4112
        %v4114 = vsel %vm3827, %v4095, -inf
        %v4115 = vrot.slane %v4114, 4
        %v4116 = vmax.f32 %v4114, %v4115
        %v4117 = vrot.slane %v4116, 2
        %v4118 = vmax.f32 %v4116, %v4117
        %v4119 = vrot.slane %v4118, 1
        %v4120 = vmax.f32 %v4118, %v4119
        %4121 = vst [vmem:[%s4104 + $0x2] sm:$0x1] %v4120
        %v4122 = vsel %vm3836, %v4095, -inf
        %v4123 = vrot.slane %v4122, 4
        %v4124 = vmax.f32 %v4122, %v4123
        %v4125 = vrot.slane %v4124, 2
        %v4126 = vmax.f32 %v4124, %v4125
        %v4127 = vrot.slane %v4126, 1
        %v4128 = vmax.f32 %v4126, %v4127
        %4129 = vst [vmem:[%s4104 + $0x3] sm:$0x1] %v4128
        %v4130 = vsel %vm3809, %v4096, -inf
        %v4131 = vrot.slane %v4130, 4
        %v4132 = vmax.f32 %v4130, %v4131
        %v4133 = vrot.slane %v4132, 2
        %v4134 = vmax.f32 %v4132, %v4133
        %v4135 = vrot.slane %v4134, 1
        %v4136 = vmax.f32 %v4134, %v4135
        %4137 = vst [vmem:[%s4104 + $0x4] sm:$0x1] %v4136
        %v4138 = vsel %vm3818, %v4096, -inf
        %v4139 = vrot.slane %v4138, 4
        %v4140 = vmax.f32 %v4138, %v4139
        %v4141 = vrot.slane %v4140, 2
        %v4142 = vmax.f32 %v4140, %v4141
        %v4143 = vrot.slane %v4142, 1
        %v4144 = vmax.f32 %v4142, %v4143
        %4145 = vst [vmem:[%s4104 + $0x5] sm:$0x1] %v4144
        %v4146 = vld [vmem:[%s4] sm:$0x1]
        %v4147 = vld [vmem:[#allocation3] sm:$0xf]
        %v4148 = vld [vmem:[#allocation6] sm:$0xff]
        %v4149 = vld [vmem:[#allocation6 + $0x8] sm:$0xff]
        %v4150 = vld [vmem:[#allocation6 + $0x10] sm:$0xff]
        %v4151 = vld [vmem:[#allocation6 + $0x18] sm:$0xff]
        %v4152 = vld [vmem:[#allocation6 + $0x20] sm:$0xff]
        %v4153 = vld [vmem:[#allocation6 + $0x28] sm:$0xff]
        %v4154 = vld [vmem:[#allocation6 + $0x30] sm:$0xff]
        %v4155 = vld [vmem:[#allocation6 + $0x38] sm:$0xff]
        %v4156 = vld [vmem:[#allocation6 + $0x40] sm:$0xff]
        %v4157 = vld [vmem:[#allocation6 + $0x48] sm:$0xff]
        %v4158 = vld [vmem:[#allocation6 + $0x50] sm:$0xff]
        %v4159 = vld [vmem:[#allocation6 + $0x58] sm:$0xff]
        %v4160 = vld [vmem:[#allocation6 + $0x60] sm:$0xff]
        %v4161 = vld [vmem:[#allocation6 + $0x68] sm:$0xff]
        %v4162 = vld [vmem:[#allocation6 + $0x70] sm:$0xff]
        %v4163 = vld [vmem:[#allocation6 + $0x78] sm:$0xff]
        %v4164 = vld [vmem:[#allocation3 + $0x1] sm:$0xf]
        %s4165 = scalar_lea.vmem [#allocation6], 128
        %v4166 = vld [vmem:[%s4165] sm:$0xff]
        %v4167 = vld [vmem:[%s4165 + $0x8] sm:$0xff]
        %v4168 = vld [vmem:[%s4165 + $0x10] sm:$0xff]
        %v4169 = vld [vmem:[%s4165 + $0x18] sm:$0xff]
        %v4170 = vld [vmem:[%s4165 + $0x20] sm:$0xff]
        %v4171 = vld [vmem:[%s4165 + $0x28] sm:$0xff]
        %v4172 = vld [vmem:[%s4165 + $0x30] sm:$0xff]
        %v4173 = vld [vmem:[%s4165 + $0x38] sm:$0xff]
        %v4174 = vld [vmem:[%s4165 + $0x40] sm:$0xff]
        %v4175 = vld [vmem:[%s4165 + $0x48] sm:$0xff]
        %v4176 = vld [vmem:[%s4165 + $0x50] sm:$0xff]
        %v4177 = vld [vmem:[%s4165 + $0x58] sm:$0xff]
        %v4178 = vld [vmem:[%s4165 + $0x60] sm:$0xff]
        %v4179 = vld [vmem:[%s4165 + $0x68] sm:$0xff]
        %v4180 = vld [vmem:[%s4165 + $0x70] sm:$0xff]
        %v4181 = vld [vmem:[%s4165 + $0x78] sm:$0xff]
        %4182 = vmatprep.subr.mxu0 0.0
        %4183 = vmatpush1.msra.mxu0 %v4181
        %4184 = vmatprep.subr.mxu0 0.0
        %4185 = vmatpush1.msra.mxu0 %v4180
        %4186 = vmatprep.subr.mxu0 0.0
        %4187 = vmatpush1.msra.mxu0 %v4179
        %4188 = vmatprep.subr.mxu0 0.0
        %4189 = vmatpush1.msra.mxu0 %v4178
        %4190 = vmatprep.subr.mxu0 0.0
        %4191 = vmatpush1.msra.mxu0 %v4177
        %4192 = vmatprep.subr.mxu0 0.0
        %4193 = vmatpush1.msra.mxu0 %v4176
        %4194 = vmatprep.subr.mxu0 0.0
        %4195 = vmatpush1.msra.mxu0 %v4175
        %4196 = vmatprep.subr.mxu0 0.0
        %4197 = vmatpush1.msra.mxu0 %v4174
        %4198 = vmatprep.subr.mxu0 0.0
        %4199 = vmatpush1.msra.mxu0 %v4173
        %4200 = vmatprep.subr.mxu0 0.0
        %4201 = vmatpush1.msra.mxu0 %v4172
        %4202 = vmatprep.subr.mxu0 0.0
        %4203 = vmatpush1.msra.mxu0 %v4171
        %4204 = vmatprep.subr.mxu0 0.0
        %4205 = vmatpush1.msra.mxu0 %v4170
        %4206 = vmatprep.subr.mxu0 0.0
        %4207 = vmatpush1.msra.mxu0 %v4169
        %4208 = vmatprep.subr.mxu0 0.0
        %4209 = vmatpush1.msra.mxu0 %v4168
        %4210 = vmatprep.subr.mxu0 0.0
        %4211 = vmatpush1.msra.mxu0 %v4167
        %4212 = vmatprep.subr.mxu0 0.0
        %4213 = vmatpush1.msra.mxu0 %v4166
        %4214 = vmatprep.subr.mxu0 0.0
        %4215 = vmatpush2.msra.mxu0 0.0
        %4216 = vmatprep.subr.mxu0 0.0
        %4217 = vmatpush2.msra.mxu0 0.0
        %4218 = vmatprep.subr.mxu0 0.0
        %4219 = vmatpush2.msra.mxu0 0.0
        %4220 = vmatprep.subr.mxu0 0.0
        %4221 = vmatpush2.msra.mxu0 0.0
        %4222 = vmatprep.subr.mxu0 0.0
        %4223 = vmatpush2.msra.mxu0 0.0
        %4224 = vmatprep.subr.mxu0 0.0
        %4225 = vmatpush2.msra.mxu0 0.0
        %4226 = vmatprep.subr.mxu0 0.0
        %4227 = vmatpush2.msra.mxu0 0.0
        %4228 = vmatprep.subr.mxu0 0.0
        %4229 = vmatpush2.msra.mxu0 0.0
        %4230 = vmatprep.subr.mxu0 0.0
        %4231 = vmatpush2.msra.mxu0 0.0
        %4232 = vmatprep.subr.mxu0 0.0
        %4233 = vmatpush2.msra.mxu0 0.0
        %4234 = vmatprep.subr.mxu0 0.0
        %4235 = vmatpush2.msra.mxu0 0.0
        %4236 = vmatprep.subr.mxu0 0.0
        %4237 = vmatpush2.msra.mxu0 0.0
        %4238 = vmatprep.subr.mxu0 0.0
        %4239 = vmatpush2.msra.mxu0 0.0
        %4240 = vmatprep.subr.mxu0 0.0
        %4241 = vmatpush2.msra.mxu0 0.0
        %4242 = vmatprep.subr.mxu0 0.0
        %4243 = vmatpush2.msra.mxu0 0.0
        %4244 = vmatprep.subr.mxu0 0.0
        %4245 = vmatpush2.msra.mxu0 0.0
        %4246 = vmatprep.mubr.f32.mxu0 0.0
        %4247 = vmatmul.mubr.f32.gmra.mxu0 %v4164
        %v4248 = vpop.f32.mrf.mxu0
        %v4249 = vadd.f32 0.0, %v4248
        %v4250 = vpop.f32.mrf.mxu0
        %4251 = vdwg.mxu0
        %4252 = vmatprep.subr.mxu0 0.0
        %4253 = vmatpush1.msra.mxu0 %v4163
        %4254 = vmatprep.subr.mxu0 0.0
        %4255 = vmatpush1.msra.mxu0 %v4162
        %4256 = vmatprep.subr.mxu0 0.0
        %4257 = vmatpush1.msra.mxu0 %v4161
        %4258 = vmatprep.subr.mxu0 0.0
        %4259 = vmatpush1.msra.mxu0 %v4160
        %4260 = vmatprep.subr.mxu0 0.0
        %4261 = vmatpush1.msra.mxu0 %v4159
        %4262 = vmatprep.subr.mxu0 0.0
        %4263 = vmatpush1.msra.mxu0 %v4158
        %4264 = vmatprep.subr.mxu0 0.0
        %4265 = vmatpush1.msra.mxu0 %v4157
        %4266 = vmatprep.subr.mxu0 0.0
        %4267 = vmatpush1.msra.mxu0 %v4156
        %4268 = vmatprep.subr.mxu0 0.0
        %4269 = vmatpush1.msra.mxu0 %v4155
        %4270 = vmatprep.subr.mxu0 0.0
        %4271 = vmatpush1.msra.mxu0 %v4154
        %4272 = vmatprep.subr.mxu0 0.0
        %4273 = vmatpush1.msra.mxu0 %v4153
        %4274 = vmatprep.subr.mxu0 0.0
        %4275 = vmatpush1.msra.mxu0 %v4152
        %4276 = vmatprep.subr.mxu0 0.0
        %4277 = vmatpush1.msra.mxu0 %v4151
        %4278 = vmatprep.subr.mxu0 0.0
        %4279 = vmatpush1.msra.mxu0 %v4150
        %4280 = vmatprep.subr.mxu0 0.0
        %4281 = vmatpush1.msra.mxu0 %v4149
        %4282 = vmatprep.subr.mxu0 0.0
        %4283 = vmatpush1.msra.mxu0 %v4148
        %4284 = vmatprep.subr.mxu0 0.0
        %4285 = vmatpush2.msra.mxu0 0.0
        %4286 = vmatprep.subr.mxu0 0.0
        %4287 = vmatpush2.msra.mxu0 0.0
        %4288 = vmatprep.subr.mxu0 0.0
        %4289 = vmatpush2.msra.mxu0 0.0
        %4290 = vmatprep.subr.mxu0 0.0
        %4291 = vmatpush2.msra.mxu0 0.0
        %4292 = vmatprep.subr.mxu0 0.0
        %4293 = vmatpush2.msra.mxu0 0.0
        %4294 = vmatprep.subr.mxu0 0.0
        %4295 = vmatpush2.msra.mxu0 0.0
        %4296 = vmatprep.subr.mxu0 0.0
        %4297 = vmatpush2.msra.mxu0 0.0
        %4298 = vmatprep.subr.mxu0 0.0
        %4299 = vmatpush2.msra.mxu0 0.0
        %4300 = vmatprep.subr.mxu0 0.0
        %4301 = vmatpush2.msra.mxu0 0.0
        %4302 = vmatprep.subr.mxu0 0.0
        %4303 = vmatpush2.msra.mxu0 0.0
        %4304 = vmatprep.subr.mxu0 0.0
        %4305 = vmatpush2.msra.mxu0 0.0
        %4306 = vmatprep.subr.mxu0 0.0
        %4307 = vmatpush2.msra.mxu0 0.0
        %4308 = vmatprep.subr.mxu0 0.0
        %4309 = vmatpush2.msra.mxu0 0.0
        %4310 = vmatprep.subr.mxu0 0.0
        %4311 = vmatpush2.msra.mxu0 0.0
        %4312 = vmatprep.subr.mxu0 0.0
        %4313 = vmatpush2.msra.mxu0 0.0
        %4314 = vmatprep.subr.mxu0 0.0
        %4315 = vmatpush2.msra.mxu0 0.0
        %4316 = vmatprep.mubr.f32.mxu0 0.0
        %4317 = vmatmul.mubr.f32.gmra.mxu0 %v4147
        %v4318 = vpop.f32.mrf.mxu0
        %v4319 = vadd.f32 %v4249, %v4318
        %v4320 = vpop.f32.mrf.mxu0
        %4321 = vdwg.mxu0
        %v4322 = vld [vmem:[#allocation3 + $0x2] sm:$0xf]
        %s4323 = scalar_lea.vmem [#allocation6], 256
        %v4324 = vld [vmem:[%s4323] sm:$0xff]
        %v4325 = vld [vmem:[%s4323 + $0x8] sm:$0xff]
        %v4326 = vld [vmem:[%s4323 + $0x10] sm:$0xff]
        %v4327 = vld [vmem:[%s4323 + $0x18] sm:$0xff]
        %v4328 = vld [vmem:[%s4323 + $0x20] sm:$0xff]
        %v4329 = vld [vmem:[%s4323 + $0x28] sm:$0xff]
        %v4330 = vld [vmem:[%s4323 + $0x30] sm:$0xff]
        %v4331 = vld [vmem:[%s4323 + $0x38] sm:$0xff]
        %v4332 = vld [vmem:[%s4323 + $0x40] sm:$0xff]
        %v4333 = vld [vmem:[%s4323 + $0x48] sm:$0xff]
        %v4334 = vld [vmem:[%s4323 + $0x50] sm:$0xff]
        %v4335 = vld [vmem:[%s4323 + $0x58] sm:$0xff]
        %v4336 = vld [vmem:[%s4323 + $0x60] sm:$0xff]
        %v4337 = vld [vmem:[%s4323 + $0x68] sm:$0xff]
        %v4338 = vld [vmem:[%s4323 + $0x70] sm:$0xff]
        %v4339 = vld [vmem:[%s4323 + $0x78] sm:$0xff]
        %4340 = vmatprep.subr.mxu0 0.0
        %4341 = vmatpush1.msra.mxu0 %v4339
        %4342 = vmatprep.subr.mxu0 0.0
        %4343 = vmatpush1.msra.mxu0 %v4338
        %4344 = vmatprep.subr.mxu0 0.0
        %4345 = vmatpush1.msra.mxu0 %v4337
        %4346 = vmatprep.subr.mxu0 0.0
        %4347 = vmatpush1.msra.mxu0 %v4336
        %4348 = vmatprep.subr.mxu0 0.0
        %4349 = vmatpush1.msra.mxu0 %v4335
        %4350 = vmatprep.subr.mxu0 0.0
        %4351 = vmatpush1.msra.mxu0 %v4334
        %4352 = vmatprep.subr.mxu0 0.0
        %4353 = vmatpush1.msra.mxu0 %v4333
        %4354 = vmatprep.subr.mxu0 0.0
        %4355 = vmatpush1.msra.mxu0 %v4332
        %4356 = vmatprep.subr.mxu0 0.0
        %4357 = vmatpush1.msra.mxu0 %v4331
        %4358 = vmatprep.subr.mxu0 0.0
        %4359 = vmatpush1.msra.mxu0 %v4330
        %4360 = vmatprep.subr.mxu0 0.0
        %4361 = vmatpush1.msra.mxu0 %v4329
        %4362 = vmatprep.subr.mxu0 0.0
        %4363 = vmatpush1.msra.mxu0 %v4328
        %4364 = vmatprep.subr.mxu0 0.0
        %4365 = vmatpush1.msra.mxu0 %v4327
        %4366 = vmatprep.subr.mxu0 0.0
        %4367 = vmatpush1.msra.mxu0 %v4326
        %4368 = vmatprep.subr.mxu0 0.0
        %4369 = vmatpush1.msra.mxu0 %v4325
        %4370 = vmatprep.subr.mxu0 0.0
        %4371 = vmatpush1.msra.mxu0 %v4324
        %4372 = vmatprep.subr.mxu0 0.0
        %4373 = vmatpush2.msra.mxu0 0.0
        %4374 = vmatprep.subr.mxu0 0.0
        %4375 = vmatpush2.msra.mxu0 0.0
        %4376 = vmatprep.subr.mxu0 0.0
        %4377 = vmatpush2.msra.mxu0 0.0
        %4378 = vmatprep.subr.mxu0 0.0
        %4379 = vmatpush2.msra.mxu0 0.0
        %4380 = vmatprep.subr.mxu0 0.0
        %4381 = vmatpush2.msra.mxu0 0.0
        %4382 = vmatprep.subr.mxu0 0.0
        %4383 = vmatpush2.msra.mxu0 0.0
        %4384 = vmatprep.subr.mxu0 0.0
        %4385 = vmatpush2.msra.mxu0 0.0
        %4386 = vmatprep.subr.mxu0 0.0
        %4387 = vmatpush2.msra.mxu0 0.0
        %4388 = vmatprep.subr.mxu0 0.0
        %4389 = vmatpush2.msra.mxu0 0.0
        %4390 = vmatprep.subr.mxu0 0.0
        %4391 = vmatpush2.msra.mxu0 0.0
        %4392 = vmatprep.subr.mxu0 0.0
        %4393 = vmatpush2.msra.mxu0 0.0
        %4394 = vmatprep.subr.mxu0 0.0
        %4395 = vmatpush2.msra.mxu0 0.0
        %4396 = vmatprep.subr.mxu0 0.0
        %4397 = vmatpush2.msra.mxu0 0.0
        %4398 = vmatprep.subr.mxu0 0.0
        %4399 = vmatpush2.msra.mxu0 0.0
        %4400 = vmatprep.subr.mxu0 0.0
        %4401 = vmatpush2.msra.mxu0 0.0
        %4402 = vmatprep.subr.mxu0 0.0
        %4403 = vmatpush2.msra.mxu0 0.0
        %4404 = vmatprep.mubr.f32.mxu0 0.0
        %4405 = vmatmul.mubr.f32.gmra.mxu0 %v4322
        %v4406 = vpop.f32.mrf.mxu0
        %v4407 = vadd.f32 0.0, %v4406
        %v4408 = vpop.f32.mrf.mxu0
        %4409 = vdwg.mxu0
        %v4410 = vadd.f32 %v4319, %v4407
        %v4411 = vld [vmem:[%s3876] sm:$0xf]
        %s4412 = scalar_lea.vmem [#allocation6], 384
        %v4413 = vld [vmem:[%s4412] sm:$0xff]
        %v4414 = vld [vmem:[%s4412 + $0x8] sm:$0xff]
        %v4415 = vld [vmem:[%s4412 + $0x10] sm:$0xff]
        %v4416 = vld [vmem:[%s4412 + $0x18] sm:$0xff]
        %v4417 = vld [vmem:[%s4412 + $0x20] sm:$0xff]
        %v4418 = vld [vmem:[%s4412 + $0x28] sm:$0xff]
        %v4419 = vld [vmem:[%s4412 + $0x30] sm:$0xff]
        %v4420 = vld [vmem:[%s4412 + $0x38] sm:$0xff]
        %v4421 = vld [vmem:[%s4412 + $0x40] sm:$0xff]
        %v4422 = vld [vmem:[%s4412 + $0x48] sm:$0xff]
        %v4423 = vld [vmem:[%s4412 + $0x50] sm:$0xff]
        %v4424 = vld [vmem:[%s4412 + $0x58] sm:$0xff]
        %v4425 = vld [vmem:[%s4412 + $0x60] sm:$0xff]
        %v4426 = vld [vmem:[%s4412 + $0x68] sm:$0xff]
        %v4427 = vld [vmem:[%s4412 + $0x70] sm:$0xff]
        %v4428 = vld [vmem:[%s4412 + $0x78] sm:$0xff]
        %4429 = vmatprep.subr.mxu0 0.0
        %4430 = vmatpush1.msra.mxu0 %v4428
        %4431 = vmatprep.subr.mxu0 0.0
        %4432 = vmatpush1.msra.mxu0 %v4427
        %4433 = vmatprep.subr.mxu0 0.0
        %4434 = vmatpush1.msra.mxu0 %v4426
        %4435 = vmatprep.subr.mxu0 0.0
        %4436 = vmatpush1.msra.mxu0 %v4425
        %4437 = vmatprep.subr.mxu0 0.0
        %4438 = vmatpush1.msra.mxu0 %v4424
        %4439 = vmatprep.subr.mxu0 0.0
        %4440 = vmatpush1.msra.mxu0 %v4423
        %4441 = vmatprep.subr.mxu0 0.0
        %4442 = vmatpush1.msra.mxu0 %v4422
        %4443 = vmatprep.subr.mxu0 0.0
        %4444 = vmatpush1.msra.mxu0 %v4421
        %4445 = vmatprep.subr.mxu0 0.0
        %4446 = vmatpush1.msra.mxu0 %v4420
        %4447 = vmatprep.subr.mxu0 0.0
        %4448 = vmatpush1.msra.mxu0 %v4419
        %4449 = vmatprep.subr.mxu0 0.0
        %4450 = vmatpush1.msra.mxu0 %v4418
        %4451 = vmatprep.subr.mxu0 0.0
        %4452 = vmatpush1.msra.mxu0 %v4417
        %4453 = vmatprep.subr.mxu0 0.0
        %4454 = vmatpush1.msra.mxu0 %v4416
        %4455 = vmatprep.subr.mxu0 0.0
        %4456 = vmatpush1.msra.mxu0 %v4415
        %4457 = vmatprep.subr.mxu0 0.0
        %4458 = vmatpush1.msra.mxu0 %v4414
        %4459 = vmatprep.subr.mxu0 0.0
        %4460 = vmatpush1.msra.mxu0 %v4413
        %4461 = vmatprep.subr.mxu0 0.0
        %4462 = vmatpush2.msra.mxu0 0.0
        %4463 = vmatprep.subr.mxu0 0.0
        %4464 = vmatpush2.msra.mxu0 0.0
        %4465 = vmatprep.subr.mxu0 0.0
        %4466 = vmatpush2.msra.mxu0 0.0
        %4467 = vmatprep.subr.mxu0 0.0
        %4468 = vmatpush2.msra.mxu0 0.0
        %4469 = vmatprep.subr.mxu0 0.0
        %4470 = vmatpush2.msra.mxu0 0.0
        %4471 = vmatprep.subr.mxu0 0.0
        %4472 = vmatpush2.msra.mxu0 0.0
        %4473 = vmatprep.subr.mxu0 0.0
        %4474 = vmatpush2.msra.mxu0 0.0
        %4475 = vmatprep.subr.mxu0 0.0
        %4476 = vmatpush2.msra.mxu0 0.0
        %4477 = vmatprep.subr.mxu0 0.0
        %4478 = vmatpush2.msra.mxu0 0.0
        %4479 = vmatprep.subr.mxu0 0.0
        %4480 = vmatpush2.msra.mxu0 0.0
        %4481 = vmatprep.subr.mxu0 0.0
        %4482 = vmatpush2.msra.mxu0 0.0
        %4483 = vmatprep.subr.mxu0 0.0
        %4484 = vmatpush2.msra.mxu0 0.0
        %4485 = vmatprep.subr.mxu0 0.0
        %4486 = vmatpush2.msra.mxu0 0.0
        %4487 = vmatprep.subr.mxu0 0.0
        %4488 = vmatpush2.msra.mxu0 0.0
        %4489 = vmatprep.subr.mxu0 0.0
        %4490 = vmatpush2.msra.mxu0 0.0
        %4491 = vmatprep.subr.mxu0 0.0
        %4492 = vmatpush2.msra.mxu0 0.0
        %4493 = vmatprep.mubr.f32.mxu0 0.0
        %4494 = vmatmul.mubr.f32.gmra.mxu0 %v4411
        %v4495 = vpop.f32.mrf.mxu0
        %v4496 = vadd.f32 0.0, %v4495
        %v4497 = vpop.f32.mrf.mxu0
        %4498 = vdwg.mxu0
        %v4499 = vadd.f32 %v4410, %v4496
        %v4500 = vld [vmem:[%s3876 + $0x1] sm:$0xf]
        %s4501 = scalar_lea.vmem [#allocation6], 512
        %v4502 = vld [vmem:[%s4501] sm:$0xff]
        %v4503 = vld [vmem:[%s4501 + $0x8] sm:$0xff]
        %v4504 = vld [vmem:[%s4501 + $0x10] sm:$0xff]
        %v4505 = vld [vmem:[%s4501 + $0x18] sm:$0xff]
        %v4506 = vld [vmem:[%s4501 + $0x20] sm:$0xff]
        %v4507 = vld [vmem:[%s4501 + $0x28] sm:$0xff]
        %v4508 = vld [vmem:[%s4501 + $0x30] sm:$0xff]
        %v4509 = vld [vmem:[%s4501 + $0x38] sm:$0xff]
        %v4510 = vld [vmem:[%s4501 + $0x40] sm:$0xff]
        %v4511 = vld [vmem:[%s4501 + $0x48] sm:$0xff]
        %v4512 = vld [vmem:[%s4501 + $0x50] sm:$0xff]
        %v4513 = vld [vmem:[%s4501 + $0x58] sm:$0xff]
        %v4514 = vld [vmem:[%s4501 + $0x60] sm:$0xff]
        %v4515 = vld [vmem:[%s4501 + $0x68] sm:$0xff]
        %v4516 = vld [vmem:[%s4501 + $0x70] sm:$0xff]
        %v4517 = vld [vmem:[%s4501 + $0x78] sm:$0xff]
        %4518 = vmatprep.subr.mxu0 0.0
        %4519 = vmatpush1.msra.mxu0 %v4517
        %4520 = vmatprep.subr.mxu0 0.0
        %4521 = vmatpush1.msra.mxu0 %v4516
        %4522 = vmatprep.subr.mxu0 0.0
        %4523 = vmatpush1.msra.mxu0 %v4515
        %4524 = vmatprep.subr.mxu0 0.0
        %4525 = vmatpush1.msra.mxu0 %v4514
        %4526 = vmatprep.subr.mxu0 0.0
        %4527 = vmatpush1.msra.mxu0 %v4513
        %4528 = vmatprep.subr.mxu0 0.0
        %4529 = vmatpush1.msra.mxu0 %v4512
        %4530 = vmatprep.subr.mxu0 0.0
        %4531 = vmatpush1.msra.mxu0 %v4511
        %4532 = vmatprep.subr.mxu0 0.0
        %4533 = vmatpush1.msra.mxu0 %v4510
        %4534 = vmatprep.subr.mxu0 0.0
        %4535 = vmatpush1.msra.mxu0 %v4509
        %4536 = vmatprep.subr.mxu0 0.0
        %4537 = vmatpush1.msra.mxu0 %v4508
        %4538 = vmatprep.subr.mxu0 0.0
        %4539 = vmatpush1.msra.mxu0 %v4507
        %4540 = vmatprep.subr.mxu0 0.0
        %4541 = vmatpush1.msra.mxu0 %v4506
        %4542 = vmatprep.subr.mxu0 0.0
        %4543 = vmatpush1.msra.mxu0 %v4505
        %4544 = vmatprep.subr.mxu0 0.0
        %4545 = vmatpush1.msra.mxu0 %v4504
        %4546 = vmatprep.subr.mxu0 0.0
        %4547 = vmatpush1.msra.mxu0 %v4503
        %4548 = vmatprep.subr.mxu0 0.0
        %4549 = vmatpush1.msra.mxu0 %v4502
        %4550 = vmatprep.subr.mxu0 0.0
        %4551 = vmatpush2.msra.mxu0 0.0
        %4552 = vmatprep.subr.mxu0 0.0
        %4553 = vmatpush2.msra.mxu0 0.0
        %4554 = vmatprep.subr.mxu0 0.0
        %4555 = vmatpush2.msra.mxu0 0.0
        %4556 = vmatprep.subr.mxu0 0.0
        %4557 = vmatpush2.msra.mxu0 0.0
        %4558 = vmatprep.subr.mxu0 0.0
        %4559 = vmatpush2.msra.mxu0 0.0
        %4560 = vmatprep.subr.mxu0 0.0
        %4561 = vmatpush2.msra.mxu0 0.0
        %4562 = vmatprep.subr.mxu0 0.0
        %4563 = vmatpush2.msra.mxu0 0.0
        %4564 = vmatprep.subr.mxu0 0.0
        %4565 = vmatpush2.msra.mxu0 0.0
        %4566 = vmatprep.subr.mxu0 0.0
        %4567 = vmatpush2.msra.mxu0 0.0
        %4568 = vmatprep.subr.mxu0 0.0
        %4569 = vmatpush2.msra.mxu0 0.0
        %4570 = vmatprep.subr.mxu0 0.0
        %4571 = vmatpush2.msra.mxu0 0.0
        %4572 = vmatprep.subr.mxu0 0.0
        %4573 = vmatpush2.msra.mxu0 0.0
        %4574 = vmatprep.subr.mxu0 0.0
        %4575 = vmatpush2.msra.mxu0 0.0
        %4576 = vmatprep.subr.mxu0 0.0
        %4577 = vmatpush2.msra.mxu0 0.0
        %4578 = vmatprep.subr.mxu0 0.0
        %4579 = vmatpush2.msra.mxu0 0.0
        %4580 = vmatprep.subr.mxu0 0.0
        %4581 = vmatpush2.msra.mxu0 0.0
        %4582 = vmatprep.mubr.f32.mxu0 0.0
        %4583 = vmatmul.mubr.f32.gmra.mxu0 %v4500
        %v4584 = vpop.f32.mrf.mxu0
        %v4585 = vadd.f32 0.0, %v4584
        %v4586 = vpop.f32.mrf.mxu0
        %4587 = vdwg.mxu0
        %v4588 = vadd.f32 %v4499, %v4585
        %v4589 = vld [vmem:[%s3876 + $0x2] sm:$0xf]
        %s4590 = scalar_lea.vmem [#allocation6], 640
        %v4591 = vld [vmem:[%s4590] sm:$0xff]
        %v4592 = vld [vmem:[%s4590 + $0x8] sm:$0xff]
        %v4593 = vld [vmem:[%s4590 + $0x10] sm:$0xff]
        %v4594 = vld [vmem:[%s4590 + $0x18] sm:$0xff]
        %v4595 = vld [vmem:[%s4590 + $0x20] sm:$0xff]
        %v4596 = vld [vmem:[%s4590 + $0x28] sm:$0xff]
        %v4597 = vld [vmem:[%s4590 + $0x30] sm:$0xff]
        %v4598 = vld [vmem:[%s4590 + $0x38] sm:$0xff]
        %v4599 = vld [vmem:[%s4590 + $0x40] sm:$0xff]
        %v4600 = vld [vmem:[%s4590 + $0x48] sm:$0xff]
        %v4601 = vld [vmem:[%s4590 + $0x50] sm:$0xff]
        %v4602 = vld [vmem:[%s4590 + $0x58] sm:$0xff]
        %v4603 = vld [vmem:[%s4590 + $0x60] sm:$0xff]
        %v4604 = vld [vmem:[%s4590 + $0x68] sm:$0xff]
        %v4605 = vld [vmem:[%s4590 + $0x70] sm:$0xff]
        %v4606 = vld [vmem:[%s4590 + $0x78] sm:$0xff]
        %4607 = vmatprep.subr.mxu0 0.0
        %4608 = vmatpush1.msra.mxu0 %v4606
        %4609 = vmatprep.subr.mxu0 0.0
        %4610 = vmatpush1.msra.mxu0 %v4605
        %4611 = vmatprep.subr.mxu0 0.0
        %4612 = vmatpush1.msra.mxu0 %v4604
        %4613 = vmatprep.subr.mxu0 0.0
        %4614 = vmatpush1.msra.mxu0 %v4603
        %4615 = vmatprep.subr.mxu0 0.0
        %4616 = vmatpush1.msra.mxu0 %v4602
        %4617 = vmatprep.subr.mxu0 0.0
        %4618 = vmatpush1.msra.mxu0 %v4601
        %4619 = vmatprep.subr.mxu0 0.0
        %4620 = vmatpush1.msra.mxu0 %v4600
        %4621 = vmatprep.subr.mxu0 0.0
        %4622 = vmatpush1.msra.mxu0 %v4599
        %4623 = vmatprep.subr.mxu0 0.0
        %4624 = vmatpush1.msra.mxu0 %v4598
        %4625 = vmatprep.subr.mxu0 0.0
        %4626 = vmatpush1.msra.mxu0 %v4597
        %4627 = vmatprep.subr.mxu0 0.0
        %4628 = vmatpush1.msra.mxu0 %v4596
        %4629 = vmatprep.subr.mxu0 0.0
        %4630 = vmatpush1.msra.mxu0 %v4595
        %4631 = vmatprep.subr.mxu0 0.0
        %4632 = vmatpush1.msra.mxu0 %v4594
        %4633 = vmatprep.subr.mxu0 0.0
        %4634 = vmatpush1.msra.mxu0 %v4593
        %4635 = vmatprep.subr.mxu0 0.0
        %4636 = vmatpush1.msra.mxu0 %v4592
        %4637 = vmatprep.subr.mxu0 0.0
        %4638 = vmatpush1.msra.mxu0 %v4591
        %4639 = vmatprep.subr.mxu0 0.0
        %4640 = vmatpush2.msra.mxu0 0.0
        %4641 = vmatprep.subr.mxu0 0.0
        %4642 = vmatpush2.msra.mxu0 0.0
        %4643 = vmatprep.subr.mxu0 0.0
        %4644 = vmatpush2.msra.mxu0 0.0
        %4645 = vmatprep.subr.mxu0 0.0
        %4646 = vmatpush2.msra.mxu0 0.0
        %4647 = vmatprep.subr.mxu0 0.0
        %4648 = vmatpush2.msra.mxu0 0.0
        %4649 = vmatprep.subr.mxu0 0.0
        %4650 = vmatpush2.msra.mxu0 0.0
        %4651 = vmatprep.subr.mxu0 0.0
        %4652 = vmatpush2.msra.mxu0 0.0
        %4653 = vmatprep.subr.mxu0 0.0
        %4654 = vmatpush2.msra.mxu0 0.0
        %4655 = vmatprep.subr.mxu0 0.0
        %4656 = vmatpush2.msra.mxu0 0.0
        %4657 = vmatprep.subr.mxu0 0.0
        %4658 = vmatpush2.msra.mxu0 0.0
        %4659 = vmatprep.subr.mxu0 0.0
        %4660 = vmatpush2.msra.mxu0 0.0
        %4661 = vmatprep.subr.mxu0 0.0
        %4662 = vmatpush2.msra.mxu0 0.0
        %4663 = vmatprep.subr.mxu0 0.0
        %4664 = vmatpush2.msra.mxu0 0.0
        %4665 = vmatprep.subr.mxu0 0.0
        %4666 = vmatpush2.msra.mxu0 0.0
        %4667 = vmatprep.subr.mxu0 0.0
        %4668 = vmatpush2.msra.mxu0 0.0
        %4669 = vmatprep.subr.mxu0 0.0
        %4670 = vmatpush2.msra.mxu0 0.0
        %4671 = vmatprep.mubr.f32.mxu0 0.0
        %4672 = vmatmul.mubr.f32.gmra.mxu0 %v4589
        %v4673 = vpop.f32.mrf.mxu0
        %v4674 = vadd.f32 0.0, %v4673
        %v4675 = vpop.f32.mrf.mxu0
        %4676 = vdwg.mxu0
        %v4677 = vadd.f32 %v4588, %v4674
        %v4678 = vld [vmem:[%s3933] sm:$0xf]
        %s4679 = scalar_lea.vmem [#allocation6], 768
        %v4680 = vld [vmem:[%s4679] sm:$0xff]
        %v4681 = vld [vmem:[%s4679 + $0x8] sm:$0xff]
        %v4682 = vld [vmem:[%s4679 + $0x10] sm:$0xff]
        %v4683 = vld [vmem:[%s4679 + $0x18] sm:$0xff]
        %v4684 = vld [vmem:[%s4679 + $0x20] sm:$0xff]
        %v4685 = vld [vmem:[%s4679 + $0x28] sm:$0xff]
        %v4686 = vld [vmem:[%s4679 + $0x30] sm:$0xff]
        %v4687 = vld [vmem:[%s4679 + $0x38] sm:$0xff]
        %v4688 = vld [vmem:[%s4679 + $0x40] sm:$0xff]
        %v4689 = vld [vmem:[%s4679 + $0x48] sm:$0xff]
        %v4690 = vld [vmem:[%s4679 + $0x50] sm:$0xff]
        %v4691 = vld [vmem:[%s4679 + $0x58] sm:$0xff]
        %v4692 = vld [vmem:[%s4679 + $0x60] sm:$0xff]
        %v4693 = vld [vmem:[%s4679 + $0x68] sm:$0xff]
        %v4694 = vld [vmem:[%s4679 + $0x70] sm:$0xff]
        %v4695 = vld [vmem:[%s4679 + $0x78] sm:$0xff]
        %4696 = vmatprep.subr.mxu0 0.0
        %4697 = vmatpush1.msra.mxu0 %v4695
        %4698 = vmatprep.subr.mxu0 0.0
        %4699 = vmatpush1.msra.mxu0 %v4694
        %4700 = vmatprep.subr.mxu0 0.0
        %4701 = vmatpush1.msra.mxu0 %v4693
        %4702 = vmatprep.subr.mxu0 0.0
        %4703 = vmatpush1.msra.mxu0 %v4692
        %4704 = vmatprep.subr.mxu0 0.0
        %4705 = vmatpush1.msra.mxu0 %v4691
        %4706 = vmatprep.subr.mxu0 0.0
        %4707 = vmatpush1.msra.mxu0 %v4690
        %4708 = vmatprep.subr.mxu0 0.0
        %4709 = vmatpush1.msra.mxu0 %v4689
        %4710 = vmatprep.subr.mxu0 0.0
        %4711 = vmatpush1.msra.mxu0 %v4688
        %4712 = vmatprep.subr.mxu0 0.0
        %4713 = vmatpush1.msra.mxu0 %v4687
        %4714 = vmatprep.subr.mxu0 0.0
        %4715 = vmatpush1.msra.mxu0 %v4686
        %4716 = vmatprep.subr.mxu0 0.0
        %4717 = vmatpush1.msra.mxu0 %v4685
        %4718 = vmatprep.subr.mxu0 0.0
        %4719 = vmatpush1.msra.mxu0 %v4684
        %4720 = vmatprep.subr.mxu0 0.0
        %4721 = vmatpush1.msra.mxu0 %v4683
        %4722 = vmatprep.subr.mxu0 0.0
        %4723 = vmatpush1.msra.mxu0 %v4682
        %4724 = vmatprep.subr.mxu0 0.0
        %4725 = vmatpush1.msra.mxu0 %v4681
        %4726 = vmatprep.subr.mxu0 0.0
        %4727 = vmatpush1.msra.mxu0 %v4680
        %4728 = vmatprep.subr.mxu0 0.0
        %4729 = vmatpush2.msra.mxu0 0.0
        %4730 = vmatprep.subr.mxu0 0.0
        %4731 = vmatpush2.msra.mxu0 0.0
        %4732 = vmatprep.subr.mxu0 0.0
        %4733 = vmatpush2.msra.mxu0 0.0
        %4734 = vmatprep.subr.mxu0 0.0
        %4735 = vmatpush2.msra.mxu0 0.0
        %4736 = vmatprep.subr.mxu0 0.0
        %4737 = vmatpush2.msra.mxu0 0.0
        %4738 = vmatprep.subr.mxu0 0.0
        %4739 = vmatpush2.msra.mxu0 0.0
        %4740 = vmatprep.subr.mxu0 0.0
        %4741 = vmatpush2.msra.mxu0 0.0
        %4742 = vmatprep.subr.mxu0 0.0
        %4743 = vmatpush2.msra.mxu0 0.0
        %4744 = vmatprep.subr.mxu0 0.0
        %4745 = vmatpush2.msra.mxu0 0.0
        %4746 = vmatprep.subr.mxu0 0.0
        %4747 = vmatpush2.msra.mxu0 0.0
        %4748 = vmatprep.subr.mxu0 0.0
        %4749 = vmatpush2.msra.mxu0 0.0
        %4750 = vmatprep.subr.mxu0 0.0
        %4751 = vmatpush2.msra.mxu0 0.0
        %4752 = vmatprep.subr.mxu0 0.0
        %4753 = vmatpush2.msra.mxu0 0.0
        %4754 = vmatprep.subr.mxu0 0.0
        %4755 = vmatpush2.msra.mxu0 0.0
        %4756 = vmatprep.subr.mxu0 0.0
        %4757 = vmatpush2.msra.mxu0 0.0
        %4758 = vmatprep.subr.mxu0 0.0
        %4759 = vmatpush2.msra.mxu0 0.0
        %4760 = vmatprep.mubr.f32.mxu0 0.0
        %4761 = vmatmul.mubr.f32.gmra.mxu0 %v4678
        %v4762 = vpop.f32.mrf.mxu0
        %v4763 = vadd.f32 0.0, %v4762
        %v4764 = vpop.f32.mrf.mxu0
        %4765 = vdwg.mxu0
        %v4766 = vadd.f32 %v4677, %v4763
        %v4767 = vld [vmem:[%s3933 + $0x1] sm:$0xf]
        %s4768 = scalar_lea.vmem [#allocation6], 896
        %v4769 = vld [vmem:[%s4768] sm:$0xff]
        %v4770 = vld [vmem:[%s4768 + $0x8] sm:$0xff]
        %v4771 = vld [vmem:[%s4768 + $0x10] sm:$0xff]
        %v4772 = vld [vmem:[%s4768 + $0x18] sm:$0xff]
        %v4773 = vld [vmem:[%s4768 + $0x20] sm:$0xff]
        %v4774 = vld [vmem:[%s4768 + $0x28] sm:$0xff]
        %v4775 = vld [vmem:[%s4768 + $0x30] sm:$0xff]
        %v4776 = vld [vmem:[%s4768 + $0x38] sm:$0xff]
        %v4777 = vld [vmem:[%s4768 + $0x40] sm:$0xff]
        %v4778 = vld [vmem:[%s4768 + $0x48] sm:$0xff]
        %v4779 = vld [vmem:[%s4768 + $0x50] sm:$0xff]
        %v4780 = vld [vmem:[%s4768 + $0x58] sm:$0xff]
        %v4781 = vld [vmem:[%s4768 + $0x60] sm:$0xff]
        %v4782 = vld [vmem:[%s4768 + $0x68] sm:$0xff]
        %v4783 = vld [vmem:[%s4768 + $0x70] sm:$0xff]
        %v4784 = vld [vmem:[%s4768 + $0x78] sm:$0xff]
        %4785 = vmatprep.subr.mxu0 0.0
        %4786 = vmatpush1.msra.mxu0 %v4784
        %4787 = vmatprep.subr.mxu0 0.0
        %4788 = vmatpush1.msra.mxu0 %v4783
        %4789 = vmatprep.subr.mxu0 0.0
        %4790 = vmatpush1.msra.mxu0 %v4782
        %4791 = vmatprep.subr.mxu0 0.0
        %4792 = vmatpush1.msra.mxu0 %v4781
        %4793 = vmatprep.subr.mxu0 0.0
        %4794 = vmatpush1.msra.mxu0 %v4780
        %4795 = vmatprep.subr.mxu0 0.0
        %4796 = vmatpush1.msra.mxu0 %v4779
        %4797 = vmatprep.subr.mxu0 0.0
        %4798 = vmatpush1.msra.mxu0 %v4778
        %4799 = vmatprep.subr.mxu0 0.0
        %4800 = vmatpush1.msra.mxu0 %v4777
        %4801 = vmatprep.subr.mxu0 0.0
        %4802 = vmatpush1.msra.mxu0 %v4776
        %4803 = vmatprep.subr.mxu0 0.0
        %4804 = vmatpush1.msra.mxu0 %v4775
        %4805 = vmatprep.subr.mxu0 0.0
        %4806 = vmatpush1.msra.mxu0 %v4774
        %4807 = vmatprep.subr.mxu0 0.0
        %4808 = vmatpush1.msra.mxu0 %v4773
        %4809 = vmatprep.subr.mxu0 0.0
        %4810 = vmatpush1.msra.mxu0 %v4772
        %4811 = vmatprep.subr.mxu0 0.0
        %4812 = vmatpush1.msra.mxu0 %v4771
        %4813 = vmatprep.subr.mxu0 0.0
        %4814 = vmatpush1.msra.mxu0 %v4770
        %4815 = vmatprep.subr.mxu0 0.0
        %4816 = vmatpush1.msra.mxu0 %v4769
        %4817 = vmatprep.subr.mxu0 0.0
        %4818 = vmatpush2.msra.mxu0 0.0
        %4819 = vmatprep.subr.mxu0 0.0
        %4820 = vmatpush2.msra.mxu0 0.0
        %4821 = vmatprep.subr.mxu0 0.0
        %4822 = vmatpush2.msra.mxu0 0.0
        %4823 = vmatprep.subr.mxu0 0.0
        %4824 = vmatpush2.msra.mxu0 0.0
        %4825 = vmatprep.subr.mxu0 0.0
        %4826 = vmatpush2.msra.mxu0 0.0
        %4827 = vmatprep.subr.mxu0 0.0
        %4828 = vmatpush2.msra.mxu0 0.0
        %4829 = vmatprep.subr.mxu0 0.0
        %4830 = vmatpush2.msra.mxu0 0.0
        %4831 = vmatprep.subr.mxu0 0.0
        %4832 = vmatpush2.msra.mxu0 0.0
        %4833 = vmatprep.subr.mxu0 0.0
        %4834 = vmatpush2.msra.mxu0 0.0
        %4835 = vmatprep.subr.mxu0 0.0
        %4836 = vmatpush2.msra.mxu0 0.0
        %4837 = vmatprep.subr.mxu0 0.0
        %4838 = vmatpush2.msra.mxu0 0.0
        %4839 = vmatprep.subr.mxu0 0.0
        %4840 = vmatpush2.msra.mxu0 0.0
        %4841 = vmatprep.subr.mxu0 0.0
        %4842 = vmatpush2.msra.mxu0 0.0
        %4843 = vmatprep.subr.mxu0 0.0
        %4844 = vmatpush2.msra.mxu0 0.0
        %4845 = vmatprep.subr.mxu0 0.0
        %4846 = vmatpush2.msra.mxu0 0.0
        %4847 = vmatprep.subr.mxu0 0.0
        %4848 = vmatpush2.msra.mxu0 0.0
        %4849 = vmatprep.mubr.f32.mxu0 0.0
        %4850 = vmatmul.mubr.f32.gmra.mxu0 %v4767
        %v4851 = vpop.f32.mrf.mxu0
        %v4852 = vadd.f32 0.0, %v4851
        %v4853 = vpop.f32.mrf.mxu0
        %4854 = vdwg.mxu0
        %v4855 = vadd.f32 %v4766, %v4852
        %v4856 = vld [vmem:[%s3933 + $0x2] sm:$0xf]
        %s4857 = scalar_lea.vmem [#allocation6], 1024
        %v4858 = vld [vmem:[%s4857] sm:$0xff]
        %v4859 = vld [vmem:[%s4857 + $0x8] sm:$0xff]
        %v4860 = vld [vmem:[%s4857 + $0x10] sm:$0xff]
        %v4861 = vld [vmem:[%s4857 + $0x18] sm:$0xff]
        %v4862 = vld [vmem:[%s4857 + $0x20] sm:$0xff]
        %v4863 = vld [vmem:[%s4857 + $0x28] sm:$0xff]
        %v4864 = vld [vmem:[%s4857 + $0x30] sm:$0xff]
        %v4865 = vld [vmem:[%s4857 + $0x38] sm:$0xff]
        %v4866 = vld [vmem:[%s4857 + $0x40] sm:$0xff]
        %v4867 = vld [vmem:[%s4857 + $0x48] sm:$0xff]
        %v4868 = vld [vmem:[%s4857 + $0x50] sm:$0xff]
        %v4869 = vld [vmem:[%s4857 + $0x58] sm:$0xff]
        %v4870 = vld [vmem:[%s4857 + $0x60] sm:$0xff]
        %v4871 = vld [vmem:[%s4857 + $0x68] sm:$0xff]
        %v4872 = vld [vmem:[%s4857 + $0x70] sm:$0xff]
        %v4873 = vld [vmem:[%s4857 + $0x78] sm:$0xff]
        %4874 = vmatprep.subr.mxu0 0.0
        %4875 = vmatpush1.msra.mxu0 %v4873
        %4876 = vmatprep.subr.mxu0 0.0
        %4877 = vmatpush1.msra.mxu0 %v4872
        %4878 = vmatprep.subr.mxu0 0.0
        %4879 = vmatpush1.msra.mxu0 %v4871
        %4880 = vmatprep.subr.mxu0 0.0
        %4881 = vmatpush1.msra.mxu0 %v4870
        %4882 = vmatprep.subr.mxu0 0.0
        %4883 = vmatpush1.msra.mxu0 %v4869
        %4884 = vmatprep.subr.mxu0 0.0
        %4885 = vmatpush1.msra.mxu0 %v4868
        %4886 = vmatprep.subr.mxu0 0.0
        %4887 = vmatpush1.msra.mxu0 %v4867
        %4888 = vmatprep.subr.mxu0 0.0
        %4889 = vmatpush1.msra.mxu0 %v4866
        %4890 = vmatprep.subr.mxu0 0.0
        %4891 = vmatpush1.msra.mxu0 %v4865
        %4892 = vmatprep.subr.mxu0 0.0
        %4893 = vmatpush1.msra.mxu0 %v4864
        %4894 = vmatprep.subr.mxu0 0.0
        %4895 = vmatpush1.msra.mxu0 %v4863
        %4896 = vmatprep.subr.mxu0 0.0
        %4897 = vmatpush1.msra.mxu0 %v4862
        %4898 = vmatprep.subr.mxu0 0.0
        %4899 = vmatpush1.msra.mxu0 %v4861
        %4900 = vmatprep.subr.mxu0 0.0
        %4901 = vmatpush1.msra.mxu0 %v4860
        %4902 = vmatprep.subr.mxu0 0.0
        %4903 = vmatpush1.msra.mxu0 %v4859
        %4904 = vmatprep.subr.mxu0 0.0
        %4905 = vmatpush1.msra.mxu0 %v4858
        %4906 = vmatprep.subr.mxu0 0.0
        %4907 = vmatpush2.msra.mxu0 0.0
        %4908 = vmatprep.subr.mxu0 0.0
        %4909 = vmatpush2.msra.mxu0 0.0
        %4910 = vmatprep.subr.mxu0 0.0
        %4911 = vmatpush2.msra.mxu0 0.0
        %4912 = vmatprep.subr.mxu0 0.0
        %4913 = vmatpush2.msra.mxu0 0.0
        %4914 = vmatprep.subr.mxu0 0.0
        %4915 = vmatpush2.msra.mxu0 0.0
        %4916 = vmatprep.subr.mxu0 0.0
        %4917 = vmatpush2.msra.mxu0 0.0
        %4918 = vmatprep.subr.mxu0 0.0
        %4919 = vmatpush2.msra.mxu0 0.0
        %4920 = vmatprep.subr.mxu0 0.0
        %4921 = vmatpush2.msra.mxu0 0.0
        %4922 = vmatprep.subr.mxu0 0.0
        %4923 = vmatpush2.msra.mxu0 0.0
        %4924 = vmatprep.subr.mxu0 0.0
        %4925 = vmatpush2.msra.mxu0 0.0
        %4926 = vmatprep.subr.mxu0 0.0
        %4927 = vmatpush2.msra.mxu0 0.0
        %4928 = vmatprep.subr.mxu0 0.0
        %4929 = vmatpush2.msra.mxu0 0.0
        %4930 = vmatprep.subr.mxu0 0.0
        %4931 = vmatpush2.msra.mxu0 0.0
        %4932 = vmatprep.subr.mxu0 0.0
        %4933 = vmatpush2.msra.mxu0 0.0
        %4934 = vmatprep.subr.mxu0 0.0
        %4935 = vmatpush2.msra.mxu0 0.0
        %4936 = vmatprep.subr.mxu0 0.0
        %4937 = vmatpush2.msra.mxu0 0.0
        %4938 = vmatprep.mubr.f32.mxu0 0.0
        %4939 = vmatmul.mubr.f32.gmra.mxu0 %v4856
        %v4940 = vpop.f32.mrf.mxu0
        %v4941 = vadd.f32 0.0, %v4940
        %v4942 = vpop.f32.mrf.mxu0
        %4943 = vdwg.mxu0
        %v4944 = vadd.f32 %v4855, %v4941
        %v4946 = vlaneseq
        %v4947 = vshrl.u32 %v4946, 7
        %v4948 = vsub.s32 0, %v4947
        %v4949 = vrot.slane %v4146, %v4948
        %v4951 = vadd.f32 %v4944, %v4949
        %v4952 = vmax.f32 %v4951, 0.0
        %4953 = vst [vmem:[#allocation4] sm:$0xf] %v4952
        %v4954 = vld [vmem:[%s3876] sm:$0xf]
        %v4955 = vld [vmem:[#allocation6] sm:$0xff]
        %v4956 = vld [vmem:[#allocation6 + $0x8] sm:$0xff]
        %v4957 = vld [vmem:[#allocation6 + $0x10] sm:$0xff]
        %v4958 = vld [vmem:[#allocation6 + $0x18] sm:$0xff]
        %v4959 = vld [vmem:[#allocation6 + $0x20] sm:$0xff]
        %v4960 = vld [vmem:[#allocation6 + $0x28] sm:$0xff]
        %v4961 = vld [vmem:[#allocation6 + $0x30] sm:$0xff]
        %v4962 = vld [vmem:[#allocation6 + $0x38] sm:$0xff]
        %v4963 = vld [vmem:[#allocation6 + $0x40] sm:$0xff]
        %v4964 = vld [vmem:[#allocation6 + $0x48] sm:$0xff]
        %v4965 = vld [vmem:[#allocation6 + $0x50] sm:$0xff]
        %v4966 = vld [vmem:[#allocation6 + $0x58] sm:$0xff]
        %v4967 = vld [vmem:[#allocation6 + $0x60] sm:$0xff]
        %v4968 = vld [vmem:[#allocation6 + $0x68] sm:$0xff]
        %v4969 = vld [vmem:[#allocation6 + $0x70] sm:$0xff]
        %v4970 = vld [vmem:[#allocation6 + $0x78] sm:$0xff]
        %v4971 = vld [vmem:[%s3876 + $0x1] sm:$0xf]
        %v4972 = vld [vmem:[%s4165] sm:$0xff]
        %v4973 = vld [vmem:[%s4165 + $0x8] sm:$0xff]
        %v4974 = vld [vmem:[%s4165 + $0x10] sm:$0xff]
        %v4975 = vld [vmem:[%s4165 + $0x18] sm:$0xff]
        %v4976 = vld [vmem:[%s4165 + $0x20] sm:$0xff]
        %v4977 = vld [vmem:[%s4165 + $0x28] sm:$0xff]
        %v4978 = vld [vmem:[%s4165 + $0x30] sm:$0xff]
        %v4979 = vld [vmem:[%s4165 + $0x38] sm:$0xff]
        %v4980 = vld [vmem:[%s4165 + $0x40] sm:$0xff]
        %v4981 = vld [vmem:[%s4165 + $0x48] sm:$0xff]
        %v4982 = vld [vmem:[%s4165 + $0x50] sm:$0xff]
        %v4983 = vld [vmem:[%s4165 + $0x58] sm:$0xff]
        %v4984 = vld [vmem:[%s4165 + $0x60] sm:$0xff]
        %v4985 = vld [vmem:[%s4165 + $0x68] sm:$0xff]
        %v4986 = vld [vmem:[%s4165 + $0x70] sm:$0xff]
        %v4987 = vld [vmem:[%s4165 + $0x78] sm:$0xff]
        %4988 = vmatprep.subr.mxu0 0.0
        %4989 = vmatpush1.msra.mxu0 %v4987
        %4990 = vmatprep.subr.mxu0 0.0
        %4991 = vmatpush1.msra.mxu0 %v4986
        %4992 = vmatprep.subr.mxu0 0.0
        %4993 = vmatpush1.msra.mxu0 %v4985
        %4994 = vmatprep.subr.mxu0 0.0
        %4995 = vmatpush1.msra.mxu0 %v4984
        %4996 = vmatprep.subr.mxu0 0.0
        %4997 = vmatpush1.msra.mxu0 %v4983
        %4998 = vmatprep.subr.mxu0 0.0
        %4999 = vmatpush1.msra.mxu0 %v4982
        %5000 = vmatprep.subr.mxu0 0.0
        %5001 = vmatpush1.msra.mxu0 %v4981
        %5002 = vmatprep.subr.mxu0 0.0
        %5003 = vmatpush1.msra.mxu0 %v4980
        %5004 = vmatprep.subr.mxu0 0.0
        %5005 = vmatpush1.msra.mxu0 %v4979
        %5006 = vmatprep.subr.mxu0 0.0
        %5007 = vmatpush1.msra.mxu0 %v4978
        %5008 = vmatprep.subr.mxu0 0.0
        %5009 = vmatpush1.msra.mxu0 %v4977
        %5010 = vmatprep.subr.mxu0 0.0
        %5011 = vmatpush1.msra.mxu0 %v4976
        %5012 = vmatprep.subr.mxu0 0.0
        %5013 = vmatpush1.msra.mxu0 %v4975
        %5014 = vmatprep.subr.mxu0 0.0
        %5015 = vmatpush1.msra.mxu0 %v4974
        %5016 = vmatprep.subr.mxu0 0.0
        %5017 = vmatpush1.msra.mxu0 %v4973
        %5018 = vmatprep.subr.mxu0 0.0
        %5019 = vmatpush1.msra.mxu0 %v4972
        %5020 = vmatprep.subr.mxu0 0.0
        %5021 = vmatpush2.msra.mxu0 0.0
        %5022 = vmatprep.subr.mxu0 0.0
        %5023 = vmatpush2.msra.mxu0 0.0
        %5024 = vmatprep.subr.mxu0 0.0
        %5025 = vmatpush2.msra.mxu0 0.0
        %5026 = vmatprep.subr.mxu0 0.0
        %5027 = vmatpush2.msra.mxu0 0.0
        %5028 = vmatprep.subr.mxu0 0.0
        %5029 = vmatpush2.msra.mxu0 0.0
        %5030 = vmatprep.subr.mxu0 0.0
        %5031 = vmatpush2.msra.mxu0 0.0
        %5032 = vmatprep.subr.mxu0 0.0
        %5033 = vmatpush2.msra.mxu0 0.0
        %5034 = vmatprep.subr.mxu0 0.0
        %5035 = vmatpush2.msra.mxu0 0.0
        %5036 = vmatprep.subr.mxu0 0.0
        %5037 = vmatpush2.msra.mxu0 0.0
        %5038 = vmatprep.subr.mxu0 0.0
        %5039 = vmatpush2.msra.mxu0 0.0
        %5040 = vmatprep.subr.mxu0 0.0
        %5041 = vmatpush2.msra.mxu0 0.0
        %5042 = vmatprep.subr.mxu0 0.0
        %5043 = vmatpush2.msra.mxu0 0.0
        %5044 = vmatprep.subr.mxu0 0.0
        %5045 = vmatpush2.msra.mxu0 0.0
        %5046 = vmatprep.subr.mxu0 0.0
        %5047 = vmatpush2.msra.mxu0 0.0
        %5048 = vmatprep.subr.mxu0 0.0
        %5049 = vmatpush2.msra.mxu0 0.0
        %5050 = vmatprep.subr.mxu0 0.0
        %5051 = vmatpush2.msra.mxu0 0.0
        %5052 = vmatprep.mubr.f32.mxu0 0.0
        %5053 = vmatmul.mubr.f32.gmra.mxu0 %v4971
        %v5054 = vpop.f32.mrf.mxu0
        %v5055 = vadd.f32 0.0, %v5054
        %v5056 = vpop.f32.mrf.mxu0
        %5057 = vdwg.mxu0
        %5058 = vmatprep.subr.mxu0 0.0
        %5059 = vmatpush1.msra.mxu0 %v4970
        %5060 = vmatprep.subr.mxu0 0.0
        %5061 = vmatpush1.msra.mxu0 %v4969
        %5062 = vmatprep.subr.mxu0 0.0
        %5063 = vmatpush1.msra.mxu0 %v4968
        %5064 = vmatprep.subr.mxu0 0.0
        %5065 = vmatpush1.msra.mxu0 %v4967
        %5066 = vmatprep.subr.mxu0 0.0
        %5067 = vmatpush1.msra.mxu0 %v4966
        %5068 = vmatprep.subr.mxu0 0.0
        %5069 = vmatpush1.msra.mxu0 %v4965
        %5070 = vmatprep.subr.mxu0 0.0
        %5071 = vmatpush1.msra.mxu0 %v4964
        %5072 = vmatprep.subr.mxu0 0.0
        %5073 = vmatpush1.msra.mxu0 %v4963
        %5074 = vmatprep.subr.mxu0 0.0
        %5075 = vmatpush1.msra.mxu0 %v4962
        %5076 = vmatprep.subr.mxu0 0.0
        %5077 = vmatpush1.msra.mxu0 %v4961
        %5078 = vmatprep.subr.mxu0 0.0
        %5079 = vmatpush1.msra.mxu0 %v4960
        %5080 = vmatprep.subr.mxu0 0.0
        %5081 = vmatpush1.msra.mxu0 %v4959
        %5082 = vmatprep.subr.mxu0 0.0
        %5083 = vmatpush1.msra.mxu0 %v4958
        %5084 = vmatprep.subr.mxu0 0.0
        %5085 = vmatpush1.msra.mxu0 %v4957
        %5086 = vmatprep.subr.mxu0 0.0
        %5087 = vmatpush1.msra.mxu0 %v4956
        %5088 = vmatprep.subr.mxu0 0.0
        %5089 = vmatpush1.msra.mxu0 %v4955
        %5090 = vmatprep.subr.mxu0 0.0
        %5091 = vmatpush2.msra.mxu0 0.0
        %5092 = vmatprep.subr.mxu0 0.0
        %5093 = vmatpush2.msra.mxu0 0.0
        %5094 = vmatprep.subr.mxu0 0.0
        %5095 = vmatpush2.msra.mxu0 0.0
        %5096 = vmatprep.subr.mxu0 0.0
        %5097 = vmatpush2.msra.mxu0 0.0
        %5098 = vmatprep.subr.mxu0 0.0
        %5099 = vmatpush2.msra.mxu0 0.0
        %5100 = vmatprep.subr.mxu0 0.0
        %5101 = vmatpush2.msra.mxu0 0.0
        %5102 = vmatprep.subr.mxu0 0.0
        %5103 = vmatpush2.msra.mxu0 0.0
        %5104 = vmatprep.subr.mxu0 0.0
        %5105 = vmatpush2.msra.mxu0 0.0
        %5106 = vmatprep.subr.mxu0 0.0
        %5107 = vmatpush2.msra.mxu0 0.0
        %5108 = vmatprep.subr.mxu0 0.0
        %5109 = vmatpush2.msra.mxu0 0.0
        %5110 = vmatprep.subr.mxu0 0.0
        %5111 = vmatpush2.msra.mxu0 0.0
        %5112 = vmatprep.subr.mxu0 0.0
        %5113 = vmatpush2.msra.mxu0 0.0
        %5114 = vmatprep.subr.mxu0 0.0
        %5115 = vmatpush2.msra.mxu0 0.0
        %5116 = vmatprep.subr.mxu0 0.0
        %5117 = vmatpush2.msra.mxu0 0.0
        %5118 = vmatprep.subr.mxu0 0.0
        %5119 = vmatpush2.msra.mxu0 0.0
        %5120 = vmatprep.subr.mxu0 0.0
        %5121 = vmatpush2.msra.mxu0 0.0
        %5122 = vmatprep.mubr.f32.mxu0 0.0
        %5123 = vmatmul.mubr.f32.gmra.mxu0 %v4954
        %v5124 = vpop.f32.mrf.mxu0
        %v5125 = vadd.f32 %v5055, %v5124
        %v5126 = vpop.f32.mrf.mxu0
        %5127 = vdwg.mxu0
        %v5128 = vld [vmem:[%s3876 + $0x2] sm:$0xf]
        %v5129 = vld [vmem:[%s4323] sm:$0xff]
        %v5130 = vld [vmem:[%s4323 + $0x8] sm:$0xff]
        %v5131 = vld [vmem:[%s4323 + $0x10] sm:$0xff]
        %v5132 = vld [vmem:[%s4323 + $0x18] sm:$0xff]
        %v5133 = vld [vmem:[%s4323 + $0x20] sm:$0xff]
        %v5134 = vld [vmem:[%s4323 + $0x28] sm:$0xff]
        %v5135 = vld [vmem:[%s4323 + $0x30] sm:$0xff]
        %v5136 = vld [vmem:[%s4323 + $0x38] sm:$0xff]
        %v5137 = vld [vmem:[%s4323 + $0x40] sm:$0xff]
        %v5138 = vld [vmem:[%s4323 + $0x48] sm:$0xff]
        %v5139 = vld [vmem:[%s4323 + $0x50] sm:$0xff]
        %v5140 = vld [vmem:[%s4323 + $0x58] sm:$0xff]
        %v5141 = vld [vmem:[%s4323 + $0x60] sm:$0xff]
        %v5142 = vld [vmem:[%s4323 + $0x68] sm:$0xff]
        %v5143 = vld [vmem:[%s4323 + $0x70] sm:$0xff]
        %v5144 = vld [vmem:[%s4323 + $0x78] sm:$0xff]
        %5145 = vmatprep.subr.mxu0 0.0
        %5146 = vmatpush1.msra.mxu0 %v5144
        %5147 = vmatprep.subr.mxu0 0.0
        %5148 = vmatpush1.msra.mxu0 %v5143
        %5149 = vmatprep.subr.mxu0 0.0
        %5150 = vmatpush1.msra.mxu0 %v5142
        %5151 = vmatprep.subr.mxu0 0.0
        %5152 = vmatpush1.msra.mxu0 %v5141
        %5153 = vmatprep.subr.mxu0 0.0
        %5154 = vmatpush1.msra.mxu0 %v5140
        %5155 = vmatprep.subr.mxu0 0.0
        %5156 = vmatpush1.msra.mxu0 %v5139
        %5157 = vmatprep.subr.mxu0 0.0
        %5158 = vmatpush1.msra.mxu0 %v5138
        %5159 = vmatprep.subr.mxu0 0.0
        %5160 = vmatpush1.msra.mxu0 %v5137
        %5161 = vmatprep.subr.mxu0 0.0
        %5162 = vmatpush1.msra.mxu0 %v5136
        %5163 = vmatprep.subr.mxu0 0.0
        %5164 = vmatpush1.msra.mxu0 %v5135
        %5165 = vmatprep.subr.mxu0 0.0
        %5166 = vmatpush1.msra.mxu0 %v5134
        %5167 = vmatprep.subr.mxu0 0.0
        %5168 = vmatpush1.msra.mxu0 %v5133
        %5169 = vmatprep.subr.mxu0 0.0
        %5170 = vmatpush1.msra.mxu0 %v5132
        %5171 = vmatprep.subr.mxu0 0.0
        %5172 = vmatpush1.msra.mxu0 %v5131
        %5173 = vmatprep.subr.mxu0 0.0
        %5174 = vmatpush1.msra.mxu0 %v5130
        %5175 = vmatprep.subr.mxu0 0.0
        %5176 = vmatpush1.msra.mxu0 %v5129
        %5177 = vmatprep.subr.mxu0 0.0
        %5178 = vmatpush2.msra.mxu0 0.0
        %5179 = vmatprep.subr.mxu0 0.0
        %5180 = vmatpush2.msra.mxu0 0.0
        %5181 = vmatprep.subr.mxu0 0.0
        %5182 = vmatpush2.msra.mxu0 0.0
        %5183 = vmatprep.subr.mxu0 0.0
        %5184 = vmatpush2.msra.mxu0 0.0
        %5185 = vmatprep.subr.mxu0 0.0
        %5186 = vmatpush2.msra.mxu0 0.0
        %5187 = vmatprep.subr.mxu0 0.0
        %5188 = vmatpush2.msra.mxu0 0.0
        %5189 = vmatprep.subr.mxu0 0.0
        %5190 = vmatpush2.msra.mxu0 0.0
        %5191 = vmatprep.subr.mxu0 0.0
        %5192 = vmatpush2.msra.mxu0 0.0
        %5193 = vmatprep.subr.mxu0 0.0
        %5194 = vmatpush2.msra.mxu0 0.0
        %5195 = vmatprep.subr.mxu0 0.0
        %5196 = vmatpush2.msra.mxu0 0.0
        %5197 = vmatprep.subr.mxu0 0.0
        %5198 = vmatpush2.msra.mxu0 0.0
        %5199 = vmatprep.subr.mxu0 0.0
        %5200 = vmatpush2.msra.mxu0 0.0
        %5201 = vmatprep.subr.mxu0 0.0
        %5202 = vmatpush2.msra.mxu0 0.0
        %5203 = vmatprep.subr.mxu0 0.0
        %5204 = vmatpush2.msra.mxu0 0.0
        %5205 = vmatprep.subr.mxu0 0.0
        %5206 = vmatpush2.msra.mxu0 0.0
        %5207 = vmatprep.subr.mxu0 0.0
        %5208 = vmatpush2.msra.mxu0 0.0
        %5209 = vmatprep.mubr.f32.mxu0 0.0
        %5210 = vmatmul.mubr.f32.gmra.mxu0 %v5128
        %v5211 = vpop.f32.mrf.mxu0
        %v5212 = vadd.f32 0.0, %v5211
        %v5213 = vpop.f32.mrf.mxu0
        %5214 = vdwg.mxu0
        %v5215 = vadd.f32 %v5125, %v5212
        %v5216 = vld [vmem:[%s3933] sm:$0xf]
        %v5217 = vld [vmem:[%s4412] sm:$0xff]
        %v5218 = vld [vmem:[%s4412 + $0x8] sm:$0xff]
        %v5219 = vld [vmem:[%s4412 + $0x10] sm:$0xff]
        %v5220 = vld [vmem:[%s4412 + $0x18] sm:$0xff]
        %v5221 = vld [vmem:[%s4412 + $0x20] sm:$0xff]
        %v5222 = vld [vmem:[%s4412 + $0x28] sm:$0xff]
        %v5223 = vld [vmem:[%s4412 + $0x30] sm:$0xff]
        %v5224 = vld [vmem:[%s4412 + $0x38] sm:$0xff]
        %v5225 = vld [vmem:[%s4412 + $0x40] sm:$0xff]
        %v5226 = vld [vmem:[%s4412 + $0x48] sm:$0xff]
        %v5227 = vld [vmem:[%s4412 + $0x50] sm:$0xff]
        %v5228 = vld [vmem:[%s4412 + $0x58] sm:$0xff]
        %v5229 = vld [vmem:[%s4412 + $0x60] sm:$0xff]
        %v5230 = vld [vmem:[%s4412 + $0x68] sm:$0xff]
        %v5231 = vld [vmem:[%s4412 + $0x70] sm:$0xff]
        %v5232 = vld [vmem:[%s4412 + $0x78] sm:$0xff]
        %5233 = vmatprep.subr.mxu0 0.0
        %5234 = vmatpush1.msra.mxu0 %v5232
        %5235 = vmatprep.subr.mxu0 0.0
        %5236 = vmatpush1.msra.mxu0 %v5231
        %5237 = vmatprep.subr.mxu0 0.0
        %5238 = vmatpush1.msra.mxu0 %v5230
        %5239 = vmatprep.subr.mxu0 0.0
        %5240 = vmatpush1.msra.mxu0 %v5229
        %5241 = vmatprep.subr.mxu0 0.0
        %5242 = vmatpush1.msra.mxu0 %v5228
        %5243 = vmatprep.subr.mxu0 0.0
        %5244 = vmatpush1.msra.mxu0 %v5227
        %5245 = vmatprep.subr.mxu0 0.0
        %5246 = vmatpush1.msra.mxu0 %v5226
        %5247 = vmatprep.subr.mxu0 0.0
        %5248 = vmatpush1.msra.mxu0 %v5225
        %5249 = vmatprep.subr.mxu0 0.0
        %5250 = vmatpush1.msra.mxu0 %v5224
        %5251 = vmatprep.subr.mxu0 0.0
        %5252 = vmatpush1.msra.mxu0 %v5223
        %5253 = vmatprep.subr.mxu0 0.0
        %5254 = vmatpush1.msra.mxu0 %v5222
        %5255 = vmatprep.subr.mxu0 0.0
        %5256 = vmatpush1.msra.mxu0 %v5221
        %5257 = vmatprep.subr.mxu0 0.0
        %5258 = vmatpush1.msra.mxu0 %v5220
        %5259 = vmatprep.subr.mxu0 0.0
        %5260 = vmatpush1.msra.mxu0 %v5219
        %5261 = vmatprep.subr.mxu0 0.0
        %5262 = vmatpush1.msra.mxu0 %v5218
        %5263 = vmatprep.subr.mxu0 0.0
        %5264 = vmatpush1.msra.mxu0 %v5217
        %5265 = vmatprep.subr.mxu0 0.0
        %5266 = vmatpush2.msra.mxu0 0.0
        %5267 = vmatprep.subr.mxu0 0.0
        %5268 = vmatpush2.msra.mxu0 0.0
        %5269 = vmatprep.subr.mxu0 0.0
        %5270 = vmatpush2.msra.mxu0 0.0
        %5271 = vmatprep.subr.mxu0 0.0
        %5272 = vmatpush2.msra.mxu0 0.0
        %5273 = vmatprep.subr.mxu0 0.0
        %5274 = vmatpush2.msra.mxu0 0.0
        %5275 = vmatprep.subr.mxu0 0.0
        %5276 = vmatpush2.msra.mxu0 0.0
        %5277 = vmatprep.subr.mxu0 0.0
        %5278 = vmatpush2.msra.mxu0 0.0
        %5279 = vmatprep.subr.mxu0 0.0
        %5280 = vmatpush2.msra.mxu0 0.0
        %5281 = vmatprep.subr.mxu0 0.0
        %5282 = vmatpush2.msra.mxu0 0.0
        %5283 = vmatprep.subr.mxu0 0.0
        %5284 = vmatpush2.msra.mxu0 0.0
        %5285 = vmatprep.subr.mxu0 0.0
        %5286 = vmatpush2.msra.mxu0 0.0
        %5287 = vmatprep.subr.mxu0 0.0
        %5288 = vmatpush2.msra.mxu0 0.0
        %5289 = vmatprep.subr.mxu0 0.0
        %5290 = vmatpush2.msra.mxu0 0.0
        %5291 = vmatprep.subr.mxu0 0.0
        %5292 = vmatpush2.msra.mxu0 0.0
        %5293 = vmatprep.subr.mxu0 0.0
        %5294 = vmatpush2.msra.mxu0 0.0
        %5295 = vmatprep.subr.mxu0 0.0
        %5296 = vmatpush2.msra.mxu0 0.0
        %5297 = vmatprep.mubr.f32.mxu0 0.0
        %5298 = vmatmul.mubr.f32.gmra.mxu0 %v5216
        %v5299 = vpop.f32.mrf.mxu0
        %v5300 = vadd.f32 0.0, %v5299
        %v5301 = vpop.f32.mrf.mxu0
        %5302 = vdwg.mxu0
        %v5303 = vadd.f32 %v5215, %v5300
        %v5304 = vld [vmem:[%s3933 + $0x1] sm:$0xf]
        %v5305 = vld [vmem:[%s4501] sm:$0xff]
        %v5306 = vld [vmem:[%s4501 + $0x8] sm:$0xff]
        %v5307 = vld [vmem:[%s4501 + $0x10] sm:$0xff]
        %v5308 = vld [vmem:[%s4501 + $0x18] sm:$0xff]
        %v5309 = vld [vmem:[%s4501 + $0x20] sm:$0xff]
        %v5310 = vld [vmem:[%s4501 + $0x28] sm:$0xff]
        %v5311 = vld [vmem:[%s4501 + $0x30] sm:$0xff]
        %v5312 = vld [vmem:[%s4501 + $0x38] sm:$0xff]
        %v5313 = vld [vmem:[%s4501 + $0x40] sm:$0xff]
        %v5314 = vld [vmem:[%s4501 + $0x48] sm:$0xff]
        %v5315 = vld [vmem:[%s4501 + $0x50] sm:$0xff]
        %v5316 = vld [vmem:[%s4501 + $0x58] sm:$0xff]
        %v5317 = vld [vmem:[%s4501 + $0x60] sm:$0xff]
        %v5318 = vld [vmem:[%s4501 + $0x68] sm:$0xff]
        %v5319 = vld [vmem:[%s4501 + $0x70] sm:$0xff]
        %v5320 = vld [vmem:[%s4501 + $0x78] sm:$0xff]
        %5321 = vmatprep.subr.mxu0 0.0
        %5322 = vmatpush1.msra.mxu0 %v5320
        %5323 = vmatprep.subr.mxu0 0.0
        %5324 = vmatpush1.msra.mxu0 %v5319
        %5325 = vmatprep.subr.mxu0 0.0
        %5326 = vmatpush1.msra.mxu0 %v5318
        %5327 = vmatprep.subr.mxu0 0.0
        %5328 = vmatpush1.msra.mxu0 %v5317
        %5329 = vmatprep.subr.mxu0 0.0
        %5330 = vmatpush1.msra.mxu0 %v5316
        %5331 = vmatprep.subr.mxu0 0.0
        %5332 = vmatpush1.msra.mxu0 %v5315
        %5333 = vmatprep.subr.mxu0 0.0
        %5334 = vmatpush1.msra.mxu0 %v5314
        %5335 = vmatprep.subr.mxu0 0.0
        %5336 = vmatpush1.msra.mxu0 %v5313
        %5337 = vmatprep.subr.mxu0 0.0
        %5338 = vmatpush1.msra.mxu0 %v5312
        %5339 = vmatprep.subr.mxu0 0.0
        %5340 = vmatpush1.msra.mxu0 %v5311
        %5341 = vmatprep.subr.mxu0 0.0
        %5342 = vmatpush1.msra.mxu0 %v5310
        %5343 = vmatprep.subr.mxu0 0.0
        %5344 = vmatpush1.msra.mxu0 %v5309
        %5345 = vmatprep.subr.mxu0 0.0
        %5346 = vmatpush1.msra.mxu0 %v5308
        %5347 = vmatprep.subr.mxu0 0.0
        %5348 = vmatpush1.msra.mxu0 %v5307
        %5349 = vmatprep.subr.mxu0 0.0
        %5350 = vmatpush1.msra.mxu0 %v5306
        %5351 = vmatprep.subr.mxu0 0.0
        %5352 = vmatpush1.msra.mxu0 %v5305
        %5353 = vmatprep.subr.mxu0 0.0
        %5354 = vmatpush2.msra.mxu0 0.0
        %5355 = vmatprep.subr.mxu0 0.0
        %5356 = vmatpush2.msra.mxu0 0.0
        %5357 = vmatprep.subr.mxu0 0.0
        %5358 = vmatpush2.msra.mxu0 0.0
        %5359 = vmatprep.subr.mxu0 0.0
        %5360 = vmatpush2.msra.mxu0 0.0
        %5361 = vmatprep.subr.mxu0 0.0
        %5362 = vmatpush2.msra.mxu0 0.0
        %5363 = vmatprep.subr.mxu0 0.0
        %5364 = vmatpush2.msra.mxu0 0.0
        %5365 = vmatprep.subr.mxu0 0.0
        %5366 = vmatpush2.msra.mxu0 0.0
        %5367 = vmatprep.subr.mxu0 0.0
        %5368 = vmatpush2.msra.mxu0 0.0
        %5369 = vmatprep.subr.mxu0 0.0
        %5370 = vmatpush2.msra.mxu0 0.0
        %5371 = vmatprep.subr.mxu0 0.0
        %5372 = vmatpush2.msra.mxu0 0.0
        %5373 = vmatprep.subr.mxu0 0.0
        %5374 = vmatpush2.msra.mxu0 0.0
        %5375 = vmatprep.subr.mxu0 0.0
        %5376 = vmatpush2.msra.mxu0 0.0
        %5377 = vmatprep.subr.mxu0 0.0
        %5378 = vmatpush2.msra.mxu0 0.0
        %5379 = vmatprep.subr.mxu0 0.0
        %5380 = vmatpush2.msra.mxu0 0.0
        %5381 = vmatprep.subr.mxu0 0.0
        %5382 = vmatpush2.msra.mxu0 0.0
        %5383 = vmatprep.subr.mxu0 0.0
        %5384 = vmatpush2.msra.mxu0 0.0
        %5385 = vmatprep.mubr.f32.mxu0 0.0
        %5386 = vmatmul.mubr.f32.gmra.mxu0 %v5304
        %v5387 = vpop.f32.mrf.mxu0
        %v5388 = vadd.f32 0.0, %v5387
        %v5389 = vpop.f32.mrf.mxu0
        %5390 = vdwg.mxu0
        %v5391 = vadd.f32 %v5303, %v5388
        %v5392 = vld [vmem:[%s3933 + $0x2] sm:$0xf]
        %v5393 = vld [vmem:[%s4590] sm:$0xff]
        %v5394 = vld [vmem:[%s4590 + $0x8] sm:$0xff]
        %v5395 = vld [vmem:[%s4590 + $0x10] sm:$0xff]
        %v5396 = vld [vmem:[%s4590 + $0x18] sm:$0xff]
        %v5397 = vld [vmem:[%s4590 + $0x20] sm:$0xff]
        %v5398 = vld [vmem:[%s4590 + $0x28] sm:$0xff]
        %v5399 = vld [vmem:[%s4590 + $0x30] sm:$0xff]
        %v5400 = vld [vmem:[%s4590 + $0x38] sm:$0xff]
        %v5401 = vld [vmem:[%s4590 + $0x40] sm:$0xff]
        %v5402 = vld [vmem:[%s4590 + $0x48] sm:$0xff]
        %v5403 = vld [vmem:[%s4590 + $0x50] sm:$0xff]
        %v5404 = vld [vmem:[%s4590 + $0x58] sm:$0xff]
        %v5405 = vld [vmem:[%s4590 + $0x60] sm:$0xff]
        %v5406 = vld [vmem:[%s4590 + $0x68] sm:$0xff]
        %v5407 = vld [vmem:[%s4590 + $0x70] sm:$0xff]
        %v5408 = vld [vmem:[%s4590 + $0x78] sm:$0xff]
        %5409 = vmatprep.subr.mxu0 0.0
        %5410 = vmatpush1.msra.mxu0 %v5408
        %5411 = vmatprep.subr.mxu0 0.0
        %5412 = vmatpush1.msra.mxu0 %v5407
        %5413 = vmatprep.subr.mxu0 0.0
        %5414 = vmatpush1.msra.mxu0 %v5406
        %5415 = vmatprep.subr.mxu0 0.0
        %5416 = vmatpush1.msra.mxu0 %v5405
        %5417 = vmatprep.subr.mxu0 0.0
        %5418 = vmatpush1.msra.mxu0 %v5404
        %5419 = vmatprep.subr.mxu0 0.0
        %5420 = vmatpush1.msra.mxu0 %v5403
        %5421 = vmatprep.subr.mxu0 0.0
        %5422 = vmatpush1.msra.mxu0 %v5402
        %5423 = vmatprep.subr.mxu0 0.0
        %5424 = vmatpush1.msra.mxu0 %v5401
        %5425 = vmatprep.subr.mxu0 0.0
        %5426 = vmatpush1.msra.mxu0 %v5400
        %5427 = vmatprep.subr.mxu0 0.0
        %5428 = vmatpush1.msra.mxu0 %v5399
        %5429 = vmatprep.subr.mxu0 0.0
        %5430 = vmatpush1.msra.mxu0 %v5398
        %5431 = vmatprep.subr.mxu0 0.0
        %5432 = vmatpush1.msra.mxu0 %v5397
        %5433 = vmatprep.subr.mxu0 0.0
        %5434 = vmatpush1.msra.mxu0 %v5396
        %5435 = vmatprep.subr.mxu0 0.0
        %5436 = vmatpush1.msra.mxu0 %v5395
        %5437 = vmatprep.subr.mxu0 0.0
        %5438 = vmatpush1.msra.mxu0 %v5394
        %5439 = vmatprep.subr.mxu0 0.0
        %5440 = vmatpush1.msra.mxu0 %v5393
        %5441 = vmatprep.subr.mxu0 0.0
        %5442 = vmatpush2.msra.mxu0 0.0
        %5443 = vmatprep.subr.mxu0 0.0
        %5444 = vmatpush2.msra.mxu0 0.0
        %5445 = vmatprep.subr.mxu0 0.0
        %5446 = vmatpush2.msra.mxu0 0.0
        %5447 = vmatprep.subr.mxu0 0.0
        %5448 = vmatpush2.msra.mxu0 0.0
        %5449 = vmatprep.subr.mxu0 0.0
        %5450 = vmatpush2.msra.mxu0 0.0
        %5451 = vmatprep.subr.mxu0 0.0
        %5452 = vmatpush2.msra.mxu0 0.0
        %5453 = vmatprep.subr.mxu0 0.0
        %5454 = vmatpush2.msra.mxu0 0.0
        %5455 = vmatprep.subr.mxu0 0.0
        %5456 = vmatpush2.msra.mxu0 0.0
        %5457 = vmatprep.subr.mxu0 0.0
        %5458 = vmatpush2.msra.mxu0 0.0
        %5459 = vmatprep.subr.mxu0 0.0
        %5460 = vmatpush2.msra.mxu0 0.0
        %5461 = vmatprep.subr.mxu0 0.0
        %5462 = vmatpush2.msra.mxu0 0.0
        %5463 = vmatprep.subr.mxu0 0.0
        %5464 = vmatpush2.msra.mxu0 0.0
        %5465 = vmatprep.subr.mxu0 0.0
        %5466 = vmatpush2.msra.mxu0 0.0
        %5467 = vmatprep.subr.mxu0 0.0
        %5468 = vmatpush2.msra.mxu0 0.0
        %5469 = vmatprep.subr.mxu0 0.0
        %5470 = vmatpush2.msra.mxu0 0.0
        %5471 = vmatprep.subr.mxu0 0.0
        %5472 = vmatpush2.msra.mxu0 0.0
        %5473 = vmatprep.mubr.f32.mxu0 0.0
        %5474 = vmatmul.mubr.f32.gmra.mxu0 %v5392
        %v5475 = vpop.f32.mrf.mxu0
        %v5476 = vadd.f32 0.0, %v5475
        %v5477 = vpop.f32.mrf.mxu0
        %5478 = vdwg.mxu0
        %v5479 = vadd.f32 %v5391, %v5476
        %v5480 = vld [vmem:[%s3990] sm:$0xf]
        %v5481 = vld [vmem:[%s4679] sm:$0xff]
        %v5482 = vld [vmem:[%s4679 + $0x8] sm:$0xff]
        %v5483 = vld [vmem:[%s4679 + $0x10] sm:$0xff]
        %v5484 = vld [vmem:[%s4679 + $0x18] sm:$0xff]
        %v5485 = vld [vmem:[%s4679 + $0x20] sm:$0xff]
        %v5486 = vld [vmem:[%s4679 + $0x28] sm:$0xff]
        %v5487 = vld [vmem:[%s4679 + $0x30] sm:$0xff]
        %v5488 = vld [vmem:[%s4679 + $0x38] sm:$0xff]
        %v5489 = vld [vmem:[%s4679 + $0x40] sm:$0xff]
        %v5490 = vld [vmem:[%s4679 + $0x48] sm:$0xff]
        %v5491 = vld [vmem:[%s4679 + $0x50] sm:$0xff]
        %v5492 = vld [vmem:[%s4679 + $0x58] sm:$0xff]
        %v5493 = vld [vmem:[%s4679 + $0x60] sm:$0xff]
        %v5494 = vld [vmem:[%s4679 + $0x68] sm:$0xff]
        %v5495 = vld [vmem:[%s4679 + $0x70] sm:$0xff]
        %v5496 = vld [vmem:[%s4679 + $0x78] sm:$0xff]
        %5497 = vmatprep.subr.mxu0 0.0
        %5498 = vmatpush1.msra.mxu0 %v5496
        %5499 = vmatprep.subr.mxu0 0.0
        %5500 = vmatpush1.msra.mxu0 %v5495
        %5501 = vmatprep.subr.mxu0 0.0
        %5502 = vmatpush1.msra.mxu0 %v5494
        %5503 = vmatprep.subr.mxu0 0.0
        %5504 = vmatpush1.msra.mxu0 %v5493
        %5505 = vmatprep.subr.mxu0 0.0
        %5506 = vmatpush1.msra.mxu0 %v5492
        %5507 = vmatprep.subr.mxu0 0.0
        %5508 = vmatpush1.msra.mxu0 %v5491
        %5509 = vmatprep.subr.mxu0 0.0
        %5510 = vmatpush1.msra.mxu0 %v5490
        %5511 = vmatprep.subr.mxu0 0.0
        %5512 = vmatpush1.msra.mxu0 %v5489
        %5513 = vmatprep.subr.mxu0 0.0
        %5514 = vmatpush1.msra.mxu0 %v5488
        %5515 = vmatprep.subr.mxu0 0.0
        %5516 = vmatpush1.msra.mxu0 %v5487
        %5517 = vmatprep.subr.mxu0 0.0
        %5518 = vmatpush1.msra.mxu0 %v5486
        %5519 = vmatprep.subr.mxu0 0.0
        %5520 = vmatpush1.msra.mxu0 %v5485
        %5521 = vmatprep.subr.mxu0 0.0
        %5522 = vmatpush1.msra.mxu0 %v5484
        %5523 = vmatprep.subr.mxu0 0.0
        %5524 = vmatpush1.msra.mxu0 %v5483
        %5525 = vmatprep.subr.mxu0 0.0
        %5526 = vmatpush1.msra.mxu0 %v5482
        %5527 = vmatprep.subr.mxu0 0.0
        %5528 = vmatpush1.msra.mxu0 %v5481
        %5529 = vmatprep.subr.mxu0 0.0
        %5530 = vmatpush2.msra.mxu0 0.0
        %5531 = vmatprep.subr.mxu0 0.0
        %5532 = vmatpush2.msra.mxu0 0.0
        %5533 = vmatprep.subr.mxu0 0.0
        %5534 = vmatpush2.msra.mxu0 0.0
        %5535 = vmatprep.subr.mxu0 0.0
        %5536 = vmatpush2.msra.mxu0 0.0
        %5537 = vmatprep.subr.mxu0 0.0
        %5538 = vmatpush2.msra.mxu0 0.0
        %5539 = vmatprep.subr.mxu0 0.0
        %5540 = vmatpush2.msra.mxu0 0.0
        %5541 = vmatprep.subr.mxu0 0.0
        %5542 = vmatpush2.msra.mxu0 0.0
        %5543 = vmatprep.subr.mxu0 0.0
        %5544 = vmatpush2.msra.mxu0 0.0
        %5545 = vmatprep.subr.mxu0 0.0
        %5546 = vmatpush2.msra.mxu0 0.0
        %5547 = vmatprep.subr.mxu0 0.0
        %5548 = vmatpush2.msra.mxu0 0.0
        %5549 = vmatprep.subr.mxu0 0.0
        %5550 = vmatpush2.msra.mxu0 0.0
        %5551 = vmatprep.subr.mxu0 0.0
        %5552 = vmatpush2.msra.mxu0 0.0
        %5553 = vmatprep.subr.mxu0 0.0
        %5554 = vmatpush2.msra.mxu0 0.0
        %5555 = vmatprep.subr.mxu0 0.0
        %5556 = vmatpush2.msra.mxu0 0.0
        %5557 = vmatprep.subr.mxu0 0.0
        %5558 = vmatpush2.msra.mxu0 0.0
        %5559 = vmatprep.subr.mxu0 0.0
        %5560 = vmatpush2.msra.mxu0 0.0
        %5561 = vmatprep.mubr.f32.mxu0 0.0
        %5562 = vmatmul.mubr.f32.gmra.mxu0 %v5480
        %v5563 = vpop.f32.mrf.mxu0
        %v5564 = vadd.f32 0.0, %v5563
        %v5565 = vpop.f32.mrf.mxu0
        %5566 = vdwg.mxu0
        %v5567 = vadd.f32 %v5479, %v5564
        %v5568 = vld [vmem:[%s3990 + $0x1] sm:$0xf]
        %v5569 = vld [vmem:[%s4768] sm:$0xff]
        %v5570 = vld [vmem:[%s4768 + $0x8] sm:$0xff]
        %v5571 = vld [vmem:[%s4768 + $0x10] sm:$0xff]
        %v5572 = vld [vmem:[%s4768 + $0x18] sm:$0xff]
        %v5573 = vld [vmem:[%s4768 + $0x20] sm:$0xff]
        %v5574 = vld [vmem:[%s4768 + $0x28] sm:$0xff]
        %v5575 = vld [vmem:[%s4768 + $0x30] sm:$0xff]
        %v5576 = vld [vmem:[%s4768 + $0x38] sm:$0xff]
        %v5577 = vld [vmem:[%s4768 + $0x40] sm:$0xff]
        %v5578 = vld [vmem:[%s4768 + $0x48] sm:$0xff]
        %v5579 = vld [vmem:[%s4768 + $0x50] sm:$0xff]
        %v5580 = vld [vmem:[%s4768 + $0x58] sm:$0xff]
        %v5581 = vld [vmem:[%s4768 + $0x60] sm:$0xff]
        %v5582 = vld [vmem:[%s4768 + $0x68] sm:$0xff]
        %v5583 = vld [vmem:[%s4768 + $0x70] sm:$0xff]
        %v5584 = vld [vmem:[%s4768 + $0x78] sm:$0xff]
        %5585 = vmatprep.subr.mxu0 0.0
        %5586 = vmatpush1.msra.mxu0 %v5584
        %5587 = vmatprep.subr.mxu0 0.0
        %5588 = vmatpush1.msra.mxu0 %v5583
        %5589 = vmatprep.subr.mxu0 0.0
        %5590 = vmatpush1.msra.mxu0 %v5582
        %5591 = vmatprep.subr.mxu0 0.0
        %5592 = vmatpush1.msra.mxu0 %v5581
        %5593 = vmatprep.subr.mxu0 0.0
        %5594 = vmatpush1.msra.mxu0 %v5580
        %5595 = vmatprep.subr.mxu0 0.0
        %5596 = vmatpush1.msra.mxu0 %v5579
        %5597 = vmatprep.subr.mxu0 0.0
        %5598 = vmatpush1.msra.mxu0 %v5578
        %5599 = vmatprep.subr.mxu0 0.0
        %5600 = vmatpush1.msra.mxu0 %v5577
        %5601 = vmatprep.subr.mxu0 0.0
        %5602 = vmatpush1.msra.mxu0 %v5576
        %5603 = vmatprep.subr.mxu0 0.0
        %5604 = vmatpush1.msra.mxu0 %v5575
        %5605 = vmatprep.subr.mxu0 0.0
        %5606 = vmatpush1.msra.mxu0 %v5574
        %5607 = vmatprep.subr.mxu0 0.0
        %5608 = vmatpush1.msra.mxu0 %v5573
        %5609 = vmatprep.subr.mxu0 0.0
        %5610 = vmatpush1.msra.mxu0 %v5572
        %5611 = vmatprep.subr.mxu0 0.0
        %5612 = vmatpush1.msra.mxu0 %v5571
        %5613 = vmatprep.subr.mxu0 0.0
        %5614 = vmatpush1.msra.mxu0 %v5570
        %5615 = vmatprep.subr.mxu0 0.0
        %5616 = vmatpush1.msra.mxu0 %v5569
        %5617 = vmatprep.subr.mxu0 0.0
        %5618 = vmatpush2.msra.mxu0 0.0
        %5619 = vmatprep.subr.mxu0 0.0
        %5620 = vmatpush2.msra.mxu0 0.0
        %5621 = vmatprep.subr.mxu0 0.0
        %5622 = vmatpush2.msra.mxu0 0.0
        %5623 = vmatprep.subr.mxu0 0.0
        %5624 = vmatpush2.msra.mxu0 0.0
        %5625 = vmatprep.subr.mxu0 0.0
        %5626 = vmatpush2.msra.mxu0 0.0
        %5627 = vmatprep.subr.mxu0 0.0
        %5628 = vmatpush2.msra.mxu0 0.0
        %5629 = vmatprep.subr.mxu0 0.0
        %5630 = vmatpush2.msra.mxu0 0.0
        %5631 = vmatprep.subr.mxu0 0.0
        %5632 = vmatpush2.msra.mxu0 0.0
        %5633 = vmatprep.subr.mxu0 0.0
        %5634 = vmatpush2.msra.mxu0 0.0
        %5635 = vmatprep.subr.mxu0 0.0
        %5636 = vmatpush2.msra.mxu0 0.0
        %5637 = vmatprep.subr.mxu0 0.0
        %5638 = vmatpush2.msra.mxu0 0.0
        %5639 = vmatprep.subr.mxu0 0.0
        %5640 = vmatpush2.msra.mxu0 0.0
        %5641 = vmatprep.subr.mxu0 0.0
        %5642 = vmatpush2.msra.mxu0 0.0
        %5643 = vmatprep.subr.mxu0 0.0
        %5644 = vmatpush2.msra.mxu0 0.0
        %5645 = vmatprep.subr.mxu0 0.0
        %5646 = vmatpush2.msra.mxu0 0.0
        %5647 = vmatprep.subr.mxu0 0.0
        %5648 = vmatpush2.msra.mxu0 0.0
        %5649 = vmatprep.mubr.f32.mxu0 0.0
        %5650 = vmatmul.mubr.f32.gmra.mxu0 %v5568
        %v5651 = vpop.f32.mrf.mxu0
        %v5652 = vadd.f32 0.0, %v5651
        %v5653 = vpop.f32.mrf.mxu0
        %5654 = vdwg.mxu0
        %v5655 = vadd.f32 %v5567, %v5652
        %v5656 = vld [vmem:[%s3990 + $0x2] sm:$0xf]
        %v5657 = vld [vmem:[%s4857] sm:$0xff]
        %v5658 = vld [vmem:[%s4857 + $0x8] sm:$0xff]
        %v5659 = vld [vmem:[%s4857 + $0x10] sm:$0xff]
        %v5660 = vld [vmem:[%s4857 + $0x18] sm:$0xff]
        %v5661 = vld [vmem:[%s4857 + $0x20] sm:$0xff]
        %v5662 = vld [vmem:[%s4857 + $0x28] sm:$0xff]
        %v5663 = vld [vmem:[%s4857 + $0x30] sm:$0xff]
        %v5664 = vld [vmem:[%s4857 + $0x38] sm:$0xff]
        %v5665 = vld [vmem:[%s4857 + $0x40] sm:$0xff]
        %v5666 = vld [vmem:[%s4857 + $0x48] sm:$0xff]
        %v5667 = vld [vmem:[%s4857 + $0x50] sm:$0xff]
        %v5668 = vld [vmem:[%s4857 + $0x58] sm:$0xff]
        %v5669 = vld [vmem:[%s4857 + $0x60] sm:$0xff]
        %v5670 = vld [vmem:[%s4857 + $0x68] sm:$0xff]
        %v5671 = vld [vmem:[%s4857 + $0x70] sm:$0xff]
        %v5672 = vld [vmem:[%s4857 + $0x78] sm:$0xff]
        %5673 = vmatprep.subr.mxu0 0.0
        %5674 = vmatpush1.msra.mxu0 %v5672
        %5675 = vmatprep.subr.mxu0 0.0
        %5676 = vmatpush1.msra.mxu0 %v5671
        %5677 = vmatprep.subr.mxu0 0.0
        %5678 = vmatpush1.msra.mxu0 %v5670
        %5679 = vmatprep.subr.mxu0 0.0
        %5680 = vmatpush1.msra.mxu0 %v5669
        %5681 = vmatprep.subr.mxu0 0.0
        %5682 = vmatpush1.msra.mxu0 %v5668
        %5683 = vmatprep.subr.mxu0 0.0
        %5684 = vmatpush1.msra.mxu0 %v5667
        %5685 = vmatprep.subr.mxu0 0.0
        %5686 = vmatpush1.msra.mxu0 %v5666
        %5687 = vmatprep.subr.mxu0 0.0
        %5688 = vmatpush1.msra.mxu0 %v5665
        %5689 = vmatprep.subr.mxu0 0.0
        %5690 = vmatpush1.msra.mxu0 %v5664
        %5691 = vmatprep.subr.mxu0 0.0
        %5692 = vmatpush1.msra.mxu0 %v5663
        %5693 = vmatprep.subr.mxu0 0.0
        %5694 = vmatpush1.msra.mxu0 %v5662
        %5695 = vmatprep.subr.mxu0 0.0
        %5696 = vmatpush1.msra.mxu0 %v5661
        %5697 = vmatprep.subr.mxu0 0.0
        %5698 = vmatpush1.msra.mxu0 %v5660
        %5699 = vmatprep.subr.mxu0 0.0
        %5700 = vmatpush1.msra.mxu0 %v5659
        %5701 = vmatprep.subr.mxu0 0.0
        %5702 = vmatpush1.msra.mxu0 %v5658
        %5703 = vmatprep.subr.mxu0 0.0
        %5704 = vmatpush1.msra.mxu0 %v5657
        %5705 = vmatprep.subr.mxu0 0.0
        %5706 = vmatpush2.msra.mxu0 0.0
        %5707 = vmatprep.subr.mxu0 0.0
        %5708 = vmatpush2.msra.mxu0 0.0
        %5709 = vmatprep.subr.mxu0 0.0
        %5710 = vmatpush2.msra.mxu0 0.0
        %5711 = vmatprep.subr.mxu0 0.0
        %5712 = vmatpush2.msra.mxu0 0.0
        %5713 = vmatprep.subr.mxu0 0.0
        %5714 = vmatpush2.msra.mxu0 0.0
        %5715 = vmatprep.subr.mxu0 0.0
        %5716 = vmatpush2.msra.mxu0 0.0
        %5717 = vmatprep.subr.mxu0 0.0
        %5718 = vmatpush2.msra.mxu0 0.0
        %5719 = vmatprep.subr.mxu0 0.0
        %5720 = vmatpush2.msra.mxu0 0.0
        %5721 = vmatprep.subr.mxu0 0.0
        %5722 = vmatpush2.msra.mxu0 0.0
        %5723 = vmatprep.subr.mxu0 0.0
        %5724 = vmatpush2.msra.mxu0 0.0
        %5725 = vmatprep.subr.mxu0 0.0
        %5726 = vmatpush2.msra.mxu0 0.0
        %5727 = vmatprep.subr.mxu0 0.0
        %5728 = vmatpush2.msra.mxu0 0.0
        %5729 = vmatprep.subr.mxu0 0.0
        %5730 = vmatpush2.msra.mxu0 0.0
        %5731 = vmatprep.subr.mxu0 0.0
        %5732 = vmatpush2.msra.mxu0 0.0
        %5733 = vmatprep.subr.mxu0 0.0
        %5734 = vmatpush2.msra.mxu0 0.0
        %5735 = vmatprep.subr.mxu0 0.0
        %5736 = vmatpush2.msra.mxu0 0.0
        %5737 = vmatprep.mubr.f32.mxu0 0.0
        %5738 = vmatmul.mubr.f32.gmra.mxu0 %v5656
        %v5739 = vpop.f32.mrf.mxu0
        %v5740 = vadd.f32 0.0, %v5739
        %v5741 = vpop.f32.mrf.mxu0
        %5742 = vdwg.mxu0
        %v5743 = vadd.f32 %v5655, %v5740
        %v5744 = vadd.f32 %v5743, %v4949
        %v5745 = vmax.f32 %v5744, 0.0
        %s5746 = scalar_lea.vmem [#allocation4], 4
        %5747 = vst [vmem:[%s5746] sm:$0xf] %v5745
        %v5748 = vld [vmem:[%s3933] sm:$0xf]
        %v5749 = vld [vmem:[#allocation6] sm:$0xff]
        %v5750 = vld [vmem:[#allocation6 + $0x8] sm:$0xff]
        %v5751 = vld [vmem:[#allocation6 + $0x10] sm:$0xff]
        %v5752 = vld [vmem:[#allocation6 + $0x18] sm:$0xff]
        %v5753 = vld [vmem:[#allocation6 + $0x20] sm:$0xff]
        %v5754 = vld [vmem:[#allocation6 + $0x28] sm:$0xff]
        %v5755 = vld [vmem:[#allocation6 + $0x30] sm:$0xff]
        %v5756 = vld [vmem:[#allocation6 + $0x38] sm:$0xff]
        %v5757 = vld [vmem:[#allocation6 + $0x40] sm:$0xff]
        %v5758 = vld [vmem:[#allocation6 + $0x48] sm:$0xff]
        %v5759 = vld [vmem:[#allocation6 + $0x50] sm:$0xff]
        %v5760 = vld [vmem:[#allocation6 + $0x58] sm:$0xff]
        %v5761 = vld [vmem:[#allocation6 + $0x60] sm:$0xff]
        %v5762 = vld [vmem:[#allocation6 + $0x68] sm:$0xff]
        %v5763 = vld [vmem:[#allocation6 + $0x70] sm:$0xff]
        %v5764 = vld [vmem:[#allocation6 + $0x78] sm:$0xff]
        %v5765 = vld [vmem:[%s3933 + $0x1] sm:$0xf]
        %v5766 = vld [vmem:[%s4165] sm:$0xff]
        %v5767 = vld [vmem:[%s4165 + $0x8] sm:$0xff]
        %v5768 = vld [vmem:[%s4165 + $0x10] sm:$0xff]
        %v5769 = vld [vmem:[%s4165 + $0x18] sm:$0xff]
        %v5770 = vld [vmem:[%s4165 + $0x20] sm:$0xff]
        %v5771 = vld [vmem:[%s4165 + $0x28] sm:$0xff]
        %v5772 = vld [vmem:[%s4165 + $0x30] sm:$0xff]
        %v5773 = vld [vmem:[%s4165 + $0x38] sm:$0xff]
        %v5774 = vld [vmem:[%s4165 + $0x40] sm:$0xff]
        %v5775 = vld [vmem:[%s4165 + $0x48] sm:$0xff]
        %v5776 = vld [vmem:[%s4165 + $0x50] sm:$0xff]
        %v5777 = vld [vmem:[%s4165 + $0x58] sm:$0xff]
        %v5778 = vld [vmem:[%s4165 + $0x60] sm:$0xff]
        %v5779 = vld [vmem:[%s4165 + $0x68] sm:$0xff]
        %v5780 = vld [vmem:[%s4165 + $0x70] sm:$0xff]
        %v5781 = vld [vmem:[%s4165 + $0x78] sm:$0xff]
        %5782 = vmatprep.subr.mxu0 0.0
        %5783 = vmatpush1.msra.mxu0 %v5781
        %5784 = vmatprep.subr.mxu0 0.0
        %5785 = vmatpush1.msra.mxu0 %v5780
        %5786 = vmatprep.subr.mxu0 0.0
        %5787 = vmatpush1.msra.mxu0 %v5779
        %5788 = vmatprep.subr.mxu0 0.0
        %5789 = vmatpush1.msra.mxu0 %v5778
        %5790 = vmatprep.subr.mxu0 0.0
        %5791 = vmatpush1.msra.mxu0 %v5777
        %5792 = vmatprep.subr.mxu0 0.0
        %5793 = vmatpush1.msra.mxu0 %v5776
        %5794 = vmatprep.subr.mxu0 0.0
        %5795 = vmatpush1.msra.mxu0 %v5775
        %5796 = vmatprep.subr.mxu0 0.0
        %5797 = vmatpush1.msra.mxu0 %v5774
        %5798 = vmatprep.subr.mxu0 0.0
        %5799 = vmatpush1.msra.mxu0 %v5773
        %5800 = vmatprep.subr.mxu0 0.0
        %5801 = vmatpush1.msra.mxu0 %v5772
        %5802 = vmatprep.subr.mxu0 0.0
        %5803 = vmatpush1.msra.mxu0 %v5771
        %5804 = vmatprep.subr.mxu0 0.0
        %5805 = vmatpush1.msra.mxu0 %v5770
        %5806 = vmatprep.subr.mxu0 0.0
        %5807 = vmatpush1.msra.mxu0 %v5769
        %5808 = vmatprep.subr.mxu0 0.0
        %5809 = vmatpush1.msra.mxu0 %v5768
        %5810 = vmatprep.subr.mxu0 0.0
        %5811 = vmatpush1.msra.mxu0 %v5767
        %5812 = vmatprep.subr.mxu0 0.0
        %5813 = vmatpush1.msra.mxu0 %v5766
        %5814 = vmatprep.subr.mxu0 0.0
        %5815 = vmatpush2.msra.mxu0 0.0
        %5816 = vmatprep.subr.mxu0 0.0
        %5817 = vmatpush2.msra.mxu0 0.0
        %5818 = vmatprep.subr.mxu0 0.0
        %5819 = vmatpush2.msra.mxu0 0.0
        %5820 = vmatprep.subr.mxu0 0.0
        %5821 = vmatpush2.msra.mxu0 0.0
        %5822 = vmatprep.subr.mxu0 0.0
        %5823 = vmatpush2.msra.mxu0 0.0
        %5824 = vmatprep.subr.mxu0 0.0
        %5825 = vmatpush2.msra.mxu0 0.0
        %5826 = vmatprep.subr.mxu0 0.0
        %5827 = vmatpush2.msra.mxu0 0.0
        %5828 = vmatprep.subr.mxu0 0.0
        %5829 = vmatpush2.msra.mxu0 0.0
        %5830 = vmatprep.subr.mxu0 0.0
        %5831 = vmatpush2.msra.mxu0 0.0
        %5832 = vmatprep.subr.mxu0 0.0
        %5833 = vmatpush2.msra.mxu0 0.0
        %5834 = vmatprep.subr.mxu0 0.0
        %5835 = vmatpush2.msra.mxu0 0.0
        %5836 = vmatprep.subr.mxu0 0.0
        %5837 = vmatpush2.msra.mxu0 0.0
        %5838 = vmatprep.subr.mxu0 0.0
        %5839 = vmatpush2.msra.mxu0 0.0
        %5840 = vmatprep.subr.mxu0 0.0
        %5841 = vmatpush2.msra.mxu0 0.0
        %5842 = vmatprep.subr.mxu0 0.0
        %5843 = vmatpush2.msra.mxu0 0.0
        %5844 = vmatprep.subr.mxu0 0.0
        %5845 = vmatpush2.msra.mxu0 0.0
        %5846 = vmatprep.mubr.f32.mxu0 0.0
        %5847 = vmatmul.mubr.f32.gmra.mxu0 %v5765
        %v5848 = vpop.f32.mrf.mxu0
        %v5849 = vadd.f32 0.0, %v5848
        %v5850 = vpop.f32.mrf.mxu0
        %5851 = vdwg.mxu0
        %5852 = vmatprep.subr.mxu0 0.0
        %5853 = vmatpush1.msra.mxu0 %v5764
        %5854 = vmatprep.subr.mxu0 0.0
        %5855 = vmatpush1.msra.mxu0 %v5763
        %5856 = vmatprep.subr.mxu0 0.0
        %5857 = vmatpush1.msra.mxu0 %v5762
        %5858 = vmatprep.subr.mxu0 0.0
        %5859 = vmatpush1.msra.mxu0 %v5761
        %5860 = vmatprep.subr.mxu0 0.0
        %5861 = vmatpush1.msra.mxu0 %v5760
        %5862 = vmatprep.subr.mxu0 0.0
        %5863 = vmatpush1.msra.mxu0 %v5759
        %5864 = vmatprep.subr.mxu0 0.0
        %5865 = vmatpush1.msra.mxu0 %v5758
        %5866 = vmatprep.subr.mxu0 0.0
        %5867 = vmatpush1.msra.mxu0 %v5757
        %5868 = vmatprep.subr.mxu0 0.0
        %5869 = vmatpush1.msra.mxu0 %v5756
        %5870 = vmatprep.subr.mxu0 0.0
        %5871 = vmatpush1.msra.mxu0 %v5755
        %5872 = vmatprep.subr.mxu0 0.0
        %5873 = vmatpush1.msra.mxu0 %v5754
        %5874 = vmatprep.subr.mxu0 0.0
        %5875 = vmatpush1.msra.mxu0 %v5753
        %5876 = vmatprep.subr.mxu0 0.0
        %5877 = vmatpush1.msra.mxu0 %v5752
        %5878 = vmatprep.subr.mxu0 0.0
        %5879 = vmatpush1.msra.mxu0 %v5751
        %5880 = vmatprep.subr.mxu0 0.0
        %5881 = vmatpush1.msra.mxu0 %v5750
        %5882 = vmatprep.subr.mxu0 0.0
        %5883 = vmatpush1.msra.mxu0 %v5749
        %5884 = vmatprep.subr.mxu0 0.0
        %5885 = vmatpush2.msra.mxu0 0.0
        %5886 = vmatprep.subr.mxu0 0.0
        %5887 = vmatpush2.msra.mxu0 0.0
        %5888 = vmatprep.subr.mxu0 0.0
        %5889 = vmatpush2.msra.mxu0 0.0
        %5890 = vmatprep.subr.mxu0 0.0
        %5891 = vmatpush2.msra.mxu0 0.0
        %5892 = vmatprep.subr.mxu0 0.0
        %5893 = vmatpush2.msra.mxu0 0.0
        %5894 = vmatprep.subr.mxu0 0.0
        %5895 = vmatpush2.msra.mxu0 0.0
        %5896 = vmatprep.subr.mxu0 0.0
        %5897 = vmatpush2.msra.mxu0 0.0
        %5898 = vmatprep.subr.mxu0 0.0
        %5899 = vmatpush2.msra.mxu0 0.0
        %5900 = vmatprep.subr.mxu0 0.0
        %5901 = vmatpush2.msra.mxu0 0.0
        %5902 = vmatprep.subr.mxu0 0.0
        %5903 = vmatpush2.msra.mxu0 0.0
        %5904 = vmatprep.subr.mxu0 0.0
        %5905 = vmatpush2.msra.mxu0 0.0
        %5906 = vmatprep.subr.mxu0 0.0
        %5907 = vmatpush2.msra.mxu0 0.0
        %5908 = vmatprep.subr.mxu0 0.0
        %5909 = vmatpush2.msra.mxu0 0.0
        %5910 = vmatprep.subr.mxu0 0.0
        %5911 = vmatpush2.msra.mxu0 0.0
        %5912 = vmatprep.subr.mxu0 0.0
        %5913 = vmatpush2.msra.mxu0 0.0
        %5914 = vmatprep.subr.mxu0 0.0
        %5915 = vmatpush2.msra.mxu0 0.0
        %5916 = vmatprep.mubr.f32.mxu0 0.0
        %5917 = vmatmul.mubr.f32.gmra.mxu0 %v5748
        %v5918 = vpop.f32.mrf.mxu0
        %v5919 = vadd.f32 %v5849, %v5918
        %v5920 = vpop.f32.mrf.mxu0
        %5921 = vdwg.mxu0
        %v5922 = vld [vmem:[%s3933 + $0x2] sm:$0xf]
        %v5923 = vld [vmem:[%s4323] sm:$0xff]
        %v5924 = vld [vmem:[%s4323 + $0x8] sm:$0xff]
        %v5925 = vld [vmem:[%s4323 + $0x10] sm:$0xff]
        %v5926 = vld [vmem:[%s4323 + $0x18] sm:$0xff]
        %v5927 = vld [vmem:[%s4323 + $0x20] sm:$0xff]
        %v5928 = vld [vmem:[%s4323 + $0x28] sm:$0xff]
        %v5929 = vld [vmem:[%s4323 + $0x30] sm:$0xff]
        %v5930 = vld [vmem:[%s4323 + $0x38] sm:$0xff]
        %v5931 = vld [vmem:[%s4323 + $0x40] sm:$0xff]
        %v5932 = vld [vmem:[%s4323 + $0x48] sm:$0xff]
        %v5933 = vld [vmem:[%s4323 + $0x50] sm:$0xff]
        %v5934 = vld [vmem:[%s4323 + $0x58] sm:$0xff]
        %v5935 = vld [vmem:[%s4323 + $0x60] sm:$0xff]
        %v5936 = vld [vmem:[%s4323 + $0x68] sm:$0xff]
        %v5937 = vld [vmem:[%s4323 + $0x70] sm:$0xff]
        %v5938 = vld [vmem:[%s4323 + $0x78] sm:$0xff]
        %5939 = vmatprep.subr.mxu0 0.0
        %5940 = vmatpush1.msra.mxu0 %v5938
        %5941 = vmatprep.subr.mxu0 0.0
        %5942 = vmatpush1.msra.mxu0 %v5937
        %5943 = vmatprep.subr.mxu0 0.0
        %5944 = vmatpush1.msra.mxu0 %v5936
        %5945 = vmatprep.subr.mxu0 0.0
        %5946 = vmatpush1.msra.mxu0 %v5935
        %5947 = vmatprep.subr.mxu0 0.0
        %5948 = vmatpush1.msra.mxu0 %v5934
        %5949 = vmatprep.subr.mxu0 0.0
        %5950 = vmatpush1.msra.mxu0 %v5933
        %5951 = vmatprep.subr.mxu0 0.0
        %5952 = vmatpush1.msra.mxu0 %v5932
        %5953 = vmatprep.subr.mxu0 0.0
        %5954 = vmatpush1.msra.mxu0 %v5931
        %5955 = vmatprep.subr.mxu0 0.0
        %5956 = vmatpush1.msra.mxu0 %v5930
        %5957 = vmatprep.subr.mxu0 0.0
        %5958 = vmatpush1.msra.mxu0 %v5929
        %5959 = vmatprep.subr.mxu0 0.0
        %5960 = vmatpush1.msra.mxu0 %v5928
        %5961 = vmatprep.subr.mxu0 0.0
        %5962 = vmatpush1.msra.mxu0 %v5927
        %5963 = vmatprep.subr.mxu0 0.0
        %5964 = vmatpush1.msra.mxu0 %v5926
        %5965 = vmatprep.subr.mxu0 0.0
        %5966 = vmatpush1.msra.mxu0 %v5925
        %5967 = vmatprep.subr.mxu0 0.0
        %5968 = vmatpush1.msra.mxu0 %v5924
        %5969 = vmatprep.subr.mxu0 0.0
        %5970 = vmatpush1.msra.mxu0 %v5923
        %5971 = vmatprep.subr.mxu0 0.0
        %5972 = vmatpush2.msra.mxu0 0.0
        %5973 = vmatprep.subr.mxu0 0.0
        %5974 = vmatpush2.msra.mxu0 0.0
        %5975 = vmatprep.subr.mxu0 0.0
        %5976 = vmatpush2.msra.mxu0 0.0
        %5977 = vmatprep.subr.mxu0 0.0
        %5978 = vmatpush2.msra.mxu0 0.0
        %5979 = vmatprep.subr.mxu0 0.0
        %5980 = vmatpush2.msra.mxu0 0.0
        %5981 = vmatprep.subr.mxu0 0.0
        %5982 = vmatpush2.msra.mxu0 0.0
        %5983 = vmatprep.subr.mxu0 0.0
        %5984 = vmatpush2.msra.mxu0 0.0
        %5985 = vmatprep.subr.mxu0 0.0
        %5986 = vmatpush2.msra.mxu0 0.0
        %5987 = vmatprep.subr.mxu0 0.0
        %5988 = vmatpush2.msra.mxu0 0.0
        %5989 = vmatprep.subr.mxu0 0.0
        %5990 = vmatpush2.msra.mxu0 0.0
        %5991 = vmatprep.subr.mxu0 0.0
        %5992 = vmatpush2.msra.mxu0 0.0
        %5993 = vmatprep.subr.mxu0 0.0
        %5994 = vmatpush2.msra.mxu0 0.0
        %5995 = vmatprep.subr.mxu0 0.0
        %5996 = vmatpush2.msra.mxu0 0.0
        %5997 = vmatprep.subr.mxu0 0.0
        %5998 = vmatpush2.msra.mxu0 0.0
        %5999 = vmatprep.subr.mxu0 0.0
        %6000 = vmatpush2.msra.mxu0 0.0
        %6001 = vmatprep.subr.mxu0 0.0
        %6002 = vmatpush2.msra.mxu0 0.0
        %6003 = vmatprep.mubr.f32.mxu0 0.0
        %6004 = vmatmul.mubr.f32.gmra.mxu0 %v5922
        %v6005 = vpop.f32.mrf.mxu0
        %v6006 = vadd.f32 0.0, %v6005
        %v6007 = vpop.f32.mrf.mxu0
        %6008 = vdwg.mxu0
        %v6009 = vadd.f32 %v5919, %v6006
        %v6010 = vld [vmem:[%s3990] sm:$0xf]
        %v6011 = vld [vmem:[%s4412] sm:$0xff]
        %v6012 = vld [vmem:[%s4412 + $0x8] sm:$0xff]
        %v6013 = vld [vmem:[%s4412 + $0x10] sm:$0xff]
        %v6014 = vld [vmem:[%s4412 + $0x18] sm:$0xff]
        %v6015 = vld [vmem:[%s4412 + $0x20] sm:$0xff]
        %v6016 = vld [vmem:[%s4412 + $0x28] sm:$0xff]
        %v6017 = vld [vmem:[%s4412 + $0x30] sm:$0xff]
        %v6018 = vld [vmem:[%s4412 + $0x38] sm:$0xff]
        %v6019 = vld [vmem:[%s4412 + $0x40] sm:$0xff]
        %v6020 = vld [vmem:[%s4412 + $0x48] sm:$0xff]
        %v6021 = vld [vmem:[%s4412 + $0x50] sm:$0xff]
        %v6022 = vld [vmem:[%s4412 + $0x58] sm:$0xff]
        %v6023 = vld [vmem:[%s4412 + $0x60] sm:$0xff]
        %v6024 = vld [vmem:[%s4412 + $0x68] sm:$0xff]
        %v6025 = vld [vmem:[%s4412 + $0x70] sm:$0xff]
        %v6026 = vld [vmem:[%s4412 + $0x78] sm:$0xff]
        %6027 = vmatprep.subr.mxu0 0.0
        %6028 = vmatpush1.msra.mxu0 %v6026
        %6029 = vmatprep.subr.mxu0 0.0
        %6030 = vmatpush1.msra.mxu0 %v6025
        %6031 = vmatprep.subr.mxu0 0.0
        %6032 = vmatpush1.msra.mxu0 %v6024
        %6033 = vmatprep.subr.mxu0 0.0
        %6034 = vmatpush1.msra.mxu0 %v6023
        %6035 = vmatprep.subr.mxu0 0.0
        %6036 = vmatpush1.msra.mxu0 %v6022
        %6037 = vmatprep.subr.mxu0 0.0
        %6038 = vmatpush1.msra.mxu0 %v6021
        %6039 = vmatprep.subr.mxu0 0.0
        %6040 = vmatpush1.msra.mxu0 %v6020
        %6041 = vmatprep.subr.mxu0 0.0
        %6042 = vmatpush1.msra.mxu0 %v6019
        %6043 = vmatprep.subr.mxu0 0.0
        %6044 = vmatpush1.msra.mxu0 %v6018
        %6045 = vmatprep.subr.mxu0 0.0
        %6046 = vmatpush1.msra.mxu0 %v6017
        %6047 = vmatprep.subr.mxu0 0.0
        %6048 = vmatpush1.msra.mxu0 %v6016
        %6049 = vmatprep.subr.mxu0 0.0
        %6050 = vmatpush1.msra.mxu0 %v6015
        %6051 = vmatprep.subr.mxu0 0.0
        %6052 = vmatpush1.msra.mxu0 %v6014
        %6053 = vmatprep.subr.mxu0 0.0
        %6054 = vmatpush1.msra.mxu0 %v6013
        %6055 = vmatprep.subr.mxu0 0.0
        %6056 = vmatpush1.msra.mxu0 %v6012
        %6057 = vmatprep.subr.mxu0 0.0
        %6058 = vmatpush1.msra.mxu0 %v6011
        %6059 = vmatprep.subr.mxu0 0.0
        %6060 = vmatpush2.msra.mxu0 0.0
        %6061 = vmatprep.subr.mxu0 0.0
        %6062 = vmatpush2.msra.mxu0 0.0
        %6063 = vmatprep.subr.mxu0 0.0
        %6064 = vmatpush2.msra.mxu0 0.0
        %6065 = vmatprep.subr.mxu0 0.0
        %6066 = vmatpush2.msra.mxu0 0.0
        %6067 = vmatprep.subr.mxu0 0.0
        %6068 = vmatpush2.msra.mxu0 0.0
        %6069 = vmatprep.subr.mxu0 0.0
        %6070 = vmatpush2.msra.mxu0 0.0
        %6071 = vmatprep.subr.mxu0 0.0
        %6072 = vmatpush2.msra.mxu0 0.0
        %6073 = vmatprep.subr.mxu0 0.0
        %6074 = vmatpush2.msra.mxu0 0.0
        %6075 = vmatprep.subr.mxu0 0.0
        %6076 = vmatpush2.msra.mxu0 0.0
        %6077 = vmatprep.subr.mxu0 0.0
        %6078 = vmatpush2.msra.mxu0 0.0
        %6079 = vmatprep.subr.mxu0 0.0
        %6080 = vmatpush2.msra.mxu0 0.0
        %6081 = vmatprep.subr.mxu0 0.0
        %6082 = vmatpush2.msra.mxu0 0.0
        %6083 = vmatprep.subr.mxu0 0.0
        %6084 = vmatpush2.msra.mxu0 0.0
        %6085 = vmatprep.subr.mxu0 0.0
        %6086 = vmatpush2.msra.mxu0 0.0
        %6087 = vmatprep.subr.mxu0 0.0
        %6088 = vmatpush2.msra.mxu0 0.0
        %6089 = vmatprep.subr.mxu0 0.0
        %6090 = vmatpush2.msra.mxu0 0.0
        %6091 = vmatprep.mubr.f32.mxu0 0.0
        %6092 = vmatmul.mubr.f32.gmra.mxu0 %v6010
        %v6093 = vpop.f32.mrf.mxu0
        %v6094 = vadd.f32 0.0, %v6093
        %v6095 = vpop.f32.mrf.mxu0
        %6096 = vdwg.mxu0
        %v6097 = vadd.f32 %v6009, %v6094
        %v6098 = vld [vmem:[%s3990 + $0x1] sm:$0xf]
        %v6099 = vld [vmem:[%s4501] sm:$0xff]
        %v6100 = vld [vmem:[%s4501 + $0x8] sm:$0xff]
        %v6101 = vld [vmem:[%s4501 + $0x10] sm:$0xff]
        %v6102 = vld [vmem:[%s4501 + $0x18] sm:$0xff]
        %v6103 = vld [vmem:[%s4501 + $0x20] sm:$0xff]
        %v6104 = vld [vmem:[%s4501 + $0x28] sm:$0xff]
        %v6105 = vld [vmem:[%s4501 + $0x30] sm:$0xff]
        %v6106 = vld [vmem:[%s4501 + $0x38] sm:$0xff]
        %v6107 = vld [vmem:[%s4501 + $0x40] sm:$0xff]
        %v6108 = vld [vmem:[%s4501 + $0x48] sm:$0xff]
        %v6109 = vld [vmem:[%s4501 + $0x50] sm:$0xff]
        %v6110 = vld [vmem:[%s4501 + $0x58] sm:$0xff]
        %v6111 = vld [vmem:[%s4501 + $0x60] sm:$0xff]
        %v6112 = vld [vmem:[%s4501 + $0x68] sm:$0xff]
        %v6113 = vld [vmem:[%s4501 + $0x70] sm:$0xff]
        %v6114 = vld [vmem:[%s4501 + $0x78] sm:$0xff]
        %6115 = vmatprep.subr.mxu0 0.0
        %6116 = vmatpush1.msra.mxu0 %v6114
        %6117 = vmatprep.subr.mxu0 0.0
        %6118 = vmatpush1.msra.mxu0 %v6113
        %6119 = vmatprep.subr.mxu0 0.0
        %6120 = vmatpush1.msra.mxu0 %v6112
        %6121 = vmatprep.subr.mxu0 0.0
        %6122 = vmatpush1.msra.mxu0 %v6111
        %6123 = vmatprep.subr.mxu0 0.0
        %6124 = vmatpush1.msra.mxu0 %v6110
        %6125 = vmatprep.subr.mxu0 0.0
        %6126 = vmatpush1.msra.mxu0 %v6109
        %6127 = vmatprep.subr.mxu0 0.0
        %6128 = vmatpush1.msra.mxu0 %v6108
        %6129 = vmatprep.subr.mxu0 0.0
        %6130 = vmatpush1.msra.mxu0 %v6107
        %6131 = vmatprep.subr.mxu0 0.0
        %6132 = vmatpush1.msra.mxu0 %v6106
        %6133 = vmatprep.subr.mxu0 0.0
        %6134 = vmatpush1.msra.mxu0 %v6105
        %6135 = vmatprep.subr.mxu0 0.0
        %6136 = vmatpush1.msra.mxu0 %v6104
        %6137 = vmatprep.subr.mxu0 0.0
        %6138 = vmatpush1.msra.mxu0 %v6103
        %6139 = vmatprep.subr.mxu0 0.0
        %6140 = vmatpush1.msra.mxu0 %v6102
        %6141 = vmatprep.subr.mxu0 0.0
        %6142 = vmatpush1.msra.mxu0 %v6101
        %6143 = vmatprep.subr.mxu0 0.0
        %6144 = vmatpush1.msra.mxu0 %v6100
        %6145 = vmatprep.subr.mxu0 0.0
        %6146 = vmatpush1.msra.mxu0 %v6099
        %6147 = vmatprep.subr.mxu0 0.0
        %6148 = vmatpush2.msra.mxu0 0.0
        %6149 = vmatprep.subr.mxu0 0.0
        %6150 = vmatpush2.msra.mxu0 0.0
        %6151 = vmatprep.subr.mxu0 0.0
        %6152 = vmatpush2.msra.mxu0 0.0
        %6153 = vmatprep.subr.mxu0 0.0
        %6154 = vmatpush2.msra.mxu0 0.0
        %6155 = vmatprep.subr.mxu0 0.0
        %6156 = vmatpush2.msra.mxu0 0.0
        %6157 = vmatprep.subr.mxu0 0.0
        %6158 = vmatpush2.msra.mxu0 0.0
        %6159 = vmatprep.subr.mxu0 0.0
        %6160 = vmatpush2.msra.mxu0 0.0
        %6161 = vmatprep.subr.mxu0 0.0
        %6162 = vmatpush2.msra.mxu0 0.0
        %6163 = vmatprep.subr.mxu0 0.0
        %6164 = vmatpush2.msra.mxu0 0.0
        %6165 = vmatprep.subr.mxu0 0.0
        %6166 = vmatpush2.msra.mxu0 0.0
        %6167 = vmatprep.subr.mxu0 0.0
        %6168 = vmatpush2.msra.mxu0 0.0
        %6169 = vmatprep.subr.mxu0 0.0
        %6170 = vmatpush2.msra.mxu0 0.0
        %6171 = vmatprep.subr.mxu0 0.0
        %6172 = vmatpush2.msra.mxu0 0.0
        %6173 = vmatprep.subr.mxu0 0.0
        %6174 = vmatpush2.msra.mxu0 0.0
        %6175 = vmatprep.subr.mxu0 0.0
        %6176 = vmatpush2.msra.mxu0 0.0
        %6177 = vmatprep.subr.mxu0 0.0
        %6178 = vmatpush2.msra.mxu0 0.0
        %6179 = vmatprep.mubr.f32.mxu0 0.0
        %6180 = vmatmul.mubr.f32.gmra.mxu0 %v6098
        %v6181 = vpop.f32.mrf.mxu0
        %v6182 = vadd.f32 0.0, %v6181
        %v6183 = vpop.f32.mrf.mxu0
        %6184 = vdwg.mxu0
        %v6185 = vadd.f32 %v6097, %v6182
        %v6186 = vld [vmem:[%s3990 + $0x2] sm:$0xf]
        %v6187 = vld [vmem:[%s4590] sm:$0xff]
        %v6188 = vld [vmem:[%s4590 + $0x8] sm:$0xff]
        %v6189 = vld [vmem:[%s4590 + $0x10] sm:$0xff]
        %v6190 = vld [vmem:[%s4590 + $0x18] sm:$0xff]
        %v6191 = vld [vmem:[%s4590 + $0x20] sm:$0xff]
        %v6192 = vld [vmem:[%s4590 + $0x28] sm:$0xff]
        %v6193 = vld [vmem:[%s4590 + $0x30] sm:$0xff]
        %v6194 = vld [vmem:[%s4590 + $0x38] sm:$0xff]
        %v6195 = vld [vmem:[%s4590 + $0x40] sm:$0xff]
        %v6196 = vld [vmem:[%s4590 + $0x48] sm:$0xff]
        %v6197 = vld [vmem:[%s4590 + $0x50] sm:$0xff]
        %v6198 = vld [vmem:[%s4590 + $0x58] sm:$0xff]
        %v6199 = vld [vmem:[%s4590 + $0x60] sm:$0xff]
        %v6200 = vld [vmem:[%s4590 + $0x68] sm:$0xff]
        %v6201 = vld [vmem:[%s4590 + $0x70] sm:$0xff]
        %v6202 = vld [vmem:[%s4590 + $0x78] sm:$0xff]
        %6203 = vmatprep.subr.mxu0 0.0
        %6204 = vmatpush1.msra.mxu0 %v6202
        %6205 = vmatprep.subr.mxu0 0.0
        %6206 = vmatpush1.msra.mxu0 %v6201
        %6207 = vmatprep.subr.mxu0 0.0
        %6208 = vmatpush1.msra.mxu0 %v6200
        %6209 = vmatprep.subr.mxu0 0.0
        %6210 = vmatpush1.msra.mxu0 %v6199
        %6211 = vmatprep.subr.mxu0 0.0
        %6212 = vmatpush1.msra.mxu0 %v6198
        %6213 = vmatprep.subr.mxu0 0.0
        %6214 = vmatpush1.msra.mxu0 %v6197
        %6215 = vmatprep.subr.mxu0 0.0
        %6216 = vmatpush1.msra.mxu0 %v6196
        %6217 = vmatprep.subr.mxu0 0.0
        %6218 = vmatpush1.msra.mxu0 %v6195
        %6219 = vmatprep.subr.mxu0 0.0
        %6220 = vmatpush1.msra.mxu0 %v6194
        %6221 = vmatprep.subr.mxu0 0.0
        %6222 = vmatpush1.msra.mxu0 %v6193
        %6223 = vmatprep.subr.mxu0 0.0
        %6224 = vmatpush1.msra.mxu0 %v6192
        %6225 = vmatprep.subr.mxu0 0.0
        %6226 = vmatpush1.msra.mxu0 %v6191
        %6227 = vmatprep.subr.mxu0 0.0
        %6228 = vmatpush1.msra.mxu0 %v6190
        %6229 = vmatprep.subr.mxu0 0.0
        %6230 = vmatpush1.msra.mxu0 %v6189
        %6231 = vmatprep.subr.mxu0 0.0
        %6232 = vmatpush1.msra.mxu0 %v6188
        %6233 = vmatprep.subr.mxu0 0.0
        %6234 = vmatpush1.msra.mxu0 %v6187
        %6235 = vmatprep.subr.mxu0 0.0
        %6236 = vmatpush2.msra.mxu0 0.0
        %6237 = vmatprep.subr.mxu0 0.0
        %6238 = vmatpush2.msra.mxu0 0.0
        %6239 = vmatprep.subr.mxu0 0.0
        %6240 = vmatpush2.msra.mxu0 0.0
        %6241 = vmatprep.subr.mxu0 0.0
        %6242 = vmatpush2.msra.mxu0 0.0
        %6243 = vmatprep.subr.mxu0 0.0
        %6244 = vmatpush2.msra.mxu0 0.0
        %6245 = vmatprep.subr.mxu0 0.0
        %6246 = vmatpush2.msra.mxu0 0.0
        %6247 = vmatprep.subr.mxu0 0.0
        %6248 = vmatpush2.msra.mxu0 0.0
        %6249 = vmatprep.subr.mxu0 0.0
        %6250 = vmatpush2.msra.mxu0 0.0
        %6251 = vmatprep.subr.mxu0 0.0
        %6252 = vmatpush2.msra.mxu0 0.0
        %6253 = vmatprep.subr.mxu0 0.0
        %6254 = vmatpush2.msra.mxu0 0.0
        %6255 = vmatprep.subr.mxu0 0.0
        %6256 = vmatpush2.msra.mxu0 0.0
        %6257 = vmatprep.subr.mxu0 0.0
        %6258 = vmatpush2.msra.mxu0 0.0
        %6259 = vmatprep.subr.mxu0 0.0
        %6260 = vmatpush2.msra.mxu0 0.0
        %6261 = vmatprep.subr.mxu0 0.0
        %6262 = vmatpush2.msra.mxu0 0.0
        %6263 = vmatprep.subr.mxu0 0.0
        %6264 = vmatpush2.msra.mxu0 0.0
        %6265 = vmatprep.subr.mxu0 0.0
        %6266 = vmatpush2.msra.mxu0 0.0
        %6267 = vmatprep.mubr.f32.mxu0 0.0
        %6268 = vmatmul.mubr.f32.gmra.mxu0 %v6186
        %v6269 = vpop.f32.mrf.mxu0
        %v6270 = vadd.f32 0.0, %v6269
        %v6271 = vpop.f32.mrf.mxu0
        %6272 = vdwg.mxu0
        %v6273 = vadd.f32 %v6185, %v6270
        %v6274 = vld [vmem:[%s4047] sm:$0xf]
        %v6275 = vld [vmem:[%s4679] sm:$0xff]
        %v6276 = vld [vmem:[%s4679 + $0x8] sm:$0xff]
        %v6277 = vld [vmem:[%s4679 + $0x10] sm:$0xff]
        %v6278 = vld [vmem:[%s4679 + $0x18] sm:$0xff]
        %v6279 = vld [vmem:[%s4679 + $0x20] sm:$0xff]
        %v6280 = vld [vmem:[%s4679 + $0x28] sm:$0xff]
        %v6281 = vld [vmem:[%s4679 + $0x30] sm:$0xff]
        %v6282 = vld [vmem:[%s4679 + $0x38] sm:$0xff]
        %v6283 = vld [vmem:[%s4679 + $0x40] sm:$0xff]
        %v6284 = vld [vmem:[%s4679 + $0x48] sm:$0xff]
        %v6285 = vld [vmem:[%s4679 + $0x50] sm:$0xff]
        %v6286 = vld [vmem:[%s4679 + $0x58] sm:$0xff]
        %v6287 = vld [vmem:[%s4679 + $0x60] sm:$0xff]
        %v6288 = vld [vmem:[%s4679 + $0x68] sm:$0xff]
        %v6289 = vld [vmem:[%s4679 + $0x70] sm:$0xff]
        %v6290 = vld [vmem:[%s4679 + $0x78] sm:$0xff]
        %6291 = vmatprep.subr.mxu0 0.0
        %6292 = vmatpush1.msra.mxu0 %v6290
        %6293 = vmatprep.subr.mxu0 0.0
        %6294 = vmatpush1.msra.mxu0 %v6289
        %6295 = vmatprep.subr.mxu0 0.0
        %6296 = vmatpush1.msra.mxu0 %v6288
        %6297 = vmatprep.subr.mxu0 0.0
        %6298 = vmatpush1.msra.mxu0 %v6287
        %6299 = vmatprep.subr.mxu0 0.0
        %6300 = vmatpush1.msra.mxu0 %v6286
        %6301 = vmatprep.subr.mxu0 0.0
        %6302 = vmatpush1.msra.mxu0 %v6285
        %6303 = vmatprep.subr.mxu0 0.0
        %6304 = vmatpush1.msra.mxu0 %v6284
        %6305 = vmatprep.subr.mxu0 0.0
        %6306 = vmatpush1.msra.mxu0 %v6283
        %6307 = vmatprep.subr.mxu0 0.0
        %6308 = vmatpush1.msra.mxu0 %v6282
        %6309 = vmatprep.subr.mxu0 0.0
        %6310 = vmatpush1.msra.mxu0 %v6281
        %6311 = vmatprep.subr.mxu0 0.0
        %6312 = vmatpush1.msra.mxu0 %v6280
        %6313 = vmatprep.subr.mxu0 0.0
        %6314 = vmatpush1.msra.mxu0 %v6279
        %6315 = vmatprep.subr.mxu0 0.0
        %6316 = vmatpush1.msra.mxu0 %v6278
        %6317 = vmatprep.subr.mxu0 0.0
        %6318 = vmatpush1.msra.mxu0 %v6277
        %6319 = vmatprep.subr.mxu0 0.0
        %6320 = vmatpush1.msra.mxu0 %v6276
        %6321 = vmatprep.subr.mxu0 0.0
        %6322 = vmatpush1.msra.mxu0 %v6275
        %6323 = vmatprep.subr.mxu0 0.0
        %6324 = vmatpush2.msra.mxu0 0.0
        %6325 = vmatprep.subr.mxu0 0.0
        %6326 = vmatpush2.msra.mxu0 0.0
        %6327 = vmatprep.subr.mxu0 0.0
        %6328 = vmatpush2.msra.mxu0 0.0
        %6329 = vmatprep.subr.mxu0 0.0
        %6330 = vmatpush2.msra.mxu0 0.0
        %6331 = vmatprep.subr.mxu0 0.0
        %6332 = vmatpush2.msra.mxu0 0.0
        %6333 = vmatprep.subr.mxu0 0.0
        %6334 = vmatpush2.msra.mxu0 0.0
        %6335 = vmatprep.subr.mxu0 0.0
        %6336 = vmatpush2.msra.mxu0 0.0
        %6337 = vmatprep.subr.mxu0 0.0
        %6338 = vmatpush2.msra.mxu0 0.0
        %6339 = vmatprep.subr.mxu0 0.0
        %6340 = vmatpush2.msra.mxu0 0.0
        %6341 = vmatprep.subr.mxu0 0.0
        %6342 = vmatpush2.msra.mxu0 0.0
        %6343 = vmatprep.subr.mxu0 0.0
        %6344 = vmatpush2.msra.mxu0 0.0
        %6345 = vmatprep.subr.mxu0 0.0
        %6346 = vmatpush2.msra.mxu0 0.0
        %6347 = vmatprep.subr.mxu0 0.0
        %6348 = vmatpush2.msra.mxu0 0.0
        %6349 = vmatprep.subr.mxu0 0.0
        %6350 = vmatpush2.msra.mxu0 0.0
        %6351 = vmatprep.subr.mxu0 0.0
        %6352 = vmatpush2.msra.mxu0 0.0
        %6353 = vmatprep.subr.mxu0 0.0
        %6354 = vmatpush2.msra.mxu0 0.0
        %6355 = vmatprep.mubr.f32.mxu0 0.0
        %6356 = vmatmul.mubr.f32.gmra.mxu0 %v6274
        %v6357 = vpop.f32.mrf.mxu0
        %v6358 = vadd.f32 0.0, %v6357
        %v6359 = vpop.f32.mrf.mxu0
        %6360 = vdwg.mxu0
        %v6361 = vadd.f32 %v6273, %v6358
        %v6362 = vld [vmem:[%s4047 + $0x1] sm:$0xf]
        %v6363 = vld [vmem:[%s4768] sm:$0xff]
        %v6364 = vld [vmem:[%s4768 + $0x8] sm:$0xff]
        %v6365 = vld [vmem:[%s4768 + $0x10] sm:$0xff]
        %v6366 = vld [vmem:[%s4768 + $0x18] sm:$0xff]
        %v6367 = vld [vmem:[%s4768 + $0x20] sm:$0xff]
        %v6368 = vld [vmem:[%s4768 + $0x28] sm:$0xff]
        %v6369 = vld [vmem:[%s4768 + $0x30] sm:$0xff]
        %v6370 = vld [vmem:[%s4768 + $0x38] sm:$0xff]
        %v6371 = vld [vmem:[%s4768 + $0x40] sm:$0xff]
        %v6372 = vld [vmem:[%s4768 + $0x48] sm:$0xff]
        %v6373 = vld [vmem:[%s4768 + $0x50] sm:$0xff]
        %v6374 = vld [vmem:[%s4768 + $0x58] sm:$0xff]
        %v6375 = vld [vmem:[%s4768 + $0x60] sm:$0xff]
        %v6376 = vld [vmem:[%s4768 + $0x68] sm:$0xff]
        %v6377 = vld [vmem:[%s4768 + $0x70] sm:$0xff]
        %v6378 = vld [vmem:[%s4768 + $0x78] sm:$0xff]
        %6379 = vmatprep.subr.mxu0 0.0
        %6380 = vmatpush1.msra.mxu0 %v6378
        %6381 = vmatprep.subr.mxu0 0.0
        %6382 = vmatpush1.msra.mxu0 %v6377
        %6383 = vmatprep.subr.mxu0 0.0
        %6384 = vmatpush1.msra.mxu0 %v6376
        %6385 = vmatprep.subr.mxu0 0.0
        %6386 = vmatpush1.msra.mxu0 %v6375
        %6387 = vmatprep.subr.mxu0 0.0
        %6388 = vmatpush1.msra.mxu0 %v6374
        %6389 = vmatprep.subr.mxu0 0.0
        %6390 = vmatpush1.msra.mxu0 %v6373
        %6391 = vmatprep.subr.mxu0 0.0
        %6392 = vmatpush1.msra.mxu0 %v6372
        %6393 = vmatprep.subr.mxu0 0.0
        %6394 = vmatpush1.msra.mxu0 %v6371
        %6395 = vmatprep.subr.mxu0 0.0
        %6396 = vmatpush1.msra.mxu0 %v6370
        %6397 = vmatprep.subr.mxu0 0.0
        %6398 = vmatpush1.msra.mxu0 %v6369
        %6399 = vmatprep.subr.mxu0 0.0
        %6400 = vmatpush1.msra.mxu0 %v6368
        %6401 = vmatprep.subr.mxu0 0.0
        %6402 = vmatpush1.msra.mxu0 %v6367
        %6403 = vmatprep.subr.mxu0 0.0
        %6404 = vmatpush1.msra.mxu0 %v6366
        %6405 = vmatprep.subr.mxu0 0.0
        %6406 = vmatpush1.msra.mxu0 %v6365
        %6407 = vmatprep.subr.mxu0 0.0
        %6408 = vmatpush1.msra.mxu0 %v6364
        %6409 = vmatprep.subr.mxu0 0.0
        %6410 = vmatpush1.msra.mxu0 %v6363
        %6411 = vmatprep.subr.mxu0 0.0
        %6412 = vmatpush2.msra.mxu0 0.0
        %6413 = vmatprep.subr.mxu0 0.0
        %6414 = vmatpush2.msra.mxu0 0.0
        %6415 = vmatprep.subr.mxu0 0.0
        %6416 = vmatpush2.msra.mxu0 0.0
        %6417 = vmatprep.subr.mxu0 0.0
        %6418 = vmatpush2.msra.mxu0 0.0
        %6419 = vmatprep.subr.mxu0 0.0
        %6420 = vmatpush2.msra.mxu0 0.0
        %6421 = vmatprep.subr.mxu0 0.0
        %6422 = vmatpush2.msra.mxu0 0.0
        %6423 = vmatprep.subr.mxu0 0.0
        %6424 = vmatpush2.msra.mxu0 0.0
        %6425 = vmatprep.subr.mxu0 0.0
        %6426 = vmatpush2.msra.mxu0 0.0
        %6427 = vmatprep.subr.mxu0 0.0
        %6428 = vmatpush2.msra.mxu0 0.0
        %6429 = vmatprep.subr.mxu0 0.0
        %6430 = vmatpush2.msra.mxu0 0.0
        %6431 = vmatprep.subr.mxu0 0.0
        %6432 = vmatpush2.msra.mxu0 0.0
        %6433 = vmatprep.subr.mxu0 0.0
        %6434 = vmatpush2.msra.mxu0 0.0
        %6435 = vmatprep.subr.mxu0 0.0
        %6436 = vmatpush2.msra.mxu0 0.0
        %6437 = vmatprep.subr.mxu0 0.0
        %6438 = vmatpush2.msra.mxu0 0.0
        %6439 = vmatprep.subr.mxu0 0.0
        %6440 = vmatpush2.msra.mxu0 0.0
        %6441 = vmatprep.subr.mxu0 0.0
        %6442 = vmatpush2.msra.mxu0 0.0
        %6443 = vmatprep.mubr.f32.mxu0 0.0
        %6444 = vmatmul.mubr.f32.gmra.mxu0 %v6362
        %v6445 = vpop.f32.mrf.mxu0
        %v6446 = vadd.f32 0.0, %v6445
        %v6447 = vpop.f32.mrf.mxu0
        %6448 = vdwg.mxu0
        %v6449 = vadd.f32 %v6361, %v6446
        %v6450 = vld [vmem:[%s4047 + $0x2] sm:$0xf]
        %v6451 = vld [vmem:[%s4857] sm:$0xff]
        %v6452 = vld [vmem:[%s4857 + $0x8] sm:$0xff]
        %v6453 = vld [vmem:[%s4857 + $0x10] sm:$0xff]
        %v6454 = vld [vmem:[%s4857 + $0x18] sm:$0xff]
        %v6455 = vld [vmem:[%s4857 + $0x20] sm:$0xff]
        %v6456 = vld [vmem:[%s4857 + $0x28] sm:$0xff]
        %v6457 = vld [vmem:[%s4857 + $0x30] sm:$0xff]
        %v6458 = vld [vmem:[%s4857 + $0x38] sm:$0xff]
        %v6459 = vld [vmem:[%s4857 + $0x40] sm:$0xff]
        %v6460 = vld [vmem:[%s4857 + $0x48] sm:$0xff]
        %v6461 = vld [vmem:[%s4857 + $0x50] sm:$0xff]
        %v6462 = vld [vmem:[%s4857 + $0x58] sm:$0xff]
        %v6463 = vld [vmem:[%s4857 + $0x60] sm:$0xff]
        %v6464 = vld [vmem:[%s4857 + $0x68] sm:$0xff]
        %v6465 = vld [vmem:[%s4857 + $0x70] sm:$0xff]
        %v6466 = vld [vmem:[%s4857 + $0x78] sm:$0xff]
        %6467 = vmatprep.subr.mxu0 0.0
        %6468 = vmatpush1.msra.mxu0 %v6466
        %6469 = vmatprep.subr.mxu0 0.0
        %6470 = vmatpush1.msra.mxu0 %v6465
        %6471 = vmatprep.subr.mxu0 0.0
        %6472 = vmatpush1.msra.mxu0 %v6464
        %6473 = vmatprep.subr.mxu0 0.0
        %6474 = vmatpush1.msra.mxu0 %v6463
        %6475 = vmatprep.subr.mxu0 0.0
        %6476 = vmatpush1.msra.mxu0 %v6462
        %6477 = vmatprep.subr.mxu0 0.0
        %6478 = vmatpush1.msra.mxu0 %v6461
        %6479 = vmatprep.subr.mxu0 0.0
        %6480 = vmatpush1.msra.mxu0 %v6460
        %6481 = vmatprep.subr.mxu0 0.0
        %6482 = vmatpush1.msra.mxu0 %v6459
        %6483 = vmatprep.subr.mxu0 0.0
        %6484 = vmatpush1.msra.mxu0 %v6458
        %6485 = vmatprep.subr.mxu0 0.0
        %6486 = vmatpush1.msra.mxu0 %v6457
        %6487 = vmatprep.subr.mxu0 0.0
        %6488 = vmatpush1.msra.mxu0 %v6456
        %6489 = vmatprep.subr.mxu0 0.0
        %6490 = vmatpush1.msra.mxu0 %v6455
        %6491 = vmatprep.subr.mxu0 0.0
        %6492 = vmatpush1.msra.mxu0 %v6454
        %6493 = vmatprep.subr.mxu0 0.0
        %6494 = vmatpush1.msra.mxu0 %v6453
        %6495 = vmatprep.subr.mxu0 0.0
        %6496 = vmatpush1.msra.mxu0 %v6452
        %6497 = vmatprep.subr.mxu0 0.0
        %6498 = vmatpush1.msra.mxu0 %v6451
        %6499 = vmatprep.subr.mxu0 0.0
        %6500 = vmatpush2.msra.mxu0 0.0
        %6501 = vmatprep.subr.mxu0 0.0
        %6502 = vmatpush2.msra.mxu0 0.0
        %6503 = vmatprep.subr.mxu0 0.0
        %6504 = vmatpush2.msra.mxu0 0.0
        %6505 = vmatprep.subr.mxu0 0.0
        %6506 = vmatpush2.msra.mxu0 0.0
        %6507 = vmatprep.subr.mxu0 0.0
        %6508 = vmatpush2.msra.mxu0 0.0
        %6509 = vmatprep.subr.mxu0 0.0
        %6510 = vmatpush2.msra.mxu0 0.0
        %6511 = vmatprep.subr.mxu0 0.0
        %6512 = vmatpush2.msra.mxu0 0.0
        %6513 = vmatprep.subr.mxu0 0.0
        %6514 = vmatpush2.msra.mxu0 0.0
        %6515 = vmatprep.subr.mxu0 0.0
        %6516 = vmatpush2.msra.mxu0 0.0
        %6517 = vmatprep.subr.mxu0 0.0
        %6518 = vmatpush2.msra.mxu0 0.0
        %6519 = vmatprep.subr.mxu0 0.0
        %6520 = vmatpush2.msra.mxu0 0.0
        %6521 = vmatprep.subr.mxu0 0.0
        %6522 = vmatpush2.msra.mxu0 0.0
        %6523 = vmatprep.subr.mxu0 0.0
        %6524 = vmatpush2.msra.mxu0 0.0
        %6525 = vmatprep.subr.mxu0 0.0
        %6526 = vmatpush2.msra.mxu0 0.0
        %6527 = vmatprep.subr.mxu0 0.0
        %6528 = vmatpush2.msra.mxu0 0.0
        %6529 = vmatprep.subr.mxu0 0.0
        %6530 = vmatpush2.msra.mxu0 0.0
        %6531 = vmatprep.mubr.f32.mxu0 0.0
        %6532 = vmatmul.mubr.f32.gmra.mxu0 %v6450
        %v6533 = vpop.f32.mrf.mxu0
        %v6534 = vadd.f32 0.0, %v6533
        %v6535 = vpop.f32.mrf.mxu0
        %6536 = vdwg.mxu0
        %v6537 = vadd.f32 %v6449, %v6534
        %v6538 = vadd.f32 %v6537, %v4949
        %v6539 = vmax.f32 %v6538, 0.0
        %s6540 = scalar_lea.vmem [#allocation4], 8
        %6541 = vst [vmem:[%s6540] sm:$0xf] %v6539
        %v6542 = vld [vmem:[%s3990] sm:$0xf]
        %v6543 = vld [vmem:[#allocation6] sm:$0xff]
        %v6544 = vld [vmem:[#allocation6 + $0x8] sm:$0xff]
        %v6545 = vld [vmem:[#allocation6 + $0x10] sm:$0xff]
        %v6546 = vld [vmem:[#allocation6 + $0x18] sm:$0xff]
        %v6547 = vld [vmem:[#allocation6 + $0x20] sm:$0xff]
        %v6548 = vld [vmem:[#allocation6 + $0x28] sm:$0xff]
        %v6549 = vld [vmem:[#allocation6 + $0x30] sm:$0xff]
        %v6550 = vld [vmem:[#allocation6 + $0x38] sm:$0xff]
        %v6551 = vld [vmem:[#allocation6 + $0x40] sm:$0xff]
        %v6552 = vld [vmem:[#allocation6 + $0x48] sm:$0xff]
        %v6553 = vld [vmem:[#allocation6 + $0x50] sm:$0xff]
        %v6554 = vld [vmem:[#allocation6 + $0x58] sm:$0xff]
        %v6555 = vld [vmem:[#allocation6 + $0x60] sm:$0xff]
        %v6556 = vld [vmem:[#allocation6 + $0x68] sm:$0xff]
        %v6557 = vld [vmem:[#allocation6 + $0x70] sm:$0xff]
        %v6558 = vld [vmem:[#allocation6 + $0x78] sm:$0xff]
        %v6559 = vld [vmem:[%s3990 + $0x1] sm:$0xf]
        %v6560 = vld [vmem:[%s4165] sm:$0xff]
        %v6561 = vld [vmem:[%s4165 + $0x8] sm:$0xff]
        %v6562 = vld [vmem:[%s4165 + $0x10] sm:$0xff]
        %v6563 = vld [vmem:[%s4165 + $0x18] sm:$0xff]
        %v6564 = vld [vmem:[%s4165 + $0x20] sm:$0xff]
        %v6565 = vld [vmem:[%s4165 + $0x28] sm:$0xff]
        %v6566 = vld [vmem:[%s4165 + $0x30] sm:$0xff]
        %v6567 = vld [vmem:[%s4165 + $0x38] sm:$0xff]
        %v6568 = vld [vmem:[%s4165 + $0x40] sm:$0xff]
        %v6569 = vld [vmem:[%s4165 + $0x48] sm:$0xff]
        %v6570 = vld [vmem:[%s4165 + $0x50] sm:$0xff]
        %v6571 = vld [vmem:[%s4165 + $0x58] sm:$0xff]
        %v6572 = vld [vmem:[%s4165 + $0x60] sm:$0xff]
        %v6573 = vld [vmem:[%s4165 + $0x68] sm:$0xff]
        %v6574 = vld [vmem:[%s4165 + $0x70] sm:$0xff]
        %v6575 = vld [vmem:[%s4165 + $0x78] sm:$0xff]
        %6576 = vmatprep.subr.mxu0 0.0
        %6577 = vmatpush1.msra.mxu0 %v6575
        %6578 = vmatprep.subr.mxu0 0.0
        %6579 = vmatpush1.msra.mxu0 %v6574
        %6580 = vmatprep.subr.mxu0 0.0
        %6581 = vmatpush1.msra.mxu0 %v6573
        %6582 = vmatprep.subr.mxu0 0.0
        %6583 = vmatpush1.msra.mxu0 %v6572
        %6584 = vmatprep.subr.mxu0 0.0
        %6585 = vmatpush1.msra.mxu0 %v6571
        %6586 = vmatprep.subr.mxu0 0.0
        %6587 = vmatpush1.msra.mxu0 %v6570
        %6588 = vmatprep.subr.mxu0 0.0
        %6589 = vmatpush1.msra.mxu0 %v6569
        %6590 = vmatprep.subr.mxu0 0.0
        %6591 = vmatpush1.msra.mxu0 %v6568
        %6592 = vmatprep.subr.mxu0 0.0
        %6593 = vmatpush1.msra.mxu0 %v6567
        %6594 = vmatprep.subr.mxu0 0.0
        %6595 = vmatpush1.msra.mxu0 %v6566
        %6596 = vmatprep.subr.mxu0 0.0
        %6597 = vmatpush1.msra.mxu0 %v6565
        %6598 = vmatprep.subr.mxu0 0.0
        %6599 = vmatpush1.msra.mxu0 %v6564
        %6600 = vmatprep.subr.mxu0 0.0
        %6601 = vmatpush1.msra.mxu0 %v6563
        %6602 = vmatprep.subr.mxu0 0.0
        %6603 = vmatpush1.msra.mxu0 %v6562
        %6604 = vmatprep.subr.mxu0 0.0
        %6605 = vmatpush1.msra.mxu0 %v6561
        %6606 = vmatprep.subr.mxu0 0.0
        %6607 = vmatpush1.msra.mxu0 %v6560
        %6608 = vmatprep.subr.mxu0 0.0
        %6609 = vmatpush2.msra.mxu0 0.0
        %6610 = vmatprep.subr.mxu0 0.0
        %6611 = vmatpush2.msra.mxu0 0.0
        %6612 = vmatprep.subr.mxu0 0.0
        %6613 = vmatpush2.msra.mxu0 0.0
        %6614 = vmatprep.subr.mxu0 0.0
        %6615 = vmatpush2.msra.mxu0 0.0
        %6616 = vmatprep.subr.mxu0 0.0
        %6617 = vmatpush2.msra.mxu0 0.0
        %6618 = vmatprep.subr.mxu0 0.0
        %6619 = vmatpush2.msra.mxu0 0.0
        %6620 = vmatprep.subr.mxu0 0.0
        %6621 = vmatpush2.msra.mxu0 0.0
        %6622 = vmatprep.subr.mxu0 0.0
        %6623 = vmatpush2.msra.mxu0 0.0
        %6624 = vmatprep.subr.mxu0 0.0
        %6625 = vmatpush2.msra.mxu0 0.0
        %6626 = vmatprep.subr.mxu0 0.0
        %6627 = vmatpush2.msra.mxu0 0.0
        %6628 = vmatprep.subr.mxu0 0.0
        %6629 = vmatpush2.msra.mxu0 0.0
        %6630 = vmatprep.subr.mxu0 0.0
        %6631 = vmatpush2.msra.mxu0 0.0
        %6632 = vmatprep.subr.mxu0 0.0
        %6633 = vmatpush2.msra.mxu0 0.0
        %6634 = vmatprep.subr.mxu0 0.0
        %6635 = vmatpush2.msra.mxu0 0.0
        %6636 = vmatprep.subr.mxu0 0.0
        %6637 = vmatpush2.msra.mxu0 0.0
        %6638 = vmatprep.subr.mxu0 0.0
        %6639 = vmatpush2.msra.mxu0 0.0
        %6640 = vmatprep.mubr.f32.mxu0 0.0
        %6641 = vmatmul.mubr.f32.gmra.mxu0 %v6559
        %v6642 = vpop.f32.mrf.mxu0
        %v6643 = vadd.f32 0.0, %v6642
        %v6644 = vpop.f32.mrf.mxu0
        %6645 = vdwg.mxu0
        %6646 = vmatprep.subr.mxu0 0.0
        %6647 = vmatpush1.msra.mxu0 %v6558
        %6648 = vmatprep.subr.mxu0 0.0
        %6649 = vmatpush1.msra.mxu0 %v6557
        %6650 = vmatprep.subr.mxu0 0.0
        %6651 = vmatpush1.msra.mxu0 %v6556
        %6652 = vmatprep.subr.mxu0 0.0
        %6653 = vmatpush1.msra.mxu0 %v6555
        %6654 = vmatprep.subr.mxu0 0.0
        %6655 = vmatpush1.msra.mxu0 %v6554
        %6656 = vmatprep.subr.mxu0 0.0
        %6657 = vmatpush1.msra.mxu0 %v6553
        %6658 = vmatprep.subr.mxu0 0.0
        %6659 = vmatpush1.msra.mxu0 %v6552
        %6660 = vmatprep.subr.mxu0 0.0
        %6661 = vmatpush1.msra.mxu0 %v6551
        %6662 = vmatprep.subr.mxu0 0.0
        %6663 = vmatpush1.msra.mxu0 %v6550
        %6664 = vmatprep.subr.mxu0 0.0
        %6665 = vmatpush1.msra.mxu0 %v6549
        %6666 = vmatprep.subr.mxu0 0.0
        %6667 = vmatpush1.msra.mxu0 %v6548
        %6668 = vmatprep.subr.mxu0 0.0
        %6669 = vmatpush1.msra.mxu0 %v6547
        %6670 = vmatprep.subr.mxu0 0.0
        %6671 = vmatpush1.msra.mxu0 %v6546
        %6672 = vmatprep.subr.mxu0 0.0
        %6673 = vmatpush1.msra.mxu0 %v6545
        %6674 = vmatprep.subr.mxu0 0.0
        %6675 = vmatpush1.msra.mxu0 %v6544
        %6676 = vmatprep.subr.mxu0 0.0
        %6677 = vmatpush1.msra.mxu0 %v6543
        %6678 = vmatprep.subr.mxu0 0.0
        %6679 = vmatpush2.msra.mxu0 0.0
        %6680 = vmatprep.subr.mxu0 0.0
        %6681 = vmatpush2.msra.mxu0 0.0
        %6682 = vmatprep.subr.mxu0 0.0
        %6683 = vmatpush2.msra.mxu0 0.0
        %6684 = vmatprep.subr.mxu0 0.0
        %6685 = vmatpush2.msra.mxu0 0.0
        %6686 = vmatprep.subr.mxu0 0.0
        %6687 = vmatpush2.msra.mxu0 0.0
        %6688 = vmatprep.subr.mxu0 0.0
        %6689 = vmatpush2.msra.mxu0 0.0
        %6690 = vmatprep.subr.mxu0 0.0
        %6691 = vmatpush2.msra.mxu0 0.0
        %6692 = vmatprep.subr.mxu0 0.0
        %6693 = vmatpush2.msra.mxu0 0.0
        %6694 = vmatprep.subr.mxu0 0.0
        %6695 = vmatpush2.msra.mxu0 0.0
        %6696 = vmatprep.subr.mxu0 0.0
        %6697 = vmatpush2.msra.mxu0 0.0
        %6698 = vmatprep.subr.mxu0 0.0
        %6699 = vmatpush2.msra.mxu0 0.0
        %6700 = vmatprep.subr.mxu0 0.0
        %6701 = vmatpush2.msra.mxu0 0.0
        %6702 = vmatprep.subr.mxu0 0.0
        %6703 = vmatpush2.msra.mxu0 0.0
        %6704 = vmatprep.subr.mxu0 0.0
        %6705 = vmatpush2.msra.mxu0 0.0
        %6706 = vmatprep.subr.mxu0 0.0
        %6707 = vmatpush2.msra.mxu0 0.0
        %6708 = vmatprep.subr.mxu0 0.0
        %6709 = vmatpush2.msra.mxu0 0.0
        %6710 = vmatprep.mubr.f32.mxu0 0.0
        %6711 = vmatmul.mubr.f32.gmra.mxu0 %v6542
        %v6712 = vpop.f32.mrf.mxu0
        %v6713 = vadd.f32 %v6643, %v6712
        %v6714 = vpop.f32.mrf.mxu0
        %6715 = vdwg.mxu0
        %v6716 = vld [vmem:[%s3990 + $0x2] sm:$0xf]
        %v6717 = vld [vmem:[%s4323] sm:$0xff]
        %v6718 = vld [vmem:[%s4323 + $0x8] sm:$0xff]
        %v6719 = vld [vmem:[%s4323 + $0x10] sm:$0xff]
        %v6720 = vld [vmem:[%s4323 + $0x18] sm:$0xff]
        %v6721 = vld [vmem:[%s4323 + $0x20] sm:$0xff]
        %v6722 = vld [vmem:[%s4323 + $0x28] sm:$0xff]
        %v6723 = vld [vmem:[%s4323 + $0x30] sm:$0xff]
        %v6724 = vld [vmem:[%s4323 + $0x38] sm:$0xff]
        %v6725 = vld [vmem:[%s4323 + $0x40] sm:$0xff]
        %v6726 = vld [vmem:[%s4323 + $0x48] sm:$0xff]
        %v6727 = vld [vmem:[%s4323 + $0x50] sm:$0xff]
        %v6728 = vld [vmem:[%s4323 + $0x58] sm:$0xff]
        %v6729 = vld [vmem:[%s4323 + $0x60] sm:$0xff]
        %v6730 = vld [vmem:[%s4323 + $0x68] sm:$0xff]
        %v6731 = vld [vmem:[%s4323 + $0x70] sm:$0xff]
        %v6732 = vld [vmem:[%s4323 + $0x78] sm:$0xff]
        %6733 = vmatprep.subr.mxu0 0.0
        %6734 = vmatpush1.msra.mxu0 %v6732
        %6735 = vmatprep.subr.mxu0 0.0
        %6736 = vmatpush1.msra.mxu0 %v6731
        %6737 = vmatprep.subr.mxu0 0.0
        %6738 = vmatpush1.msra.mxu0 %v6730
        %6739 = vmatprep.subr.mxu0 0.0
        %6740 = vmatpush1.msra.mxu0 %v6729
        %6741 = vmatprep.subr.mxu0 0.0
        %6742 = vmatpush1.msra.mxu0 %v6728
        %6743 = vmatprep.subr.mxu0 0.0
        %6744 = vmatpush1.msra.mxu0 %v6727
        %6745 = vmatprep.subr.mxu0 0.0
        %6746 = vmatpush1.msra.mxu0 %v6726
        %6747 = vmatprep.subr.mxu0 0.0
        %6748 = vmatpush1.msra.mxu0 %v6725
        %6749 = vmatprep.subr.mxu0 0.0
        %6750 = vmatpush1.msra.mxu0 %v6724
        %6751 = vmatprep.subr.mxu0 0.0
        %6752 = vmatpush1.msra.mxu0 %v6723
        %6753 = vmatprep.subr.mxu0 0.0
        %6754 = vmatpush1.msra.mxu0 %v6722
        %6755 = vmatprep.subr.mxu0 0.0
        %6756 = vmatpush1.msra.mxu0 %v6721
        %6757 = vmatprep.subr.mxu0 0.0
        %6758 = vmatpush1.msra.mxu0 %v6720
        %6759 = vmatprep.subr.mxu0 0.0
        %6760 = vmatpush1.msra.mxu0 %v6719
        %6761 = vmatprep.subr.mxu0 0.0
        %6762 = vmatpush1.msra.mxu0 %v6718
        %6763 = vmatprep.subr.mxu0 0.0
        %6764 = vmatpush1.msra.mxu0 %v6717
        %6765 = vmatprep.subr.mxu0 0.0
        %6766 = vmatpush2.msra.mxu0 0.0
        %6767 = vmatprep.subr.mxu0 0.0
        %6768 = vmatpush2.msra.mxu0 0.0
        %6769 = vmatprep.subr.mxu0 0.0
        %6770 = vmatpush2.msra.mxu0 0.0
        %6771 = vmatprep.subr.mxu0 0.0
        %6772 = vmatpush2.msra.mxu0 0.0
        %6773 = vmatprep.subr.mxu0 0.0
        %6774 = vmatpush2.msra.mxu0 0.0
        %6775 = vmatprep.subr.mxu0 0.0
        %6776 = vmatpush2.msra.mxu0 0.0
        %6777 = vmatprep.subr.mxu0 0.0
        %6778 = vmatpush2.msra.mxu0 0.0
        %6779 = vmatprep.subr.mxu0 0.0
        %6780 = vmatpush2.msra.mxu0 0.0
        %6781 = vmatprep.subr.mxu0 0.0
        %6782 = vmatpush2.msra.mxu0 0.0
        %6783 = vmatprep.subr.mxu0 0.0
        %6784 = vmatpush2.msra.mxu0 0.0
        %6785 = vmatprep.subr.mxu0 0.0
        %6786 = vmatpush2.msra.mxu0 0.0
        %6787 = vmatprep.subr.mxu0 0.0
        %6788 = vmatpush2.msra.mxu0 0.0
        %6789 = vmatprep.subr.mxu0 0.0
        %6790 = vmatpush2.msra.mxu0 0.0
        %6791 = vmatprep.subr.mxu0 0.0
        %6792 = vmatpush2.msra.mxu0 0.0
        %6793 = vmatprep.subr.mxu0 0.0
        %6794 = vmatpush2.msra.mxu0 0.0
        %6795 = vmatprep.subr.mxu0 0.0
        %6796 = vmatpush2.msra.mxu0 0.0
        %6797 = vmatprep.mubr.f32.mxu0 0.0
        %6798 = vmatmul.mubr.f32.gmra.mxu0 %v6716
        %v6799 = vpop.f32.mrf.mxu0
        %v6800 = vadd.f32 0.0, %v6799
        %v6801 = vpop.f32.mrf.mxu0
        %6802 = vdwg.mxu0
        %v6803 = vadd.f32 %v6713, %v6800
        %v6804 = vld [vmem:[%s4047] sm:$0xf]
        %v6805 = vld [vmem:[%s4412] sm:$0xff]
        %v6806 = vld [vmem:[%s4412 + $0x8] sm:$0xff]
        %v6807 = vld [vmem:[%s4412 + $0x10] sm:$0xff]
        %v6808 = vld [vmem:[%s4412 + $0x18] sm:$0xff]
        %v6809 = vld [vmem:[%s4412 + $0x20] sm:$0xff]
        %v6810 = vld [vmem:[%s4412 + $0x28] sm:$0xff]
        %v6811 = vld [vmem:[%s4412 + $0x30] sm:$0xff]
        %v6812 = vld [vmem:[%s4412 + $0x38] sm:$0xff]
        %v6813 = vld [vmem:[%s4412 + $0x40] sm:$0xff]
        %v6814 = vld [vmem:[%s4412 + $0x48] sm:$0xff]
        %v6815 = vld [vmem:[%s4412 + $0x50] sm:$0xff]
        %v6816 = vld [vmem:[%s4412 + $0x58] sm:$0xff]
        %v6817 = vld [vmem:[%s4412 + $0x60] sm:$0xff]
        %v6818 = vld [vmem:[%s4412 + $0x68] sm:$0xff]
        %v6819 = vld [vmem:[%s4412 + $0x70] sm:$0xff]
        %v6820 = vld [vmem:[%s4412 + $0x78] sm:$0xff]
        %6821 = vmatprep.subr.mxu0 0.0
        %6822 = vmatpush1.msra.mxu0 %v6820
        %6823 = vmatprep.subr.mxu0 0.0
        %6824 = vmatpush1.msra.mxu0 %v6819
        %6825 = vmatprep.subr.mxu0 0.0
        %6826 = vmatpush1.msra.mxu0 %v6818
        %6827 = vmatprep.subr.mxu0 0.0
        %6828 = vmatpush1.msra.mxu0 %v6817
        %6829 = vmatprep.subr.mxu0 0.0
        %6830 = vmatpush1.msra.mxu0 %v6816
        %6831 = vmatprep.subr.mxu0 0.0
        %6832 = vmatpush1.msra.mxu0 %v6815
        %6833 = vmatprep.subr.mxu0 0.0
        %6834 = vmatpush1.msra.mxu0 %v6814
        %6835 = vmatprep.subr.mxu0 0.0
        %6836 = vmatpush1.msra.mxu0 %v6813
        %6837 = vmatprep.subr.mxu0 0.0
        %6838 = vmatpush1.msra.mxu0 %v6812
        %6839 = vmatprep.subr.mxu0 0.0
        %6840 = vmatpush1.msra.mxu0 %v6811
        %6841 = vmatprep.subr.mxu0 0.0
        %6842 = vmatpush1.msra.mxu0 %v6810
        %6843 = vmatprep.subr.mxu0 0.0
        %6844 = vmatpush1.msra.mxu0 %v6809
        %6845 = vmatprep.subr.mxu0 0.0
        %6846 = vmatpush1.msra.mxu0 %v6808
        %6847 = vmatprep.subr.mxu0 0.0
        %6848 = vmatpush1.msra.mxu0 %v6807
        %6849 = vmatprep.subr.mxu0 0.0
        %6850 = vmatpush1.msra.mxu0 %v6806
        %6851 = vmatprep.subr.mxu0 0.0
        %6852 = vmatpush1.msra.mxu0 %v6805
        %6853 = vmatprep.subr.mxu0 0.0
        %6854 = vmatpush2.msra.mxu0 0.0
        %6855 = vmatprep.subr.mxu0 0.0
        %6856 = vmatpush2.msra.mxu0 0.0
        %6857 = vmatprep.subr.mxu0 0.0
        %6858 = vmatpush2.msra.mxu0 0.0
        %6859 = vmatprep.subr.mxu0 0.0
        %6860 = vmatpush2.msra.mxu0 0.0
        %6861 = vmatprep.subr.mxu0 0.0
        %6862 = vmatpush2.msra.mxu0 0.0
        %6863 = vmatprep.subr.mxu0 0.0
        %6864 = vmatpush2.msra.mxu0 0.0
        %6865 = vmatprep.subr.mxu0 0.0
        %6866 = vmatpush2.msra.mxu0 0.0
        %6867 = vmatprep.subr.mxu0 0.0
        %6868 = vmatpush2.msra.mxu0 0.0
        %6869 = vmatprep.subr.mxu0 0.0
        %6870 = vmatpush2.msra.mxu0 0.0
        %6871 = vmatprep.subr.mxu0 0.0
        %6872 = vmatpush2.msra.mxu0 0.0
        %6873 = vmatprep.subr.mxu0 0.0
        %6874 = vmatpush2.msra.mxu0 0.0
        %6875 = vmatprep.subr.mxu0 0.0
        %6876 = vmatpush2.msra.mxu0 0.0
        %6877 = vmatprep.subr.mxu0 0.0
        %6878 = vmatpush2.msra.mxu0 0.0
        %6879 = vmatprep.subr.mxu0 0.0
        %6880 = vmatpush2.msra.mxu0 0.0
        %6881 = vmatprep.subr.mxu0 0.0
        %6882 = vmatpush2.msra.mxu0 0.0
        %6883 = vmatprep.subr.mxu0 0.0
        %6884 = vmatpush2.msra.mxu0 0.0
        %6885 = vmatprep.mubr.f32.mxu0 0.0
        %6886 = vmatmul.mubr.f32.gmra.mxu0 %v6804
        %v6887 = vpop.f32.mrf.mxu0
        %v6888 = vadd.f32 0.0, %v6887
        %v6889 = vpop.f32.mrf.mxu0
        %6890 = vdwg.mxu0
        %v6891 = vadd.f32 %v6803, %v6888
        %v6892 = vld [vmem:[%s4047 + $0x1] sm:$0xf]
        %v6893 = vld [vmem:[%s4501] sm:$0xff]
        %v6894 = vld [vmem:[%s4501 + $0x8] sm:$0xff]
        %v6895 = vld [vmem:[%s4501 + $0x10] sm:$0xff]
        %v6896 = vld [vmem:[%s4501 + $0x18] sm:$0xff]
        %v6897 = vld [vmem:[%s4501 + $0x20] sm:$0xff]
        %v6898 = vld [vmem:[%s4501 + $0x28] sm:$0xff]
        %v6899 = vld [vmem:[%s4501 + $0x30] sm:$0xff]
        %v6900 = vld [vmem:[%s4501 + $0x38] sm:$0xff]
        %v6901 = vld [vmem:[%s4501 + $0x40] sm:$0xff]
        %v6902 = vld [vmem:[%s4501 + $0x48] sm:$0xff]
        %v6903 = vld [vmem:[%s4501 + $0x50] sm:$0xff]
        %v6904 = vld [vmem:[%s4501 + $0x58] sm:$0xff]
        %v6905 = vld [vmem:[%s4501 + $0x60] sm:$0xff]
        %v6906 = vld [vmem:[%s4501 + $0x68] sm:$0xff]
        %v6907 = vld [vmem:[%s4501 + $0x70] sm:$0xff]
        %v6908 = vld [vmem:[%s4501 + $0x78] sm:$0xff]
        %6909 = vmatprep.subr.mxu0 0.0
        %6910 = vmatpush1.msra.mxu0 %v6908
        %6911 = vmatprep.subr.mxu0 0.0
        %6912 = vmatpush1.msra.mxu0 %v6907
        %6913 = vmatprep.subr.mxu0 0.0
        %6914 = vmatpush1.msra.mxu0 %v6906
        %6915 = vmatprep.subr.mxu0 0.0
        %6916 = vmatpush1.msra.mxu0 %v6905
        %6917 = vmatprep.subr.mxu0 0.0
        %6918 = vmatpush1.msra.mxu0 %v6904
        %6919 = vmatprep.subr.mxu0 0.0
        %6920 = vmatpush1.msra.mxu0 %v6903
        %6921 = vmatprep.subr.mxu0 0.0
        %6922 = vmatpush1.msra.mxu0 %v6902
        %6923 = vmatprep.subr.mxu0 0.0
        %6924 = vmatpush1.msra.mxu0 %v6901
        %6925 = vmatprep.subr.mxu0 0.0
        %6926 = vmatpush1.msra.mxu0 %v6900
        %6927 = vmatprep.subr.mxu0 0.0
        %6928 = vmatpush1.msra.mxu0 %v6899
        %6929 = vmatprep.subr.mxu0 0.0
        %6930 = vmatpush1.msra.mxu0 %v6898
        %6931 = vmatprep.subr.mxu0 0.0
        %6932 = vmatpush1.msra.mxu0 %v6897
        %6933 = vmatprep.subr.mxu0 0.0
        %6934 = vmatpush1.msra.mxu0 %v6896
        %6935 = vmatprep.subr.mxu0 0.0
        %6936 = vmatpush1.msra.mxu0 %v6895
        %6937 = vmatprep.subr.mxu0 0.0
        %6938 = vmatpush1.msra.mxu0 %v6894
        %6939 = vmatprep.subr.mxu0 0.0
        %6940 = vmatpush1.msra.mxu0 %v6893
        %6941 = vmatprep.subr.mxu0 0.0
        %6942 = vmatpush2.msra.mxu0 0.0
        %6943 = vmatprep.subr.mxu0 0.0
        %6944 = vmatpush2.msra.mxu0 0.0
        %6945 = vmatprep.subr.mxu0 0.0
        %6946 = vmatpush2.msra.mxu0 0.0
        %6947 = vmatprep.subr.mxu0 0.0
        %6948 = vmatpush2.msra.mxu0 0.0
        %6949 = vmatprep.subr.mxu0 0.0
        %6950 = vmatpush2.msra.mxu0 0.0
        %6951 = vmatprep.subr.mxu0 0.0
        %6952 = vmatpush2.msra.mxu0 0.0
        %6953 = vmatprep.subr.mxu0 0.0
        %6954 = vmatpush2.msra.mxu0 0.0
        %6955 = vmatprep.subr.mxu0 0.0
        %6956 = vmatpush2.msra.mxu0 0.0
        %6957 = vmatprep.subr.mxu0 0.0
        %6958 = vmatpush2.msra.mxu0 0.0
        %6959 = vmatprep.subr.mxu0 0.0
        %6960 = vmatpush2.msra.mxu0 0.0
        %6961 = vmatprep.subr.mxu0 0.0
        %6962 = vmatpush2.msra.mxu0 0.0
        %6963 = vmatprep.subr.mxu0 0.0
        %6964 = vmatpush2.msra.mxu0 0.0
        %6965 = vmatprep.subr.mxu0 0.0
        %6966 = vmatpush2.msra.mxu0 0.0
        %6967 = vmatprep.subr.mxu0 0.0
        %6968 = vmatpush2.msra.mxu0 0.0
        %6969 = vmatprep.subr.mxu0 0.0
        %6970 = vmatpush2.msra.mxu0 0.0
        %6971 = vmatprep.subr.mxu0 0.0
        %6972 = vmatpush2.msra.mxu0 0.0
        %6973 = vmatprep.mubr.f32.mxu0 0.0
        %6974 = vmatmul.mubr.f32.gmra.mxu0 %v6892
        %v6975 = vpop.f32.mrf.mxu0
        %v6976 = vadd.f32 0.0, %v6975
        %v6977 = vpop.f32.mrf.mxu0
        %6978 = vdwg.mxu0
        %v6979 = vadd.f32 %v6891, %v6976
        %v6980 = vld [vmem:[%s4047 + $0x2] sm:$0xf]
        %v6981 = vld [vmem:[%s4590] sm:$0xff]
        %v6982 = vld [vmem:[%s4590 + $0x8] sm:$0xff]
        %v6983 = vld [vmem:[%s4590 + $0x10] sm:$0xff]
        %v6984 = vld [vmem:[%s4590 + $0x18] sm:$0xff]
        %v6985 = vld [vmem:[%s4590 + $0x20] sm:$0xff]
        %v6986 = vld [vmem:[%s4590 + $0x28] sm:$0xff]
        %v6987 = vld [vmem:[%s4590 + $0x30] sm:$0xff]
        %v6988 = vld [vmem:[%s4590 + $0x38] sm:$0xff]
        %v6989 = vld [vmem:[%s4590 + $0x40] sm:$0xff]
        %v6990 = vld [vmem:[%s4590 + $0x48] sm:$0xff]
        %v6991 = vld [vmem:[%s4590 + $0x50] sm:$0xff]
        %v6992 = vld [vmem:[%s4590 + $0x58] sm:$0xff]
        %v6993 = vld [vmem:[%s4590 + $0x60] sm:$0xff]
        %v6994 = vld [vmem:[%s4590 + $0x68] sm:$0xff]
        %v6995 = vld [vmem:[%s4590 + $0x70] sm:$0xff]
        %v6996 = vld [vmem:[%s4590 + $0x78] sm:$0xff]
        %6997 = vmatprep.subr.mxu0 0.0
        %6998 = vmatpush1.msra.mxu0 %v6996
        %6999 = vmatprep.subr.mxu0 0.0
        %7000 = vmatpush1.msra.mxu0 %v6995
        %7001 = vmatprep.subr.mxu0 0.0
        %7002 = vmatpush1.msra.mxu0 %v6994
        %7003 = vmatprep.subr.mxu0 0.0
        %7004 = vmatpush1.msra.mxu0 %v6993
        %7005 = vmatprep.subr.mxu0 0.0
        %7006 = vmatpush1.msra.mxu0 %v6992
        %7007 = vmatprep.subr.mxu0 0.0
        %7008 = vmatpush1.msra.mxu0 %v6991
        %7009 = vmatprep.subr.mxu0 0.0
        %7010 = vmatpush1.msra.mxu0 %v6990
        %7011 = vmatprep.subr.mxu0 0.0
        %7012 = vmatpush1.msra.mxu0 %v6989
        %7013 = vmatprep.subr.mxu0 0.0
        %7014 = vmatpush1.msra.mxu0 %v6988
        %7015 = vmatprep.subr.mxu0 0.0
        %7016 = vmatpush1.msra.mxu0 %v6987
        %7017 = vmatprep.subr.mxu0 0.0
        %7018 = vmatpush1.msra.mxu0 %v6986
        %7019 = vmatprep.subr.mxu0 0.0
        %7020 = vmatpush1.msra.mxu0 %v6985
        %7021 = vmatprep.subr.mxu0 0.0
        %7022 = vmatpush1.msra.mxu0 %v6984
        %7023 = vmatprep.subr.mxu0 0.0
        %7024 = vmatpush1.msra.mxu0 %v6983
        %7025 = vmatprep.subr.mxu0 0.0
        %7026 = vmatpush1.msra.mxu0 %v6982
        %7027 = vmatprep.subr.mxu0 0.0
        %7028 = vmatpush1.msra.mxu0 %v6981
        %7029 = vmatprep.subr.mxu0 0.0
        %7030 = vmatpush2.msra.mxu0 0.0
        %7031 = vmatprep.subr.mxu0 0.0
        %7032 = vmatpush2.msra.mxu0 0.0
        %7033 = vmatprep.subr.mxu0 0.0
        %7034 = vmatpush2.msra.mxu0 0.0
        %7035 = vmatprep.subr.mxu0 0.0
        %7036 = vmatpush2.msra.mxu0 0.0
        %7037 = vmatprep.subr.mxu0 0.0
        %7038 = vmatpush2.msra.mxu0 0.0
        %7039 = vmatprep.subr.mxu0 0.0
        %7040 = vmatpush2.msra.mxu0 0.0
        %7041 = vmatprep.subr.mxu0 0.0
        %7042 = vmatpush2.msra.mxu0 0.0
        %7043 = vmatprep.subr.mxu0 0.0
        %7044 = vmatpush2.msra.mxu0 0.0
        %7045 = vmatprep.subr.mxu0 0.0
        %7046 = vmatpush2.msra.mxu0 0.0
        %7047 = vmatprep.subr.mxu0 0.0
        %7048 = vmatpush2.msra.mxu0 0.0
        %7049 = vmatprep.subr.mxu0 0.0
        %7050 = vmatpush2.msra.mxu0 0.0
        %7051 = vmatprep.subr.mxu0 0.0
        %7052 = vmatpush2.msra.mxu0 0.0
        %7053 = vmatprep.subr.mxu0 0.0
        %7054 = vmatpush2.msra.mxu0 0.0
        %7055 = vmatprep.subr.mxu0 0.0
        %7056 = vmatpush2.msra.mxu0 0.0
        %7057 = vmatprep.subr.mxu0 0.0
        %7058 = vmatpush2.msra.mxu0 0.0
        %7059 = vmatprep.subr.mxu0 0.0
        %7060 = vmatpush2.msra.mxu0 0.0
        %7061 = vmatprep.mubr.f32.mxu0 0.0
        %7062 = vmatmul.mubr.f32.gmra.mxu0 %v6980
        %v7063 = vpop.f32.mrf.mxu0
        %v7064 = vadd.f32 0.0, %v7063
        %v7065 = vpop.f32.mrf.mxu0
        %7066 = vdwg.mxu0
        %v7067 = vadd.f32 %v6979, %v7064
        %v7068 = vld [vmem:[%s4104] sm:$0xf]
        %v7069 = vld [vmem:[%s4679] sm:$0xff]
        %v7070 = vld [vmem:[%s4679 + $0x8] sm:$0xff]
        %v7071 = vld [vmem:[%s4679 + $0x10] sm:$0xff]
        %v7072 = vld [vmem:[%s4679 + $0x18] sm:$0xff]
        %v7073 = vld [vmem:[%s4679 + $0x20] sm:$0xff]
        %v7074 = vld [vmem:[%s4679 + $0x28] sm:$0xff]
        %v7075 = vld [vmem:[%s4679 + $0x30] sm:$0xff]
        %v7076 = vld [vmem:[%s4679 + $0x38] sm:$0xff]
        %v7077 = vld [vmem:[%s4679 + $0x40] sm:$0xff]
        %v7078 = vld [vmem:[%s4679 + $0x48] sm:$0xff]
        %v7079 = vld [vmem:[%s4679 + $0x50] sm:$0xff]
        %v7080 = vld [vmem:[%s4679 + $0x58] sm:$0xff]
        %v7081 = vld [vmem:[%s4679 + $0x60] sm:$0xff]
        %v7082 = vld [vmem:[%s4679 + $0x68] sm:$0xff]
        %v7083 = vld [vmem:[%s4679 + $0x70] sm:$0xff]
        %v7084 = vld [vmem:[%s4679 + $0x78] sm:$0xff]
        %7085 = vmatprep.subr.mxu0 0.0
        %7086 = vmatpush1.msra.mxu0 %v7084
        %7087 = vmatprep.subr.mxu0 0.0
        %7088 = vmatpush1.msra.mxu0 %v7083
        %7089 = vmatprep.subr.mxu0 0.0
        %7090 = vmatpush1.msra.mxu0 %v7082
        %7091 = vmatprep.subr.mxu0 0.0
        %7092 = vmatpush1.msra.mxu0 %v7081
        %7093 = vmatprep.subr.mxu0 0.0
        %7094 = vmatpush1.msra.mxu0 %v7080
        %7095 = vmatprep.subr.mxu0 0.0
        %7096 = vmatpush1.msra.mxu0 %v7079
        %7097 = vmatprep.subr.mxu0 0.0
        %7098 = vmatpush1.msra.mxu0 %v7078
        %7099 = vmatprep.subr.mxu0 0.0
        %7100 = vmatpush1.msra.mxu0 %v7077
        %7101 = vmatprep.subr.mxu0 0.0
        %7102 = vmatpush1.msra.mxu0 %v7076
        %7103 = vmatprep.subr.mxu0 0.0
        %7104 = vmatpush1.msra.mxu0 %v7075
        %7105 = vmatprep.subr.mxu0 0.0
        %7106 = vmatpush1.msra.mxu0 %v7074
        %7107 = vmatprep.subr.mxu0 0.0
        %7108 = vmatpush1.msra.mxu0 %v7073
        %7109 = vmatprep.subr.mxu0 0.0
        %7110 = vmatpush1.msra.mxu0 %v7072
        %7111 = vmatprep.subr.mxu0 0.0
        %7112 = vmatpush1.msra.mxu0 %v7071
        %7113 = vmatprep.subr.mxu0 0.0
        %7114 = vmatpush1.msra.mxu0 %v7070
        %7115 = vmatprep.subr.mxu0 0.0
        %7116 = vmatpush1.msra.mxu0 %v7069
        %7117 = vmatprep.subr.mxu0 0.0
        %7118 = vmatpush2.msra.mxu0 0.0
        %7119 = vmatprep.subr.mxu0 0.0
        %7120 = vmatpush2.msra.mxu0 0.0
        %7121 = vmatprep.subr.mxu0 0.0
        %7122 = vmatpush2.msra.mxu0 0.0
        %7123 = vmatprep.subr.mxu0 0.0
        %7124 = vmatpush2.msra.mxu0 0.0
        %7125 = vmatprep.subr.mxu0 0.0
        %7126 = vmatpush2.msra.mxu0 0.0
        %7127 = vmatprep.subr.mxu0 0.0
        %7128 = vmatpush2.msra.mxu0 0.0
        %7129 = vmatprep.subr.mxu0 0.0
        %7130 = vmatpush2.msra.mxu0 0.0
        %7131 = vmatprep.subr.mxu0 0.0
        %7132 = vmatpush2.msra.mxu0 0.0
        %7133 = vmatprep.subr.mxu0 0.0
        %7134 = vmatpush2.msra.mxu0 0.0
        %7135 = vmatprep.subr.mxu0 0.0
        %7136 = vmatpush2.msra.mxu0 0.0
        %7137 = vmatprep.subr.mxu0 0.0
        %7138 = vmatpush2.msra.mxu0 0.0
        %7139 = vmatprep.subr.mxu0 0.0
        %7140 = vmatpush2.msra.mxu0 0.0
        %7141 = vmatprep.subr.mxu0 0.0
        %7142 = vmatpush2.msra.mxu0 0.0
        %7143 = vmatprep.subr.mxu0 0.0
        %7144 = vmatpush2.msra.mxu0 0.0
        %7145 = vmatprep.subr.mxu0 0.0
        %7146 = vmatpush2.msra.mxu0 0.0
        %7147 = vmatprep.subr.mxu0 0.0
        %7148 = vmatpush2.msra.mxu0 0.0
        %7149 = vmatprep.mubr.f32.mxu0 0.0
        %7150 = vmatmul.mubr.f32.gmra.mxu0 %v7068
        %v7151 = vpop.f32.mrf.mxu0
        %v7152 = vadd.f32 0.0, %v7151
        %v7153 = vpop.f32.mrf.mxu0
        %7154 = vdwg.mxu0
        %v7155 = vadd.f32 %v7067, %v7152
        %v7156 = vld [vmem:[%s4104 + $0x1] sm:$0xf]
        %v7157 = vld [vmem:[%s4768] sm:$0xff]
        %v7158 = vld [vmem:[%s4768 + $0x8] sm:$0xff]
        %v7159 = vld [vmem:[%s4768 + $0x10] sm:$0xff]
        %v7160 = vld [vmem:[%s4768 + $0x18] sm:$0xff]
        %v7161 = vld [vmem:[%s4768 + $0x20] sm:$0xff]
        %v7162 = vld [vmem:[%s4768 + $0x28] sm:$0xff]
        %v7163 = vld [vmem:[%s4768 + $0x30] sm:$0xff]
        %v7164 = vld [vmem:[%s4768 + $0x38] sm:$0xff]
        %v7165 = vld [vmem:[%s4768 + $0x40] sm:$0xff]
        %v7166 = vld [vmem:[%s4768 + $0x48] sm:$0xff]
        %v7167 = vld [vmem:[%s4768 + $0x50] sm:$0xff]
        %v7168 = vld [vmem:[%s4768 + $0x58] sm:$0xff]
        %v7169 = vld [vmem:[%s4768 + $0x60] sm:$0xff]
        %v7170 = vld [vmem:[%s4768 + $0x68] sm:$0xff]
        %v7171 = vld [vmem:[%s4768 + $0x70] sm:$0xff]
        %v7172 = vld [vmem:[%s4768 + $0x78] sm:$0xff]
        %7173 = vmatprep.subr.mxu0 0.0
        %7174 = vmatpush1.msra.mxu0 %v7172
        %7175 = vmatprep.subr.mxu0 0.0
        %7176 = vmatpush1.msra.mxu0 %v7171
        %7177 = vmatprep.subr.mxu0 0.0
        %7178 = vmatpush1.msra.mxu0 %v7170
        %7179 = vmatprep.subr.mxu0 0.0
        %7180 = vmatpush1.msra.mxu0 %v7169
        %7181 = vmatprep.subr.mxu0 0.0
        %7182 = vmatpush1.msra.mxu0 %v7168
        %7183 = vmatprep.subr.mxu0 0.0
        %7184 = vmatpush1.msra.mxu0 %v7167
        %7185 = vmatprep.subr.mxu0 0.0
        %7186 = vmatpush1.msra.mxu0 %v7166
        %7187 = vmatprep.subr.mxu0 0.0
        %7188 = vmatpush1.msra.mxu0 %v7165
        %7189 = vmatprep.subr.mxu0 0.0
        %7190 = vmatpush1.msra.mxu0 %v7164
        %7191 = vmatprep.subr.mxu0 0.0
        %7192 = vmatpush1.msra.mxu0 %v7163
        %7193 = vmatprep.subr.mxu0 0.0
        %7194 = vmatpush1.msra.mxu0 %v7162
        %7195 = vmatprep.subr.mxu0 0.0
        %7196 = vmatpush1.msra.mxu0 %v7161
        %7197 = vmatprep.subr.mxu0 0.0
        %7198 = vmatpush1.msra.mxu0 %v7160
        %7199 = vmatprep.subr.mxu0 0.0
        %7200 = vmatpush1.msra.mxu0 %v7159
        %7201 = vmatprep.subr.mxu0 0.0
        %7202 = vmatpush1.msra.mxu0 %v7158
        %7203 = vmatprep.subr.mxu0 0.0
        %7204 = vmatpush1.msra.mxu0 %v7157
        %7205 = vmatprep.subr.mxu0 0.0
        %7206 = vmatpush2.msra.mxu0 0.0
        %7207 = vmatprep.subr.mxu0 0.0
        %7208 = vmatpush2.msra.mxu0 0.0
        %7209 = vmatprep.subr.mxu0 0.0
        %7210 = vmatpush2.msra.mxu0 0.0
        %7211 = vmatprep.subr.mxu0 0.0
        %7212 = vmatpush2.msra.mxu0 0.0
        %7213 = vmatprep.subr.mxu0 0.0
        %7214 = vmatpush2.msra.mxu0 0.0
        %7215 = vmatprep.subr.mxu0 0.0
        %7216 = vmatpush2.msra.mxu0 0.0
        %7217 = vmatprep.subr.mxu0 0.0
        %7218 = vmatpush2.msra.mxu0 0.0
        %7219 = vmatprep.subr.mxu0 0.0
        %7220 = vmatpush2.msra.mxu0 0.0
        %7221 = vmatprep.subr.mxu0 0.0
        %7222 = vmatpush2.msra.mxu0 0.0
        %7223 = vmatprep.subr.mxu0 0.0
        %7224 = vmatpush2.msra.mxu0 0.0
        %7225 = vmatprep.subr.mxu0 0.0
        %7226 = vmatpush2.msra.mxu0 0.0
        %7227 = vmatprep.subr.mxu0 0.0
        %7228 = vmatpush2.msra.mxu0 0.0
        %7229 = vmatprep.subr.mxu0 0.0
        %7230 = vmatpush2.msra.mxu0 0.0
        %7231 = vmatprep.subr.mxu0 0.0
        %7232 = vmatpush2.msra.mxu0 0.0
        %7233 = vmatprep.subr.mxu0 0.0
        %7234 = vmatpush2.msra.mxu0 0.0
        %7235 = vmatprep.subr.mxu0 0.0
        %7236 = vmatpush2.msra.mxu0 0.0
        %7237 = vmatprep.mubr.f32.mxu0 0.0
        %7238 = vmatmul.mubr.f32.gmra.mxu0 %v7156
        %v7239 = vpop.f32.mrf.mxu0
        %v7240 = vadd.f32 0.0, %v7239
        %v7241 = vpop.f32.mrf.mxu0
        %7242 = vdwg.mxu0
        %v7243 = vadd.f32 %v7155, %v7240
        %v7244 = vld [vmem:[%s4104 + $0x2] sm:$0xf]
        %v7245 = vld [vmem:[%s4857] sm:$0xff]
        %v7246 = vld [vmem:[%s4857 + $0x8] sm:$0xff]
        %v7247 = vld [vmem:[%s4857 + $0x10] sm:$0xff]
        %v7248 = vld [vmem:[%s4857 + $0x18] sm:$0xff]
        %v7249 = vld [vmem:[%s4857 + $0x20] sm:$0xff]
        %v7250 = vld [vmem:[%s4857 + $0x28] sm:$0xff]
        %v7251 = vld [vmem:[%s4857 + $0x30] sm:$0xff]
        %v7252 = vld [vmem:[%s4857 + $0x38] sm:$0xff]
        %v7253 = vld [vmem:[%s4857 + $0x40] sm:$0xff]
        %v7254 = vld [vmem:[%s4857 + $0x48] sm:$0xff]
        %v7255 = vld [vmem:[%s4857 + $0x50] sm:$0xff]
        %v7256 = vld [vmem:[%s4857 + $0x58] sm:$0xff]
        %v7257 = vld [vmem:[%s4857 + $0x60] sm:$0xff]
        %v7258 = vld [vmem:[%s4857 + $0x68] sm:$0xff]
        %v7259 = vld [vmem:[%s4857 + $0x70] sm:$0xff]
        %v7260 = vld [vmem:[%s4857 + $0x78] sm:$0xff]
        %7261 = vmatprep.subr.mxu0 0.0
        %7262 = vmatpush1.msra.mxu0 %v7260
        %7263 = vmatprep.subr.mxu0 0.0
        %7264 = vmatpush1.msra.mxu0 %v7259
        %7265 = vmatprep.subr.mxu0 0.0
        %7266 = vmatpush1.msra.mxu0 %v7258
        %7267 = vmatprep.subr.mxu0 0.0
        %7268 = vmatpush1.msra.mxu0 %v7257
        %7269 = vmatprep.subr.mxu0 0.0
        %7270 = vmatpush1.msra.mxu0 %v7256
        %7271 = vmatprep.subr.mxu0 0.0
        %7272 = vmatpush1.msra.mxu0 %v7255
        %7273 = vmatprep.subr.mxu0 0.0
        %7274 = vmatpush1.msra.mxu0 %v7254
        %7275 = vmatprep.subr.mxu0 0.0
        %7276 = vmatpush1.msra.mxu0 %v7253
        %7277 = vmatprep.subr.mxu0 0.0
        %7278 = vmatpush1.msra.mxu0 %v7252
        %7279 = vmatprep.subr.mxu0 0.0
        %7280 = vmatpush1.msra.mxu0 %v7251
        %7281 = vmatprep.subr.mxu0 0.0
        %7282 = vmatpush1.msra.mxu0 %v7250
        %7283 = vmatprep.subr.mxu0 0.0
        %7284 = vmatpush1.msra.mxu0 %v7249
        %7285 = vmatprep.subr.mxu0 0.0
        %7286 = vmatpush1.msra.mxu0 %v7248
        %7287 = vmatprep.subr.mxu0 0.0
        %7288 = vmatpush1.msra.mxu0 %v7247
        %7289 = vmatprep.subr.mxu0 0.0
        %7290 = vmatpush1.msra.mxu0 %v7246
        %7291 = vmatprep.subr.mxu0 0.0
        %7292 = vmatpush1.msra.mxu0 %v7245
        %7293 = vmatprep.subr.mxu0 0.0
        %7294 = vmatpush2.msra.mxu0 0.0
        %7295 = vmatprep.subr.mxu0 0.0
        %7296 = vmatpush2.msra.mxu0 0.0
        %7297 = vmatprep.subr.mxu0 0.0
        %7298 = vmatpush2.msra.mxu0 0.0
        %7299 = vmatprep.subr.mxu0 0.0
        %7300 = vmatpush2.msra.mxu0 0.0
        %7301 = vmatprep.subr.mxu0 0.0
        %7302 = vmatpush2.msra.mxu0 0.0
        %7303 = vmatprep.subr.mxu0 0.0
        %7304 = vmatpush2.msra.mxu0 0.0
        %7305 = vmatprep.subr.mxu0 0.0
        %7306 = vmatpush2.msra.mxu0 0.0
        %7307 = vmatprep.subr.mxu0 0.0
        %7308 = vmatpush2.msra.mxu0 0.0
        %7309 = vmatprep.subr.mxu0 0.0
        %7310 = vmatpush2.msra.mxu0 0.0
        %7311 = vmatprep.subr.mxu0 0.0
        %7312 = vmatpush2.msra.mxu0 0.0
        %7313 = vmatprep.subr.mxu0 0.0
        %7314 = vmatpush2.msra.mxu0 0.0
        %7315 = vmatprep.subr.mxu0 0.0
        %7316 = vmatpush2.msra.mxu0 0.0
        %7317 = vmatprep.subr.mxu0 0.0
        %7318 = vmatpush2.msra.mxu0 0.0
        %7319 = vmatprep.subr.mxu0 0.0
        %7320 = vmatpush2.msra.mxu0 0.0
        %7321 = vmatprep.subr.mxu0 0.0
        %7322 = vmatpush2.msra.mxu0 0.0
        %7323 = vmatprep.subr.mxu0 0.0
        %7324 = vmatpush2.msra.mxu0 0.0
        %7325 = vmatprep.mubr.f32.mxu0 0.0
        %7326 = vmatmul.mubr.f32.gmra.mxu0 %v7244
        %v7327 = vpop.f32.mrf.mxu0
        %v7328 = vadd.f32 0.0, %v7327
        %v7329 = vpop.f32.mrf.mxu0
        %7330 = vdwg.mxu0
        %v7331 = vadd.f32 %v7243, %v7328
        %v7332 = vadd.f32 %v7331, %v4949
        %v7333 = vmax.f32 %v7332, 0.0
        %s7334 = scalar_lea.vmem [#allocation4], 12
        %7335 = vst [vmem:[%s7334] sm:$0xf] %v7333
        %v7336 = vld [vmem:[%s6] sm:$0x1]
        %v7337 = vld [vmem:[#allocation4] sm:$0x1]
        %v7338 = vld [vmem:[#allocation9] sm:$0xff]
        %v7339 = vld [vmem:[#allocation9 + $0x8] sm:$0xff]
        %v7340 = vld [vmem:[#allocation9 + $0x10] sm:$0xff]
        %v7341 = vld [vmem:[#allocation9 + $0x18] sm:$0xff]
        %v7342 = vld [vmem:[#allocation9 + $0x20] sm:$0xff]
        %v7343 = vld [vmem:[#allocation9 + $0x28] sm:$0xff]
        %v7344 = vld [vmem:[#allocation9 + $0x30] sm:$0xff]
        %v7345 = vld [vmem:[#allocation9 + $0x38] sm:$0xff]
        %v7346 = vld [vmem:[#allocation9 + $0x40] sm:$0xff]
        %v7347 = vld [vmem:[#allocation9 + $0x48] sm:$0xff]
        %v7348 = vld [vmem:[#allocation9 + $0x50] sm:$0xff]
        %v7349 = vld [vmem:[#allocation9 + $0x58] sm:$0xff]
        %v7350 = vld [vmem:[#allocation9 + $0x60] sm:$0xff]
        %v7351 = vld [vmem:[#allocation9 + $0x68] sm:$0xff]
        %v7352 = vld [vmem:[#allocation9 + $0x70] sm:$0xff]
        %v7353 = vld [vmem:[#allocation9 + $0x78] sm:$0xff]
        %7354 = vmatprep.subr.mxu0 0.0
        %7355 = vmatpush1.msra.mxu0 %v7353
        %7356 = vmatprep.subr.mxu0 0.0
        %7357 = vmatpush1.msra.mxu0 %v7352
        %7358 = vmatprep.subr.mxu0 0.0
        %7359 = vmatpush1.msra.mxu0 %v7351
        %7360 = vmatprep.subr.mxu0 0.0
        %7361 = vmatpush1.msra.mxu0 %v7350
        %7362 = vmatprep.subr.mxu0 0.0
        %7363 = vmatpush1.msra.mxu0 %v7349
        %7364 = vmatprep.subr.mxu0 0.0
        %7365 = vmatpush1.msra.mxu0 %v7348
        %7366 = vmatprep.subr.mxu0 0.0
        %7367 = vmatpush1.msra.mxu0 %v7347
        %7368 = vmatprep.subr.mxu0 0.0
        %7369 = vmatpush1.msra.mxu0 %v7346
        %7370 = vmatprep.subr.mxu0 0.0
        %7371 = vmatpush1.msra.mxu0 %v7345
        %7372 = vmatprep.subr.mxu0 0.0
        %7373 = vmatpush1.msra.mxu0 %v7344
        %7374 = vmatprep.subr.mxu0 0.0
        %7375 = vmatpush1.msra.mxu0 %v7343
        %7376 = vmatprep.subr.mxu0 0.0
        %7377 = vmatpush1.msra.mxu0 %v7342
        %7378 = vmatprep.subr.mxu0 0.0
        %7379 = vmatpush1.msra.mxu0 %v7341
        %7380 = vmatprep.subr.mxu0 0.0
        %7381 = vmatpush1.msra.mxu0 %v7340
        %7382 = vmatprep.subr.mxu0 0.0
        %7383 = vmatpush1.msra.mxu0 %v7339
        %7384 = vmatprep.subr.mxu0 0.0
        %7385 = vmatpush1.msra.mxu0 %v7338
        %7386 = vmatprep.subr.mxu0 0.0
        %7387 = vmatpush2.msra.mxu0 0.0
        %7388 = vmatprep.subr.mxu0 0.0
        %7389 = vmatpush2.msra.mxu0 0.0
        %7390 = vmatprep.subr.mxu0 0.0
        %7391 = vmatpush2.msra.mxu0 0.0
        %7392 = vmatprep.subr.mxu0 0.0
        %7393 = vmatpush2.msra.mxu0 0.0
        %7394 = vmatprep.subr.mxu0 0.0
        %7395 = vmatpush2.msra.mxu0 0.0
        %7396 = vmatprep.subr.mxu0 0.0
        %7397 = vmatpush2.msra.mxu0 0.0
        %7398 = vmatprep.subr.mxu0 0.0
        %7399 = vmatpush2.msra.mxu0 0.0
        %7400 = vmatprep.subr.mxu0 0.0
        %7401 = vmatpush2.msra.mxu0 0.0
        %7402 = vmatprep.subr.mxu0 0.0
        %7403 = vmatpush2.msra.mxu0 0.0
        %7404 = vmatprep.subr.mxu0 0.0
        %7405 = vmatpush2.msra.mxu0 0.0
        %7406 = vmatprep.subr.mxu0 0.0
        %7407 = vmatpush2.msra.mxu0 0.0
        %7408 = vmatprep.subr.mxu0 0.0
        %7409 = vmatpush2.msra.mxu0 0.0
        %7410 = vmatprep.subr.mxu0 0.0
        %7411 = vmatpush2.msra.mxu0 0.0
        %7412 = vmatprep.subr.mxu0 0.0
        %7413 = vmatpush2.msra.mxu0 0.0
        %7414 = vmatprep.subr.mxu0 0.0
        %7415 = vmatpush2.msra.mxu0 0.0
        %7416 = vmatprep.subr.mxu0 0.0
        %7417 = vmatpush2.msra.mxu0 0.0
        %7418 = vmatprep.mubr.f32.mxu0 0.0
        %7419 = vmatmul.mubr.f32.gmra.mxu0 %v7337
        %v7420 = vpop.f32.mrf.mxu0
        %v7421 = vadd.f32 0.0, %v7420
        %v7422 = vpop.f32.mrf.mxu0
        %7423 = vdwg.mxu0
        %v7424 = vadd.f32 %v7336, %v7421
        %v7425 = vld [vmem:[#allocation4 + $0x1] sm:$0x1]
        %s7426 = scalar_lea.vmem [#allocation9], 128
        %v7427 = vld [vmem:[%s7426] sm:$0xff]
        %v7428 = vld [vmem:[%s7426 + $0x8] sm:$0xff]
        %v7429 = vld [vmem:[%s7426 + $0x10] sm:$0xff]
        %v7430 = vld [vmem:[%s7426 + $0x18] sm:$0xff]
        %v7431 = vld [vmem:[%s7426 + $0x20] sm:$0xff]
        %v7432 = vld [vmem:[%s7426 + $0x28] sm:$0xff]
        %v7433 = vld [vmem:[%s7426 + $0x30] sm:$0xff]
        %v7434 = vld [vmem:[%s7426 + $0x38] sm:$0xff]
        %v7435 = vld [vmem:[%s7426 + $0x40] sm:$0xff]
        %v7436 = vld [vmem:[%s7426 + $0x48] sm:$0xff]
        %v7437 = vld [vmem:[%s7426 + $0x50] sm:$0xff]
        %v7438 = vld [vmem:[%s7426 + $0x58] sm:$0xff]
        %v7439 = vld [vmem:[%s7426 + $0x60] sm:$0xff]
        %v7440 = vld [vmem:[%s7426 + $0x68] sm:$0xff]
        %v7441 = vld [vmem:[%s7426 + $0x70] sm:$0xff]
        %v7442 = vld [vmem:[%s7426 + $0x78] sm:$0xff]
        %7443 = vmatprep.subr.mxu0 0.0
        %7444 = vmatpush1.msra.mxu0 %v7442
        %7445 = vmatprep.subr.mxu0 0.0
        %7446 = vmatpush1.msra.mxu0 %v7441
        %7447 = vmatprep.subr.mxu0 0.0
        %7448 = vmatpush1.msra.mxu0 %v7440
        %7449 = vmatprep.subr.mxu0 0.0
        %7450 = vmatpush1.msra.mxu0 %v7439
        %7451 = vmatprep.subr.mxu0 0.0
        %7452 = vmatpush1.msra.mxu0 %v7438
        %7453 = vmatprep.subr.mxu0 0.0
        %7454 = vmatpush1.msra.mxu0 %v7437
        %7455 = vmatprep.subr.mxu0 0.0
        %7456 = vmatpush1.msra.mxu0 %v7436
        %7457 = vmatprep.subr.mxu0 0.0
        %7458 = vmatpush1.msra.mxu0 %v7435
        %7459 = vmatprep.subr.mxu0 0.0
        %7460 = vmatpush1.msra.mxu0 %v7434
        %7461 = vmatprep.subr.mxu0 0.0
        %7462 = vmatpush1.msra.mxu0 %v7433
        %7463 = vmatprep.subr.mxu0 0.0
        %7464 = vmatpush1.msra.mxu0 %v7432
        %7465 = vmatprep.subr.mxu0 0.0
        %7466 = vmatpush1.msra.mxu0 %v7431
        %7467 = vmatprep.subr.mxu0 0.0
        %7468 = vmatpush1.msra.mxu0 %v7430
        %7469 = vmatprep.subr.mxu0 0.0
        %7470 = vmatpush1.msra.mxu0 %v7429
        %7471 = vmatprep.subr.mxu0 0.0
        %7472 = vmatpush1.msra.mxu0 %v7428
        %7473 = vmatprep.subr.mxu0 0.0
        %7474 = vmatpush1.msra.mxu0 %v7427
        %7475 = vmatprep.subr.mxu0 0.0
        %7476 = vmatpush2.msra.mxu0 0.0
        %7477 = vmatprep.subr.mxu0 0.0
        %7478 = vmatpush2.msra.mxu0 0.0
        %7479 = vmatprep.subr.mxu0 0.0
        %7480 = vmatpush2.msra.mxu0 0.0
        %7481 = vmatprep.subr.mxu0 0.0
        %7482 = vmatpush2.msra.mxu0 0.0
        %7483 = vmatprep.subr.mxu0 0.0
        %7484 = vmatpush2.msra.mxu0 0.0
        %7485 = vmatprep.subr.mxu0 0.0
        %7486 = vmatpush2.msra.mxu0 0.0
        %7487 = vmatprep.subr.mxu0 0.0
        %7488 = vmatpush2.msra.mxu0 0.0
        %7489 = vmatprep.subr.mxu0 0.0
        %7490 = vmatpush2.msra.mxu0 0.0
        %7491 = vmatprep.subr.mxu0 0.0
        %7492 = vmatpush2.msra.mxu0 0.0
        %7493 = vmatprep.subr.mxu0 0.0
        %7494 = vmatpush2.msra.mxu0 0.0
        %7495 = vmatprep.subr.mxu0 0.0
        %7496 = vmatpush2.msra.mxu0 0.0
        %7497 = vmatprep.subr.mxu0 0.0
        %7498 = vmatpush2.msra.mxu0 0.0
        %7499 = vmatprep.subr.mxu0 0.0
        %7500 = vmatpush2.msra.mxu0 0.0
        %7501 = vmatprep.subr.mxu0 0.0
        %7502 = vmatpush2.msra.mxu0 0.0
        %7503 = vmatprep.subr.mxu0 0.0
        %7504 = vmatpush2.msra.mxu0 0.0
        %7505 = vmatprep.subr.mxu0 0.0
        %7506 = vmatpush2.msra.mxu0 0.0
        %7507 = vmatprep.mubr.f32.mxu0 0.0
        %7508 = vmatmul.mubr.f32.gmra.mxu0 %v7425
        %v7509 = vpop.f32.mrf.mxu0
        %v7510 = vadd.f32 0.0, %v7509
        %v7511 = vpop.f32.mrf.mxu0
        %7512 = vdwg.mxu0
        %v7513 = vadd.f32 %v7424, %v7510
        %v7514 = vld [vmem:[#allocation4 + $0x2] sm:$0x1]
        %s7515 = scalar_lea.vmem [#allocation9], 256
        %v7516 = vld [vmem:[%s7515] sm:$0xff]
        %v7517 = vld [vmem:[%s7515 + $0x8] sm:$0xff]
        %v7518 = vld [vmem:[%s7515 + $0x10] sm:$0xff]
        %v7519 = vld [vmem:[%s7515 + $0x18] sm:$0xff]
        %v7520 = vld [vmem:[%s7515 + $0x20] sm:$0xff]
        %v7521 = vld [vmem:[%s7515 + $0x28] sm:$0xff]
        %v7522 = vld [vmem:[%s7515 + $0x30] sm:$0xff]
        %v7523 = vld [vmem:[%s7515 + $0x38] sm:$0xff]
        %v7524 = vld [vmem:[%s7515 + $0x40] sm:$0xff]
        %v7525 = vld [vmem:[%s7515 + $0x48] sm:$0xff]
        %v7526 = vld [vmem:[%s7515 + $0x50] sm:$0xff]
        %v7527 = vld [vmem:[%s7515 + $0x58] sm:$0xff]
        %v7528 = vld [vmem:[%s7515 + $0x60] sm:$0xff]
        %v7529 = vld [vmem:[%s7515 + $0x68] sm:$0xff]
        %v7530 = vld [vmem:[%s7515 + $0x70] sm:$0xff]
        %v7531 = vld [vmem:[%s7515 + $0x78] sm:$0xff]
        %7532 = vmatprep.subr.mxu0 0.0
        %7533 = vmatpush1.msra.mxu0 %v7531
        %7534 = vmatprep.subr.mxu0 0.0
        %7535 = vmatpush1.msra.mxu0 %v7530
        %7536 = vmatprep.subr.mxu0 0.0
        %7537 = vmatpush1.msra.mxu0 %v7529
        %7538 = vmatprep.subr.mxu0 0.0
        %7539 = vmatpush1.msra.mxu0 %v7528
        %7540 = vmatprep.subr.mxu0 0.0
        %7541 = vmatpush1.msra.mxu0 %v7527
        %7542 = vmatprep.subr.mxu0 0.0
        %7543 = vmatpush1.msra.mxu0 %v7526
        %7544 = vmatprep.subr.mxu0 0.0
        %7545 = vmatpush1.msra.mxu0 %v7525
        %7546 = vmatprep.subr.mxu0 0.0
        %7547 = vmatpush1.msra.mxu0 %v7524
        %7548 = vmatprep.subr.mxu0 0.0
        %7549 = vmatpush1.msra.mxu0 %v7523
        %7550 = vmatprep.subr.mxu0 0.0
        %7551 = vmatpush1.msra.mxu0 %v7522
        %7552 = vmatprep.subr.mxu0 0.0
        %7553 = vmatpush1.msra.mxu0 %v7521
        %7554 = vmatprep.subr.mxu0 0.0
        %7555 = vmatpush1.msra.mxu0 %v7520
        %7556 = vmatprep.subr.mxu0 0.0
        %7557 = vmatpush1.msra.mxu0 %v7519
        %7558 = vmatprep.subr.mxu0 0.0
        %7559 = vmatpush1.msra.mxu0 %v7518
        %7560 = vmatprep.subr.mxu0 0.0
        %7561 = vmatpush1.msra.mxu0 %v7517
        %7562 = vmatprep.subr.mxu0 0.0
        %7563 = vmatpush1.msra.mxu0 %v7516
        %7564 = vmatprep.subr.mxu0 0.0
        %7565 = vmatpush2.msra.mxu0 0.0
        %7566 = vmatprep.subr.mxu0 0.0
        %7567 = vmatpush2.msra.mxu0 0.0
        %7568 = vmatprep.subr.mxu0 0.0
        %7569 = vmatpush2.msra.mxu0 0.0
        %7570 = vmatprep.subr.mxu0 0.0
        %7571 = vmatpush2.msra.mxu0 0.0
        %7572 = vmatprep.subr.mxu0 0.0
        %7573 = vmatpush2.msra.mxu0 0.0
        %7574 = vmatprep.subr.mxu0 0.0
        %7575 = vmatpush2.msra.mxu0 0.0
        %7576 = vmatprep.subr.mxu0 0.0
        %7577 = vmatpush2.msra.mxu0 0.0
        %7578 = vmatprep.subr.mxu0 0.0
        %7579 = vmatpush2.msra.mxu0 0.0
        %7580 = vmatprep.subr.mxu0 0.0
        %7581 = vmatpush2.msra.mxu0 0.0
        %7582 = vmatprep.subr.mxu0 0.0
        %7583 = vmatpush2.msra.mxu0 0.0
        %7584 = vmatprep.subr.mxu0 0.0
        %7585 = vmatpush2.msra.mxu0 0.0
        %7586 = vmatprep.subr.mxu0 0.0
        %7587 = vmatpush2.msra.mxu0 0.0
        %7588 = vmatprep.subr.mxu0 0.0
        %7589 = vmatpush2.msra.mxu0 0.0
        %7590 = vmatprep.subr.mxu0 0.0
        %7591 = vmatpush2.msra.mxu0 0.0
        %7592 = vmatprep.subr.mxu0 0.0
        %7593 = vmatpush2.msra.mxu0 0.0
        %7594 = vmatprep.subr.mxu0 0.0
        %7595 = vmatpush2.msra.mxu0 0.0
        %7596 = vmatprep.mubr.f32.mxu0 0.0
        %7597 = vmatmul.mubr.f32.gmra.mxu0 %v7514
        %v7598 = vpop.f32.mrf.mxu0
        %v7599 = vadd.f32 0.0, %v7598
        %v7600 = vpop.f32.mrf.mxu0
        %7601 = vdwg.mxu0
        %v7602 = vadd.f32 %v7513, %v7599
        %v7603 = vld [vmem:[#allocation4 + $0x3] sm:$0x1]
        %s7604 = scalar_lea.vmem [#allocation9], 384
        %v7605 = vld [vmem:[%s7604] sm:$0xff]
        %v7606 = vld [vmem:[%s7604 + $0x8] sm:$0xff]
        %v7607 = vld [vmem:[%s7604 + $0x10] sm:$0xff]
        %v7608 = vld [vmem:[%s7604 + $0x18] sm:$0xff]
        %v7609 = vld [vmem:[%s7604 + $0x20] sm:$0xff]
        %v7610 = vld [vmem:[%s7604 + $0x28] sm:$0xff]
        %v7611 = vld [vmem:[%s7604 + $0x30] sm:$0xff]
        %v7612 = vld [vmem:[%s7604 + $0x38] sm:$0xff]
        %v7613 = vld [vmem:[%s7604 + $0x40] sm:$0xff]
        %v7614 = vld [vmem:[%s7604 + $0x48] sm:$0xff]
        %v7615 = vld [vmem:[%s7604 + $0x50] sm:$0xff]
        %v7616 = vld [vmem:[%s7604 + $0x58] sm:$0xff]
        %v7617 = vld [vmem:[%s7604 + $0x60] sm:$0xff]
        %v7618 = vld [vmem:[%s7604 + $0x68] sm:$0xff]
        %v7619 = vld [vmem:[%s7604 + $0x70] sm:$0xff]
        %v7620 = vld [vmem:[%s7604 + $0x78] sm:$0xff]
        %7621 = vmatprep.subr.mxu0 0.0
        %7622 = vmatpush1.msra.mxu0 %v7620
        %7623 = vmatprep.subr.mxu0 0.0
        %7624 = vmatpush1.msra.mxu0 %v7619
        %7625 = vmatprep.subr.mxu0 0.0
        %7626 = vmatpush1.msra.mxu0 %v7618
        %7627 = vmatprep.subr.mxu0 0.0
        %7628 = vmatpush1.msra.mxu0 %v7617
        %7629 = vmatprep.subr.mxu0 0.0
        %7630 = vmatpush1.msra.mxu0 %v7616
        %7631 = vmatprep.subr.mxu0 0.0
        %7632 = vmatpush1.msra.mxu0 %v7615
        %7633 = vmatprep.subr.mxu0 0.0
        %7634 = vmatpush1.msra.mxu0 %v7614
        %7635 = vmatprep.subr.mxu0 0.0
        %7636 = vmatpush1.msra.mxu0 %v7613
        %7637 = vmatprep.subr.mxu0 0.0
        %7638 = vmatpush1.msra.mxu0 %v7612
        %7639 = vmatprep.subr.mxu0 0.0
        %7640 = vmatpush1.msra.mxu0 %v7611
        %7641 = vmatprep.subr.mxu0 0.0
        %7642 = vmatpush1.msra.mxu0 %v7610
        %7643 = vmatprep.subr.mxu0 0.0
        %7644 = vmatpush1.msra.mxu0 %v7609
        %7645 = vmatprep.subr.mxu0 0.0
        %7646 = vmatpush1.msra.mxu0 %v7608
        %7647 = vmatprep.subr.mxu0 0.0
        %7648 = vmatpush1.msra.mxu0 %v7607
        %7649 = vmatprep.subr.mxu0 0.0
        %7650 = vmatpush1.msra.mxu0 %v7606
        %7651 = vmatprep.subr.mxu0 0.0
        %7652 = vmatpush1.msra.mxu0 %v7605
        %7653 = vmatprep.subr.mxu0 0.0
        %7654 = vmatpush2.msra.mxu0 0.0
        %7655 = vmatprep.subr.mxu0 0.0
        %7656 = vmatpush2.msra.mxu0 0.0
        %7657 = vmatprep.subr.mxu0 0.0
        %7658 = vmatpush2.msra.mxu0 0.0
        %7659 = vmatprep.subr.mxu0 0.0
        %7660 = vmatpush2.msra.mxu0 0.0
        %7661 = vmatprep.subr.mxu0 0.0
        %7662 = vmatpush2.msra.mxu0 0.0
        %7663 = vmatprep.subr.mxu0 0.0
        %7664 = vmatpush2.msra.mxu0 0.0
        %7665 = vmatprep.subr.mxu0 0.0
        %7666 = vmatpush2.msra.mxu0 0.0
        %7667 = vmatprep.subr.mxu0 0.0
        %7668 = vmatpush2.msra.mxu0 0.0
        %7669 = vmatprep.subr.mxu0 0.0
        %7670 = vmatpush2.msra.mxu0 0.0
        %7671 = vmatprep.subr.mxu0 0.0
        %7672 = vmatpush2.msra.mxu0 0.0
        %7673 = vmatprep.subr.mxu0 0.0
        %7674 = vmatpush2.msra.mxu0 0.0
        %7675 = vmatprep.subr.mxu0 0.0
        %7676 = vmatpush2.msra.mxu0 0.0
        %7677 = vmatprep.subr.mxu0 0.0
        %7678 = vmatpush2.msra.mxu0 0.0
        %7679 = vmatprep.subr.mxu0 0.0
        %7680 = vmatpush2.msra.mxu0 0.0
        %7681 = vmatprep.subr.mxu0 0.0
        %7682 = vmatpush2.msra.mxu0 0.0
        %7683 = vmatprep.subr.mxu0 0.0
        %7684 = vmatpush2.msra.mxu0 0.0
        %7685 = vmatprep.mubr.f32.mxu0 0.0
        %7686 = vmatmul.mubr.f32.gmra.mxu0 %v7603
        %v7687 = vpop.f32.mrf.mxu0
        %v7688 = vadd.f32 0.0, %v7687
        %v7689 = vpop.f32.mrf.mxu0
        %7690 = vdwg.mxu0
        %v7691 = vadd.f32 %v7602, %v7688
        %v7692 = vld [vmem:[%s5746] sm:$0x1]
        %s7693 = scalar_lea.vmem [#allocation9], 512
        %v7694 = vld [vmem:[%s7693] sm:$0xff]
        %v7695 = vld [vmem:[%s7693 + $0x8] sm:$0xff]
        %v7696 = vld [vmem:[%s7693 + $0x10] sm:$0xff]
        %v7697 = vld [vmem:[%s7693 + $0x18] sm:$0xff]
        %v7698 = vld [vmem:[%s7693 + $0x20] sm:$0xff]
        %v7699 = vld [vmem:[%s7693 + $0x28] sm:$0xff]
        %v7700 = vld [vmem:[%s7693 + $0x30] sm:$0xff]
        %v7701 = vld [vmem:[%s7693 + $0x38] sm:$0xff]
        %v7702 = vld [vmem:[%s7693 + $0x40] sm:$0xff]
        %v7703 = vld [vmem:[%s7693 + $0x48] sm:$0xff]
        %v7704 = vld [vmem:[%s7693 + $0x50] sm:$0xff]
        %v7705 = vld [vmem:[%s7693 + $0x58] sm:$0xff]
        %v7706 = vld [vmem:[%s7693 + $0x60] sm:$0xff]
        %v7707 = vld [vmem:[%s7693 + $0x68] sm:$0xff]
        %v7708 = vld [vmem:[%s7693 + $0x70] sm:$0xff]
        %v7709 = vld [vmem:[%s7693 + $0x78] sm:$0xff]
        %7710 = vmatprep.subr.mxu0 0.0
        %7711 = vmatpush1.msra.mxu0 %v7709
        %7712 = vmatprep.subr.mxu0 0.0
        %7713 = vmatpush1.msra.mxu0 %v7708
        %7714 = vmatprep.subr.mxu0 0.0
        %7715 = vmatpush1.msra.mxu0 %v7707
        %7716 = vmatprep.subr.mxu0 0.0
        %7717 = vmatpush1.msra.mxu0 %v7706
        %7718 = vmatprep.subr.mxu0 0.0
        %7719 = vmatpush1.msra.mxu0 %v7705
        %7720 = vmatprep.subr.mxu0 0.0
        %7721 = vmatpush1.msra.mxu0 %v7704
        %7722 = vmatprep.subr.mxu0 0.0
        %7723 = vmatpush1.msra.mxu0 %v7703
        %7724 = vmatprep.subr.mxu0 0.0
        %7725 = vmatpush1.msra.mxu0 %v7702
        %7726 = vmatprep.subr.mxu0 0.0
        %7727 = vmatpush1.msra.mxu0 %v7701
        %7728 = vmatprep.subr.mxu0 0.0
        %7729 = vmatpush1.msra.mxu0 %v7700
        %7730 = vmatprep.subr.mxu0 0.0
        %7731 = vmatpush1.msra.mxu0 %v7699
        %7732 = vmatprep.subr.mxu0 0.0
        %7733 = vmatpush1.msra.mxu0 %v7698
        %7734 = vmatprep.subr.mxu0 0.0
        %7735 = vmatpush1.msra.mxu0 %v7697
        %7736 = vmatprep.subr.mxu0 0.0
        %7737 = vmatpush1.msra.mxu0 %v7696
        %7738 = vmatprep.subr.mxu0 0.0
        %7739 = vmatpush1.msra.mxu0 %v7695
        %7740 = vmatprep.subr.mxu0 0.0
        %7741 = vmatpush1.msra.mxu0 %v7694
        %7742 = vmatprep.subr.mxu0 0.0
        %7743 = vmatpush2.msra.mxu0 0.0
        %7744 = vmatprep.subr.mxu0 0.0
        %7745 = vmatpush2.msra.mxu0 0.0
        %7746 = vmatprep.subr.mxu0 0.0
        %7747 = vmatpush2.msra.mxu0 0.0
        %7748 = vmatprep.subr.mxu0 0.0
        %7749 = vmatpush2.msra.mxu0 0.0
        %7750 = vmatprep.subr.mxu0 0.0
        %7751 = vmatpush2.msra.mxu0 0.0
        %7752 = vmatprep.subr.mxu0 0.0
        %7753 = vmatpush2.msra.mxu0 0.0
        %7754 = vmatprep.subr.mxu0 0.0
        %7755 = vmatpush2.msra.mxu0 0.0
        %7756 = vmatprep.subr.mxu0 0.0
        %7757 = vmatpush2.msra.mxu0 0.0
        %7758 = vmatprep.subr.mxu0 0.0
        %7759 = vmatpush2.msra.mxu0 0.0
        %7760 = vmatprep.subr.mxu0 0.0
        %7761 = vmatpush2.msra.mxu0 0.0
        %7762 = vmatprep.subr.mxu0 0.0
        %7763 = vmatpush2.msra.mxu0 0.0
        %7764 = vmatprep.subr.mxu0 0.0
        %7765 = vmatpush2.msra.mxu0 0.0
        %7766 = vmatprep.subr.mxu0 0.0
        %7767 = vmatpush2.msra.mxu0 0.0
        %7768 = vmatprep.subr.mxu0 0.0
        %7769 = vmatpush2.msra.mxu0 0.0
        %7770 = vmatprep.subr.mxu0 0.0
        %7771 = vmatpush2.msra.mxu0 0.0
        %7772 = vmatprep.subr.mxu0 0.0
        %7773 = vmatpush2.msra.mxu0 0.0
        %7774 = vmatprep.mubr.f32.mxu0 0.0
        %7775 = vmatmul.mubr.f32.gmra.mxu0 %v7692
        %v7776 = vpop.f32.mrf.mxu0
        %v7777 = vadd.f32 0.0, %v7776
        %v7778 = vpop.f32.mrf.mxu0
        %7779 = vdwg.mxu0
        %v7780 = vadd.f32 %v7691, %v7777
        %v7781 = vld [vmem:[%s5746 + $0x1] sm:$0x1]
        %s7782 = scalar_lea.vmem [#allocation9], 640
        %v7783 = vld [vmem:[%s7782] sm:$0xff]
        %v7784 = vld [vmem:[%s7782 + $0x8] sm:$0xff]
        %v7785 = vld [vmem:[%s7782 + $0x10] sm:$0xff]
        %v7786 = vld [vmem:[%s7782 + $0x18] sm:$0xff]
        %v7787 = vld [vmem:[%s7782 + $0x20] sm:$0xff]
        %v7788 = vld [vmem:[%s7782 + $0x28] sm:$0xff]
        %v7789 = vld [vmem:[%s7782 + $0x30] sm:$0xff]
        %v7790 = vld [vmem:[%s7782 + $0x38] sm:$0xff]
        %v7791 = vld [vmem:[%s7782 + $0x40] sm:$0xff]
        %v7792 = vld [vmem:[%s7782 + $0x48] sm:$0xff]
        %v7793 = vld [vmem:[%s7782 + $0x50] sm:$0xff]
        %v7794 = vld [vmem:[%s7782 + $0x58] sm:$0xff]
        %v7795 = vld [vmem:[%s7782 + $0x60] sm:$0xff]
        %v7796 = vld [vmem:[%s7782 + $0x68] sm:$0xff]
        %v7797 = vld [vmem:[%s7782 + $0x70] sm:$0xff]
        %v7798 = vld [vmem:[%s7782 + $0x78] sm:$0xff]
        %7799 = vmatprep.subr.mxu0 0.0
        %7800 = vmatpush1.msra.mxu0 %v7798
        %7801 = vmatprep.subr.mxu0 0.0
        %7802 = vmatpush1.msra.mxu0 %v7797
        %7803 = vmatprep.subr.mxu0 0.0
        %7804 = vmatpush1.msra.mxu0 %v7796
        %7805 = vmatprep.subr.mxu0 0.0
        %7806 = vmatpush1.msra.mxu0 %v7795
        %7807 = vmatprep.subr.mxu0 0.0
        %7808 = vmatpush1.msra.mxu0 %v7794
        %7809 = vmatprep.subr.mxu0 0.0
        %7810 = vmatpush1.msra.mxu0 %v7793
        %7811 = vmatprep.subr.mxu0 0.0
        %7812 = vmatpush1.msra.mxu0 %v7792
        %7813 = vmatprep.subr.mxu0 0.0
        %7814 = vmatpush1.msra.mxu0 %v7791
        %7815 = vmatprep.subr.mxu0 0.0
        %7816 = vmatpush1.msra.mxu0 %v7790
        %7817 = vmatprep.subr.mxu0 0.0
        %7818 = vmatpush1.msra.mxu0 %v7789
        %7819 = vmatprep.subr.mxu0 0.0
        %7820 = vmatpush1.msra.mxu0 %v7788
        %7821 = vmatprep.subr.mxu0 0.0
        %7822 = vmatpush1.msra.mxu0 %v7787
        %7823 = vmatprep.subr.mxu0 0.0
        %7824 = vmatpush1.msra.mxu0 %v7786
        %7825 = vmatprep.subr.mxu0 0.0
        %7826 = vmatpush1.msra.mxu0 %v7785
        %7827 = vmatprep.subr.mxu0 0.0
        %7828 = vmatpush1.msra.mxu0 %v7784
        %7829 = vmatprep.subr.mxu0 0.0
        %7830 = vmatpush1.msra.mxu0 %v7783
        %7831 = vmatprep.subr.mxu0 0.0
        %7832 = vmatpush2.msra.mxu0 0.0
        %7833 = vmatprep.subr.mxu0 0.0
        %7834 = vmatpush2.msra.mxu0 0.0
        %7835 = vmatprep.subr.mxu0 0.0
        %7836 = vmatpush2.msra.mxu0 0.0
        %7837 = vmatprep.subr.mxu0 0.0
        %7838 = vmatpush2.msra.mxu0 0.0
        %7839 = vmatprep.subr.mxu0 0.0
        %7840 = vmatpush2.msra.mxu0 0.0
        %7841 = vmatprep.subr.mxu0 0.0
        %7842 = vmatpush2.msra.mxu0 0.0
        %7843 = vmatprep.subr.mxu0 0.0
        %7844 = vmatpush2.msra.mxu0 0.0
        %7845 = vmatprep.subr.mxu0 0.0
        %7846 = vmatpush2.msra.mxu0 0.0
        %7847 = vmatprep.subr.mxu0 0.0
        %7848 = vmatpush2.msra.mxu0 0.0
        %7849 = vmatprep.subr.mxu0 0.0
        %7850 = vmatpush2.msra.mxu0 0.0
        %7851 = vmatprep.subr.mxu0 0.0
        %7852 = vmatpush2.msra.mxu0 0.0
        %7853 = vmatprep.subr.mxu0 0.0
        %7854 = vmatpush2.msra.mxu0 0.0
        %7855 = vmatprep.subr.mxu0 0.0
        %7856 = vmatpush2.msra.mxu0 0.0
        %7857 = vmatprep.subr.mxu0 0.0
        %7858 = vmatpush2.msra.mxu0 0.0
        %7859 = vmatprep.subr.mxu0 0.0
        %7860 = vmatpush2.msra.mxu0 0.0
        %7861 = vmatprep.subr.mxu0 0.0
        %7862 = vmatpush2.msra.mxu0 0.0
        %7863 = vmatprep.mubr.f32.mxu0 0.0
        %7864 = vmatmul.mubr.f32.gmra.mxu0 %v7781
        %v7865 = vpop.f32.mrf.mxu0
        %v7866 = vadd.f32 0.0, %v7865
        %v7867 = vpop.f32.mrf.mxu0
        %7868 = vdwg.mxu0
        %v7869 = vadd.f32 %v7780, %v7866
        %v7870 = vld [vmem:[%s5746 + $0x2] sm:$0x1]
        %s7871 = scalar_lea.vmem [#allocation9], 768
        %v7872 = vld [vmem:[%s7871] sm:$0xff]
        %v7873 = vld [vmem:[%s7871 + $0x8] sm:$0xff]
        %v7874 = vld [vmem:[%s7871 + $0x10] sm:$0xff]
        %v7875 = vld [vmem:[%s7871 + $0x18] sm:$0xff]
        %v7876 = vld [vmem:[%s7871 + $0x20] sm:$0xff]
        %v7877 = vld [vmem:[%s7871 + $0x28] sm:$0xff]
        %v7878 = vld [vmem:[%s7871 + $0x30] sm:$0xff]
        %v7879 = vld [vmem:[%s7871 + $0x38] sm:$0xff]
        %v7880 = vld [vmem:[%s7871 + $0x40] sm:$0xff]
        %v7881 = vld [vmem:[%s7871 + $0x48] sm:$0xff]
        %v7882 = vld [vmem:[%s7871 + $0x50] sm:$0xff]
        %v7883 = vld [vmem:[%s7871 + $0x58] sm:$0xff]
        %v7884 = vld [vmem:[%s7871 + $0x60] sm:$0xff]
        %v7885 = vld [vmem:[%s7871 + $0x68] sm:$0xff]
        %v7886 = vld [vmem:[%s7871 + $0x70] sm:$0xff]
        %v7887 = vld [vmem:[%s7871 + $0x78] sm:$0xff]
        %7888 = vmatprep.subr.mxu0 0.0
        %7889 = vmatpush1.msra.mxu0 %v7887
        %7890 = vmatprep.subr.mxu0 0.0
        %7891 = vmatpush1.msra.mxu0 %v7886
        %7892 = vmatprep.subr.mxu0 0.0
        %7893 = vmatpush1.msra.mxu0 %v7885
        %7894 = vmatprep.subr.mxu0 0.0
        %7895 = vmatpush1.msra.mxu0 %v7884
        %7896 = vmatprep.subr.mxu0 0.0
        %7897 = vmatpush1.msra.mxu0 %v7883
        %7898 = vmatprep.subr.mxu0 0.0
        %7899 = vmatpush1.msra.mxu0 %v7882
        %7900 = vmatprep.subr.mxu0 0.0
        %7901 = vmatpush1.msra.mxu0 %v7881
        %7902 = vmatprep.subr.mxu0 0.0
        %7903 = vmatpush1.msra.mxu0 %v7880
        %7904 = vmatprep.subr.mxu0 0.0
        %7905 = vmatpush1.msra.mxu0 %v7879
        %7906 = vmatprep.subr.mxu0 0.0
        %7907 = vmatpush1.msra.mxu0 %v7878
        %7908 = vmatprep.subr.mxu0 0.0
        %7909 = vmatpush1.msra.mxu0 %v7877
        %7910 = vmatprep.subr.mxu0 0.0
        %7911 = vmatpush1.msra.mxu0 %v7876
        %7912 = vmatprep.subr.mxu0 0.0
        %7913 = vmatpush1.msra.mxu0 %v7875
        %7914 = vmatprep.subr.mxu0 0.0
        %7915 = vmatpush1.msra.mxu0 %v7874
        %7916 = vmatprep.subr.mxu0 0.0
        %7917 = vmatpush1.msra.mxu0 %v7873
        %7918 = vmatprep.subr.mxu0 0.0
        %7919 = vmatpush1.msra.mxu0 %v7872
        %7920 = vmatprep.subr.mxu0 0.0
        %7921 = vmatpush2.msra.mxu0 0.0
        %7922 = vmatprep.subr.mxu0 0.0
        %7923 = vmatpush2.msra.mxu0 0.0
        %7924 = vmatprep.subr.mxu0 0.0
        %7925 = vmatpush2.msra.mxu0 0.0
        %7926 = vmatprep.subr.mxu0 0.0
        %7927 = vmatpush2.msra.mxu0 0.0
        %7928 = vmatprep.subr.mxu0 0.0
        %7929 = vmatpush2.msra.mxu0 0.0
        %7930 = vmatprep.subr.mxu0 0.0
        %7931 = vmatpush2.msra.mxu0 0.0
        %7932 = vmatprep.subr.mxu0 0.0
        %7933 = vmatpush2.msra.mxu0 0.0
        %7934 = vmatprep.subr.mxu0 0.0
        %7935 = vmatpush2.msra.mxu0 0.0
        %7936 = vmatprep.subr.mxu0 0.0
        %7937 = vmatpush2.msra.mxu0 0.0
        %7938 = vmatprep.subr.mxu0 0.0
        %7939 = vmatpush2.msra.mxu0 0.0
        %7940 = vmatprep.subr.mxu0 0.0
        %7941 = vmatpush2.msra.mxu0 0.0
        %7942 = vmatprep.subr.mxu0 0.0
        %7943 = vmatpush2.msra.mxu0 0.0
        %7944 = vmatprep.subr.mxu0 0.0
        %7945 = vmatpush2.msra.mxu0 0.0
        %7946 = vmatprep.subr.mxu0 0.0
        %7947 = vmatpush2.msra.mxu0 0.0
        %7948 = vmatprep.subr.mxu0 0.0
        %7949 = vmatpush2.msra.mxu0 0.0
        %7950 = vmatprep.subr.mxu0 0.0
        %7951 = vmatpush2.msra.mxu0 0.0
        %7952 = vmatprep.mubr.f32.mxu0 0.0
        %7953 = vmatmul.mubr.f32.gmra.mxu0 %v7870
        %v7954 = vpop.f32.mrf.mxu0
        %v7955 = vadd.f32 0.0, %v7954
        %v7956 = vpop.f32.mrf.mxu0
        %7957 = vdwg.mxu0
        %v7958 = vadd.f32 %v7869, %v7955
        %v7959 = vld [vmem:[%s5746 + $0x3] sm:$0x1]
        %s7960 = scalar_lea.vmem [#allocation9], 896
        %v7961 = vld [vmem:[%s7960] sm:$0xff]
        %v7962 = vld [vmem:[%s7960 + $0x8] sm:$0xff]
        %v7963 = vld [vmem:[%s7960 + $0x10] sm:$0xff]
        %v7964 = vld [vmem:[%s7960 + $0x18] sm:$0xff]
        %v7965 = vld [vmem:[%s7960 + $0x20] sm:$0xff]
        %v7966 = vld [vmem:[%s7960 + $0x28] sm:$0xff]
        %v7967 = vld [vmem:[%s7960 + $0x30] sm:$0xff]
        %v7968 = vld [vmem:[%s7960 + $0x38] sm:$0xff]
        %v7969 = vld [vmem:[%s7960 + $0x40] sm:$0xff]
        %v7970 = vld [vmem:[%s7960 + $0x48] sm:$0xff]
        %v7971 = vld [vmem:[%s7960 + $0x50] sm:$0xff]
        %v7972 = vld [vmem:[%s7960 + $0x58] sm:$0xff]
        %v7973 = vld [vmem:[%s7960 + $0x60] sm:$0xff]
        %v7974 = vld [vmem:[%s7960 + $0x68] sm:$0xff]
        %v7975 = vld [vmem:[%s7960 + $0x70] sm:$0xff]
        %v7976 = vld [vmem:[%s7960 + $0x78] sm:$0xff]
        %7977 = vmatprep.subr.mxu0 0.0
        %7978 = vmatpush1.msra.mxu0 %v7976
        %7979 = vmatprep.subr.mxu0 0.0
        %7980 = vmatpush1.msra.mxu0 %v7975
        %7981 = vmatprep.subr.mxu0 0.0
        %7982 = vmatpush1.msra.mxu0 %v7974
        %7983 = vmatprep.subr.mxu0 0.0
        %7984 = vmatpush1.msra.mxu0 %v7973
        %7985 = vmatprep.subr.mxu0 0.0
        %7986 = vmatpush1.msra.mxu0 %v7972
        %7987 = vmatprep.subr.mxu0 0.0
        %7988 = vmatpush1.msra.mxu0 %v7971
        %7989 = vmatprep.subr.mxu0 0.0
        %7990 = vmatpush1.msra.mxu0 %v7970
        %7991 = vmatprep.subr.mxu0 0.0
        %7992 = vmatpush1.msra.mxu0 %v7969
        %7993 = vmatprep.subr.mxu0 0.0
        %7994 = vmatpush1.msra.mxu0 %v7968
        %7995 = vmatprep.subr.mxu0 0.0
        %7996 = vmatpush1.msra.mxu0 %v7967
        %7997 = vmatprep.subr.mxu0 0.0
        %7998 = vmatpush1.msra.mxu0 %v7966
        %7999 = vmatprep.subr.mxu0 0.0
        %8000 = vmatpush1.msra.mxu0 %v7965
        %8001 = vmatprep.subr.mxu0 0.0
        %8002 = vmatpush1.msra.mxu0 %v7964
        %8003 = vmatprep.subr.mxu0 0.0
        %8004 = vmatpush1.msra.mxu0 %v7963
        %8005 = vmatprep.subr.mxu0 0.0
        %8006 = vmatpush1.msra.mxu0 %v7962
        %8007 = vmatprep.subr.mxu0 0.0
        %8008 = vmatpush1.msra.mxu0 %v7961
        %8009 = vmatprep.subr.mxu0 0.0
        %8010 = vmatpush2.msra.mxu0 0.0
        %8011 = vmatprep.subr.mxu0 0.0
        %8012 = vmatpush2.msra.mxu0 0.0
        %8013 = vmatprep.subr.mxu0 0.0
        %8014 = vmatpush2.msra.mxu0 0.0
        %8015 = vmatprep.subr.mxu0 0.0
        %8016 = vmatpush2.msra.mxu0 0.0
        %8017 = vmatprep.subr.mxu0 0.0
        %8018 = vmatpush2.msra.mxu0 0.0
        %8019 = vmatprep.subr.mxu0 0.0
        %8020 = vmatpush2.msra.mxu0 0.0
        %8021 = vmatprep.subr.mxu0 0.0
        %8022 = vmatpush2.msra.mxu0 0.0
        %8023 = vmatprep.subr.mxu0 0.0
        %8024 = vmatpush2.msra.mxu0 0.0
        %8025 = vmatprep.subr.mxu0 0.0
        %8026 = vmatpush2.msra.mxu0 0.0
        %8027 = vmatprep.subr.mxu0 0.0
        %8028 = vmatpush2.msra.mxu0 0.0
        %8029 = vmatprep.subr.mxu0 0.0
        %8030 = vmatpush2.msra.mxu0 0.0
        %8031 = vmatprep.subr.mxu0 0.0
        %8032 = vmatpush2.msra.mxu0 0.0
        %8033 = vmatprep.subr.mxu0 0.0
        %8034 = vmatpush2.msra.mxu0 0.0
        %8035 = vmatprep.subr.mxu0 0.0
        %8036 = vmatpush2.msra.mxu0 0.0
        %8037 = vmatprep.subr.mxu0 0.0
        %8038 = vmatpush2.msra.mxu0 0.0
        %8039 = vmatprep.subr.mxu0 0.0
        %8040 = vmatpush2.msra.mxu0 0.0
        %8041 = vmatprep.mubr.f32.mxu0 0.0
        %8042 = vmatmul.mubr.f32.gmra.mxu0 %v7959
        %v8043 = vpop.f32.mrf.mxu0
        %v8044 = vadd.f32 0.0, %v8043
        %v8045 = vpop.f32.mrf.mxu0
        %8046 = vdwg.mxu0
        %v8047 = vadd.f32 %v7958, %v8044
        %v8048 = vld [vmem:[%s6540] sm:$0x1]
        %s8049 = scalar_lea.vmem [#allocation9], 1024
        %v8050 = vld [vmem:[%s8049] sm:$0xff]
        %v8051 = vld [vmem:[%s8049 + $0x8] sm:$0xff]
        %v8052 = vld [vmem:[%s8049 + $0x10] sm:$0xff]
        %v8053 = vld [vmem:[%s8049 + $0x18] sm:$0xff]
        %v8054 = vld [vmem:[%s8049 + $0x20] sm:$0xff]
        %v8055 = vld [vmem:[%s8049 + $0x28] sm:$0xff]
        %v8056 = vld [vmem:[%s8049 + $0x30] sm:$0xff]
        %v8057 = vld [vmem:[%s8049 + $0x38] sm:$0xff]
        %v8058 = vld [vmem:[%s8049 + $0x40] sm:$0xff]
        %v8059 = vld [vmem:[%s8049 + $0x48] sm:$0xff]
        %v8060 = vld [vmem:[%s8049 + $0x50] sm:$0xff]
        %v8061 = vld [vmem:[%s8049 + $0x58] sm:$0xff]
        %v8062 = vld [vmem:[%s8049 + $0x60] sm:$0xff]
        %v8063 = vld [vmem:[%s8049 + $0x68] sm:$0xff]
        %v8064 = vld [vmem:[%s8049 + $0x70] sm:$0xff]
        %v8065 = vld [vmem:[%s8049 + $0x78] sm:$0xff]
        %8066 = vmatprep.subr.mxu0 0.0
        %8067 = vmatpush1.msra.mxu0 %v8065
        %8068 = vmatprep.subr.mxu0 0.0
        %8069 = vmatpush1.msra.mxu0 %v8064
        %8070 = vmatprep.subr.mxu0 0.0
        %8071 = vmatpush1.msra.mxu0 %v8063
        %8072 = vmatprep.subr.mxu0 0.0
        %8073 = vmatpush1.msra.mxu0 %v8062
        %8074 = vmatprep.subr.mxu0 0.0
        %8075 = vmatpush1.msra.mxu0 %v8061
        %8076 = vmatprep.subr.mxu0 0.0
        %8077 = vmatpush1.msra.mxu0 %v8060
        %8078 = vmatprep.subr.mxu0 0.0
        %8079 = vmatpush1.msra.mxu0 %v8059
        %8080 = vmatprep.subr.mxu0 0.0
        %8081 = vmatpush1.msra.mxu0 %v8058
        %8082 = vmatprep.subr.mxu0 0.0
        %8083 = vmatpush1.msra.mxu0 %v8057
        %8084 = vmatprep.subr.mxu0 0.0
        %8085 = vmatpush1.msra.mxu0 %v8056
        %8086 = vmatprep.subr.mxu0 0.0
        %8087 = vmatpush1.msra.mxu0 %v8055
        %8088 = vmatprep.subr.mxu0 0.0
        %8089 = vmatpush1.msra.mxu0 %v8054
        %8090 = vmatprep.subr.mxu0 0.0
        %8091 = vmatpush1.msra.mxu0 %v8053
        %8092 = vmatprep.subr.mxu0 0.0
        %8093 = vmatpush1.msra.mxu0 %v8052
        %8094 = vmatprep.subr.mxu0 0.0
        %8095 = vmatpush1.msra.mxu0 %v8051
        %8096 = vmatprep.subr.mxu0 0.0
        %8097 = vmatpush1.msra.mxu0 %v8050
        %8098 = vmatprep.subr.mxu0 0.0
        %8099 = vmatpush2.msra.mxu0 0.0
        %8100 = vmatprep.subr.mxu0 0.0
        %8101 = vmatpush2.msra.mxu0 0.0
        %8102 = vmatprep.subr.mxu0 0.0
        %8103 = vmatpush2.msra.mxu0 0.0
        %8104 = vmatprep.subr.mxu0 0.0
        %8105 = vmatpush2.msra.mxu0 0.0
        %8106 = vmatprep.subr.mxu0 0.0
        %8107 = vmatpush2.msra.mxu0 0.0
        %8108 = vmatprep.subr.mxu0 0.0
        %8109 = vmatpush2.msra.mxu0 0.0
        %8110 = vmatprep.subr.mxu0 0.0
        %8111 = vmatpush2.msra.mxu0 0.0
        %8112 = vmatprep.subr.mxu0 0.0
        %8113 = vmatpush2.msra.mxu0 0.0
        %8114 = vmatprep.subr.mxu0 0.0
        %8115 = vmatpush2.msra.mxu0 0.0
        %8116 = vmatprep.subr.mxu0 0.0
        %8117 = vmatpush2.msra.mxu0 0.0
        %8118 = vmatprep.subr.mxu0 0.0
        %8119 = vmatpush2.msra.mxu0 0.0
        %8120 = vmatprep.subr.mxu0 0.0
        %8121 = vmatpush2.msra.mxu0 0.0
        %8122 = vmatprep.subr.mxu0 0.0
        %8123 = vmatpush2.msra.mxu0 0.0
        %8124 = vmatprep.subr.mxu0 0.0
        %8125 = vmatpush2.msra.mxu0 0.0
        %8126 = vmatprep.subr.mxu0 0.0
        %8127 = vmatpush2.msra.mxu0 0.0
        %8128 = vmatprep.subr.mxu0 0.0
        %8129 = vmatpush2.msra.mxu0 0.0
        %8130 = vmatprep.mubr.f32.mxu0 0.0
        %8131 = vmatmul.mubr.f32.gmra.mxu0 %v8048
        %v8132 = vpop.f32.mrf.mxu0
        %v8133 = vadd.f32 0.0, %v8132
        %v8134 = vpop.f32.mrf.mxu0
        %8135 = vdwg.mxu0
        %v8136 = vadd.f32 %v8047, %v8133
        %v8137 = vld [vmem:[%s6540 + $0x1] sm:$0x1]
        %s8138 = scalar_lea.vmem [#allocation9], 1152
        %v8139 = vld [vmem:[%s8138] sm:$0xff]
        %v8140 = vld [vmem:[%s8138 + $0x8] sm:$0xff]
        %v8141 = vld [vmem:[%s8138 + $0x10] sm:$0xff]
        %v8142 = vld [vmem:[%s8138 + $0x18] sm:$0xff]
        %v8143 = vld [vmem:[%s8138 + $0x20] sm:$0xff]
        %v8144 = vld [vmem:[%s8138 + $0x28] sm:$0xff]
        %v8145 = vld [vmem:[%s8138 + $0x30] sm:$0xff]
        %v8146 = vld [vmem:[%s8138 + $0x38] sm:$0xff]
        %v8147 = vld [vmem:[%s8138 + $0x40] sm:$0xff]
        %v8148 = vld [vmem:[%s8138 + $0x48] sm:$0xff]
        %v8149 = vld [vmem:[%s8138 + $0x50] sm:$0xff]
        %v8150 = vld [vmem:[%s8138 + $0x58] sm:$0xff]
        %v8151 = vld [vmem:[%s8138 + $0x60] sm:$0xff]
        %v8152 = vld [vmem:[%s8138 + $0x68] sm:$0xff]
        %v8153 = vld [vmem:[%s8138 + $0x70] sm:$0xff]
        %v8154 = vld [vmem:[%s8138 + $0x78] sm:$0xff]
        %8155 = vmatprep.subr.mxu0 0.0
        %8156 = vmatpush1.msra.mxu0 %v8154
        %8157 = vmatprep.subr.mxu0 0.0
        %8158 = vmatpush1.msra.mxu0 %v8153
        %8159 = vmatprep.subr.mxu0 0.0
        %8160 = vmatpush1.msra.mxu0 %v8152
        %8161 = vmatprep.subr.mxu0 0.0
        %8162 = vmatpush1.msra.mxu0 %v8151
        %8163 = vmatprep.subr.mxu0 0.0
        %8164 = vmatpush1.msra.mxu0 %v8150
        %8165 = vmatprep.subr.mxu0 0.0
        %8166 = vmatpush1.msra.mxu0 %v8149
        %8167 = vmatprep.subr.mxu0 0.0
        %8168 = vmatpush1.msra.mxu0 %v8148
        %8169 = vmatprep.subr.mxu0 0.0
        %8170 = vmatpush1.msra.mxu0 %v8147
        %8171 = vmatprep.subr.mxu0 0.0
        %8172 = vmatpush1.msra.mxu0 %v8146
        %8173 = vmatprep.subr.mxu0 0.0
        %8174 = vmatpush1.msra.mxu0 %v8145
        %8175 = vmatprep.subr.mxu0 0.0
        %8176 = vmatpush1.msra.mxu0 %v8144
        %8177 = vmatprep.subr.mxu0 0.0
        %8178 = vmatpush1.msra.mxu0 %v8143
        %8179 = vmatprep.subr.mxu0 0.0
        %8180 = vmatpush1.msra.mxu0 %v8142
        %8181 = vmatprep.subr.mxu0 0.0
        %8182 = vmatpush1.msra.mxu0 %v8141
        %8183 = vmatprep.subr.mxu0 0.0
        %8184 = vmatpush1.msra.mxu0 %v8140
        %8185 = vmatprep.subr.mxu0 0.0
        %8186 = vmatpush1.msra.mxu0 %v8139
        %8187 = vmatprep.subr.mxu0 0.0
        %8188 = vmatpush2.msra.mxu0 0.0
        %8189 = vmatprep.subr.mxu0 0.0
        %8190 = vmatpush2.msra.mxu0 0.0
        %8191 = vmatprep.subr.mxu0 0.0
        %8192 = vmatpush2.msra.mxu0 0.0
        %8193 = vmatprep.subr.mxu0 0.0
        %8194 = vmatpush2.msra.mxu0 0.0
        %8195 = vmatprep.subr.mxu0 0.0
        %8196 = vmatpush2.msra.mxu0 0.0
        %8197 = vmatprep.subr.mxu0 0.0
        %8198 = vmatpush2.msra.mxu0 0.0
        %8199 = vmatprep.subr.mxu0 0.0
        %8200 = vmatpush2.msra.mxu0 0.0
        %8201 = vmatprep.subr.mxu0 0.0
        %8202 = vmatpush2.msra.mxu0 0.0
        %8203 = vmatprep.subr.mxu0 0.0
        %8204 = vmatpush2.msra.mxu0 0.0
        %8205 = vmatprep.subr.mxu0 0.0
        %8206 = vmatpush2.msra.mxu0 0.0
        %8207 = vmatprep.subr.mxu0 0.0
        %8208 = vmatpush2.msra.mxu0 0.0
        %8209 = vmatprep.subr.mxu0 0.0
        %8210 = vmatpush2.msra.mxu0 0.0
        %8211 = vmatprep.subr.mxu0 0.0
        %8212 = vmatpush2.msra.mxu0 0.0
        %8213 = vmatprep.subr.mxu0 0.0
        %8214 = vmatpush2.msra.mxu0 0.0
        %8215 = vmatprep.subr.mxu0 0.0
        %8216 = vmatpush2.msra.mxu0 0.0
        %8217 = vmatprep.subr.mxu0 0.0
        %8218 = vmatpush2.msra.mxu0 0.0
        %8219 = vmatprep.mubr.f32.mxu0 0.0
        %8220 = vmatmul.mubr.f32.gmra.mxu0 %v8137
        %v8221 = vpop.f32.mrf.mxu0
        %v8222 = vadd.f32 0.0, %v8221
        %v8223 = vpop.f32.mrf.mxu0
        %8224 = vdwg.mxu0
        %v8225 = vadd.f32 %v8136, %v8222
        %v8226 = vld [vmem:[%s6540 + $0x2] sm:$0x1]
        %s8227 = scalar_lea.vmem [#allocation9], 1280
        %v8228 = vld [vmem:[%s8227] sm:$0xff]
        %v8229 = vld [vmem:[%s8227 + $0x8] sm:$0xff]
        %v8230 = vld [vmem:[%s8227 + $0x10] sm:$0xff]
        %v8231 = vld [vmem:[%s8227 + $0x18] sm:$0xff]
        %v8232 = vld [vmem:[%s8227 + $0x20] sm:$0xff]
        %v8233 = vld [vmem:[%s8227 + $0x28] sm:$0xff]
        %v8234 = vld [vmem:[%s8227 + $0x30] sm:$0xff]
        %v8235 = vld [vmem:[%s8227 + $0x38] sm:$0xff]
        %v8236 = vld [vmem:[%s8227 + $0x40] sm:$0xff]
        %v8237 = vld [vmem:[%s8227 + $0x48] sm:$0xff]
        %v8238 = vld [vmem:[%s8227 + $0x50] sm:$0xff]
        %v8239 = vld [vmem:[%s8227 + $0x58] sm:$0xff]
        %v8240 = vld [vmem:[%s8227 + $0x60] sm:$0xff]
        %v8241 = vld [vmem:[%s8227 + $0x68] sm:$0xff]
        %v8242 = vld [vmem:[%s8227 + $0x70] sm:$0xff]
        %v8243 = vld [vmem:[%s8227 + $0x78] sm:$0xff]
        %8244 = vmatprep.subr.mxu0 0.0
        %8245 = vmatpush1.msra.mxu0 %v8243
        %8246 = vmatprep.subr.mxu0 0.0
        %8247 = vmatpush1.msra.mxu0 %v8242
        %8248 = vmatprep.subr.mxu0 0.0
        %8249 = vmatpush1.msra.mxu0 %v8241
        %8250 = vmatprep.subr.mxu0 0.0
        %8251 = vmatpush1.msra.mxu0 %v8240
        %8252 = vmatprep.subr.mxu0 0.0
        %8253 = vmatpush1.msra.mxu0 %v8239
        %8254 = vmatprep.subr.mxu0 0.0
        %8255 = vmatpush1.msra.mxu0 %v8238
        %8256 = vmatprep.subr.mxu0 0.0
        %8257 = vmatpush1.msra.mxu0 %v8237
        %8258 = vmatprep.subr.mxu0 0.0
        %8259 = vmatpush1.msra.mxu0 %v8236
        %8260 = vmatprep.subr.mxu0 0.0
        %8261 = vmatpush1.msra.mxu0 %v8235
        %8262 = vmatprep.subr.mxu0 0.0
        %8263 = vmatpush1.msra.mxu0 %v8234
        %8264 = vmatprep.subr.mxu0 0.0
        %8265 = vmatpush1.msra.mxu0 %v8233
        %8266 = vmatprep.subr.mxu0 0.0
        %8267 = vmatpush1.msra.mxu0 %v8232
        %8268 = vmatprep.subr.mxu0 0.0
        %8269 = vmatpush1.msra.mxu0 %v8231
        %8270 = vmatprep.subr.mxu0 0.0
        %8271 = vmatpush1.msra.mxu0 %v8230
        %8272 = vmatprep.subr.mxu0 0.0
        %8273 = vmatpush1.msra.mxu0 %v8229
        %8274 = vmatprep.subr.mxu0 0.0
        %8275 = vmatpush1.msra.mxu0 %v8228
        %8276 = vmatprep.subr.mxu0 0.0
        %8277 = vmatpush2.msra.mxu0 0.0
        %8278 = vmatprep.subr.mxu0 0.0
        %8279 = vmatpush2.msra.mxu0 0.0
        %8280 = vmatprep.subr.mxu0 0.0
        %8281 = vmatpush2.msra.mxu0 0.0
        %8282 = vmatprep.subr.mxu0 0.0
        %8283 = vmatpush2.msra.mxu0 0.0
        %8284 = vmatprep.subr.mxu0 0.0
        %8285 = vmatpush2.msra.mxu0 0.0
        %8286 = vmatprep.subr.mxu0 0.0
        %8287 = vmatpush2.msra.mxu0 0.0
        %8288 = vmatprep.subr.mxu0 0.0
        %8289 = vmatpush2.msra.mxu0 0.0
        %8290 = vmatprep.subr.mxu0 0.0
        %8291 = vmatpush2.msra.mxu0 0.0
        %8292 = vmatprep.subr.mxu0 0.0
        %8293 = vmatpush2.msra.mxu0 0.0
        %8294 = vmatprep.subr.mxu0 0.0
        %8295 = vmatpush2.msra.mxu0 0.0
        %8296 = vmatprep.subr.mxu0 0.0
        %8297 = vmatpush2.msra.mxu0 0.0
        %8298 = vmatprep.subr.mxu0 0.0
        %8299 = vmatpush2.msra.mxu0 0.0
        %8300 = vmatprep.subr.mxu0 0.0
        %8301 = vmatpush2.msra.mxu0 0.0
        %8302 = vmatprep.subr.mxu0 0.0
        %8303 = vmatpush2.msra.mxu0 0.0
        %8304 = vmatprep.subr.mxu0 0.0
        %8305 = vmatpush2.msra.mxu0 0.0
        %8306 = vmatprep.subr.mxu0 0.0
        %8307 = vmatpush2.msra.mxu0 0.0
        %8308 = vmatprep.mubr.f32.mxu0 0.0
        %8309 = vmatmul.mubr.f32.gmra.mxu0 %v8226
        %v8310 = vpop.f32.mrf.mxu0
        %v8311 = vadd.f32 0.0, %v8310
        %v8312 = vpop.f32.mrf.mxu0
        %8313 = vdwg.mxu0
        %v8314 = vadd.f32 %v8225, %v8311
        %v8315 = vld [vmem:[%s6540 + $0x3] sm:$0x1]
        %s8316 = scalar_lea.vmem [#allocation9], 1408
        %v8317 = vld [vmem:[%s8316] sm:$0xff]
        %v8318 = vld [vmem:[%s8316 + $0x8] sm:$0xff]
        %v8319 = vld [vmem:[%s8316 + $0x10] sm:$0xff]
        %v8320 = vld [vmem:[%s8316 + $0x18] sm:$0xff]
        %v8321 = vld [vmem:[%s8316 + $0x20] sm:$0xff]
        %v8322 = vld [vmem:[%s8316 + $0x28] sm:$0xff]
        %v8323 = vld [vmem:[%s8316 + $0x30] sm:$0xff]
        %v8324 = vld [vmem:[%s8316 + $0x38] sm:$0xff]
        %v8325 = vld [vmem:[%s8316 + $0x40] sm:$0xff]
        %v8326 = vld [vmem:[%s8316 + $0x48] sm:$0xff]
        %v8327 = vld [vmem:[%s8316 + $0x50] sm:$0xff]
        %v8328 = vld [vmem:[%s8316 + $0x58] sm:$0xff]
        %v8329 = vld [vmem:[%s8316 + $0x60] sm:$0xff]
        %v8330 = vld [vmem:[%s8316 + $0x68] sm:$0xff]
        %v8331 = vld [vmem:[%s8316 + $0x70] sm:$0xff]
        %v8332 = vld [vmem:[%s8316 + $0x78] sm:$0xff]
        %8333 = vmatprep.subr.mxu0 0.0
        %8334 = vmatpush1.msra.mxu0 %v8332
        %8335 = vmatprep.subr.mxu0 0.0
        %8336 = vmatpush1.msra.mxu0 %v8331
        %8337 = vmatprep.subr.mxu0 0.0
        %8338 = vmatpush1.msra.mxu0 %v8330
        %8339 = vmatprep.subr.mxu0 0.0
        %8340 = vmatpush1.msra.mxu0 %v8329
        %8341 = vmatprep.subr.mxu0 0.0
        %8342 = vmatpush1.msra.mxu0 %v8328
        %8343 = vmatprep.subr.mxu0 0.0
        %8344 = vmatpush1.msra.mxu0 %v8327
        %8345 = vmatprep.subr.mxu0 0.0
        %8346 = vmatpush1.msra.mxu0 %v8326
        %8347 = vmatprep.subr.mxu0 0.0
        %8348 = vmatpush1.msra.mxu0 %v8325
        %8349 = vmatprep.subr.mxu0 0.0
        %8350 = vmatpush1.msra.mxu0 %v8324
        %8351 = vmatprep.subr.mxu0 0.0
        %8352 = vmatpush1.msra.mxu0 %v8323
        %8353 = vmatprep.subr.mxu0 0.0
        %8354 = vmatpush1.msra.mxu0 %v8322
        %8355 = vmatprep.subr.mxu0 0.0
        %8356 = vmatpush1.msra.mxu0 %v8321
        %8357 = vmatprep.subr.mxu0 0.0
        %8358 = vmatpush1.msra.mxu0 %v8320
        %8359 = vmatprep.subr.mxu0 0.0
        %8360 = vmatpush1.msra.mxu0 %v8319
        %8361 = vmatprep.subr.mxu0 0.0
        %8362 = vmatpush1.msra.mxu0 %v8318
        %8363 = vmatprep.subr.mxu0 0.0
        %8364 = vmatpush1.msra.mxu0 %v8317
        %8365 = vmatprep.subr.mxu0 0.0
        %8366 = vmatpush2.msra.mxu0 0.0
        %8367 = vmatprep.subr.mxu0 0.0
        %8368 = vmatpush2.msra.mxu0 0.0
        %8369 = vmatprep.subr.mxu0 0.0
        %8370 = vmatpush2.msra.mxu0 0.0
        %8371 = vmatprep.subr.mxu0 0.0
        %8372 = vmatpush2.msra.mxu0 0.0
        %8373 = vmatprep.subr.mxu0 0.0
        %8374 = vmatpush2.msra.mxu0 0.0
        %8375 = vmatprep.subr.mxu0 0.0
        %8376 = vmatpush2.msra.mxu0 0.0
        %8377 = vmatprep.subr.mxu0 0.0
        %8378 = vmatpush2.msra.mxu0 0.0
        %8379 = vmatprep.subr.mxu0 0.0
        %8380 = vmatpush2.msra.mxu0 0.0
        %8381 = vmatprep.subr.mxu0 0.0
        %8382 = vmatpush2.msra.mxu0 0.0
        %8383 = vmatprep.subr.mxu0 0.0
        %8384 = vmatpush2.msra.mxu0 0.0
        %8385 = vmatprep.subr.mxu0 0.0
        %8386 = vmatpush2.msra.mxu0 0.0
        %8387 = vmatprep.subr.mxu0 0.0
        %8388 = vmatpush2.msra.mxu0 0.0
        %8389 = vmatprep.subr.mxu0 0.0
        %8390 = vmatpush2.msra.mxu0 0.0
        %8391 = vmatprep.subr.mxu0 0.0
        %8392 = vmatpush2.msra.mxu0 0.0
        %8393 = vmatprep.subr.mxu0 0.0
        %8394 = vmatpush2.msra.mxu0 0.0
        %8395 = vmatprep.subr.mxu0 0.0
        %8396 = vmatpush2.msra.mxu0 0.0
        %8397 = vmatprep.mubr.f32.mxu0 0.0
        %8398 = vmatmul.mubr.f32.gmra.mxu0 %v8315
        %v8399 = vpop.f32.mrf.mxu0
        %v8400 = vadd.f32 0.0, %v8399
        %v8401 = vpop.f32.mrf.mxu0
        %8402 = vdwg.mxu0
        %v8403 = vadd.f32 %v8314, %v8400
        %v8404 = vld [vmem:[%s7334] sm:$0x1]
        %s8405 = scalar_lea.vmem [#allocation9], 1536
        %v8406 = vld [vmem:[%s8405] sm:$0xff]
        %v8407 = vld [vmem:[%s8405 + $0x8] sm:$0xff]
        %v8408 = vld [vmem:[%s8405 + $0x10] sm:$0xff]
        %v8409 = vld [vmem:[%s8405 + $0x18] sm:$0xff]
        %v8410 = vld [vmem:[%s8405 + $0x20] sm:$0xff]
        %v8411 = vld [vmem:[%s8405 + $0x28] sm:$0xff]
        %v8412 = vld [vmem:[%s8405 + $0x30] sm:$0xff]
        %v8413 = vld [vmem:[%s8405 + $0x38] sm:$0xff]
        %v8414 = vld [vmem:[%s8405 + $0x40] sm:$0xff]
        %v8415 = vld [vmem:[%s8405 + $0x48] sm:$0xff]
        %v8416 = vld [vmem:[%s8405 + $0x50] sm:$0xff]
        %v8417 = vld [vmem:[%s8405 + $0x58] sm:$0xff]
        %v8418 = vld [vmem:[%s8405 + $0x60] sm:$0xff]
        %v8419 = vld [vmem:[%s8405 + $0x68] sm:$0xff]
        %v8420 = vld [vmem:[%s8405 + $0x70] sm:$0xff]
        %v8421 = vld [vmem:[%s8405 + $0x78] sm:$0xff]
        %8422 = vmatprep.subr.mxu0 0.0
        %8423 = vmatpush1.msra.mxu0 %v8421
        %8424 = vmatprep.subr.mxu0 0.0
        %8425 = vmatpush1.msra.mxu0 %v8420
        %8426 = vmatprep.subr.mxu0 0.0
        %8427 = vmatpush1.msra.mxu0 %v8419
        %8428 = vmatprep.subr.mxu0 0.0
        %8429 = vmatpush1.msra.mxu0 %v8418
        %8430 = vmatprep.subr.mxu0 0.0
        %8431 = vmatpush1.msra.mxu0 %v8417
        %8432 = vmatprep.subr.mxu0 0.0
        %8433 = vmatpush1.msra.mxu0 %v8416
        %8434 = vmatprep.subr.mxu0 0.0
        %8435 = vmatpush1.msra.mxu0 %v8415
        %8436 = vmatprep.subr.mxu0 0.0
        %8437 = vmatpush1.msra.mxu0 %v8414
        %8438 = vmatprep.subr.mxu0 0.0
        %8439 = vmatpush1.msra.mxu0 %v8413
        %8440 = vmatprep.subr.mxu0 0.0
        %8441 = vmatpush1.msra.mxu0 %v8412
        %8442 = vmatprep.subr.mxu0 0.0
        %8443 = vmatpush1.msra.mxu0 %v8411
        %8444 = vmatprep.subr.mxu0 0.0
        %8445 = vmatpush1.msra.mxu0 %v8410
        %8446 = vmatprep.subr.mxu0 0.0
        %8447 = vmatpush1.msra.mxu0 %v8409
        %8448 = vmatprep.subr.mxu0 0.0
        %8449 = vmatpush1.msra.mxu0 %v8408
        %8450 = vmatprep.subr.mxu0 0.0
        %8451 = vmatpush1.msra.mxu0 %v8407
        %8452 = vmatprep.subr.mxu0 0.0
        %8453 = vmatpush1.msra.mxu0 %v8406
        %8454 = vmatprep.subr.mxu0 0.0
        %8455 = vmatpush2.msra.mxu0 0.0
        %8456 = vmatprep.subr.mxu0 0.0
        %8457 = vmatpush2.msra.mxu0 0.0
        %8458 = vmatprep.subr.mxu0 0.0
        %8459 = vmatpush2.msra.mxu0 0.0
        %8460 = vmatprep.subr.mxu0 0.0
        %8461 = vmatpush2.msra.mxu0 0.0
        %8462 = vmatprep.subr.mxu0 0.0
        %8463 = vmatpush2.msra.mxu0 0.0
        %8464 = vmatprep.subr.mxu0 0.0
        %8465 = vmatpush2.msra.mxu0 0.0
        %8466 = vmatprep.subr.mxu0 0.0
        %8467 = vmatpush2.msra.mxu0 0.0
        %8468 = vmatprep.subr.mxu0 0.0
        %8469 = vmatpush2.msra.mxu0 0.0
        %8470 = vmatprep.subr.mxu0 0.0
        %8471 = vmatpush2.msra.mxu0 0.0
        %8472 = vmatprep.subr.mxu0 0.0
        %8473 = vmatpush2.msra.mxu0 0.0
        %8474 = vmatprep.subr.mxu0 0.0
        %8475 = vmatpush2.msra.mxu0 0.0
        %8476 = vmatprep.subr.mxu0 0.0
        %8477 = vmatpush2.msra.mxu0 0.0
        %8478 = vmatprep.subr.mxu0 0.0
        %8479 = vmatpush2.msra.mxu0 0.0
        %8480 = vmatprep.subr.mxu0 0.0
        %8481 = vmatpush2.msra.mxu0 0.0
        %8482 = vmatprep.subr.mxu0 0.0
        %8483 = vmatpush2.msra.mxu0 0.0
        %8484 = vmatprep.subr.mxu0 0.0
        %8485 = vmatpush2.msra.mxu0 0.0
        %8486 = vmatprep.mubr.f32.mxu0 0.0
        %8487 = vmatmul.mubr.f32.gmra.mxu0 %v8404
        %v8488 = vpop.f32.mrf.mxu0
        %v8489 = vadd.f32 0.0, %v8488
        %v8490 = vpop.f32.mrf.mxu0
        %8491 = vdwg.mxu0
        %v8492 = vadd.f32 %v8403, %v8489
        %v8493 = vld [vmem:[%s7334 + $0x1] sm:$0x1]
        %s8494 = scalar_lea.vmem [#allocation9], 1664
        %v8495 = vld [vmem:[%s8494] sm:$0xff]
        %v8496 = vld [vmem:[%s8494 + $0x8] sm:$0xff]
        %v8497 = vld [vmem:[%s8494 + $0x10] sm:$0xff]
        %v8498 = vld [vmem:[%s8494 + $0x18] sm:$0xff]
        %v8499 = vld [vmem:[%s8494 + $0x20] sm:$0xff]
        %v8500 = vld [vmem:[%s8494 + $0x28] sm:$0xff]
        %v8501 = vld [vmem:[%s8494 + $0x30] sm:$0xff]
        %v8502 = vld [vmem:[%s8494 + $0x38] sm:$0xff]
        %v8503 = vld [vmem:[%s8494 + $0x40] sm:$0xff]
        %v8504 = vld [vmem:[%s8494 + $0x48] sm:$0xff]
        %v8505 = vld [vmem:[%s8494 + $0x50] sm:$0xff]
        %v8506 = vld [vmem:[%s8494 + $0x58] sm:$0xff]
        %v8507 = vld [vmem:[%s8494 + $0x60] sm:$0xff]
        %v8508 = vld [vmem:[%s8494 + $0x68] sm:$0xff]
        %v8509 = vld [vmem:[%s8494 + $0x70] sm:$0xff]
        %v8510 = vld [vmem:[%s8494 + $0x78] sm:$0xff]
        %8511 = vmatprep.subr.mxu0 0.0
        %8512 = vmatpush1.msra.mxu0 %v8510
        %8513 = vmatprep.subr.mxu0 0.0
        %8514 = vmatpush1.msra.mxu0 %v8509
        %8515 = vmatprep.subr.mxu0 0.0
        %8516 = vmatpush1.msra.mxu0 %v8508
        %8517 = vmatprep.subr.mxu0 0.0
        %8518 = vmatpush1.msra.mxu0 %v8507
        %8519 = vmatprep.subr.mxu0 0.0
        %8520 = vmatpush1.msra.mxu0 %v8506
        %8521 = vmatprep.subr.mxu0 0.0
        %8522 = vmatpush1.msra.mxu0 %v8505
        %8523 = vmatprep.subr.mxu0 0.0
        %8524 = vmatpush1.msra.mxu0 %v8504
        %8525 = vmatprep.subr.mxu0 0.0
        %8526 = vmatpush1.msra.mxu0 %v8503
        %8527 = vmatprep.subr.mxu0 0.0
        %8528 = vmatpush1.msra.mxu0 %v8502
        %8529 = vmatprep.subr.mxu0 0.0
        %8530 = vmatpush1.msra.mxu0 %v8501
        %8531 = vmatprep.subr.mxu0 0.0
        %8532 = vmatpush1.msra.mxu0 %v8500
        %8533 = vmatprep.subr.mxu0 0.0
        %8534 = vmatpush1.msra.mxu0 %v8499
        %8535 = vmatprep.subr.mxu0 0.0
        %8536 = vmatpush1.msra.mxu0 %v8498
        %8537 = vmatprep.subr.mxu0 0.0
        %8538 = vmatpush1.msra.mxu0 %v8497
        %8539 = vmatprep.subr.mxu0 0.0
        %8540 = vmatpush1.msra.mxu0 %v8496
        %8541 = vmatprep.subr.mxu0 0.0
        %8542 = vmatpush1.msra.mxu0 %v8495
        %8543 = vmatprep.subr.mxu0 0.0
        %8544 = vmatpush2.msra.mxu0 0.0
        %8545 = vmatprep.subr.mxu0 0.0
        %8546 = vmatpush2.msra.mxu0 0.0
        %8547 = vmatprep.subr.mxu0 0.0
        %8548 = vmatpush2.msra.mxu0 0.0
        %8549 = vmatprep.subr.mxu0 0.0
        %8550 = vmatpush2.msra.mxu0 0.0
        %8551 = vmatprep.subr.mxu0 0.0
        %8552 = vmatpush2.msra.mxu0 0.0
        %8553 = vmatprep.subr.mxu0 0.0
        %8554 = vmatpush2.msra.mxu0 0.0
        %8555 = vmatprep.subr.mxu0 0.0
        %8556 = vmatpush2.msra.mxu0 0.0
        %8557 = vmatprep.subr.mxu0 0.0
        %8558 = vmatpush2.msra.mxu0 0.0
        %8559 = vmatprep.subr.mxu0 0.0
        %8560 = vmatpush2.msra.mxu0 0.0
        %8561 = vmatprep.subr.mxu0 0.0
        %8562 = vmatpush2.msra.mxu0 0.0
        %8563 = vmatprep.subr.mxu0 0.0
        %8564 = vmatpush2.msra.mxu0 0.0
        %8565 = vmatprep.subr.mxu0 0.0
        %8566 = vmatpush2.msra.mxu0 0.0
        %8567 = vmatprep.subr.mxu0 0.0
        %8568 = vmatpush2.msra.mxu0 0.0
        %8569 = vmatprep.subr.mxu0 0.0
        %8570 = vmatpush2.msra.mxu0 0.0
        %8571 = vmatprep.subr.mxu0 0.0
        %8572 = vmatpush2.msra.mxu0 0.0
        %8573 = vmatprep.subr.mxu0 0.0
        %8574 = vmatpush2.msra.mxu0 0.0
        %8575 = vmatprep.mubr.f32.mxu0 0.0
        %8576 = vmatmul.mubr.f32.gmra.mxu0 %v8493
        %v8577 = vpop.f32.mrf.mxu0
        %v8578 = vadd.f32 0.0, %v8577
        %v8579 = vpop.f32.mrf.mxu0
        %8580 = vdwg.mxu0
        %v8581 = vadd.f32 %v8492, %v8578
        %v8582 = vld [vmem:[%s7334 + $0x2] sm:$0x1]
        %s8583 = scalar_lea.vmem [#allocation9], 1792
        %v8584 = vld [vmem:[%s8583] sm:$0xff]
        %v8585 = vld [vmem:[%s8583 + $0x8] sm:$0xff]
        %v8586 = vld [vmem:[%s8583 + $0x10] sm:$0xff]
        %v8587 = vld [vmem:[%s8583 + $0x18] sm:$0xff]
        %v8588 = vld [vmem:[%s8583 + $0x20] sm:$0xff]
        %v8589 = vld [vmem:[%s8583 + $0x28] sm:$0xff]
        %v8590 = vld [vmem:[%s8583 + $0x30] sm:$0xff]
        %v8591 = vld [vmem:[%s8583 + $0x38] sm:$0xff]
        %v8592 = vld [vmem:[%s8583 + $0x40] sm:$0xff]
        %v8593 = vld [vmem:[%s8583 + $0x48] sm:$0xff]
        %v8594 = vld [vmem:[%s8583 + $0x50] sm:$0xff]
        %v8595 = vld [vmem:[%s8583 + $0x58] sm:$0xff]
        %v8596 = vld [vmem:[%s8583 + $0x60] sm:$0xff]
        %v8597 = vld [vmem:[%s8583 + $0x68] sm:$0xff]
        %v8598 = vld [vmem:[%s8583 + $0x70] sm:$0xff]
        %v8599 = vld [vmem:[%s8583 + $0x78] sm:$0xff]
        %8600 = vmatprep.subr.mxu0 0.0
        %8601 = vmatpush1.msra.mxu0 %v8599
        %8602 = vmatprep.subr.mxu0 0.0
        %8603 = vmatpush1.msra.mxu0 %v8598
        %8604 = vmatprep.subr.mxu0 0.0
        %8605 = vmatpush1.msra.mxu0 %v8597
        %8606 = vmatprep.subr.mxu0 0.0
        %8607 = vmatpush1.msra.mxu0 %v8596
        %8608 = vmatprep.subr.mxu0 0.0
        %8609 = vmatpush1.msra.mxu0 %v8595
        %8610 = vmatprep.subr.mxu0 0.0
        %8611 = vmatpush1.msra.mxu0 %v8594
        %8612 = vmatprep.subr.mxu0 0.0
        %8613 = vmatpush1.msra.mxu0 %v8593
        %8614 = vmatprep.subr.mxu0 0.0
        %8615 = vmatpush1.msra.mxu0 %v8592
        %8616 = vmatprep.subr.mxu0 0.0
        %8617 = vmatpush1.msra.mxu0 %v8591
        %8618 = vmatprep.subr.mxu0 0.0
        %8619 = vmatpush1.msra.mxu0 %v8590
        %8620 = vmatprep.subr.mxu0 0.0
        %8621 = vmatpush1.msra.mxu0 %v8589
        %8622 = vmatprep.subr.mxu0 0.0
        %8623 = vmatpush1.msra.mxu0 %v8588
        %8624 = vmatprep.subr.mxu0 0.0
        %8625 = vmatpush1.msra.mxu0 %v8587
        %8626 = vmatprep.subr.mxu0 0.0
        %8627 = vmatpush1.msra.mxu0 %v8586
        %8628 = vmatprep.subr.mxu0 0.0
        %8629 = vmatpush1.msra.mxu0 %v8585
        %8630 = vmatprep.subr.mxu0 0.0
        %8631 = vmatpush1.msra.mxu0 %v8584
        %8632 = vmatprep.subr.mxu0 0.0
        %8633 = vmatpush2.msra.mxu0 0.0
        %8634 = vmatprep.subr.mxu0 0.0
        %8635 = vmatpush2.msra.mxu0 0.0
        %8636 = vmatprep.subr.mxu0 0.0
        %8637 = vmatpush2.msra.mxu0 0.0
        %8638 = vmatprep.subr.mxu0 0.0
        %8639 = vmatpush2.msra.mxu0 0.0
        %8640 = vmatprep.subr.mxu0 0.0
        %8641 = vmatpush2.msra.mxu0 0.0
        %8642 = vmatprep.subr.mxu0 0.0
        %8643 = vmatpush2.msra.mxu0 0.0
        %8644 = vmatprep.subr.mxu0 0.0
        %8645 = vmatpush2.msra.mxu0 0.0
        %8646 = vmatprep.subr.mxu0 0.0
        %8647 = vmatpush2.msra.mxu0 0.0
        %8648 = vmatprep.subr.mxu0 0.0
        %8649 = vmatpush2.msra.mxu0 0.0
        %8650 = vmatprep.subr.mxu0 0.0
        %8651 = vmatpush2.msra.mxu0 0.0
        %8652 = vmatprep.subr.mxu0 0.0
        %8653 = vmatpush2.msra.mxu0 0.0
        %8654 = vmatprep.subr.mxu0 0.0
        %8655 = vmatpush2.msra.mxu0 0.0
        %8656 = vmatprep.subr.mxu0 0.0
        %8657 = vmatpush2.msra.mxu0 0.0
        %8658 = vmatprep.subr.mxu0 0.0
        %8659 = vmatpush2.msra.mxu0 0.0
        %8660 = vmatprep.subr.mxu0 0.0
        %8661 = vmatpush2.msra.mxu0 0.0
        %8662 = vmatprep.subr.mxu0 0.0
        %8663 = vmatpush2.msra.mxu0 0.0
        %8664 = vmatprep.mubr.f32.mxu0 0.0
        %8665 = vmatmul.mubr.f32.gmra.mxu0 %v8582
        %v8666 = vpop.f32.mrf.mxu0
        %v8667 = vadd.f32 0.0, %v8666
        %v8668 = vpop.f32.mrf.mxu0
        %8669 = vdwg.mxu0
        %v8670 = vadd.f32 %v8581, %v8667
        %v8671 = vld [vmem:[%s7334 + $0x3] sm:$0x1]
        %s8672 = scalar_lea.vmem [#allocation9], 1920
        %v8673 = vld [vmem:[%s8672] sm:$0xff]
        %v8674 = vld [vmem:[%s8672 + $0x8] sm:$0xff]
        %v8675 = vld [vmem:[%s8672 + $0x10] sm:$0xff]
        %v8676 = vld [vmem:[%s8672 + $0x18] sm:$0xff]
        %v8677 = vld [vmem:[%s8672 + $0x20] sm:$0xff]
        %v8678 = vld [vmem:[%s8672 + $0x28] sm:$0xff]
        %v8679 = vld [vmem:[%s8672 + $0x30] sm:$0xff]
        %v8680 = vld [vmem:[%s8672 + $0x38] sm:$0xff]
        %v8681 = vld [vmem:[%s8672 + $0x40] sm:$0xff]
        %v8682 = vld [vmem:[%s8672 + $0x48] sm:$0xff]
        %v8683 = vld [vmem:[%s8672 + $0x50] sm:$0xff]
        %v8684 = vld [vmem:[%s8672 + $0x58] sm:$0xff]
        %v8685 = vld [vmem:[%s8672 + $0x60] sm:$0xff]
        %v8686 = vld [vmem:[%s8672 + $0x68] sm:$0xff]
        %v8687 = vld [vmem:[%s8672 + $0x70] sm:$0xff]
        %v8688 = vld [vmem:[%s8672 + $0x78] sm:$0xff]
        %8689 = vmatprep.subr.mxu0 0.0
        %8690 = vmatpush1.msra.mxu0 %v8688
        %8691 = vmatprep.subr.mxu0 0.0
        %8692 = vmatpush1.msra.mxu0 %v8687
        %8693 = vmatprep.subr.mxu0 0.0
        %8694 = vmatpush1.msra.mxu0 %v8686
        %8695 = vmatprep.subr.mxu0 0.0
        %8696 = vmatpush1.msra.mxu0 %v8685
        %8697 = vmatprep.subr.mxu0 0.0
        %8698 = vmatpush1.msra.mxu0 %v8684
        %8699 = vmatprep.subr.mxu0 0.0
        %8700 = vmatpush1.msra.mxu0 %v8683
        %8701 = vmatprep.subr.mxu0 0.0
        %8702 = vmatpush1.msra.mxu0 %v8682
        %8703 = vmatprep.subr.mxu0 0.0
        %8704 = vmatpush1.msra.mxu0 %v8681
        %8705 = vmatprep.subr.mxu0 0.0
        %8706 = vmatpush1.msra.mxu0 %v8680
        %8707 = vmatprep.subr.mxu0 0.0
        %8708 = vmatpush1.msra.mxu0 %v8679
        %8709 = vmatprep.subr.mxu0 0.0
        %8710 = vmatpush1.msra.mxu0 %v8678
        %8711 = vmatprep.subr.mxu0 0.0
        %8712 = vmatpush1.msra.mxu0 %v8677
        %8713 = vmatprep.subr.mxu0 0.0
        %8714 = vmatpush1.msra.mxu0 %v8676
        %8715 = vmatprep.subr.mxu0 0.0
        %8716 = vmatpush1.msra.mxu0 %v8675
        %8717 = vmatprep.subr.mxu0 0.0
        %8718 = vmatpush1.msra.mxu0 %v8674
        %8719 = vmatprep.subr.mxu0 0.0
        %8720 = vmatpush1.msra.mxu0 %v8673
        %8721 = vmatprep.subr.mxu0 0.0
        %8722 = vmatpush2.msra.mxu0 0.0
        %8723 = vmatprep.subr.mxu0 0.0
        %8724 = vmatpush2.msra.mxu0 0.0
        %8725 = vmatprep.subr.mxu0 0.0
        %8726 = vmatpush2.msra.mxu0 0.0
        %8727 = vmatprep.subr.mxu0 0.0
        %8728 = vmatpush2.msra.mxu0 0.0
        %8729 = vmatprep.subr.mxu0 0.0
        %8730 = vmatpush2.msra.mxu0 0.0
        %8731 = vmatprep.subr.mxu0 0.0
        %8732 = vmatpush2.msra.mxu0 0.0
        %8733 = vmatprep.subr.mxu0 0.0
        %8734 = vmatpush2.msra.mxu0 0.0
        %8735 = vmatprep.subr.mxu0 0.0
        %8736 = vmatpush2.msra.mxu0 0.0
        %8737 = vmatprep.subr.mxu0 0.0
        %8738 = vmatpush2.msra.mxu0 0.0
        %8739 = vmatprep.subr.mxu0 0.0
        %8740 = vmatpush2.msra.mxu0 0.0
        %8741 = vmatprep.subr.mxu0 0.0
        %8742 = vmatpush2.msra.mxu0 0.0
        %8743 = vmatprep.subr.mxu0 0.0
        %8744 = vmatpush2.msra.mxu0 0.0
        %8745 = vmatprep.subr.mxu0 0.0
        %8746 = vmatpush2.msra.mxu0 0.0
        %8747 = vmatprep.subr.mxu0 0.0
        %8748 = vmatpush2.msra.mxu0 0.0
        %8749 = vmatprep.subr.mxu0 0.0
        %8750 = vmatpush2.msra.mxu0 0.0
        %8751 = vmatprep.subr.mxu0 0.0
        %8752 = vmatpush2.msra.mxu0 0.0
        %8753 = vmatprep.mubr.f32.mxu0 0.0
        %8754 = vmatmul.mubr.f32.gmra.mxu0 %v8671
        %v8755 = vpop.f32.mrf.mxu0
        %v8756 = vadd.f32 0.0, %v8755
        %v8757 = vpop.f32.mrf.mxu0
        %8758 = vdwg.mxu0
        %v8759 = vadd.f32 %v8670, %v8756
        %8760 = vst [vmem:[%s300] sm:$0x1] %v8759
        %s8761 = sand.u32 %s183, 1
        %s8762 = scalar_lea.sflag [#allocation8], %s8761
        %s8763 = sand.u32 %s183, 1
        %s8764 = scalar_lea.vmem [#allocation11], %s8763
        // Predicated region
        $region57: #{fwd.1} parent=47 // pred_check
          %p8765 = pneg %p193
        $region58: #{fwd.1} parent=47 // pred_check_branch
          %8767 = sbr.rel (%p8765) target = $region60
        $region59: #{fwd.1} parent=47 // pred_region
          %s8769 = ssub.s32 16, 16
          %8770 = vsyncadd %s8762, %s8769
          %s8771 = smul.addr %s23, 16
          %s8772 = scalar_lea.hbm %s7, %s8771
          %s8774 = sshll.u32 %s8764, 4
          %s8775 = int_to_ptr.vmem [resolvable:$true] %s8774
          %8777 = dma.vmem_to_hbm [thread:$0]  %s8775, 16, %s8772, %s8762
        $region60: #{fwd.1} parent=47 // pred_fallthru
          _
      $region48: #{fwd.1} parent=5 // pred_fallthru
        _
      %p8778 = scmp.le.s32.totalorder 2, %s18
      // Predicated region
      $region61: #{fwd.1} parent=5 // pred_check
        %p8779 = pneg %p8778
      $region62: #{fwd.1} parent=5 // pred_check_branch
        %8781 = sbr.rel (%p8779) target = $region64
      $region63: #{fwd.1} parent=5 // pred_region
        %s8782 = ssub.s32 %s18, 2
        // Predicated region
        $region65: #{fwd.1} parent=63 // pred_check
          %p8783 = pneg %p199
        $region66: #{fwd.1} parent=63 // pred_check_branch
          %8785 = sbr.rel (%p8783) target = $region68
        $region67: #{fwd.1} parent=63 // pred_region
          %s8786 = sand.u32 %s184, 1
          %s8787 = scalar_lea.sflag [#allocation8], %s8786
          %s8788 = sand.u32 %s184, 1
          %s8789 = scalar_lea.vmem [#allocation11], %s8788
          %8790 = dma.done %s8787, 16
        $region68: #{fwd.1} parent=63 // pred_fallthru
          _
      $region64: #{fwd.1} parent=5 // pred_fallthru
        _
    $region6: #{fwd.1} parent=1 // loop_footer
      %s22 = sadd.s32 1, %s18
    $region7: #{fwd.1} parent=1 // loop_footer_branch
      %17 = sbr.rel target = $region3
    $region8: #{fwd.1} parent=1 // loop_exit
      _
    %8791 = vsyncpa [#allocation7], 1
    %s8792 = scalar_lea.sflag [#allocation7], 1
    %8793 = vsyncpa %s8792, 1
    %8794 = vsyncpa [#allocation10], 1
    %8795 = vsyncpa [#allocation8], 1
    %s8796 = scalar_lea.sflag [#allocation8], 1
    %8797 = vsyncpa %s8796, 1

</llo_original>
